<compile_context>
chip_gen: v5e
topology: v5e:2x2
jax: 0.10.0
libtpu: 0.0.40
codegen_flags: <defaults>
</compile_context>

<pallas_src>
import math
import functools
import numpy as np

import jax
import jax.numpy as jnp
from jax.experimental import pallas as pl
from jax.experimental.pallas import tpu as pltpu

_LN_EPS = 1e-5
_VMEM_LIMIT = 32 * 1024 * 1024


def _tile_rows(M, cap=512):
    """Largest row tile up to `cap`; grid via cdiv; no forced multi-step grids."""
    return M if M <= cap else cap


def _ln(x, g, b, eps):
    """LayerNorm over the last axis (f32, traced helper used inside kernels)."""
    mu = jnp.mean(x, axis=-1, keepdims=True)
    var = jnp.mean((x - mu) ** 2, axis=-1, keepdims=True)
    return (x - mu) * jax.lax.rsqrt(var + eps) * g + b


def inverse_sigmoid(x, eps=1e-5):
    x = jnp.clip(x, 0.0, 1.0)
    return jnp.log(jnp.maximum(x, eps) / jnp.maximum(1.0 - x, eps))


# ----------------------------- generic linear -----------------------------

def _linear_kernel(x_ref, w_ref, b_ref, o_ref):
    x = x_ref[...].astype(jnp.bfloat16)
    y = jnp.dot(x, w_ref[...], preferred_element_type=jnp.float32) + b_ref[...]
    o_ref[...] = y.astype(o_ref.dtype)


def linear(x, w, b):
    """y = x @ w + b. bf16 MXU operands, f32 accumulation, M-tiled grid."""
    K = x.shape[-1]
    N = w.shape[1]
    lead = x.shape[:-1]
    M = int(np.prod(lead)) if lead else 1
    tm = _tile_rows(M)
    out = pl.pallas_call(
        _linear_kernel,
        out_shape=jax.ShapeDtypeStruct((M, N), jnp.float32),
        grid=(pl.cdiv(M, tm),),
        in_specs=[
            pl.BlockSpec((tm, K), lambda i: (i, 0)),
            pl.BlockSpec((K, N), lambda i: (0, 0)),
            pl.BlockSpec((1, N), lambda i: (0, 0)),
        ],
        out_specs=pl.BlockSpec((tm, N), lambda i: (i, 0)),
        compiler_params=pltpu.CompilerParams(
            dimension_semantics=("parallel",), vmem_limit_bytes=_VMEM_LIMIT),
    )(x.reshape(M, K), w, b.reshape(1, N))
    return out.reshape(*lead, N)


# ------------------------- fused per-layer "pre" kernel -------------------------
# query_pos MLP + self-attention (+norm1) + sampling-offset/attn-weight projection
# with grouped softmax and sampling-location arithmetic, one grid step per batch.

def _decoder_pre_kernel(tgt_ref, ref_ref,
                        wqp1_ref, bqp1_ref, wqp2_ref, bqp2_ref,
                        wqk_ref, bqk_ref, wv_ref, bv_ref, wo_ref, bo_ref,
                        g1_ref, be1_ref,
                        soaw_w_ref, soaw_b_ref, gmat_ref,
                        tgt1_ref, loc_ref, aw_ref,
                        *, num_heads, num_levels, num_points, eps):
    f32 = jnp.float32
    bf16 = jnp.bfloat16
    tgt = tgt_ref[0].astype(f32)        # (L, E)
    ref = ref_ref[0].astype(f32)        # (L, 4)
    L, E = tgt.shape
    hd = E // num_heads
    scale = 1.0 / math.sqrt(hd)
    total = num_heads * num_levels * num_points

    # query_pos_head MLP: 4 -> 2E (relu) -> E
    h = jnp.dot(ref.astype(bf16), wqp1_ref[...], preferred_element_type=f32) + bqp1_ref[...]
    h = jnp.maximum(h, 0.0)
    pos = jnp.dot(h.astype(bf16), wqp2_ref[...], preferred_element_type=f32) + bqp2_ref[...]

    # self-attention: q = k = tgt + pos, value = tgt (fused QK projection)
    q_in = tgt + pos
    qk = jnp.dot(q_in.astype(bf16), wqk_ref[...], preferred_element_type=f32) + bqk_ref[...]
    v = jnp.dot(tgt.astype(bf16), wv_ref[...], preferred_element_type=f32) + bv_ref[...]
    q = qk[:, :E]
    k = qk[:, E:]

    # per-head SDPA; accumulate straight through the output projection (no concat)
    attn = jnp.zeros((L, E), f32)
    for hh in range(num_heads):
        sl = slice(hh * hd, (hh + 1) * hd)
        qh = q[:, sl].astype(bf16)
        kh = k[:, sl].astype(bf16)
        vh = v[:, sl].astype(bf16)
        s = jax.lax.dot_general(qh, kh, (((1,), (1,)), ((), ())),
                                preferred_element_type=f32) * scale        # (L, L)
        s = s - jnp.max(s, axis=-1, keepdims=True)
        p = jnp.exp(s)
        p = p * pl.reciprocal(jnp.sum(p, axis=-1, keepdims=True), approx=True)
        oh = jnp.dot(p.astype(bf16), vh, preferred_element_type=f32)        # (L, hd)
        attn = attn + jnp.dot(oh.astype(bf16), wo_ref[hh],
                              preferred_element_type=f32)                   # += oh @ Wo[h]
    out = attn + bo_ref[...]
    tgt1 = _ln(tgt + out, g1_ref[...], be1_ref[...], eps)
    tgt1_ref[0] = tgt1.astype(tgt1_ref.dtype)

    # fused sampling-offset + attention-weight projection on (tgt1 + pos)
    q2 = (tgt1 + pos).astype(bf16)
    soaw = jnp.dot(q2, soaw_w_ref[...], preferred_element_type=f32) + soaw_b_ref[...]
    off = soaw[:, :total * 2]
    aw_raw = soaw[:, total * 2:]

    # sampling locations: ref center/size interleaved over x/y lanes
    lane = jax.lax.broadcasted_iota(jnp.int32, (L, total * 2), 1)
    is_x = (lane & 1) == 0
    center = jnp.where(is_x, ref[:, 0:1], ref[:, 1:2])
    size = jnp.where(is_x, ref[:, 2:3], ref[:, 3:4])
    loc = center + off * (0.5 / num_points) * size
    loc_ref[0] = loc.astype(loc_ref.dtype)

    # grouped softmax over each head's (levels*points) lanes:
    # shift by the row max (constant per group) then block-diagonal-sum matmul.
    m = jnp.max(aw_raw, axis=-1, keepdims=True)
    e = jnp.exp(aw_raw - m)
    gs = jnp.dot(e, gmat_ref[...], preferred_element_type=f32)
    aw = e * pl.reciprocal(gs, approx=True)
    aw_ref[0] = aw.astype(aw_ref.dtype)


def decoder_pre_block(tgt, ref_points, layer_p, qp_head, group_sum,
                      num_heads, num_levels, num_points, eps=_LN_EPS):
    # TODO(synk): at real scale add an L-tile grid axis (flash-style online softmax)
    #             so v7x gets >=2 grid steps per TensorCore even when B is small.
    B, L, E = tgt.shape
    total = num_heads * num_levels * num_points
    sa = layer_p["self_attn"]
    ca = layer_p["cross_attn"]
    g1, be1 = layer_p["norm1"]
    wqp1, bqp1, wqp2, bqp2 = qp_head

    def const(a):
        return pl.BlockSpec(a.shape, lambda b, n=a.ndim: (0,) * n)

    kernel = functools.partial(_decoder_pre_kernel, num_heads=num_heads,
                               num_levels=num_levels, num_points=num_points, eps=eps)
    return pl.pallas_call(
        kernel,
        out_shape=(jax.ShapeDtypeStruct((B, L, E), jnp.float32),
                   jax.ShapeDtypeStruct((B, L, total * 2), jnp.float32),
                   jax.ShapeDtypeStruct((B, L, total), jnp.float32)),
        grid=(B,),
        in_specs=[
            pl.BlockSpec((1, L, E), lambda b: (b, 0, 0)),
            pl.BlockSpec((1, L, 4), lambda b: (b, 0, 0)),
            const(wqp1), const(bqp1), const(wqp2), const(bqp2),
            const(sa["wqk"]), const(sa["bqk"]), const(sa["wv"]), const(sa["bv"]),
            const(sa["wo_h"]), const(sa["bo"]),
            const(g1), const(be1),
            const(ca["soaw_w"]), const(ca["soaw_b"]), const(group_sum),
        ],
        out_specs=(pl.BlockSpec((1, L, E), lambda b: (b, 0, 0)),
                   pl.BlockSpec((1, L, total * 2), lambda b: (b, 0, 0)),
                   pl.BlockSpec((1, L, total), lambda b: (b, 0, 0))),
        compiler_params=pltpu.CompilerParams(
            dimension_semantics=("parallel",), vmem_limit_bytes=_VMEM_LIMIT),
    )(tgt, ref_points, wqp1, bqp1, wqp2, bqp2,
      sa["wqk"], sa["bqk"], sa["wv"], sa["bv"], sa["wo_h"], sa["bo"],
      g1, be1, ca["soaw_w"], ca["soaw_b"], group_sum)


# ------------------------- fused per-layer "post" kernel -------------------------
# deformable out-proj + residual + norm2 + FFN + residual + norm3 + bbox MLP +
# score head (lane-dense combined output), row-tiled over B*L.

def _decoder_post_kernel(tgt2_ref, tgt1_ref,
                         opw_ref, opb_ref, g2_ref, be2_ref,
                         w1_ref, b1_ref, w2_ref, b2_ref, g3_ref, be3_ref,
                         bw1_ref, bb1_ref, bw2_ref, bb2_ref,
                         bw3p_ref, swp_ref, hb_ref,
                         out_ref, heads_ref, *, eps):
    f32 = jnp.float32
    bf16 = jnp.bfloat16
    tgt2 = tgt2_ref[...].astype(f32)
    tgt1 = tgt1_ref[...].astype(f32)

    x = jnp.dot(tgt2.astype(bf16), opw_ref[...], preferred_element_type=f32) + opb_ref[...]
    t = _ln(tgt1 + x, g2_ref[...], be2_ref[...], eps)

    hdn = jnp.maximum(jnp.dot(t.astype(bf16), w1_ref[...],
                              preferred_element_type=f32) + b1_ref[...], 0.0)
    y = jnp.dot(hdn.astype(bf16), w2_ref[...], preferred_element_type=f32) + b2_ref[...]
    t3 = _ln(t + y, g3_ref[...], be3_ref[...], eps)
    out_ref[...] = t3.astype(out_ref.dtype)

    # bbox MLP (E->E->E, relu) + zero-padded concatenated (bbox | logits) heads
    bh = jnp.maximum(jnp.dot(t3.astype(bf16), bw1_ref[...],
                             preferred_element_type=f32) + bb1_ref[...], 0.0)
    bh = jnp.maximum(jnp.dot(bh.astype(bf16), bw2_ref[...],
                             preferred_element_type=f32) + bb2_ref[...], 0.0)
    heads = (jnp.dot(bh.astype(bf16), bw3p_ref[...], preferred_element_type=f32)
             + jnp.dot(t3.astype(bf16), swp_ref[...], preferred_element_type=f32)
             + hb_ref[...])
    heads_ref[...] = heads.astype(heads_ref.dtype)


def decoder_post_block(tgt2, tgt1, layer_p, head_p, eps=_LN_EPS):
    B, L, E = tgt1.shape
    ca = layer_p["cross_attn"]
    (w1, b1), (w2, b2) = layer_p["ffn"]
    g2, be2 = layer_p["norm2"]
    g3, be3 = layer_p["norm3"]
    NH = head_p["hb"].shape[1]
    M = B * L
    tm = _tile_rows(M)

    def const(a):
        return pl.BlockSpec(a.shape, lambda i, n=a.ndim: (0,) * n)

    out, heads = pl.pallas_call(
        functools.partial(_decoder_post_kernel, eps=eps),
        out_shape=(jax.ShapeDtypeStruct((M, E), jnp.float32),
                   jax.ShapeDtypeStruct((M, NH), jnp.float32)),
        grid=(pl.cdiv(M, tm),),
        in_specs=[
            pl.BlockSpec((tm, E), lambda i: (i, 0)),
            pl.BlockSpec((tm, E), lambda i: (i, 0)),
            const(ca["op_w"]), const(ca["op_b"]), const(g2), const(be2),
            const(w1), const(b1), const(w2), const(b2), const(g3), const(be3),
            const(head_p["bw1"]), const(head_p["bb1"]),
            const(head_p["bw2"]), const(head_p["bb2"]),
            const(head_p["bw3p"]), const(head_p["swp"]), const(head_p["hb"]),
        ],
        out_specs=(pl.BlockSpec((tm, E), lambda i: (i, 0)),
                   pl.BlockSpec((tm, NH), lambda i: (i, 0))),
        compiler_params=pltpu.CompilerParams(
            dimension_semantics=("parallel",), vmem_limit_bytes=_VMEM_LIMIT),
    )(tgt2.reshape(M, E), tgt1.reshape(M, E),
      ca["op_w"], ca["op_b"], g2, be2, w1, b1, w2, b2, g3, be3,
      head_p["bw1"], head_p["bb1"], head_p["bw2"], head_p["bb2"],
      head_p["bw3p"], head_p["swp"], head_p["hb"])
    return out.reshape(B, L, E), heads.reshape(B, L, NH)


# --------------------- deformable attention core (plain JAX) ---------------------
# TODO(synk): replace with a Pallas DMA-gather kernel at real scale; the current
# version does ONE value-tensor transpose per layer and vectorized take_along_axis.

def _deformable_attention_core(value, spatial_shapes, sampling_locations, attention_weights):
    # value: (bs, len_v, H, c); sampling_locations: (bs, nq, H, Lv, P, 2) in [0, 1]
    bs, len_v, H, c = value.shape
    _, nq, _, Lv, P, _ = sampling_locations.shape
    hs = np.array([h for h, w in spatial_shapes], np.float32)
    ws = np.array([w for h, w in spatial_shapes], np.float32)
    hw = [h * w for h, w in spatial_shapes]
    starts = np.concatenate([[0], np.cumsum(hw)[:-1]]).astype(np.int32)
    W_b = ws[None, None, None, :, None]
    H_b = hs[None, None, None, :, None]
    ws_i = ws.astype(np.int32)[None, None, None, :, None]
    starts_b = starts[None, None, None, :, None]

    grid = 2.0 * sampling_locations - 1.0
    gx, gy = grid[..., 0], grid[..., 1]                       # (bs, nq, H, Lv, P)
    ix = ((gx + 1.0) * W_b - 1.0) * 0.5                       # align_corners=False
    iy = ((gy + 1.0) * H_b - 1.0) * 0.5
    x0 = jnp.floor(ix); x1 = x0 + 1.0
    y0 = jnp.floor(iy); y1 = y0 + 1.0
    wx1 = ix - x0; wx0 = 1.0 - wx1
    wy1 = iy - y0; wy0 = 1.0 - wy1

    value_t = value.transpose(0, 2, 1, 3)                     # (bs, H, len_v, c)

    def gather(xf, yf):
        valid = ((xf >= 0) & (xf <= W_b - 1) & (yf >= 0) & (yf <= H_b - 1)).astype(value.dtype)
        xi = jnp.clip(xf, 0, W_b - 1).astype(jnp.int32)
        yi = jnp.clip(yf, 0, H_b - 1).astype(jnp.int32)
        idx = starts_b + yi * ws_i + xi                        # (bs, nq, H, Lv, P)
        idx_t = idx.transpose(0, 2, 1, 3, 4).reshape(bs, H, nq * Lv * P, 1)
        idx_t = jnp.broadcast_to(idx_t, (bs, H, nq * Lv * P, c))
        v = jnp.take_along_axis(value_t, idx_t, axis=2)        # (bs, H, nq*Lv*P, c)
        v = v.reshape(bs, H, nq, Lv, P, c)
        return v * valid.transpose(0, 2, 1, 3, 4)[..., None]

    def w_t(w):
        return w.transpose(0, 2, 1, 3, 4)[..., None]

    samp = (gather(x0, y0) * w_t(wx0 * wy0)
            + gather(x1, y0) * w_t(wx1 * wy0)
            + gather(x0, y1) * w_t(wx0 * wy1)
            + gather(x1, y1) * w_t(wx1 * wy1))                 # (bs, H, nq, Lv, P, c)
    aw = attention_weights.transpose(0, 2, 1, 3, 4)[..., None]
    out = (samp * aw).sum(axis=(3, 4))                         # (bs, H, nq, c)
    return out.transpose(0, 2, 1, 3).reshape(bs, nq, H * c)


# ----------------------------- decoder forward -----------------------------

def transformer_decoder_forward(params, tgt, ref_points_unact, memory, *,
                                spatial_shapes, level_start_index,
                                num_heads, num_levels, num_points, eval_idx):
    del level_start_index  # API parity; starts are derived from spatial_shapes
    B, L, E = tgt.shape
    hd = E // num_heads
    len_v = memory.shape[1]

    output = tgt
    dec_out_bboxes, dec_out_logits = [], []
    ref_points_detach = jax.nn.sigmoid(ref_points_unact)

    for i, lp in enumerate(params["layers"]):
        # fused: query_pos MLP + self-attn (+norm1) + soaw projection/softmax/locations
        tgt1, loc_flat, aw_flat = decoder_pre_block(
            output, ref_points_detach, lp, params["query_pos_head"], params["group_sum"],
            num_heads, num_levels, num_points)

        # per-layer value projection (Pallas) + deformable bilinear gather (plain JAX)
        value_p = linear(memory, lp["cross_attn"]["vp_w"], lp["cross_attn"]["vp_b"])
        value_p = value_p.reshape(B, len_v, num_heads, hd)
        samp_loc = loc_flat.reshape(B, L, num_heads, num_levels, num_points, 2)
        attn_w = aw_flat.reshape(B, L, num_heads, num_levels, num_points)
        tgt2 = _deformable_attention_core(value_p, spatial_shapes, samp_loc, attn_w)

        # fused: out-proj + norm2 + FFN + norm3 + bbox MLP + score head
        output, heads = decoder_post_block(tgt2, tgt1, lp, params["heads"][i])
        bbox_delta = heads[..., :4]
        inter_ref_bbox = jax.nn.sigmoid(bbox_delta + inverse_sigmoid(ref_points_detach))

        if i == eval_idx:
            dec_out_bboxes.append(inter_ref_bbox)
            dec_out_logits.append(heads[..., 4:])
            break
        ref_points_detach = inter_ref_bbox

    return jnp.stack(dec_out_bboxes), jnp.stack(dec_out_logits)


# ----------------------------- parameter init -----------------------------

def _init_linear(key, in_dim, out_dim, scale=0.1):
    kw, kb = jax.random.split(key)
    w = jax.random.normal(kw, (in_dim, out_dim), jnp.float32) * scale
    b = jax.random.normal(kb, (out_dim,), jnp.float32) * scale
    return w, b


def init_params(key, d_model, n_head, dim_ff, n_levels, n_points, num_layers, num_classes):
    E, H = d_model, n_head
    hd = E // H
    total = H * n_levels * n_points
    bf16 = jnp.bfloat16
    keys = jax.random.split(key, num_layers + 3)

    layers = []
    for li in range(num_layers):
        ks = jax.random.split(keys[li], 10)
        wq, bq = _init_linear(ks[0], E, E)
        wk, bk = _init_linear(ks[1], E, E)
        wv, bv = _init_linear(ks[2], E, E)
        wo, bo = _init_linear(ks[3], E, E)
        so_w, so_b = _init_linear(ks[4], E, total * 2)
        aw_w, aw_b = _init_linear(ks[5], E, total)
        vp_w, vp_b = _init_linear(ks[6], E, E)
        op_w, op_b = _init_linear(ks[7], E, E)
        w1, b1 = _init_linear(ks[8], E, dim_ff)
        w2, b2 = _init_linear(ks[9], dim_ff, E)
        ones = jnp.ones((1, E), jnp.float32)
        zeros = jnp.zeros((1, E), jnp.float32)
        layers.append(dict(
            self_attn=dict(
                wqk=jnp.concatenate([wq, wk], axis=1).astype(bf16),
                bqk=jnp.concatenate([bq, bk], axis=0).reshape(1, 2 * E),
                wv=wv.astype(bf16), bv=bv.reshape(1, E),
                # output-projection rows grouped per head -> per-head accumulation
                wo_h=wo.reshape(H, hd, E).astype(bf16),
                bo=bo.reshape(1, E)),
            cross_attn=dict(
                soaw_w=jnp.concatenate([so_w, aw_w], axis=1).astype(bf16),
                soaw_b=jnp.concatenate([so_b, aw_b], axis=0).reshape(1, total * 3),
                vp_w=vp_w.astype(bf16), vp_b=vp_b,
                op_w=op_w.astype(bf16), op_b=op_b.reshape(1, E)),
            ffn=((w1.astype(bf16), b1.reshape(1, dim_ff)),
                 (w2.astype(bf16), b2.reshape(1, E))),
            norm1=(ones, zeros), norm2=(ones, zeros), norm3=(ones, zeros)))

    kq, kb_, ks_ = keys[num_layers:num_layers + 3]
    kq1, kq2 = jax.random.split(kq)
    wqp1, bqp1 = _init_linear(kq1, 4, 2 * E)
    wqp2, bqp2 = _init_linear(kq2, 2 * E, E)
    query_pos_head = (wqp1.astype(bf16), bqp1.reshape(1, 2 * E),
                      wqp2.astype(bf16), bqp2.reshape(1, E))

    heads = []
    kbs = jax.random.split(kb_, num_layers)
    kss = jax.random.split(ks_, num_layers)
    NH = 4 + num_classes
    for i in range(num_layers):
        kb1, kb2, kb3 = jax.random.split(kbs[i], 3)
        bw1, bb1 = _init_linear(kb1, E, E)
        bw2, bb2 = _init_linear(kb2, E, E)
        bw3, bb3 = _init_linear(kb3, E, 4)
        sw, sb = _init_linear(kss[i], E, num_classes)
        # zero-padded so bbox-delta and class logits come out of ONE lane-dense store
        bw3p = jnp.concatenate([bw3, jnp.zeros((E, num_classes), jnp.float32)], axis=1).astype(bf16)
        swp = jnp.concatenate([jnp.zeros((E, 4), jnp.float32), sw], axis=1).astype(bf16)
        hb = jnp.concatenate([bb3, sb], axis=0).reshape(1, NH)
        heads.append(dict(bw1=bw1.astype(bf16), bb1=bb1.reshape(1, E),
                          bw2=bw2.astype(bf16), bb2=bb2.reshape(1, E),
                          bw3p=bw3p, swp=swp, hb=hb))

    # block-diagonal ones: per-head grouped softmax via a single tiny matmul
    G = n_levels * n_points
    group_sum = jnp.asarray(np.kron(np.eye(H, dtype=np.float32),
                                    np.ones((G, G), np.float32)))

    return dict(layers=layers, query_pos_head=query_pos_head,
                heads=heads, group_sum=group_sum)


# ----------------------------- main -----------------------------

if __name__ == "__main__":
    batch, num_queries, hidden_dim = 2, 8, 32
    num_heads, num_levels, num_points = 8, 2, 4
    dim_ff, num_layers, num_classes = 64, 3, 16
    spatial_shapes = ((4, 4), (2, 2))
    level_start_index = (0, 16)
    len_v = sum(h * w for h, w in spatial_shapes)

    key = jax.random.PRNGKey(0)
    kparams, kin = jax.random.split(key)
    params = init_params(kparams, hidden_dim, num_heads, dim_ff,
                         num_levels, num_points, num_layers, num_classes)

    k1, k2, k3 = jax.random.split(kin, 3)
    tgt = jax.random.normal(k1, (batch, num_queries, hidden_dim), jnp.float32)
    ref_points_unact = jax.random.normal(k2, (batch, num_queries, 4), jnp.float32)
    memory = jax.random.normal(k3, (batch, len_v, hidden_dim), jnp.float32)

    fwd = jax.jit(functools.partial(
        transformer_decoder_forward,
        spatial_shapes=spatial_shapes,
        level_start_index=level_start_index,
        num_heads=num_heads,
        num_levels=num_levels,
        num_points=num_points,
        eval_idx=num_layers - 1,     # eval_idx=-1 in the module => last layer
    ))

    dec_bboxes, dec_logits = fwd(params, tgt, ref_points_unact, memory)
    jax.block_until_ready((dec_bboxes, dec_logits))

    assert dec_bboxes.shape == (1, batch, num_queries, 4)
    assert dec_logits.shape == (1, batch, num_queries, num_classes)
    assert bool(jnp.all(jnp.isfinite(dec_bboxes))) and bool(jnp.all(jnp.isfinite(dec_logits)))
    print("KERNEL_OK")
</pallas_src>

<mosaic_0001>
module attributes {stable_mosaic.version = 11 : i64} {
  func.func @_decoder_pre_kernel(%arg0: i32, %arg1: memref<1x8x32xf32, #tpu.memory_space<vmem>>, %arg2: memref<1x8x4xf32, #tpu.memory_space<vmem>>, %arg3: memref<4x64xbf16, #tpu.memory_space<vmem>>, %arg4: memref<1x64xf32, #tpu.memory_space<vmem>>, %arg5: memref<64x32xbf16, #tpu.memory_space<vmem>>, %arg6: memref<1x32xf32, #tpu.memory_space<vmem>>, %arg7: memref<32x64xbf16, #tpu.memory_space<vmem>>, %arg8: memref<1x64xf32, #tpu.memory_space<vmem>>, %arg9: memref<32x32xbf16, #tpu.memory_space<vmem>>, %arg10: memref<1x32xf32, #tpu.memory_space<vmem>>, %arg11: memref<8x4x32xbf16, #tpu.memory_space<vmem>>, %arg12: memref<1x32xf32, #tpu.memory_space<vmem>>, %arg13: memref<1x32xf32, #tpu.memory_space<vmem>>, %arg14: memref<1x32xf32, #tpu.memory_space<vmem>>, %arg15: memref<32x192xbf16, #tpu.memory_space<vmem>>, %arg16: memref<1x192xf32, #tpu.memory_space<vmem>>, %arg17: memref<64x64xf32, #tpu.memory_space<vmem>>, %arg18: memref<1x8x32xf32, #tpu.memory_space<vmem>>, %arg19: memref<1x8x128xf32, #tpu.memory_space<vmem>>, %arg20: memref<1x8x64xf32, #tpu.memory_space<vmem>>) attributes {dimension_semantics = [#tpu.dimension_semantics<parallel>], iteration_bounds = array<i64: 2>, scalar_prefetch = 0 : i64, scratch_operands = 0 : i64, tpu.core_type = #tpu.core_type<tc>, window_params = [{transform_indices = @transform_0, window_bounds = array<i64: 1, 8, 32>}, {transform_indices = @transform_1, window_bounds = array<i64: 1, 8, 4>}, {pipeline_mode = #tpu.pipeline_mode<synchronous>, transform_indices = @transform_2, window_bounds = array<i64: 4, 64>}, {pipeline_mode = #tpu.pipeline_mode<synchronous>, transform_indices = @transform_3, window_bounds = array<i64: 1, 64>}, {pipeline_mode = #tpu.pipeline_mode<synchronous>, transform_indices = @transform_4, window_bounds = array<i64: 64, 32>}, {pipeline_mode = #tpu.pipeline_mode<synchronous>, transform_indices = @transform_5, window_bounds = array<i64: 1, 32>}, {pipeline_mode = #tpu.pipeline_mode<synchronous>, transform_indices = @transform_6, window_bounds = array<i64: 32, 64>}, {pipeline_mode = #tpu.pipeline_mode<synchronous>, transform_indices = @transform_7, window_bounds = array<i64: 1, 64>}, {pipeline_mode = #tpu.pipeline_mode<synchronous>, transform_indices = @transform_8, window_bounds = array<i64: 32, 32>}, {pipeline_mode = #tpu.pipeline_mode<synchronous>, transform_indices = @transform_9, window_bounds = array<i64: 1, 32>}, {pipeline_mode = #tpu.pipeline_mode<synchronous>, transform_indices = @transform_10, window_bounds = array<i64: 8, 4, 32>}, {pipeline_mode = #tpu.pipeline_mode<synchronous>, transform_indices = @transform_11, window_bounds = array<i64: 1, 32>}, {pipeline_mode = #tpu.pipeline_mode<synchronous>, transform_indices = @transform_12, window_bounds = array<i64: 1, 32>}, {pipeline_mode = #tpu.pipeline_mode<synchronous>, transform_indices = @transform_13, window_bounds = array<i64: 1, 32>}, {pipeline_mode = #tpu.pipeline_mode<synchronous>, transform_indices = @transform_14, window_bounds = array<i64: 32, 192>}, {pipeline_mode = #tpu.pipeline_mode<synchronous>, transform_indices = @transform_15, window_bounds = array<i64: 1, 192>}, {pipeline_mode = #tpu.pipeline_mode<synchronous>, transform_indices = @transform_16, window_bounds = array<i64: 64, 64>}, {transform_indices = @transform_17, window_bounds = array<i64: 1, 8, 32>}, {transform_indices = @transform_18, window_bounds = array<i64: 1, 8, 128>}, {transform_indices = @transform_19, window_bounds = array<i64: 1, 8, 64>}]} {
    %c0 = arith.constant 0 : index
    %c0_0 = arith.constant 0 : index
    %c0_1 = arith.constant 0 : index
    %0 = vector.load %arg1[%c0, %c0_0, %c0_1] : memref<1x8x32xf32, #tpu.memory_space<vmem>>, vector<1x8x32xf32>
    %1 = vector.shape_cast %0 : vector<1x8x32xf32> to vector<8x32xf32>
    %c0_2 = arith.constant 0 : index
    %c0_3 = arith.constant 0 : index
    %c0_4 = arith.constant 0 : index
    %2 = vector.load %arg2[%c0_2, %c0_3, %c0_4] : memref<1x8x4xf32, #tpu.memory_space<vmem>>, vector<1x8x4xf32>
    %3 = vector.shape_cast %2 : vector<1x8x4xf32> to vector<8x4xf32>
    %4 = arith.truncf %3 : vector<8x4xf32> to vector<8x4xbf16>
    %c0_5 = arith.constant 0 : index
    %c0_6 = arith.constant 0 : index
    %5 = vector.load %arg3[%c0_5, %c0_6] : memref<4x64xbf16, #tpu.memory_space<vmem>>, vector<4x64xbf16>
    %cst = arith.constant dense<0.000000e+00> : vector<8x64xf32>
    %6 = tpu.matmul %4, %5, %cst {dimension_numbers = #tpu.dot_dimension_numbers<[1], [0], [0], [1], [0, 0, 1, 1], [], []>} : vector<8x4xbf16>, vector<4x64xbf16>, vector<8x64xf32> -> vector<8x64xf32>
    %c0_7 = arith.constant 0 : index
    %c0_8 = arith.constant 0 : index
    %7 = vector.load %arg4[%c0_7, %c0_8] : memref<1x64xf32, #tpu.memory_space<vmem>>, vector<1x64xf32>
    %8 = vector.broadcast %7 : vector<1x64xf32> to vector<8x64xf32>
    %9 = arith.addf %6, %8 : vector<8x64xf32>
    %cst_9 = arith.constant 0.000000e+00 : f32
    %10 = vector.broadcast %cst_9 : f32 to vector<8x64xf32>
    %11 = arith.maximumf %9, %10 : vector<8x64xf32>
    %12 = arith.truncf %11 : vector<8x64xf32> to vector<8x64xbf16>
    %c0_10 = arith.constant 0 : index
    %c0_11 = arith.constant 0 : index
    %13 = vector.load %arg5[%c0_10, %c0_11] : memref<64x32xbf16, #tpu.memory_space<vmem>>, vector<64x32xbf16>
    %cst_12 = arith.constant dense<0.000000e+00> : vector<8x32xf32>
    %14 = tpu.matmul %12, %13, %cst_12 {dimension_numbers = #tpu.dot_dimension_numbers<[1], [0], [0], [1], [0, 0, 1, 1], [], []>} : vector<8x64xbf16>, vector<64x32xbf16>, vector<8x32xf32> -> vector<8x32xf32>
    %c0_13 = arith.constant 0 : index
    %c0_14 = arith.constant 0 : index
    %15 = vector.load %arg6[%c0_13, %c0_14] : memref<1x32xf32, #tpu.memory_space<vmem>>, vector<1x32xf32>
    %16 = vector.broadcast %15 : vector<1x32xf32> to vector<8x32xf32>
    %17 = arith.addf %14, %16 : vector<8x32xf32>
    %18 = arith.addf %1, %17 : vector<8x32xf32>
    %19 = arith.truncf %18 : vector<8x32xf32> to vector<8x32xbf16>
    %c0_15 = arith.constant 0 : index
    %c0_16 = arith.constant 0 : index
    %20 = vector.load %arg7[%c0_15, %c0_16] : memref<32x64xbf16, #tpu.memory_space<vmem>>, vector<32x64xbf16>
    %cst_17 = arith.constant dense<0.000000e+00> : vector<8x64xf32>
    %21 = tpu.matmul %19, %20, %cst_17 {dimension_numbers = #tpu.dot_dimension_numbers<[1], [0], [0], [1], [0, 0, 1, 1], [], []>} : vector<8x32xbf16>, vector<32x64xbf16>, vector<8x64xf32> -> vector<8x64xf32>
    %c0_18 = arith.constant 0 : index
    %c0_19 = arith.constant 0 : index
    %22 = vector.load %arg8[%c0_18, %c0_19] : memref<1x64xf32, #tpu.memory_space<vmem>>, vector<1x64xf32>
    %23 = vector.broadcast %22 : vector<1x64xf32> to vector<8x64xf32>
    %24 = arith.addf %21, %23 : vector<8x64xf32>
    %25 = arith.truncf %1 : vector<8x32xf32> to vector<8x32xbf16>
    %c0_20 = arith.constant 0 : index
    %c0_21 = arith.constant 0 : index
    %26 = vector.load %arg9[%c0_20, %c0_21] : memref<32x32xbf16, #tpu.memory_space<vmem>>, vector<32x32xbf16>
    %cst_22 = arith.constant dense<0.000000e+00> : vector<8x32xf32>
    %27 = tpu.matmul %25, %26, %cst_22 {dimension_numbers = #tpu.dot_dimension_numbers<[1], [0], [0], [1], [0, 0, 1, 1], [], []>} : vector<8x32xbf16>, vector<32x32xbf16>, vector<8x32xf32> -> vector<8x32xf32>
    %c0_23 = arith.constant 0 : index
    %c0_24 = arith.constant 0 : index
    %28 = vector.load %arg10[%c0_23, %c0_24] : memref<1x32xf32, #tpu.memory_space<vmem>>, vector<1x32xf32>
    %29 = vector.broadcast %28 : vector<1x32xf32> to vector<8x32xf32>
    %30 = arith.addf %27, %29 : vector<8x32xf32>
    %31 = vector.extract_strided_slice %24 {offsets = [0, 0], sizes = [8, 32], strides = [1, 1]} : vector<8x64xf32> to vector<8x32xf32>
    %32 = vector.extract_strided_slice %24 {offsets = [0, 32], sizes = [8, 32], strides = [1, 1]} : vector<8x64xf32> to vector<8x32xf32>
    %cst_25 = arith.constant 0.000000e+00 : f32
    %33 = vector.broadcast %cst_25 : f32 to vector<8x32xf32>
    %34 = vector.extract_strided_slice %31 {offsets = [0, 0], sizes = [8, 4], strides = [1, 1]} : vector<8x32xf32> to vector<8x4xf32>
    %35 = arith.truncf %34 : vector<8x4xf32> to vector<8x4xbf16>
    %36 = vector.extract_strided_slice %32 {offsets = [0, 0], sizes = [8, 4], strides = [1, 1]} : vector<8x32xf32> to vector<8x4xf32>
    %37 = arith.truncf %36 : vector<8x4xf32> to vector<8x4xbf16>
    %38 = vector.extract_strided_slice %30 {offsets = [0, 0], sizes = [8, 4], strides = [1, 1]} : vector<8x32xf32> to vector<8x4xf32>
    %39 = arith.truncf %38 : vector<8x4xf32> to vector<8x4xbf16>
    %cst_26 = arith.constant dense<0.000000e+00> : vector<8x8xf32>
    %40 = tpu.matmul %35, %37, %cst_26 {dimension_numbers = #tpu.dot_dimension_numbers<[1], [1], [0], [0], [0, 0, 1, 0], [], []>} : vector<8x4xbf16>, vector<8x4xbf16>, vector<8x8xf32> -> vector<8x8xf32>
    %cst_27 = arith.constant 5.000000e-01 : f32
    %41 = vector.broadcast %cst_27 : f32 to vector<8x8xf32>
    %42 = arith.mulf %40, %41 : vector<8x8xf32>
    %cst_28 = arith.constant dense<0xFF800000> : vector<8xf32>
    %43 = vector.multi_reduction <maximumf>, %42, %cst_28 [1] : vector<8x8xf32> to vector<8xf32>
    %44 = vector.shape_cast %43 : vector<8xf32> to vector<8x1xf32>
    %45 = vector.broadcast %44 : vector<8x1xf32> to vector<8x8xf32>
    %46 = arith.subf %42, %45 : vector<8x8xf32>
    %47 = math.exp %46 : vector<8x8xf32>
    %cst_29 = arith.constant dense<0.000000e+00> : vector<8xf32>
    %48 = vector.multi_reduction <add>, %47, %cst_29 [1] : vector<8x8xf32> to vector<8xf32>
    %49 = vector.shape_cast %48 : vector<8xf32> to vector<8x1xf32>
    %50 = tpu.reciprocal %49 {approx = true} : vector<8x1xf32> -> vector<8x1xf32>
    %51 = vector.broadcast %50 : vector<8x1xf32> to vector<8x8xf32>
    %52 = arith.mulf %47, %51 : vector<8x8xf32>
    %53 = arith.truncf %52 : vector<8x8xf32> to vector<8x8xbf16>
    %cst_30 = arith.constant dense<0.000000e+00> : vector<8x4xf32>
    %54 = tpu.matmul %53, %39, %cst_30 {dimension_numbers = #tpu.dot_dimension_numbers<[1], [0], [0], [1], [0, 0, 1, 1], [], []>} : vector<8x8xbf16>, vector<8x4xbf16>, vector<8x4xf32> -> vector<8x4xf32>
    %55 = arith.truncf %54 : vector<8x4xf32> to vector<8x4xbf16>
    %c0_31 = arith.constant 0 : index
    %c0_32 = arith.constant 0 : index
    %c0_33 = arith.constant 0 : index
    %56 = vector.load %arg11[%c0_31, %c0_32, %c0_33] : memref<8x4x32xbf16, #tpu.memory_space<vmem>>, vector<1x4x32xbf16>
    %57 = vector.shape_cast %56 : vector<1x4x32xbf16> to vector<4x32xbf16>
    %cst_34 = arith.constant dense<0.000000e+00> : vector<8x32xf32>
    %58 = tpu.matmul %55, %57, %cst_34 {dimension_numbers = #tpu.dot_dimension_numbers<[1], [0], [0], [1], [0, 0, 1, 1], [], []>} : vector<8x4xbf16>, vector<4x32xbf16>, vector<8x32xf32> -> vector<8x32xf32>
    %59 = arith.addf %33, %58 : vector<8x32xf32>
    %60 = vector.extract_strided_slice %31 {offsets = [0, 4], sizes = [8, 4], strides = [1, 1]} : vector<8x32xf32> to vector<8x4xf32>
    %61 = arith.truncf %60 : vector<8x4xf32> to vector<8x4xbf16>
    %62 = vector.extract_strided_slice %32 {offsets = [0, 4], sizes = [8, 4], strides = [1, 1]} : vector<8x32xf32> to vector<8x4xf32>
    %63 = arith.truncf %62 : vector<8x4xf32> to vector<8x4xbf16>
    %64 = vector.extract_strided_slice %30 {offsets = [0, 4], sizes = [8, 4], strides = [1, 1]} : vector<8x32xf32> to vector<8x4xf32>
    %65 = arith.truncf %64 : vector<8x4xf32> to vector<8x4xbf16>
    %cst_35 = arith.constant dense<0.000000e+00> : vector<8x8xf32>
    %66 = tpu.matmul %61, %63, %cst_35 {dimension_numbers = #tpu.dot_dimension_numbers<[1], [1], [0], [0], [0, 0, 1, 0], [], []>} : vector<8x4xbf16>, vector<8x4xbf16>, vector<8x8xf32> -> vector<8x8xf32>
    %cst_36 = arith.constant 5.000000e-01 : f32
    %67 = vector.broadcast %cst_36 : f32 to vector<8x8xf32>
    %68 = arith.mulf %66, %67 : vector<8x8xf32>
    %cst_37 = arith.constant dense<0xFF800000> : vector<8xf32>
    %69 = vector.multi_reduction <maximumf>, %68, %cst_37 [1] : vector<8x8xf32> to vector<8xf32>
    %70 = vector.shape_cast %69 : vector<8xf32> to vector<8x1xf32>
    %71 = vector.broadcast %70 : vector<8x1xf32> to vector<8x8xf32>
    %72 = arith.subf %68, %71 : vector<8x8xf32>
    %73 = math.exp %72 : vector<8x8xf32>
    %cst_38 = arith.constant dense<0.000000e+00> : vector<8xf32>
    %74 = vector.multi_reduction <add>, %73, %cst_38 [1] : vector<8x8xf32> to vector<8xf32>
    %75 = vector.shape_cast %74 : vector<8xf32> to vector<8x1xf32>
    %76 = tpu.reciprocal %75 {approx = true} : vector<8x1xf32> -> vector<8x1xf32>
    %77 = vector.broadcast %76 : vector<8x1xf32> to vector<8x8xf32>
    %78 = arith.mulf %73, %77 : vector<8x8xf32>
    %79 = arith.truncf %78 : vector<8x8xf32> to vector<8x8xbf16>
    %cst_39 = arith.constant dense<0.000000e+00> : vector<8x4xf32>
    %80 = tpu.matmul %79, %65, %cst_39 {dimension_numbers = #tpu.dot_dimension_numbers<[1], [0], [0], [1], [0, 0, 1, 1], [], []>} : vector<8x8xbf16>, vector<8x4xbf16>, vector<8x4xf32> -> vector<8x4xf32>
    %81 = arith.truncf %80 : vector<8x4xf32> to vector<8x4xbf16>
    %c1 = arith.constant 1 : index
    %c0_40 = arith.constant 0 : index
    %c0_41 = arith.constant 0 : index
    %82 = vector.load %arg11[%c1, %c0_40, %c0_41] : memref<8x4x32xbf16, #tpu.memory_space<vmem>>, vector<1x4x32xbf16>
    %83 = vector.shape_cast %82 : vector<1x4x32xbf16> to vector<4x32xbf16>
    %cst_42 = arith.constant dense<0.000000e+00> : vector<8x32xf32>
    %84 = tpu.matmul %81, %83, %cst_42 {dimension_numbers = #tpu.dot_dimension_numbers<[1], [0], [0], [1], [0, 0, 1, 1], [], []>} : vector<8x4xbf16>, vector<4x32xbf16>, vector<8x32xf32> -> vector<8x32xf32>
    %85 = arith.addf %59, %84 : vector<8x32xf32>
    %86 = vector.extract_strided_slice %31 {offsets = [0, 8], sizes = [8, 4], strides = [1, 1]} : vector<8x32xf32> to vector<8x4xf32>
    %87 = arith.truncf %86 : vector<8x4xf32> to vector<8x4xbf16>
    %88 = vector.extract_strided_slice %32 {offsets = [0, 8], sizes = [8, 4], strides = [1, 1]} : vector<8x32xf32> to vector<8x4xf32>
    %89 = arith.truncf %88 : vector<8x4xf32> to vector<8x4xbf16>
    %90 = vector.extract_strided_slice %30 {offsets = [0, 8], sizes = [8, 4], strides = [1, 1]} : vector<8x32xf32> to vector<8x4xf32>
    %91 = arith.truncf %90 : vector<8x4xf32> to vector<8x4xbf16>
    %cst_43 = arith.constant dense<0.000000e+00> : vector<8x8xf32>
    %92 = tpu.matmul %87, %89, %cst_43 {dimension_numbers = #tpu.dot_dimension_numbers<[1], [1], [0], [0], [0, 0, 1, 0], [], []>} : vector<8x4xbf16>, vector<8x4xbf16>, vector<8x8xf32> -> vector<8x8xf32>
    %cst_44 = arith.constant 5.000000e-01 : f32
    %93 = vector.broadcast %cst_44 : f32 to vector<8x8xf32>
    %94 = arith.mulf %92, %93 : vector<8x8xf32>
    %cst_45 = arith.constant dense<0xFF800000> : vector<8xf32>
    %95 = vector.multi_reduction <maximumf>, %94, %cst_45 [1] : vector<8x8xf32> to vector<8xf32>
    %96 = vector.shape_cast %95 : vector<8xf32> to vector<8x1xf32>
    %97 = vector.broadcast %96 : vector<8x1xf32> to vector<8x8xf32>
    %98 = arith.subf %94, %97 : vector<8x8xf32>
    %99 = math.exp %98 : vector<8x8xf32>
    %cst_46 = arith.constant dense<0.000000e+00> : vector<8xf32>
    %100 = vector.multi_reduction <add>, %99, %cst_46 [1] : vector<8x8xf32> to vector<8xf32>
    %101 = vector.shape_cast %100 : vector<8xf32> to vector<8x1xf32>
    %102 = tpu.reciprocal %101 {approx = true} : vector<8x1xf32> -> vector<8x1xf32>
    %103 = vector.broadcast %102 : vector<8x1xf32> to vector<8x8xf32>
    %104 = arith.mulf %99, %103 : vector<8x8xf32>
    %105 = arith.truncf %104 : vector<8x8xf32> to vector<8x8xbf16>
    %cst_47 = arith.constant dense<0.000000e+00> : vector<8x4xf32>
    %106 = tpu.matmul %105, %91, %cst_47 {dimension_numbers = #tpu.dot_dimension_numbers<[1], [0], [0], [1], [0, 0, 1, 1], [], []>} : vector<8x8xbf16>, vector<8x4xbf16>, vector<8x4xf32> -> vector<8x4xf32>
    %107 = arith.truncf %106 : vector<8x4xf32> to vector<8x4xbf16>
    %c2 = arith.constant 2 : index
    %c0_48 = arith.constant 0 : index
    %c0_49 = arith.constant 0 : index
    %108 = vector.load %arg11[%c2, %c0_48, %c0_49] : memref<8x4x32xbf16, #tpu.memory_space<vmem>>, vector<1x4x32xbf16>
    %109 = vector.shape_cast %108 : vector<1x4x32xbf16> to vector<4x32xbf16>
    %cst_50 = arith.constant dense<0.000000e+00> : vector<8x32xf32>
    %110 = tpu.matmul %107, %109, %cst_50 {dimension_numbers = #tpu.dot_dimension_numbers<[1], [0], [0], [1], [0, 0, 1, 1], [], []>} : vector<8x4xbf16>, vector<4x32xbf16>, vector<8x32xf32> -> vector<8x32xf32>
    %111 = arith.addf %85, %110 : vector<8x32xf32>
    %112 = vector.extract_strided_slice %31 {offsets = [0, 12], sizes = [8, 4], strides = [1, 1]} : vector<8x32xf32> to vector<8x4xf32>
    %113 = arith.truncf %112 : vector<8x4xf32> to vector<8x4xbf16>
    %114 = vector.extract_strided_slice %32 {offsets = [0, 12], sizes = [8, 4], strides = [1, 1]} : vector<8x32xf32> to vector<8x4xf32>
    %115 = arith.truncf %114 : vector<8x4xf32> to vector<8x4xbf16>
    %116 = vector.extract_strided_slice %30 {offsets = [0, 12], sizes = [8, 4], strides = [1, 1]} : vector<8x32xf32> to vector<8x4xf32>
    %117 = arith.truncf %116 : vector<8x4xf32> to vector<8x4xbf16>
    %cst_51 = arith.constant dense<0.000000e+00> : vector<8x8xf32>
    %118 = tpu.matmul %113, %115, %cst_51 {dimension_numbers = #tpu.dot_dimension_numbers<[1], [1], [0], [0], [0, 0, 1, 0], [], []>} : vector<8x4xbf16>, vector<8x4xbf16>, vector<8x8xf32> -> vector<8x8xf32>
    %cst_52 = arith.constant 5.000000e-01 : f32
    %119 = vector.broadcast %cst_52 : f32 to vector<8x8xf32>
    %120 = arith.mulf %118, %119 : vector<8x8xf32>
    %cst_53 = arith.constant dense<0xFF800000> : vector<8xf32>
    %121 = vector.multi_reduction <maximumf>, %120, %cst_53 [1] : vector<8x8xf32> to vector<8xf32>
    %122 = vector.shape_cast %121 : vector<8xf32> to vector<8x1xf32>
    %123 = vector.broadcast %122 : vector<8x1xf32> to vector<8x8xf32>
    %124 = arith.subf %120, %123 : vector<8x8xf32>
    %125 = math.exp %124 : vector<8x8xf32>
    %cst_54 = arith.constant dense<0.000000e+00> : vector<8xf32>
    %126 = vector.multi_reduction <add>, %125, %cst_54 [1] : vector<8x8xf32> to vector<8xf32>
    %127 = vector.shape_cast %126 : vector<8xf32> to vector<8x1xf32>
    %128 = tpu.reciprocal %127 {approx = true} : vector<8x1xf32> -> vector<8x1xf32>
    %129 = vector.broadcast %128 : vector<8x1xf32> to vector<8x8xf32>
    %130 = arith.mulf %125, %129 : vector<8x8xf32>
    %131 = arith.truncf %130 : vector<8x8xf32> to vector<8x8xbf16>
    %cst_55 = arith.constant dense<0.000000e+00> : vector<8x4xf32>
    %132 = tpu.matmul %131, %117, %cst_55 {dimension_numbers = #tpu.dot_dimension_numbers<[1], [0], [0], [1], [0, 0, 1, 1], [], []>} : vector<8x8xbf16>, vector<8x4xbf16>, vector<8x4xf32> -> vector<8x4xf32>
    %133 = arith.truncf %132 : vector<8x4xf32> to vector<8x4xbf16>
    %c3 = arith.constant 3 : index
    %c0_56 = arith.constant 0 : index
    %c0_57 = arith.constant 0 : index
    %134 = vector.load %arg11[%c3, %c0_56, %c0_57] : memref<8x4x32xbf16, #tpu.memory_space<vmem>>, vector<1x4x32xbf16>
    %135 = vector.shape_cast %134 : vector<1x4x32xbf16> to vector<4x32xbf16>
    %cst_58 = arith.constant dense<0.000000e+00> : vector<8x32xf32>
    %136 = tpu.matmul %133, %135, %cst_58 {dimension_numbers = #tpu.dot_dimension_numbers<[1], [0], [0], [1], [0, 0, 1, 1], [], []>} : vector<8x4xbf16>, vector<4x32xbf16>, vector<8x32xf32> -> vector<8x32xf32>
    %137 = arith.addf %111, %136 : vector<8x32xf32>
    %138 = vector.extract_strided_slice %31 {offsets = [0, 16], sizes = [8, 4], strides = [1, 1]} : vector<8x32xf32> to vector<8x4xf32>
    %139 = arith.truncf %138 : vector<8x4xf32> to vector<8x4xbf16>
    %140 = vector.extract_strided_slice %32 {offsets = [0, 16], sizes = [8, 4], strides = [1, 1]} : vector<8x32xf32> to vector<8x4xf32>
    %141 = arith.truncf %140 : vector<8x4xf32> to vector<8x4xbf16>
    %142 = vector.extract_strided_slice %30 {offsets = [0, 16], sizes = [8, 4], strides = [1, 1]} : vector<8x32xf32> to vector<8x4xf32>
    %143 = arith.truncf %142 : vector<8x4xf32> to vector<8x4xbf16>
    %cst_59 = arith.constant dense<0.000000e+00> : vector<8x8xf32>
    %144 = tpu.matmul %139, %141, %cst_59 {dimension_numbers = #tpu.dot_dimension_numbers<[1], [1], [0], [0], [0, 0, 1, 0], [], []>} : vector<8x4xbf16>, vector<8x4xbf16>, vector<8x8xf32> -> vector<8x8xf32>
    %cst_60 = arith.constant 5.000000e-01 : f32
    %145 = vector.broadcast %cst_60 : f32 to vector<8x8xf32>
    %146 = arith.mulf %144, %145 : vector<8x8xf32>
    %cst_61 = arith.constant dense<0xFF800000> : vector<8xf32>
    %147 = vector.multi_reduction <maximumf>, %146, %cst_61 [1] : vector<8x8xf32> to vector<8xf32>
    %148 = vector.shape_cast %147 : vector<8xf32> to vector<8x1xf32>
    %149 = vector.broadcast %148 : vector<8x1xf32> to vector<8x8xf32>
    %150 = arith.subf %146, %149 : vector<8x8xf32>
    %151 = math.exp %150 : vector<8x8xf32>
    %cst_62 = arith.constant dense<0.000000e+00> : vector<8xf32>
    %152 = vector.multi_reduction <add>, %151, %cst_62 [1] : vector<8x8xf32> to vector<8xf32>
    %153 = vector.shape_cast %152 : vector<8xf32> to vector<8x1xf32>
    %154 = tpu.reciprocal %153 {approx = true} : vector<8x1xf32> -> vector<8x1xf32>
    %155 = vector.broadcast %154 : vector<8x1xf32> to vector<8x8xf32>
    %156 = arith.mulf %151, %155 : vector<8x8xf32>
    %157 = arith.truncf %156 : vector<8x8xf32> to vector<8x8xbf16>
    %cst_63 = arith.constant dense<0.000000e+00> : vector<8x4xf32>
    %158 = tpu.matmul %157, %143, %cst_63 {dimension_numbers = #tpu.dot_dimension_numbers<[1], [0], [0], [1], [0, 0, 1, 1], [], []>} : vector<8x8xbf16>, vector<8x4xbf16>, vector<8x4xf32> -> vector<8x4xf32>
    %159 = arith.truncf %158 : vector<8x4xf32> to vector<8x4xbf16>
    %c4 = arith.constant 4 : index
    %c0_64 = arith.constant 0 : index
    %c0_65 = arith.constant 0 : index
    %160 = vector.load %arg11[%c4, %c0_64, %c0_65] : memref<8x4x32xbf16, #tpu.memory_space<vmem>>, vector<1x4x32xbf16>
    %161 = vector.shape_cast %160 : vector<1x4x32xbf16> to vector<4x32xbf16>
    %cst_66 = arith.constant dense<0.000000e+00> : vector<8x32xf32>
    %162 = tpu.matmul %159, %161, %cst_66 {dimension_numbers = #tpu.dot_dimension_numbers<[1], [0], [0], [1], [0, 0, 1, 1], [], []>} : vector<8x4xbf16>, vector<4x32xbf16>, vector<8x32xf32> -> vector<8x32xf32>
    %163 = arith.addf %137, %162 : vector<8x32xf32>
    %164 = vector.extract_strided_slice %31 {offsets = [0, 20], sizes = [8, 4], strides = [1, 1]} : vector<8x32xf32> to vector<8x4xf32>
    %165 = arith.truncf %164 : vector<8x4xf32> to vector<8x4xbf16>
    %166 = vector.extract_strided_slice %32 {offsets = [0, 20], sizes = [8, 4], strides = [1, 1]} : vector<8x32xf32> to vector<8x4xf32>
    %167 = arith.truncf %166 : vector<8x4xf32> to vector<8x4xbf16>
    %168 = vector.extract_strided_slice %30 {offsets = [0, 20], sizes = [8, 4], strides = [1, 1]} : vector<8x32xf32> to vector<8x4xf32>
    %169 = arith.truncf %168 : vector<8x4xf32> to vector<8x4xbf16>
    %cst_67 = arith.constant dense<0.000000e+00> : vector<8x8xf32>
    %170 = tpu.matmul %165, %167, %cst_67 {dimension_numbers = #tpu.dot_dimension_numbers<[1], [1], [0], [0], [0, 0, 1, 0], [], []>} : vector<8x4xbf16>, vector<8x4xbf16>, vector<8x8xf32> -> vector<8x8xf32>
    %cst_68 = arith.constant 5.000000e-01 : f32
    %171 = vector.broadcast %cst_68 : f32 to vector<8x8xf32>
    %172 = arith.mulf %170, %171 : vector<8x8xf32>
    %cst_69 = arith.constant dense<0xFF800000> : vector<8xf32>
    %173 = vector.multi_reduction <maximumf>, %172, %cst_69 [1] : vector<8x8xf32> to vector<8xf32>
    %174 = vector.shape_cast %173 : vector<8xf32> to vector<8x1xf32>
    %175 = vector.broadcast %174 : vector<8x1xf32> to vector<8x8xf32>
    %176 = arith.subf %172, %175 : vector<8x8xf32>
    %177 = math.exp %176 : vector<8x8xf32>
    %cst_70 = arith.constant dense<0.000000e+00> : vector<8xf32>
    %178 = vector.multi_reduction <add>, %177, %cst_70 [1] : vector<8x8xf32> to vector<8xf32>
    %179 = vector.shape_cast %178 : vector<8xf32> to vector<8x1xf32>
    %180 = tpu.reciprocal %179 {approx = true} : vector<8x1xf32> -> vector<8x1xf32>
    %181 = vector.broadcast %180 : vector<8x1xf32> to vector<8x8xf32>
    %182 = arith.mulf %177, %181 : vector<8x8xf32>
    %183 = arith.truncf %182 : vector<8x8xf32> to vector<8x8xbf16>
    %cst_71 = arith.constant dense<0.000000e+00> : vector<8x4xf32>
    %184 = tpu.matmul %183, %169, %cst_71 {dimension_numbers = #tpu.dot_dimension_numbers<[1], [0], [0], [1], [0, 0, 1, 1], [], []>} : vector<8x8xbf16>, vector<8x4xbf16>, vector<8x4xf32> -> vector<8x4xf32>
    %185 = arith.truncf %184 : vector<8x4xf32> to vector<8x4xbf16>
    %c5 = arith.constant 5 : index
    %c0_72 = arith.constant 0 : index
    %c0_73 = arith.constant 0 : index
    %186 = vector.load %arg11[%c5, %c0_72, %c0_73] : memref<8x4x32xbf16, #tpu.memory_space<vmem>>, vector<1x4x32xbf16>
    %187 = vector.shape_cast %186 : vector<1x4x32xbf16> to vector<4x32xbf16>
    %cst_74 = arith.constant dense<0.000000e+00> : vector<8x32xf32>
    %188 = tpu.matmul %185, %187, %cst_74 {dimension_numbers = #tpu.dot_dimension_numbers<[1], [0], [0], [1], [0, 0, 1, 1], [], []>} : vector<8x4xbf16>, vector<4x32xbf16>, vector<8x32xf32> -> vector<8x32xf32>
    %189 = arith.addf %163, %188 : vector<8x32xf32>
    %190 = vector.extract_strided_slice %31 {offsets = [0, 24], sizes = [8, 4], strides = [1, 1]} : vector<8x32xf32> to vector<8x4xf32>
    %191 = arith.truncf %190 : vector<8x4xf32> to vector<8x4xbf16>
    %192 = vector.extract_strided_slice %32 {offsets = [0, 24], sizes = [8, 4], strides = [1, 1]} : vector<8x32xf32> to vector<8x4xf32>
    %193 = arith.truncf %192 : vector<8x4xf32> to vector<8x4xbf16>
    %194 = vector.extract_strided_slice %30 {offsets = [0, 24], sizes = [8, 4], strides = [1, 1]} : vector<8x32xf32> to vector<8x4xf32>
    %195 = arith.truncf %194 : vector<8x4xf32> to vector<8x4xbf16>
    %cst_75 = arith.constant dense<0.000000e+00> : vector<8x8xf32>
    %196 = tpu.matmul %191, %193, %cst_75 {dimension_numbers = #tpu.dot_dimension_numbers<[1], [1], [0], [0], [0, 0, 1, 0], [], []>} : vector<8x4xbf16>, vector<8x4xbf16>, vector<8x8xf32> -> vector<8x8xf32>
    %cst_76 = arith.constant 5.000000e-01 : f32
    %197 = vector.broadcast %cst_76 : f32 to vector<8x8xf32>
    %198 = arith.mulf %196, %197 : vector<8x8xf32>
    %cst_77 = arith.constant dense<0xFF800000> : vector<8xf32>
    %199 = vector.multi_reduction <maximumf>, %198, %cst_77 [1] : vector<8x8xf32> to vector<8xf32>
    %200 = vector.shape_cast %199 : vector<8xf32> to vector<8x1xf32>
    %201 = vector.broadcast %200 : vector<8x1xf32> to vector<8x8xf32>
    %202 = arith.subf %198, %201 : vector<8x8xf32>
    %203 = math.exp %202 : vector<8x8xf32>
    %cst_78 = arith.constant dense<0.000000e+00> : vector<8xf32>
    %204 = vector.multi_reduction <add>, %203, %cst_78 [1] : vector<8x8xf32> to vector<8xf32>
    %205 = vector.shape_cast %204 : vector<8xf32> to vector<8x1xf32>
    %206 = tpu.reciprocal %205 {approx = true} : vector<8x1xf32> -> vector<8x1xf32>
    %207 = vector.broadcast %206 : vector<8x1xf32> to vector<8x8xf32>
    %208 = arith.mulf %203, %207 : vector<8x8xf32>
    %209 = arith.truncf %208 : vector<8x8xf32> to vector<8x8xbf16>
    %cst_79 = arith.constant dense<0.000000e+00> : vector<8x4xf32>
    %210 = tpu.matmul %209, %195, %cst_79 {dimension_numbers = #tpu.dot_dimension_numbers<[1], [0], [0], [1], [0, 0, 1, 1], [], []>} : vector<8x8xbf16>, vector<8x4xbf16>, vector<8x4xf32> -> vector<8x4xf32>
    %211 = arith.truncf %210 : vector<8x4xf32> to vector<8x4xbf16>
    %c6 = arith.constant 6 : index
    %c0_80 = arith.constant 0 : index
    %c0_81 = arith.constant 0 : index
    %212 = vector.load %arg11[%c6, %c0_80, %c0_81] : memref<8x4x32xbf16, #tpu.memory_space<vmem>>, vector<1x4x32xbf16>
    %213 = vector.shape_cast %212 : vector<1x4x32xbf16> to vector<4x32xbf16>
    %cst_82 = arith.constant dense<0.000000e+00> : vector<8x32xf32>
    %214 = tpu.matmul %211, %213, %cst_82 {dimension_numbers = #tpu.dot_dimension_numbers<[1], [0], [0], [1], [0, 0, 1, 1], [], []>} : vector<8x4xbf16>, vector<4x32xbf16>, vector<8x32xf32> -> vector<8x32xf32>
    %215 = arith.addf %189, %214 : vector<8x32xf32>
    %216 = vector.extract_strided_slice %31 {offsets = [0, 28], sizes = [8, 4], strides = [1, 1]} : vector<8x32xf32> to vector<8x4xf32>
    %217 = arith.truncf %216 : vector<8x4xf32> to vector<8x4xbf16>
    %218 = vector.extract_strided_slice %32 {offsets = [0, 28], sizes = [8, 4], strides = [1, 1]} : vector<8x32xf32> to vector<8x4xf32>
    %219 = arith.truncf %218 : vector<8x4xf32> to vector<8x4xbf16>
    %220 = vector.extract_strided_slice %30 {offsets = [0, 28], sizes = [8, 4], strides = [1, 1]} : vector<8x32xf32> to vector<8x4xf32>
    %221 = arith.truncf %220 : vector<8x4xf32> to vector<8x4xbf16>
    %cst_83 = arith.constant dense<0.000000e+00> : vector<8x8xf32>
    %222 = tpu.matmul %217, %219, %cst_83 {dimension_numbers = #tpu.dot_dimension_numbers<[1], [1], [0], [0], [0, 0, 1, 0], [], []>} : vector<8x4xbf16>, vector<8x4xbf16>, vector<8x8xf32> -> vector<8x8xf32>
    %cst_84 = arith.constant 5.000000e-01 : f32
    %223 = vector.broadcast %cst_84 : f32 to vector<8x8xf32>
    %224 = arith.mulf %222, %223 : vector<8x8xf32>
    %cst_85 = arith.constant dense<0xFF800000> : vector<8xf32>
    %225 = vector.multi_reduction <maximumf>, %224, %cst_85 [1] : vector<8x8xf32> to vector<8xf32>
    %226 = vector.shape_cast %225 : vector<8xf32> to vector<8x1xf32>
    %227 = vector.broadcast %226 : vector<8x1xf32> to vector<8x8xf32>
    %228 = arith.subf %224, %227 : vector<8x8xf32>
    %229 = math.exp %228 : vector<8x8xf32>
    %cst_86 = arith.constant dense<0.000000e+00> : vector<8xf32>
    %230 = vector.multi_reduction <add>, %229, %cst_86 [1] : vector<8x8xf32> to vector<8xf32>
    %231 = vector.shape_cast %230 : vector<8xf32> to vector<8x1xf32>
    %232 = tpu.reciprocal %231 {approx = true} : vector<8x1xf32> -> vector<8x1xf32>
    %233 = vector.broadcast %232 : vector<8x1xf32> to vector<8x8xf32>
    %234 = arith.mulf %229, %233 : vector<8x8xf32>
    %235 = arith.truncf %234 : vector<8x8xf32> to vector<8x8xbf16>
    %cst_87 = arith.constant dense<0.000000e+00> : vector<8x4xf32>
    %236 = tpu.matmul %235, %221, %cst_87 {dimension_numbers = #tpu.dot_dimension_numbers<[1], [0], [0], [1], [0, 0, 1, 1], [], []>} : vector<8x8xbf16>, vector<8x4xbf16>, vector<8x4xf32> -> vector<8x4xf32>
    %237 = arith.truncf %236 : vector<8x4xf32> to vector<8x4xbf16>
    %c7 = arith.constant 7 : index
    %c0_88 = arith.constant 0 : index
    %c0_89 = arith.constant 0 : index
    %238 = vector.load %arg11[%c7, %c0_88, %c0_89] : memref<8x4x32xbf16, #tpu.memory_space<vmem>>, vector<1x4x32xbf16>
    %239 = vector.shape_cast %238 : vector<1x4x32xbf16> to vector<4x32xbf16>
    %cst_90 = arith.constant dense<0.000000e+00> : vector<8x32xf32>
    %240 = tpu.matmul %237, %239, %cst_90 {dimension_numbers = #tpu.dot_dimension_numbers<[1], [0], [0], [1], [0, 0, 1, 1], [], []>} : vector<8x4xbf16>, vector<4x32xbf16>, vector<8x32xf32> -> vector<8x32xf32>
    %241 = arith.addf %215, %240 : vector<8x32xf32>
    %c0_91 = arith.constant 0 : index
    %c0_92 = arith.constant 0 : index
    %242 = vector.load %arg12[%c0_91, %c0_92] : memref<1x32xf32, #tpu.memory_space<vmem>>, vector<1x32xf32>
    %243 = vector.broadcast %242 : vector<1x32xf32> to vector<8x32xf32>
    %244 = arith.addf %241, %243 : vector<8x32xf32>
    %245 = arith.addf %1, %244 : vector<8x32xf32>
    %c0_93 = arith.constant 0 : index
    %c0_94 = arith.constant 0 : index
    %246 = vector.load %arg13[%c0_93, %c0_94] : memref<1x32xf32, #tpu.memory_space<vmem>>, vector<1x32xf32>
    %c0_95 = arith.constant 0 : index
    %c0_96 = arith.constant 0 : index
    %247 = vector.load %arg14[%c0_95, %c0_96] : memref<1x32xf32, #tpu.memory_space<vmem>>, vector<1x32xf32>
    %cst_97 = arith.constant dense<0.000000e+00> : vector<8xf32>
    %248 = vector.multi_reduction <add>, %245, %cst_97 [1] : vector<8x32xf32> to vector<8xf32>
    %249 = vector.shape_cast %248 : vector<8xf32> to vector<8x1xf32>
    %cst_98 = arith.constant 3.200000e+01 : f32
    %250 = vector.broadcast %cst_98 : f32 to vector<8x1xf32>
    %251 = arith.divf %249, %250 : vector<8x1xf32>
    %252 = vector.broadcast %251 : vector<8x1xf32> to vector<8x32xf32>
    %253 = arith.subf %245, %252 : vector<8x32xf32>
    %254 = arith.mulf %253, %253 : vector<8x32xf32>
    %cst_99 = arith.constant dense<0.000000e+00> : vector<8xf32>
    %255 = vector.multi_reduction <add>, %254, %cst_99 [1] : vector<8x32xf32> to vector<8xf32>
    %256 = vector.shape_cast %255 : vector<8xf32> to vector<8x1xf32>
    %cst_100 = arith.constant 3.200000e+01 : f32
    %257 = vector.broadcast %cst_100 : f32 to vector<8x1xf32>
    %258 = arith.divf %256, %257 : vector<8x1xf32>
    %259 = vector.broadcast %251 : vector<8x1xf32> to vector<8x32xf32>
    %260 = arith.subf %245, %259 : vector<8x32xf32>
    %cst_101 = arith.constant 9.99999974E-6 : f32
    %261 = vector.broadcast %cst_101 : f32 to vector<8x1xf32>
    %262 = arith.addf %258, %261 : vector<8x1xf32>
    %263 = math.rsqrt %262 : vector<8x1xf32>
    %264 = vector.broadcast %263 : vector<8x1xf32> to vector<8x32xf32>
    %265 = arith.mulf %260, %264 : vector<8x32xf32>
    %266 = vector.broadcast %246 : vector<1x32xf32> to vector<8x32xf32>
    %267 = arith.mulf %265, %266 : vector<8x32xf32>
    %268 = vector.broadcast %247 : vector<1x32xf32> to vector<8x32xf32>
    %269 = arith.addf %267, %268 : vector<8x32xf32>
    %c0_102 = arith.constant 0 : index
    %c0_103 = arith.constant 0 : index
    %c0_104 = arith.constant 0 : index
    %270 = vector.load %arg18[%c0_102, %c0_103, %c0_104] : memref<1x8x32xf32, #tpu.memory_space<vmem>>, vector<1x8x32xf32>
    %271 = vector.shape_cast %270 : vector<1x8x32xf32> to vector<8x32xf32>
    %272 = vector.shape_cast %269 : vector<8x32xf32> to vector<1x8x32xf32>
    tpu.vector_store %arg18[%c0_102, %c0_103, %c0_104], %272 {strides = array<i32>} : memref<1x8x32xf32, #tpu.memory_space<vmem>>, vector<1x8x32xf32>,
    %273 = arith.addf %269, %17 : vector<8x32xf32>
    %274 = arith.truncf %273 : vector<8x32xf32> to vector<8x32xbf16>
    %c0_105 = arith.constant 0 : index
    %c0_106 = arith.constant 0 : index
    %275 = vector.load %arg15[%c0_105, %c0_106] : memref<32x192xbf16, #tpu.memory_space<vmem>>, vector<32x192xbf16>
    %cst_107 = arith.constant dense<0.000000e+00> : vector<8x192xf32>
    %276 = tpu.matmul %274, %275, %cst_107 {dimension_numbers = #tpu.dot_dimension_numbers<[1], [0], [0], [1], [0, 0, 1, 1], [], []>} : vector<8x32xbf16>, vector<32x192xbf16>, vector<8x192xf32> -> vector<8x192xf32>
    %c0_108 = arith.constant 0 : index
    %c0_109 = arith.constant 0 : index
    %277 = vector.load %arg16[%c0_108, %c0_109] : memref<1x192xf32, #tpu.memory_space<vmem>>, vector<1x192xf32>
    %278 = vector.broadcast %277 : vector<1x192xf32> to vector<8x192xf32>
    %279 = arith.addf %276, %278 : vector<8x192xf32>
    %280 = vector.extract_strided_slice %279 {offsets = [0, 0], sizes = [8, 128], strides = [1, 1]} : vector<8x192xf32> to vector<8x128xf32>
    %281 = vector.extract_strided_slice %279 {offsets = [0, 128], sizes = [8, 64], strides = [1, 1]} : vector<8x192xf32> to vector<8x64xf32>
    %282 = tpu.iota {dimensions = array<i32: 1>} : vector<8x128xi32>
    %c1_i32 = arith.constant 1 : i32
    %283 = vector.broadcast %c1_i32 : i32 to vector<8x128xi32>
    %284 = arith.andi %282, %283 : vector<8x128xi32>
    %c0_i32 = arith.constant 0 : i32
    %285 = vector.broadcast %c0_i32 : i32 to vector<8x128xi32>
    %286 = arith.cmpi eq, %284, %285 : vector<8x128xi32>
    %287 = vector.extract_strided_slice %3 {offsets = [0, 0], sizes = [8, 1], strides = [1, 1]} : vector<8x4xf32> to vector<8x1xf32>
    %288 = vector.extract_strided_slice %3 {offsets = [0, 1], sizes = [8, 1], strides = [1, 1]} : vector<8x4xf32> to vector<8x1xf32>
    %289 = vector.shape_cast %287 : vector<8x1xf32> to vector<8x1xf32>
    %290 = vector.broadcast %289 : vector<8x1xf32> to vector<8x128xf32>
    %291 = vector.shape_cast %288 : vector<8x1xf32> to vector<8x1xf32>
    %292 = vector.broadcast %291 : vector<8x1xf32> to vector<8x128xf32>
    %293 = arith.select %286, %290, %292 : vector<8x128xi1>, vector<8x128xf32>
    %294 = vector.extract_strided_slice %3 {offsets = [0, 2], sizes = [8, 1], strides = [1, 1]} : vector<8x4xf32> to vector<8x1xf32>
    %295 = vector.extract_strided_slice %3 {offsets = [0, 3], sizes = [8, 1], strides = [1, 1]} : vector<8x4xf32> to vector<8x1xf32>
    %296 = vector.shape_cast %294 : vector<8x1xf32> to vector<8x1xf32>
    %297 = vector.broadcast %296 : vector<8x1xf32> to vector<8x128xf32>
    %298 = vector.shape_cast %295 : vector<8x1xf32> to vector<8x1xf32>
    %299 = vector.broadcast %298 : vector<8x1xf32> to vector<8x128xf32>
    %300 = arith.select %286, %297, %299 : vector<8x128xi1>, vector<8x128xf32>
    %cst_110 = arith.constant 1.250000e-01 : f32
    %301 = vector.broadcast %cst_110 : f32 to vector<8x128xf32>
    %302 = arith.mulf %280, %301 : vector<8x128xf32>
    %303 = arith.mulf %302, %300 : vector<8x128xf32>
    %304 = arith.addf %293, %303 : vector<8x128xf32>
    %c0_111 = arith.constant 0 : index
    %c0_112 = arith.constant 0 : index
    %c0_113 = arith.constant 0 : index
    %305 = vector.load %arg19[%c0_111, %c0_112, %c0_113] : memref<1x8x128xf32, #tpu.memory_space<vmem>>, vector<1x8x128xf32>
    %306 = vector.shape_cast %305 : vector<1x8x128xf32> to vector<8x128xf32>
    %307 = vector.shape_cast %304 : vector<8x128xf32> to vector<1x8x128xf32>
    tpu.vector_store %arg19[%c0_111, %c0_112, %c0_113], %307 {strides = array<i32>} : memref<1x8x128xf32, #tpu.memory_space<vmem>>, vector<1x8x128xf32>,
    %cst_114 = arith.constant dense<0xFF800000> : vector<8xf32>
    %308 = vector.multi_reduction <maximumf>, %281, %cst_114 [1] : vector<8x64xf32> to vector<8xf32>
    %309 = vector.shape_cast %308 : vector<8xf32> to vector<8x1xf32>
    %310 = vector.broadcast %309 : vector<8x1xf32> to vector<8x64xf32>
    %311 = arith.subf %281, %310 : vector<8x64xf32>
    %312 = math.exp %311 : vector<8x64xf32>
    %c0_115 = arith.constant 0 : index
    %c0_116 = arith.constant 0 : index
    %313 = vector.load %arg17[%c0_115, %c0_116] : memref<64x64xf32, #tpu.memory_space<vmem>>, vector<64x64xf32>
    %cst_117 = arith.constant dense<0.000000e+00> : vector<8x64xf32>
    %314 = tpu.matmul %312, %313, %cst_117 {dimension_numbers = #tpu.dot_dimension_numbers<[1], [0], [0], [1], [0, 0, 1, 1], [], []>} : vector<8x64xf32>, vector<64x64xf32>, vector<8x64xf32> -> vector<8x64xf32>
    %315 = tpu.reciprocal %314 {approx = true} : vector<8x64xf32> -> vector<8x64xf32>
    %316 = arith.mulf %312, %315 : vector<8x64xf32>
    %c0_118 = arith.constant 0 : index
    %c0_119 = arith.constant 0 : index
    %c0_120 = arith.constant 0 : index
    %317 = vector.load %arg20[%c0_118, %c0_119, %c0_120] : memref<1x8x64xf32, #tpu.memory_space<vmem>>, vector<1x8x64xf32>
    %318 = vector.shape_cast %317 : vector<1x8x64xf32> to vector<8x64xf32>
    %319 = vector.shape_cast %316 : vector<8x64xf32> to vector<1x8x64xf32>
    tpu.vector_store %arg20[%c0_118, %c0_119, %c0_120], %319 {strides = array<i32>} : memref<1x8x64xf32, #tpu.memory_space<vmem>>, vector<1x8x64xf32>,
    return
  }
  func.func @transform_0(%arg0: i32) -> (i32, i32, i32) {
    %c0_i32 = arith.constant 0 : i32
    %c0_i32_0 = arith.constant 0 : i32
    %c0_i32_1 = arith.constant 0 : i32
    return %arg0, %c0_i32, %c0_i32_0 : i32, i32, i32
  }
  func.func @transform_1(%arg0: i32) -> (i32, i32, i32) {
    %c0_i32 = arith.constant 0 : i32
    %c0_i32_0 = arith.constant 0 : i32
    %c0_i32_1 = arith.constant 0 : i32
    return %arg0, %c0_i32, %c0_i32_0 : i32, i32, i32
  }
  func.func @transform_2(%arg0: i32) -> (i32, i32) {
    %c0_i32 = arith.constant 0 : i32
    %c0_i32_0 = arith.constant 0 : i32
    %c0_i32_1 = arith.constant 0 : i32
    return %c0_i32, %c0_i32_0 : i32, i32
  }
  func.func @transform_3(%arg0: i32) -> (i32, i32) {
    %c0_i32 = arith.constant 0 : i32
    %c0_i32_0 = arith.constant 0 : i32
    %c0_i32_1 = arith.constant 0 : i32
    return %c0_i32, %c0_i32_0 : i32, i32
  }
  func.func @transform_4(%arg0: i32) -> (i32, i32) {
    %c0_i32 = arith.constant 0 : i32
    %c0_i32_0 = arith.constant 0 : i32
    %c0_i32_1 = arith.constant 0 : i32
    return %c0_i32, %c0_i32_0 : i32, i32
  }
  func.func @transform_5(%arg0: i32) -> (i32, i32) {
    %c0_i32 = arith.constant 0 : i32
    %c0_i32_0 = arith.constant 0 : i32
    %c0_i32_1 = arith.constant 0 : i32
    return %c0_i32, %c0_i32_0 : i32, i32
  }
  func.func @transform_6(%arg0: i32) -> (i32, i32) {
    %c0_i32 = arith.constant 0 : i32
    %c0_i32_0 = arith.constant 0 : i32
    %c0_i32_1 = arith.constant 0 : i32
    return %c0_i32, %c0_i32_0 : i32, i32
  }
  func.func @transform_7(%arg0: i32) -> (i32, i32) {
    %c0_i32 = arith.constant 0 : i32
    %c0_i32_0 = arith.constant 0 : i32
    %c0_i32_1 = arith.constant 0 : i32
    return %c0_i32, %c0_i32_0 : i32, i32
  }
  func.func @transform_8(%arg0: i32) -> (i32, i32) {
    %c0_i32 = arith.constant 0 : i32
    %c0_i32_0 = arith.constant 0 : i32
    %c0_i32_1 = arith.constant 0 : i32
    return %c0_i32, %c0_i32_0 : i32, i32
  }
  func.func @transform_9(%arg0: i32) -> (i32, i32) {
    %c0_i32 = arith.constant 0 : i32
    %c0_i32_0 = arith.constant 0 : i32
    %c0_i32_1 = arith.constant 0 : i32
    return %c0_i32, %c0_i32_0 : i32, i32
  }
  func.func @transform_10(%arg0: i32) -> (i32, i32, i32) {
    %c0_i32 = arith.constant 0 : i32
    %c0_i32_0 = arith.constant 0 : i32
    %c0_i32_1 = arith.constant 0 : i32
    %c0_i32_2 = arith.constant 0 : i32
    return %c0_i32, %c0_i32_0, %c0_i32_1 : i32, i32, i32
  }
  func.func @transform_11(%arg0: i32) -> (i32, i32) {
    %c0_i32 = arith.constant 0 : i32
    %c0_i32_0 = arith.constant 0 : i32
    %c0_i32_1 = arith.constant 0 : i32
    return %c0_i32, %c0_i32_0 : i32, i32
  }
  func.func @transform_12(%arg0: i32) -> (i32, i32) {
    %c0_i32 = arith.constant 0 : i32
    %c0_i32_0 = arith.constant 0 : i32
    %c0_i32_1 = arith.constant 0 : i32
    return %c0_i32, %c0_i32_0 : i32, i32
  }
  func.func @transform_13(%arg0: i32) -> (i32, i32) {
    %c0_i32 = arith.constant 0 : i32
    %c0_i32_0 = arith.constant 0 : i32
    %c0_i32_1 = arith.constant 0 : i32
    return %c0_i32, %c0_i32_0 : i32, i32
  }
  func.func @transform_14(%arg0: i32) -> (i32, i32) {
    %c0_i32 = arith.constant 0 : i32
    %c0_i32_0 = arith.constant 0 : i32
    %c0_i32_1 = arith.constant 0 : i32
    return %c0_i32, %c0_i32_0 : i32, i32
  }
  func.func @transform_15(%arg0: i32) -> (i32, i32) {
    %c0_i32 = arith.constant 0 : i32
    %c0_i32_0 = arith.constant 0 : i32
    %c0_i32_1 = arith.constant 0 : i32
    return %c0_i32, %c0_i32_0 : i32, i32
  }
  func.func @transform_16(%arg0: i32) -> (i32, i32) {
    %c0_i32 = arith.constant 0 : i32
    %c0_i32_0 = arith.constant 0 : i32
    %c0_i32_1 = arith.constant 0 : i32
    return %c0_i32, %c0_i32_0 : i32, i32
  }
  func.func @transform_17(%arg0: i32) -> (i32, i32, i32) {
    %c0_i32 = arith.constant 0 : i32
    %c0_i32_0 = arith.constant 0 : i32
    %c0_i32_1 = arith.constant 0 : i32
    return %arg0, %c0_i32, %c0_i32_0 : i32, i32, i32
  }
  func.func @transform_18(%arg0: i32) -> (i32, i32, i32) {
    %c0_i32 = arith.constant 0 : i32
    %c0_i32_0 = arith.constant 0 : i32
    %c0_i32_1 = arith.constant 0 : i32
    return %arg0, %c0_i32, %c0_i32_0 : i32, i32, i32
  }
  func.func @transform_19(%arg0: i32) -> (i32, i32, i32) {
    %c0_i32 = arith.constant 0 : i32
    %c0_i32_0 = arith.constant 0 : i32
    %c0_i32_1 = arith.constant 0 : i32
    return %arg0, %c0_i32, %c0_i32_0 : i32, i32, i32
  }
}

module attributes {stable_mosaic.version = 11 : i64} {
  func.func @_linear_kernel(%arg0: i32, %arg1: memref<40x32xf32, #tpu.memory_space<vmem>>, %arg2: memref<32x32xbf16, #tpu.memory_space<vmem>>, %arg3: memref<1x32xf32, #tpu.memory_space<vmem>>, %arg4: memref<40x32xf32, #tpu.memory_space<vmem>>) attributes {dimension_semantics = [#tpu.dimension_semantics<parallel>], iteration_bounds = array<i64: 1>, scalar_prefetch = 0 : i64, scratch_operands = 0 : i64, tpu.core_type = #tpu.core_type<tc>, window_params = [{transform_indices = @transform_0, window_bounds = array<i64: 40, 32>}, {pipeline_mode = #tpu.pipeline_mode<synchronous>, transform_indices = @transform_1, window_bounds = array<i64: 32, 32>}, {pipeline_mode = #tpu.pipeline_mode<synchronous>, transform_indices = @transform_2, window_bounds = array<i64: 1, 32>}, {transform_indices = @transform_3, window_bounds = array<i64: 40, 32>}]} {
    %c0 = arith.constant 0 : index
    %c0_0 = arith.constant 0 : index
    %0 = vector.load %arg1[%c0, %c0_0] : memref<40x32xf32, #tpu.memory_space<vmem>>, vector<40x32xf32>
    %1 = arith.truncf %0 : vector<40x32xf32> to vector<40x32xbf16>
    %c0_1 = arith.constant 0 : index
    %c0_2 = arith.constant 0 : index
    %2 = vector.load %arg2[%c0_1, %c0_2] : memref<32x32xbf16, #tpu.memory_space<vmem>>, vector<32x32xbf16>
    %cst = arith.constant dense<0.000000e+00> : vector<40x32xf32>
    %3 = tpu.matmul %1, %2, %cst {dimension_numbers = #tpu.dot_dimension_numbers<[1], [0], [0], [1], [0, 0, 1, 1], [], []>} : vector<40x32xbf16>, vector<32x32xbf16>, vector<40x32xf32> -> vector<40x32xf32>
    %c0_3 = arith.constant 0 : index
    %c0_4 = arith.constant 0 : index
    %4 = vector.load %arg3[%c0_3, %c0_4] : memref<1x32xf32, #tpu.memory_space<vmem>>, vector<1x32xf32>
    %5 = vector.broadcast %4 : vector<1x32xf32> to vector<40x32xf32>
    %6 = arith.addf %3, %5 : vector<40x32xf32>
    %c0_5 = arith.constant 0 : index
    %c0_6 = arith.constant 0 : index
    %7 = vector.load %arg4[%c0_5, %c0_6] : memref<40x32xf32, #tpu.memory_space<vmem>>, vector<40x32xf32>
    tpu.vector_store %arg4[%c0_5, %c0_6], %6 {strides = array<i32>} : memref<40x32xf32, #tpu.memory_space<vmem>>, vector<40x32xf32>,
    return
  }
  func.func @transform_0(%arg0: i32) -> (i32, i32) {
    %c0_i32 = arith.constant 0 : i32
    %c0_i32_0 = arith.constant 0 : i32
    return %arg0, %c0_i32 : i32, i32
  }
  func.func @transform_1(%arg0: i32) -> (i32, i32) {
    %c0_i32 = arith.constant 0 : i32
    %c0_i32_0 = arith.constant 0 : i32
    %c0_i32_1 = arith.constant 0 : i32
    return %c0_i32, %c0_i32_0 : i32, i32
  }
  func.func @transform_2(%arg0: i32) -> (i32, i32) {
    %c0_i32 = arith.constant 0 : i32
    %c0_i32_0 = arith.constant 0 : i32
    %c0_i32_1 = arith.constant 0 : i32
    return %c0_i32, %c0_i32_0 : i32, i32
  }
  func.func @transform_3(%arg0: i32) -> (i32, i32) {
    %c0_i32 = arith.constant 0 : i32
    %c0_i32_0 = arith.constant 0 : i32
    return %arg0, %c0_i32 : i32, i32
  }
}

module attributes {stable_mosaic.version = 11 : i64} {
  func.func @_decoder_post_kernel(%arg0: i32, %arg1: memref<16x32xf32, #tpu.memory_space<vmem>>, %arg2: memref<16x32xf32, #tpu.memory_space<vmem>>, %arg3: memref<32x32xbf16, #tpu.memory_space<vmem>>, %arg4: memref<1x32xf32, #tpu.memory_space<vmem>>, %arg5: memref<1x32xf32, #tpu.memory_space<vmem>>, %arg6: memref<1x32xf32, #tpu.memory_space<vmem>>, %arg7: memref<32x64xbf16, #tpu.memory_space<vmem>>, %arg8: memref<1x64xf32, #tpu.memory_space<vmem>>, %arg9: memref<64x32xbf16, #tpu.memory_space<vmem>>, %arg10: memref<1x32xf32, #tpu.memory_space<vmem>>, %arg11: memref<1x32xf32, #tpu.memory_space<vmem>>, %arg12: memref<1x32xf32, #tpu.memory_space<vmem>>, %arg13: memref<32x32xbf16, #tpu.memory_space<vmem>>, %arg14: memref<1x32xf32, #tpu.memory_space<vmem>>, %arg15: memref<32x32xbf16, #tpu.memory_space<vmem>>, %arg16: memref<1x32xf32, #tpu.memory_space<vmem>>, %arg17: memref<32x20xbf16, #tpu.memory_space<vmem>>, %arg18: memref<32x20xbf16, #tpu.memory_space<vmem>>, %arg19: memref<1x20xf32, #tpu.memory_space<vmem>>, %arg20: memref<16x32xf32, #tpu.memory_space<vmem>>, %arg21: memref<16x20xf32, #tpu.memory_space<vmem>>) attributes {dimension_semantics = [#tpu.dimension_semantics<parallel>], iteration_bounds = array<i64: 1>, scalar_prefetch = 0 : i64, scratch_operands = 0 : i64, tpu.core_type = #tpu.core_type<tc>, window_params = [{transform_indices = @transform_0, window_bounds = array<i64: 16, 32>}, {transform_indices = @transform_1, window_bounds = array<i64: 16, 32>}, {pipeline_mode = #tpu.pipeline_mode<synchronous>, transform_indices = @transform_2, window_bounds = array<i64: 32, 32>}, {pipeline_mode = #tpu.pipeline_mode<synchronous>, transform_indices = @transform_3, window_bounds = array<i64: 1, 32>}, {pipeline_mode = #tpu.pipeline_mode<synchronous>, transform_indices = @transform_4, window_bounds = array<i64: 1, 32>}, {pipeline_mode = #tpu.pipeline_mode<synchronous>, transform_indices = @transform_5, window_bounds = array<i64: 1, 32>}, {pipeline_mode = #tpu.pipeline_mode<synchronous>, transform_indices = @transform_6, window_bounds = array<i64: 32, 64>}, {pipeline_mode = #tpu.pipeline_mode<synchronous>, transform_indices = @transform_7, window_bounds = array<i64: 1, 64>}, {pipeline_mode = #tpu.pipeline_mode<synchronous>, transform_indices = @transform_8, window_bounds = array<i64: 64, 32>}, {pipeline_mode = #tpu.pipeline_mode<synchronous>, transform_indices = @transform_9, window_bounds = array<i64: 1, 32>}, {pipeline_mode = #tpu.pipeline_mode<synchronous>, transform_indices = @transform_10, window_bounds = array<i64: 1, 32>}, {pipeline_mode = #tpu.pipeline_mode<synchronous>, transform_indices = @transform_11, window_bounds = array<i64: 1, 32>}, {pipeline_mode = #tpu.pipeline_mode<synchronous>, transform_indices = @transform_12, window_bounds = array<i64: 32, 32>}, {pipeline_mode = #tpu.pipeline_mode<synchronous>, transform_indices = @transform_13, window_bounds = array<i64: 1, 32>}, {pipeline_mode = #tpu.pipeline_mode<synchronous>, transform_indices = @transform_14, window_bounds = array<i64: 32, 32>}, {pipeline_mode = #tpu.pipeline_mode<synchronous>, transform_indices = @transform_15, window_bounds = array<i64: 1, 32>}, {pipeline_mode = #tpu.pipeline_mode<synchronous>, transform_indices = @transform_16, window_bounds = array<i64: 32, 20>}, {pipeline_mode = #tpu.pipeline_mode<synchronous>, transform_indices = @transform_17, window_bounds = array<i64: 32, 20>}, {pipeline_mode = #tpu.pipeline_mode<synchronous>, transform_indices = @transform_18, window_bounds = array<i64: 1, 20>}, {transform_indices = @transform_19, window_bounds = array<i64: 16, 32>}, {transform_indices = @transform_20, window_bounds = array<i64: 16, 20>}]} {
    %c0 = arith.constant 0 : index
    %c0_0 = arith.constant 0 : index
    %0 = vector.load %arg1[%c0, %c0_0] : memref<16x32xf32, #tpu.memory_space<vmem>>, vector<16x32xf32>
    %c0_1 = arith.constant 0 : index
    %c0_2 = arith.constant 0 : index
    %1 = vector.load %arg2[%c0_1, %c0_2] : memref<16x32xf32, #tpu.memory_space<vmem>>, vector<16x32xf32>
    %2 = arith.truncf %0 : vector<16x32xf32> to vector<16x32xbf16>
    %c0_3 = arith.constant 0 : index
    %c0_4 = arith.constant 0 : index
    %3 = vector.load %arg3[%c0_3, %c0_4] : memref<32x32xbf16, #tpu.memory_space<vmem>>, vector<32x32xbf16>
    %cst = arith.constant dense<0.000000e+00> : vector<16x32xf32>
    %4 = tpu.matmul %2, %3, %cst {dimension_numbers = #tpu.dot_dimension_numbers<[1], [0], [0], [1], [0, 0, 1, 1], [], []>} : vector<16x32xbf16>, vector<32x32xbf16>, vector<16x32xf32> -> vector<16x32xf32>
    %c0_5 = arith.constant 0 : index
    %c0_6 = arith.constant 0 : index
    %5 = vector.load %arg4[%c0_5, %c0_6] : memref<1x32xf32, #tpu.memory_space<vmem>>, vector<1x32xf32>
    %6 = vector.broadcast %5 : vector<1x32xf32> to vector<16x32xf32>
    %7 = arith.addf %4, %6 : vector<16x32xf32>
    %8 = arith.addf %1, %7 : vector<16x32xf32>
    %c0_7 = arith.constant 0 : index
    %c0_8 = arith.constant 0 : index
    %9 = vector.load %arg5[%c0_7, %c0_8] : memref<1x32xf32, #tpu.memory_space<vmem>>, vector<1x32xf32>
    %c0_9 = arith.constant 0 : index
    %c0_10 = arith.constant 0 : index
    %10 = vector.load %arg6[%c0_9, %c0_10] : memref<1x32xf32, #tpu.memory_space<vmem>>, vector<1x32xf32>
    %cst_11 = arith.constant dense<0.000000e+00> : vector<16xf32>
    %11 = vector.multi_reduction <add>, %8, %cst_11 [1] : vector<16x32xf32> to vector<16xf32>
    %12 = vector.shape_cast %11 : vector<16xf32> to vector<16x1xf32>
    %cst_12 = arith.constant 3.200000e+01 : f32
    %13 = vector.broadcast %cst_12 : f32 to vector<16x1xf32>
    %14 = arith.divf %12, %13 : vector<16x1xf32>
    %15 = vector.broadcast %14 : vector<16x1xf32> to vector<16x32xf32>
    %16 = arith.subf %8, %15 : vector<16x32xf32>
    %17 = arith.mulf %16, %16 : vector<16x32xf32>
    %cst_13 = arith.constant dense<0.000000e+00> : vector<16xf32>
    %18 = vector.multi_reduction <add>, %17, %cst_13 [1] : vector<16x32xf32> to vector<16xf32>
    %19 = vector.shape_cast %18 : vector<16xf32> to vector<16x1xf32>
    %cst_14 = arith.constant 3.200000e+01 : f32
    %20 = vector.broadcast %cst_14 : f32 to vector<16x1xf32>
    %21 = arith.divf %19, %20 : vector<16x1xf32>
    %22 = vector.broadcast %14 : vector<16x1xf32> to vector<16x32xf32>
    %23 = arith.subf %8, %22 : vector<16x32xf32>
    %cst_15 = arith.constant 9.99999974E-6 : f32
    %24 = vector.broadcast %cst_15 : f32 to vector<16x1xf32>
    %25 = arith.addf %21, %24 : vector<16x1xf32>
    %26 = math.rsqrt %25 : vector<16x1xf32>
    %27 = vector.broadcast %26 : vector<16x1xf32> to vector<16x32xf32>
    %28 = arith.mulf %23, %27 : vector<16x32xf32>
    %29 = vector.broadcast %9 : vector<1x32xf32> to vector<16x32xf32>
    %30 = arith.mulf %28, %29 : vector<16x32xf32>
    %31 = vector.broadcast %10 : vector<1x32xf32> to vector<16x32xf32>
    %32 = arith.addf %30, %31 : vector<16x32xf32>
    %33 = arith.truncf %32 : vector<16x32xf32> to vector<16x32xbf16>
    %c0_16 = arith.constant 0 : index
    %c0_17 = arith.constant 0 : index
    %34 = vector.load %arg7[%c0_16, %c0_17] : memref<32x64xbf16, #tpu.memory_space<vmem>>, vector<32x64xbf16>
    %cst_18 = arith.constant dense<0.000000e+00> : vector<16x64xf32>
    %35 = tpu.matmul %33, %34, %cst_18 {dimension_numbers = #tpu.dot_dimension_numbers<[1], [0], [0], [1], [0, 0, 1, 1], [], []>} : vector<16x32xbf16>, vector<32x64xbf16>, vector<16x64xf32> -> vector<16x64xf32>
    %c0_19 = arith.constant 0 : index
    %c0_20 = arith.constant 0 : index
    %36 = vector.load %arg8[%c0_19, %c0_20] : memref<1x64xf32, #tpu.memory_space<vmem>>, vector<1x64xf32>
    %37 = vector.broadcast %36 : vector<1x64xf32> to vector<16x64xf32>
    %38 = arith.addf %35, %37 : vector<16x64xf32>
    %cst_21 = arith.constant 0.000000e+00 : f32
    %39 = vector.broadcast %cst_21 : f32 to vector<16x64xf32>
    %40 = arith.maximumf %38, %39 : vector<16x64xf32>
    %41 = arith.truncf %40 : vector<16x64xf32> to vector<16x64xbf16>
    %c0_22 = arith.constant 0 : index
    %c0_23 = arith.constant 0 : index
    %42 = vector.load %arg9[%c0_22, %c0_23] : memref<64x32xbf16, #tpu.memory_space<vmem>>, vector<64x32xbf16>
    %cst_24 = arith.constant dense<0.000000e+00> : vector<16x32xf32>
    %43 = tpu.matmul %41, %42, %cst_24 {dimension_numbers = #tpu.dot_dimension_numbers<[1], [0], [0], [1], [0, 0, 1, 1], [], []>} : vector<16x64xbf16>, vector<64x32xbf16>, vector<16x32xf32> -> vector<16x32xf32>
    %c0_25 = arith.constant 0 : index
    %c0_26 = arith.constant 0 : index
    %44 = vector.load %arg10[%c0_25, %c0_26] : memref<1x32xf32, #tpu.memory_space<vmem>>, vector<1x32xf32>
    %45 = vector.broadcast %44 : vector<1x32xf32> to vector<16x32xf32>
    %46 = arith.addf %43, %45 : vector<16x32xf32>
    %47 = arith.addf %32, %46 : vector<16x32xf32>
    %c0_27 = arith.constant 0 : index
    %c0_28 = arith.constant 0 : index
    %48 = vector.load %arg11[%c0_27, %c0_28] : memref<1x32xf32, #tpu.memory_space<vmem>>, vector<1x32xf32>
    %c0_29 = arith.constant 0 : index
    %c0_30 = arith.constant 0 : index
    %49 = vector.load %arg12[%c0_29, %c0_30] : memref<1x32xf32, #tpu.memory_space<vmem>>, vector<1x32xf32>
    %cst_31 = arith.constant dense<0.000000e+00> : vector<16xf32>
    %50 = vector.multi_reduction <add>, %47, %cst_31 [1] : vector<16x32xf32> to vector<16xf32>
    %51 = vector.shape_cast %50 : vector<16xf32> to vector<16x1xf32>
    %cst_32 = arith.constant 3.200000e+01 : f32
    %52 = vector.broadcast %cst_32 : f32 to vector<16x1xf32>
    %53 = arith.divf %51, %52 : vector<16x1xf32>
    %54 = vector.broadcast %53 : vector<16x1xf32> to vector<16x32xf32>
    %55 = arith.subf %47, %54 : vector<16x32xf32>
    %56 = arith.mulf %55, %55 : vector<16x32xf32>
    %cst_33 = arith.constant dense<0.000000e+00> : vector<16xf32>
    %57 = vector.multi_reduction <add>, %56, %cst_33 [1] : vector<16x32xf32> to vector<16xf32>
    %58 = vector.shape_cast %57 : vector<16xf32> to vector<16x1xf32>
    %cst_34 = arith.constant 3.200000e+01 : f32
    %59 = vector.broadcast %cst_34 : f32 to vector<16x1xf32>
    %60 = arith.divf %58, %59 : vector<16x1xf32>
    %61 = vector.broadcast %53 : vector<16x1xf32> to vector<16x32xf32>
    %62 = arith.subf %47, %61 : vector<16x32xf32>
    %cst_35 = arith.constant 9.99999974E-6 : f32
    %63 = vector.broadcast %cst_35 : f32 to vector<16x1xf32>
    %64 = arith.addf %60, %63 : vector<16x1xf32>
    %65 = math.rsqrt %64 : vector<16x1xf32>
    %66 = vector.broadcast %65 : vector<16x1xf32> to vector<16x32xf32>
    %67 = arith.mulf %62, %66 : vector<16x32xf32>
    %68 = vector.broadcast %48 : vector<1x32xf32> to vector<16x32xf32>
    %69 = arith.mulf %67, %68 : vector<16x32xf32>
    %70 = vector.broadcast %49 : vector<1x32xf32> to vector<16x32xf32>
    %71 = arith.addf %69, %70 : vector<16x32xf32>
    %c0_36 = arith.constant 0 : index
    %c0_37 = arith.constant 0 : index
    %72 = vector.load %arg20[%c0_36, %c0_37] : memref<16x32xf32, #tpu.memory_space<vmem>>, vector<16x32xf32>
    tpu.vector_store %arg20[%c0_36, %c0_37], %71 {strides = array<i32>} : memref<16x32xf32, #tpu.memory_space<vmem>>, vector<16x32xf32>,
    %73 = arith.truncf %71 : vector<16x32xf32> to vector<16x32xbf16>
    %c0_38 = arith.constant 0 : index
    %c0_39 = arith.constant 0 : index
    %74 = vector.load %arg13[%c0_38, %c0_39] : memref<32x32xbf16, #tpu.memory_space<vmem>>, vector<32x32xbf16>
    %cst_40 = arith.constant dense<0.000000e+00> : vector<16x32xf32>
    %75 = tpu.matmul %73, %74, %cst_40 {dimension_numbers = #tpu.dot_dimension_numbers<[1], [0], [0], [1], [0, 0, 1, 1], [], []>} : vector<16x32xbf16>, vector<32x32xbf16>, vector<16x32xf32> -> vector<16x32xf32>
    %c0_41 = arith.constant 0 : index
    %c0_42 = arith.constant 0 : index
    %76 = vector.load %arg14[%c0_41, %c0_42] : memref<1x32xf32, #tpu.memory_space<vmem>>, vector<1x32xf32>
    %77 = vector.broadcast %76 : vector<1x32xf32> to vector<16x32xf32>
    %78 = arith.addf %75, %77 : vector<16x32xf32>
    %cst_43 = arith.constant 0.000000e+00 : f32
    %79 = vector.broadcast %cst_43 : f32 to vector<16x32xf32>
    %80 = arith.maximumf %78, %79 : vector<16x32xf32>
    %81 = arith.truncf %80 : vector<16x32xf32> to vector<16x32xbf16>
    %c0_44 = arith.constant 0 : index
    %c0_45 = arith.constant 0 : index
    %82 = vector.load %arg15[%c0_44, %c0_45] : memref<32x32xbf16, #tpu.memory_space<vmem>>, vector<32x32xbf16>
    %cst_46 = arith.constant dense<0.000000e+00> : vector<16x32xf32>
    %83 = tpu.matmul %81, %82, %cst_46 {dimension_numbers = #tpu.dot_dimension_numbers<[1], [0], [0], [1], [0, 0, 1, 1], [], []>} : vector<16x32xbf16>, vector<32x32xbf16>, vector<16x32xf32> -> vector<16x32xf32>
    %c0_47 = arith.constant 0 : index
    %c0_48 = arith.constant 0 : index
    %84 = vector.load %arg16[%c0_47, %c0_48] : memref<1x32xf32, #tpu.memory_space<vmem>>, vector<1x32xf32>
    %85 = vector.broadcast %84 : vector<1x32xf32> to vector<16x32xf32>
    %86 = arith.addf %83, %85 : vector<16x32xf32>
    %cst_49 = arith.constant 0.000000e+00 : f32
    %87 = vector.broadcast %cst_49 : f32 to vector<16x32xf32>
    %88 = arith.maximumf %86, %87 : vector<16x32xf32>
    %89 = arith.truncf %88 : vector<16x32xf32> to vector<16x32xbf16>
    %c0_50 = arith.constant 0 : index
    %c0_51 = arith.constant 0 : index
    %90 = vector.load %arg17[%c0_50, %c0_51] : memref<32x20xbf16, #tpu.memory_space<vmem>>, vector<32x20xbf16>
    %cst_52 = arith.constant dense<0.000000e+00> : vector<16x20xf32>
    %91 = tpu.matmul %89, %90, %cst_52 {dimension_numbers = #tpu.dot_dimension_numbers<[1], [0], [0], [1], [0, 0, 1, 1], [], []>} : vector<16x32xbf16>, vector<32x20xbf16>, vector<16x20xf32> -> vector<16x20xf32>
    %92 = arith.truncf %71 : vector<16x32xf32> to vector<16x32xbf16>
    %c0_53 = arith.constant 0 : index
    %c0_54 = arith.constant 0 : index
    %93 = vector.load %arg18[%c0_53, %c0_54] : memref<32x20xbf16, #tpu.memory_space<vmem>>, vector<32x20xbf16>
    %cst_55 = arith.constant dense<0.000000e+00> : vector<16x20xf32>
    %94 = tpu.matmul %92, %93, %cst_55 {dimension_numbers = #tpu.dot_dimension_numbers<[1], [0], [0], [1], [0, 0, 1, 1], [], []>} : vector<16x32xbf16>, vector<32x20xbf16>, vector<16x20xf32> -> vector<16x20xf32>
    %95 = arith.addf %91, %94 : vector<16x20xf32>
    %c0_56 = arith.constant 0 : index
    %c0_57 = arith.constant 0 : index
    %96 = vector.load %arg19[%c0_56, %c0_57] : memref<1x20xf32, #tpu.memory_space<vmem>>, vector<1x20xf32>
    %97 = vector.broadcast %96 : vector<1x20xf32> to vector<16x20xf32>
    %98 = arith.addf %95, %97 : vector<16x20xf32>
    %c0_58 = arith.constant 0 : index
    %c0_59 = arith.constant 0 : index
    %99 = vector.load %arg21[%c0_58, %c0_59] : memref<16x20xf32, #tpu.memory_space<vmem>>, vector<16x20xf32>
    tpu.vector_store %arg21[%c0_58, %c0_59], %98 {strides = array<i32>} : memref<16x20xf32, #tpu.memory_space<vmem>>, vector<16x20xf32>,
    return
  }
  func.func @transform_0(%arg0: i32) -> (i32, i32) {
    %c0_i32 = arith.constant 0 : i32
    %c0_i32_0 = arith.constant 0 : i32
    return %arg0, %c0_i32 : i32, i32
  }
  func.func @transform_1(%arg0: i32) -> (i32, i32) {
    %c0_i32 = arith.constant 0 : i32
    %c0_i32_0 = arith.constant 0 : i32
    return %arg0, %c0_i32 : i32, i32
  }
  func.func @transform_2(%arg0: i32) -> (i32, i32) {
    %c0_i32 = arith.constant 0 : i32
    %c0_i32_0 = arith.constant 0 : i32
    %c0_i32_1 = arith.constant 0 : i32
    return %c0_i32, %c0_i32_0 : i32, i32
  }
  func.func @transform_3(%arg0: i32) -> (i32, i32) {
    %c0_i32 = arith.constant 0 : i32
    %c0_i32_0 = arith.constant 0 : i32
    %c0_i32_1 = arith.constant 0 : i32
    return %c0_i32, %c0_i32_0 : i32, i32
  }
  func.func @transform_4(%arg0: i32) -> (i32, i32) {
    %c0_i32 = arith.constant 0 : i32
    %c0_i32_0 = arith.constant 0 : i32
    %c0_i32_1 = arith.constant 0 : i32
    return %c0_i32, %c0_i32_0 : i32, i32
  }
  func.func @transform_5(%arg0: i32) -> (i32, i32) {
    %c0_i32 = arith.constant 0 : i32
    %c0_i32_0 = arith.constant 0 : i32
    %c0_i32_1 = arith.constant 0 : i32
    return %c0_i32, %c0_i32_0 : i32, i32
  }
  func.func @transform_6(%arg0: i32) -> (i32, i32) {
    %c0_i32 = arith.constant 0 : i32
    %c0_i32_0 = arith.constant 0 : i32
    %c0_i32_1 = arith.constant 0 : i32
    return %c0_i32, %c0_i32_0 : i32, i32
  }
  func.func @transform_7(%arg0: i32) -> (i32, i32) {
    %c0_i32 = arith.constant 0 : i32
    %c0_i32_0 = arith.constant 0 : i32
    %c0_i32_1 = arith.constant 0 : i32
    return %c0_i32, %c0_i32_0 : i32, i32
  }
  func.func @transform_8(%arg0: i32) -> (i32, i32) {
    %c0_i32 = arith.constant 0 : i32
    %c0_i32_0 = arith.constant 0 : i32
    %c0_i32_1 = arith.constant 0 : i32
    return %c0_i32, %c0_i32_0 : i32, i32
  }
  func.func @transform_9(%arg0: i32) -> (i32, i32) {
    %c0_i32 = arith.constant 0 : i32
    %c0_i32_0 = arith.constant 0 : i32
    %c0_i32_1 = arith.constant 0 : i32
    return %c0_i32, %c0_i32_0 : i32, i32
  }
  func.func @transform_10(%arg0: i32) -> (i32, i32) {
    %c0_i32 = arith.constant 0 : i32
    %c0_i32_0 = arith.constant 0 : i32
    %c0_i32_1 = arith.constant 0 : i32
    return %c0_i32, %c0_i32_0 : i32, i32
  }
  func.func @transform_11(%arg0: i32) -> (i32, i32) {
    %c0_i32 = arith.constant 0 : i32
    %c0_i32_0 = arith.constant 0 : i32
    %c0_i32_1 = arith.constant 0 : i32
    return %c0_i32, %c0_i32_0 : i32, i32
  }
  func.func @transform_12(%arg0: i32) -> (i32, i32) {
    %c0_i32 = arith.constant 0 : i32
    %c0_i32_0 = arith.constant 0 : i32
    %c0_i32_1 = arith.constant 0 : i32
    return %c0_i32, %c0_i32_0 : i32, i32
  }
  func.func @transform_13(%arg0: i32) -> (i32, i32) {
    %c0_i32 = arith.constant 0 : i32
    %c0_i32_0 = arith.constant 0 : i32
    %c0_i32_1 = arith.constant 0 : i32
    return %c0_i32, %c0_i32_0 : i32, i32
  }
  func.func @transform_14(%arg0: i32) -> (i32, i32) {
    %c0_i32 = arith.constant 0 : i32
    %c0_i32_0 = arith.constant 0 : i32
    %c0_i32_1 = arith.constant 0 : i32
    return %c0_i32, %c0_i32_0 : i32, i32
  }
  func.func @transform_15(%arg0: i32) -> (i32, i32) {
    %c0_i32 = arith.constant 0 : i32
    %c0_i32_0 = arith.constant 0 : i32
    %c0_i32_1 = arith.constant 0 : i32
    return %c0_i32, %c0_i32_0 : i32, i32
  }
  func.func @transform_16(%arg0: i32) -> (i32, i32) {
    %c0_i32 = arith.constant 0 : i32
    %c0_i32_0 = arith.constant 0 : i32
    %c0_i32_1 = arith.constant 0 : i32
    return %c0_i32, %c0_i32_0 : i32, i32
  }
  func.func @transform_17(%arg0: i32) -> (i32, i32) {
    %c0_i32 = arith.constant 0 : i32
    %c0_i32_0 = arith.constant 0 : i32
    %c0_i32_1 = arith.constant 0 : i32
    return %c0_i32, %c0_i32_0 : i32, i32
  }
  func.func @transform_18(%arg0: i32) -> (i32, i32) {
    %c0_i32 = arith.constant 0 : i32
    %c0_i32_0 = arith.constant 0 : i32
    %c0_i32_1 = arith.constant 0 : i32
    return %c0_i32, %c0_i32_0 : i32, i32
  }
  func.func @transform_19(%arg0: i32) -> (i32, i32) {
    %c0_i32 = arith.constant 0 : i32
    %c0_i32_0 = arith.constant 0 : i32
    return %arg0, %c0_i32 : i32, i32
  }
  func.func @transform_20(%arg0: i32) -> (i32, i32) {
    %c0_i32 = arith.constant 0 : i32
    %c0_i32_0 = arith.constant 0 : i32
    return %arg0, %c0_i32 : i32, i32
  }
}

module attributes {stable_mosaic.version = 11 : i64} {
  func.func @_decoder_pre_kernel(%arg0: i32, %arg1: memref<1x8x32xf32, #tpu.memory_space<vmem>>, %arg2: memref<1x8x4xf32, #tpu.memory_space<vmem>>, %arg3: memref<4x64xbf16, #tpu.memory_space<vmem>>, %arg4: memref<1x64xf32, #tpu.memory_space<vmem>>, %arg5: memref<64x32xbf16, #tpu.memory_space<vmem>>, %arg6: memref<1x32xf32, #tpu.memory_space<vmem>>, %arg7: memref<32x64xbf16, #tpu.memory_space<vmem>>, %arg8: memref<1x64xf32, #tpu.memory_space<vmem>>, %arg9: memref<32x32xbf16, #tpu.memory_space<vmem>>, %arg10: memref<1x32xf32, #tpu.memory_space<vmem>>, %arg11: memref<8x4x32xbf16, #tpu.memory_space<vmem>>, %arg12: memref<1x32xf32, #tpu.memory_space<vmem>>, %arg13: memref<1x32xf32, #tpu.memory_space<vmem>>, %arg14: memref<1x32xf32, #tpu.memory_space<vmem>>, %arg15: memref<32x192xbf16, #tpu.memory_space<vmem>>, %arg16: memref<1x192xf32, #tpu.memory_space<vmem>>, %arg17: memref<64x64xf32, #tpu.memory_space<vmem>>, %arg18: memref<1x8x32xf32, #tpu.memory_space<vmem>>, %arg19: memref<1x8x128xf32, #tpu.memory_space<vmem>>, %arg20: memref<1x8x64xf32, #tpu.memory_space<vmem>>) attributes {dimension_semantics = [#tpu.dimension_semantics<parallel>], iteration_bounds = array<i64: 2>, scalar_prefetch = 0 : i64, scratch_operands = 0 : i64, tpu.core_type = #tpu.core_type<tc>, window_params = [{transform_indices = @transform_0, window_bounds = array<i64: 1, 8, 32>}, {transform_indices = @transform_1, window_bounds = array<i64: 1, 8, 4>}, {pipeline_mode = #tpu.pipeline_mode<synchronous>, transform_indices = @transform_2, window_bounds = array<i64: 4, 64>}, {pipeline_mode = #tpu.pipeline_mode<synchronous>, transform_indices = @transform_3, window_bounds = array<i64: 1, 64>}, {pipeline_mode = #tpu.pipeline_mode<synchronous>, transform_indices = @transform_4, window_bounds = array<i64: 64, 32>}, {pipeline_mode = #tpu.pipeline_mode<synchronous>, transform_indices = @transform_5, window_bounds = array<i64: 1, 32>}, {pipeline_mode = #tpu.pipeline_mode<synchronous>, transform_indices = @transform_6, window_bounds = array<i64: 32, 64>}, {pipeline_mode = #tpu.pipeline_mode<synchronous>, transform_indices = @transform_7, window_bounds = array<i64: 1, 64>}, {pipeline_mode = #tpu.pipeline_mode<synchronous>, transform_indices = @transform_8, window_bounds = array<i64: 32, 32>}, {pipeline_mode = #tpu.pipeline_mode<synchronous>, transform_indices = @transform_9, window_bounds = array<i64: 1, 32>}, {pipeline_mode = #tpu.pipeline_mode<synchronous>, transform_indices = @transform_10, window_bounds = array<i64: 8, 4, 32>}, {pipeline_mode = #tpu.pipeline_mode<synchronous>, transform_indices = @transform_11, window_bounds = array<i64: 1, 32>}, {pipeline_mode = #tpu.pipeline_mode<synchronous>, transform_indices = @transform_12, window_bounds = array<i64: 1, 32>}, {pipeline_mode = #tpu.pipeline_mode<synchronous>, transform_indices = @transform_13, window_bounds = array<i64: 1, 32>}, {pipeline_mode = #tpu.pipeline_mode<synchronous>, transform_indices = @transform_14, window_bounds = array<i64: 32, 192>}, {pipeline_mode = #tpu.pipeline_mode<synchronous>, transform_indices = @transform_15, window_bounds = array<i64: 1, 192>}, {pipeline_mode = #tpu.pipeline_mode<synchronous>, transform_indices = @transform_16, window_bounds = array<i64: 64, 64>}, {transform_indices = @transform_17, window_bounds = array<i64: 1, 8, 32>}, {transform_indices = @transform_18, window_bounds = array<i64: 1, 8, 128>}, {transform_indices = @transform_19, window_bounds = array<i64: 1, 8, 64>}]} {
    %c0 = arith.constant 0 : index
    %c0_0 = arith.constant 0 : index
    %c0_1 = arith.constant 0 : index
    %0 = vector.load %arg1[%c0, %c0_0, %c0_1] : memref<1x8x32xf32, #tpu.memory_space<vmem>>, vector<1x8x32xf32>
    %1 = vector.shape_cast %0 : vector<1x8x32xf32> to vector<8x32xf32>
    %c0_2 = arith.constant 0 : index
    %c0_3 = arith.constant 0 : index
    %c0_4 = arith.constant 0 : index
    %2 = vector.load %arg2[%c0_2, %c0_3, %c0_4] : memref<1x8x4xf32, #tpu.memory_space<vmem>>, vector<1x8x4xf32>
    %3 = vector.shape_cast %2 : vector<1x8x4xf32> to vector<8x4xf32>
    %4 = arith.truncf %3 : vector<8x4xf32> to vector<8x4xbf16>
    %c0_5 = arith.constant 0 : index
    %c0_6 = arith.constant 0 : index
    %5 = vector.load %arg3[%c0_5, %c0_6] : memref<4x64xbf16, #tpu.memory_space<vmem>>, vector<4x64xbf16>
    %cst = arith.constant dense<0.000000e+00> : vector<8x64xf32>
    %6 = tpu.matmul %4, %5, %cst {dimension_numbers = #tpu.dot_dimension_numbers<[1], [0], [0], [1], [0, 0, 1, 1], [], []>} : vector<8x4xbf16>, vector<4x64xbf16>, vector<8x64xf32> -> vector<8x64xf32>
    %c0_7 = arith.constant 0 : index
    %c0_8 = arith.constant 0 : index
    %7 = vector.load %arg4[%c0_7, %c0_8] : memref<1x64xf32, #tpu.memory_space<vmem>>, vector<1x64xf32>
    %8 = vector.broadcast %7 : vector<1x64xf32> to vector<8x64xf32>
    %9 = arith.addf %6, %8 : vector<8x64xf32>
    %cst_9 = arith.constant 0.000000e+00 : f32
    %10 = vector.broadcast %cst_9 : f32 to vector<8x64xf32>
    %11 = arith.maximumf %9, %10 : vector<8x64xf32>
    %12 = arith.truncf %11 : vector<8x64xf32> to vector<8x64xbf16>
    %c0_10 = arith.constant 0 : index
    %c0_11 = arith.constant 0 : index
    %13 = vector.load %arg5[%c0_10, %c0_11] : memref<64x32xbf16, #tpu.memory_space<vmem>>, vector<64x32xbf16>
    %cst_12 = arith.constant dense<0.000000e+00> : vector<8x32xf32>
    %14 = tpu.matmul %12, %13, %cst_12 {dimension_numbers = #tpu.dot_dimension_numbers<[1], [0], [0], [1], [0, 0, 1, 1], [], []>} : vector<8x64xbf16>, vector<64x32xbf16>, vector<8x32xf32> -> vector<8x32xf32>
    %c0_13 = arith.constant 0 : index
    %c0_14 = arith.constant 0 : index
    %15 = vector.load %arg6[%c0_13, %c0_14] : memref<1x32xf32, #tpu.memory_space<vmem>>, vector<1x32xf32>
    %16 = vector.broadcast %15 : vector<1x32xf32> to vector<8x32xf32>
    %17 = arith.addf %14, %16 : vector<8x32xf32>
    %18 = arith.addf %1, %17 : vector<8x32xf32>
    %19 = arith.truncf %18 : vector<8x32xf32> to vector<8x32xbf16>
    %c0_15 = arith.constant 0 : index
    %c0_16 = arith.constant 0 : index
    %20 = vector.load %arg7[%c0_15, %c0_16] : memref<32x64xbf16, #tpu.memory_space<vmem>>, vector<32x64xbf16>
    %cst_17 = arith.constant dense<0.000000e+00> : vector<8x64xf32>
    %21 = tpu.matmul %19, %20, %cst_17 {dimension_numbers = #tpu.dot_dimension_numbers<[1], [0], [0], [1], [0, 0, 1, 1], [], []>} : vector<8x32xbf16>, vector<32x64xbf16>, vector<8x64xf32> -> vector<8x64xf32>
    %c0_18 = arith.constant 0 : index
    %c0_19 = arith.constant 0 : index
    %22 = vector.load %arg8[%c0_18, %c0_19] : memref<1x64xf32, #tpu.memory_space<vmem>>, vector<1x64xf32>
    %23 = vector.broadcast %22 : vector<1x64xf32> to vector<8x64xf32>
    %24 = arith.addf %21, %23 : vector<8x64xf32>
    %25 = arith.truncf %1 : vector<8x32xf32> to vector<8x32xbf16>
    %c0_20 = arith.constant 0 : index
    %c0_21 = arith.constant 0 : index
    %26 = vector.load %arg9[%c0_20, %c0_21] : memref<32x32xbf16, #tpu.memory_space<vmem>>, vector<32x32xbf16>
    %cst_22 = arith.constant dense<0.000000e+00> : vector<8x32xf32>
    %27 = tpu.matmul %25, %26, %cst_22 {dimension_numbers = #tpu.dot_dimension_numbers<[1], [0], [0], [1], [0, 0, 1, 1], [], []>} : vector<8x32xbf16>, vector<32x32xbf16>, vector<8x32xf32> -> vector<8x32xf32>
    %c0_23 = arith.constant 0 : index
    %c0_24 = arith.constant 0 : index
    %28 = vector.load %arg10[%c0_23, %c0_24] : memref<1x32xf32, #tpu.memory_space<vmem>>, vector<1x32xf32>
    %29 = vector.broadcast %28 : vector<1x32xf32> to vector<8x32xf32>
    %30 = arith.addf %27, %29 : vector<8x32xf32>
    %31 = vector.extract_strided_slice %24 {offsets = [0, 0], sizes = [8, 32], strides = [1, 1]} : vector<8x64xf32> to vector<8x32xf32>
    %32 = vector.extract_strided_slice %24 {offsets = [0, 32], sizes = [8, 32], strides = [1, 1]} : vector<8x64xf32> to vector<8x32xf32>
    %cst_25 = arith.constant 0.000000e+00 : f32
    %33 = vector.broadcast %cst_25 : f32 to vector<8x32xf32>
    %34 = vector.extract_strided_slice %31 {offsets = [0, 0], sizes = [8, 4], strides = [1, 1]} : vector<8x32xf32> to vector<8x4xf32>
    %35 = arith.truncf %34 : vector<8x4xf32> to vector<8x4xbf16>
    %36 = vector.extract_strided_slice %32 {offsets = [0, 0], sizes = [8, 4], strides = [1, 1]} : vector<8x32xf32> to vector<8x4xf32>
    %37 = arith.truncf %36 : vector<8x4xf32> to vector<8x4xbf16>
    %38 = vector.extract_strided_slice %30 {offsets = [0, 0], sizes = [8, 4], strides = [1, 1]} : vector<8x32xf32> to vector<8x4xf32>
    %39 = arith.truncf %38 : vector<8x4xf32> to vector<8x4xbf16>
    %cst_26 = arith.constant dense<0.000000e+00> : vector<8x8xf32>
    %40 = tpu.matmul %35, %37, %cst_26 {dimension_numbers = #tpu.dot_dimension_numbers<[1], [1], [0], [0], [0, 0, 1, 0], [], []>} : vector<8x4xbf16>, vector<8x4xbf16>, vector<8x8xf32> -> vector<8x8xf32>
    %cst_27 = arith.constant 5.000000e-01 : f32
    %41 = vector.broadcast %cst_27 : f32 to vector<8x8xf32>
    %42 = arith.mulf %40, %41 : vector<8x8xf32>
    %cst_28 = arith.constant dense<0xFF800000> : vector<8xf32>
    %43 = vector.multi_reduction <maximumf>, %42, %cst_28 [1] : vector<8x8xf32> to vector<8xf32>
    %44 = vector.shape_cast %43 : vector<8xf32> to vector<8x1xf32>
    %45 = vector.broadcast %44 : vector<8x1xf32> to vector<8x8xf32>
    %46 = arith.subf %42, %45 : vector<8x8xf32>
    %47 = math.exp %46 : vector<8x8xf32>
    %cst_29 = arith.constant dense<0.000000e+00> : vector<8xf32>
    %48 = vector.multi_reduction <add>, %47, %cst_29 [1] : vector<8x8xf32> to vector<8xf32>
    %49 = vector.shape_cast %48 : vector<8xf32> to vector<8x1xf32>
    %50 = tpu.reciprocal %49 {approx = true} : vector<8x1xf32> -> vector<8x1xf32>
    %51 = vector.broadcast %50 : vector<8x1xf32> to vector<8x8xf32>
    %52 = arith.mulf %47, %51 : vector<8x8xf32>
    %53 = arith.truncf %52 : vector<8x8xf32> to vector<8x8xbf16>
    %cst_30 = arith.constant dense<0.000000e+00> : vector<8x4xf32>
    %54 = tpu.matmul %53, %39, %cst_30 {dimension_numbers = #tpu.dot_dimension_numbers<[1], [0], [0], [1], [0, 0, 1, 1], [], []>} : vector<8x8xbf16>, vector<8x4xbf16>, vector<8x4xf32> -> vector<8x4xf32>
    %55 = arith.truncf %54 : vector<8x4xf32> to vector<8x4xbf16>
    %c0_31 = arith.constant 0 : index
    %c0_32 = arith.constant 0 : index
    %c0_33 = arith.constant 0 : index
    %56 = vector.load %arg11[%c0_31, %c0_32, %c0_33] : memref<8x4x32xbf16, #tpu.memory_space<vmem>>, vector<1x4x32xbf16>
    %57 = vector.shape_cast %56 : vector<1x4x32xbf16> to vector<4x32xbf16>
    %cst_34 = arith.constant dense<0.000000e+00> : vector<8x32xf32>
    %58 = tpu.matmul %55, %57, %cst_34 {dimension_numbers = #tpu.dot_dimension_numbers<[1], [0], [0], [1], [0, 0, 1, 1], [], []>} : vector<8x4xbf16>, vector<4x32xbf16>, vector<8x32xf32> -> vector<8x32xf32>
    %59 = arith.addf %33, %58 : vector<8x32xf32>
    %60 = vector.extract_strided_slice %31 {offsets = [0, 4], sizes = [8, 4], strides = [1, 1]} : vector<8x32xf32> to vector<8x4xf32>
    %61 = arith.truncf %60 : vector<8x4xf32> to vector<8x4xbf16>
    %62 = vector.extract_strided_slice %32 {offsets = [0, 4], sizes = [8, 4], strides = [1, 1]} : vector<8x32xf32> to vector<8x4xf32>
    %63 = arith.truncf %62 : vector<8x4xf32> to vector<8x4xbf16>
    %64 = vector.extract_strided_slice %30 {offsets = [0, 4], sizes = [8, 4], strides = [1, 1]} : vector<8x32xf32> to vector<8x4xf32>
    %65 = arith.truncf %64 : vector<8x4xf32> to vector<8x4xbf16>
    %cst_35 = arith.constant dense<0.000000e+00> : vector<8x8xf32>
    %66 = tpu.matmul %61, %63, %cst_35 {dimension_numbers = #tpu.dot_dimension_numbers<[1], [1], [0], [0], [0, 0, 1, 0], [], []>} : vector<8x4xbf16>, vector<8x4xbf16>, vector<8x8xf32> -> vector<8x8xf32>
    %cst_36 = arith.constant 5.000000e-01 : f32
    %67 = vector.broadcast %cst_36 : f32 to vector<8x8xf32>
    %68 = arith.mulf %66, %67 : vector<8x8xf32>
    %cst_37 = arith.constant dense<0xFF800000> : vector<8xf32>
    %69 = vector.multi_reduction <maximumf>, %68, %cst_37 [1] : vector<8x8xf32> to vector<8xf32>
    %70 = vector.shape_cast %69 : vector<8xf32> to vector<8x1xf32>
    %71 = vector.broadcast %70 : vector<8x1xf32> to vector<8x8xf32>
    %72 = arith.subf %68, %71 : vector<8x8xf32>
    %73 = math.exp %72 : vector<8x8xf32>
    %cst_38 = arith.constant dense<0.000000e+00> : vector<8xf32>
    %74 = vector.multi_reduction <add>, %73, %cst_38 [1] : vector<8x8xf32> to vector<8xf32>
    %75 = vector.shape_cast %74 : vector<8xf32> to vector<8x1xf32>
    %76 = tpu.reciprocal %75 {approx = true} : vector<8x1xf32> -> vector<8x1xf32>
    %77 = vector.broadcast %76 : vector<8x1xf32> to vector<8x8xf32>
    %78 = arith.mulf %73, %77 : vector<8x8xf32>
    %79 = arith.truncf %78 : vector<8x8xf32> to vector<8x8xbf16>
    %cst_39 = arith.constant dense<0.000000e+00> : vector<8x4xf32>
    %80 = tpu.matmul %79, %65, %cst_39 {dimension_numbers = #tpu.dot_dimension_numbers<[1], [0], [0], [1], [0, 0, 1, 1], [], []>} : vector<8x8xbf16>, vector<8x4xbf16>, vector<8x4xf32> -> vector<8x4xf32>
    %81 = arith.truncf %80 : vector<8x4xf32> to vector<8x4xbf16>
    %c1 = arith.constant 1 : index
    %c0_40 = arith.constant 0 : index
    %c0_41 = arith.constant 0 : index
    %82 = vector.load %arg11[%c1, %c0_40, %c0_41] : memref<8x4x32xbf16, #tpu.memory_space<vmem>>, vector<1x4x32xbf16>
    %83 = vector.shape_cast %82 : vector<1x4x32xbf16> to vector<4x32xbf16>
    %cst_42 = arith.constant dense<0.000000e+00> : vector<8x32xf32>
    %84 = tpu.matmul %81, %83, %cst_42 {dimension_numbers = #tpu.dot_dimension_numbers<[1], [0], [0], [1], [0, 0, 1, 1], [], []>} : vector<8x4xbf16>, vector<4x32xbf16>, vector<8x32xf32> -> vector<8x32xf32>
    %85 = arith.addf %59, %84 : vector<8x32xf32>
    %86 = vector.extract_strided_slice %31 {offsets = [0, 8], sizes = [8, 4], strides = [1, 1]} : vector<8x32xf32> to vector<8x4xf32>
    %87 = arith.truncf %86 : vector<8x4xf32> to vector<8x4xbf16>
    %88 = vector.extract_strided_slice %32 {offsets = [0, 8], sizes = [8, 4], strides = [1, 1]} : vector<8x32xf32> to vector<8x4xf32>
    %89 = arith.truncf %88 : vector<8x4xf32> to vector<8x4xbf16>
    %90 = vector.extract_strided_slice %30 {offsets = [0, 8], sizes = [8, 4], strides = [1, 1]} : vector<8x32xf32> to vector<8x4xf32>
    %91 = arith.truncf %90 : vector<8x4xf32> to vector<8x4xbf16>
    %cst_43 = arith.constant dense<0.000000e+00> : vector<8x8xf32>
    %92 = tpu.matmul %87, %89, %cst_43 {dimension_numbers = #tpu.dot_dimension_numbers<[1], [1], [0], [0], [0, 0, 1, 0], [], []>} : vector<8x4xbf16>, vector<8x4xbf16>, vector<8x8xf32> -> vector<8x8xf32>
    %cst_44 = arith.constant 5.000000e-01 : f32
    %93 = vector.broadcast %cst_44 : f32 to vector<8x8xf32>
    %94 = arith.mulf %92, %93 : vector<8x8xf32>
    %cst_45 = arith.constant dense<0xFF800000> : vector<8xf32>
    %95 = vector.multi_reduction <maximumf>, %94, %cst_45 [1] : vector<8x8xf32> to vector<8xf32>
    %96 = vector.shape_cast %95 : vector<8xf32> to vector<8x1xf32>
    %97 = vector.broadcast %96 : vector<8x1xf32> to vector<8x8xf32>
    %98 = arith.subf %94, %97 : vector<8x8xf32>
    %99 = math.exp %98 : vector<8x8xf32>
    %cst_46 = arith.constant dense<0.000000e+00> : vector<8xf32>
    %100 = vector.multi_reduction <add>, %99, %cst_46 [1] : vector<8x8xf32> to vector<8xf32>
    %101 = vector.shape_cast %100 : vector<8xf32> to vector<8x1xf32>
    %102 = tpu.reciprocal %101 {approx = true} : vector<8x1xf32> -> vector<8x1xf32>
    %103 = vector.broadcast %102 : vector<8x1xf32> to vector<8x8xf32>
    %104 = arith.mulf %99, %103 : vector<8x8xf32>
    %105 = arith.truncf %104 : vector<8x8xf32> to vector<8x8xbf16>
    %cst_47 = arith.constant dense<0.000000e+00> : vector<8x4xf32>
    %106 = tpu.matmul %105, %91, %cst_47 {dimension_numbers = #tpu.dot_dimension_numbers<[1], [0], [0], [1], [0, 0, 1, 1], [], []>} : vector<8x8xbf16>, vector<8x4xbf16>, vector<8x4xf32> -> vector<8x4xf32>
    %107 = arith.truncf %106 : vector<8x4xf32> to vector<8x4xbf16>
    %c2 = arith.constant 2 : index
    %c0_48 = arith.constant 0 : index
    %c0_49 = arith.constant 0 : index
    %108 = vector.load %arg11[%c2, %c0_48, %c0_49] : memref<8x4x32xbf16, #tpu.memory_space<vmem>>, vector<1x4x32xbf16>
    %109 = vector.shape_cast %108 : vector<1x4x32xbf16> to vector<4x32xbf16>
    %cst_50 = arith.constant dense<0.000000e+00> : vector<8x32xf32>
    %110 = tpu.matmul %107, %109, %cst_50 {dimension_numbers = #tpu.dot_dimension_numbers<[1], [0], [0], [1], [0, 0, 1, 1], [], []>} : vector<8x4xbf16>, vector<4x32xbf16>, vector<8x32xf32> -> vector<8x32xf32>
    %111 = arith.addf %85, %110 : vector<8x32xf32>
    %112 = vector.extract_strided_slice %31 {offsets = [0, 12], sizes = [8, 4], strides = [1, 1]} : vector<8x32xf32> to vector<8x4xf32>
    %113 = arith.truncf %112 : vector<8x4xf32> to vector<8x4xbf16>
    %114 = vector.extract_strided_slice %32 {offsets = [0, 12], sizes = [8, 4], strides = [1, 1]} : vector<8x32xf32> to vector<8x4xf32>
    %115 = arith.truncf %114 : vector<8x4xf32> to vector<8x4xbf16>
    %116 = vector.extract_strided_slice %30 {offsets = [0, 12], sizes = [8, 4], strides = [1, 1]} : vector<8x32xf32> to vector<8x4xf32>
    %117 = arith.truncf %116 : vector<8x4xf32> to vector<8x4xbf16>
    %cst_51 = arith.constant dense<0.000000e+00> : vector<8x8xf32>
    %118 = tpu.matmul %113, %115, %cst_51 {dimension_numbers = #tpu.dot_dimension_numbers<[1], [1], [0], [0], [0, 0, 1, 0], [], []>} : vector<8x4xbf16>, vector<8x4xbf16>, vector<8x8xf32> -> vector<8x8xf32>
    %cst_52 = arith.constant 5.000000e-01 : f32
    %119 = vector.broadcast %cst_52 : f32 to vector<8x8xf32>
    %120 = arith.mulf %118, %119 : vector<8x8xf32>
    %cst_53 = arith.constant dense<0xFF800000> : vector<8xf32>
    %121 = vector.multi_reduction <maximumf>, %120, %cst_53 [1] : vector<8x8xf32> to vector<8xf32>
    %122 = vector.shape_cast %121 : vector<8xf32> to vector<8x1xf32>
    %123 = vector.broadcast %122 : vector<8x1xf32> to vector<8x8xf32>
    %124 = arith.subf %120, %123 : vector<8x8xf32>
    %125 = math.exp %124 : vector<8x8xf32>
    %cst_54 = arith.constant dense<0.000000e+00> : vector<8xf32>
    %126 = vector.multi_reduction <add>, %125, %cst_54 [1] : vector<8x8xf32> to vector<8xf32>
    %127 = vector.shape_cast %126 : vector<8xf32> to vector<8x1xf32>
    %128 = tpu.reciprocal %127 {approx = true} : vector<8x1xf32> -> vector<8x1xf32>
    %129 = vector.broadcast %128 : vector<8x1xf32> to vector<8x8xf32>
    %130 = arith.mulf %125, %129 : vector<8x8xf32>
    %131 = arith.truncf %130 : vector<8x8xf32> to vector<8x8xbf16>
    %cst_55 = arith.constant dense<0.000000e+00> : vector<8x4xf32>
    %132 = tpu.matmul %131, %117, %cst_55 {dimension_numbers = #tpu.dot_dimension_numbers<[1], [0], [0], [1], [0, 0, 1, 1], [], []>} : vector<8x8xbf16>, vector<8x4xbf16>, vector<8x4xf32> -> vector<8x4xf32>
    %133 = arith.truncf %132 : vector<8x4xf32> to vector<8x4xbf16>
    %c3 = arith.constant 3 : index
    %c0_56 = arith.constant 0 : index
    %c0_57 = arith.constant 0 : index
    %134 = vector.load %arg11[%c3, %c0_56, %c0_57] : memref<8x4x32xbf16, #tpu.memory_space<vmem>>, vector<1x4x32xbf16>
    %135 = vector.shape_cast %134 : vector<1x4x32xbf16> to vector<4x32xbf16>
    %cst_58 = arith.constant dense<0.000000e+00> : vector<8x32xf32>
    %136 = tpu.matmul %133, %135, %cst_58 {dimension_numbers = #tpu.dot_dimension_numbers<[1], [0], [0], [1], [0, 0, 1, 1], [], []>} : vector<8x4xbf16>, vector<4x32xbf16>, vector<8x32xf32> -> vector<8x32xf32>
    %137 = arith.addf %111, %136 : vector<8x32xf32>
    %138 = vector.extract_strided_slice %31 {offsets = [0, 16], sizes = [8, 4], strides = [1, 1]} : vector<8x32xf32> to vector<8x4xf32>
    %139 = arith.truncf %138 : vector<8x4xf32> to vector<8x4xbf16>
    %140 = vector.extract_strided_slice %32 {offsets = [0, 16], sizes = [8, 4], strides = [1, 1]} : vector<8x32xf32> to vector<8x4xf32>
    %141 = arith.truncf %140 : vector<8x4xf32> to vector<8x4xbf16>
    %142 = vector.extract_strided_slice %30 {offsets = [0, 16], sizes = [8, 4], strides = [1, 1]} : vector<8x32xf32> to vector<8x4xf32>
    %143 = arith.truncf %142 : vector<8x4xf32> to vector<8x4xbf16>
    %cst_59 = arith.constant dense<0.000000e+00> : vector<8x8xf32>
    %144 = tpu.matmul %139, %141, %cst_59 {dimension_numbers = #tpu.dot_dimension_numbers<[1], [1], [0], [0], [0, 0, 1, 0], [], []>} : vector<8x4xbf16>, vector<8x4xbf16>, vector<8x8xf32> -> vector<8x8xf32>
    %cst_60 = arith.constant 5.000000e-01 : f32
    %145 = vector.broadcast %cst_60 : f32 to vector<8x8xf32>
    %146 = arith.mulf %144, %145 : vector<8x8xf32>
    %cst_61 = arith.constant dense<0xFF800000> : vector<8xf32>
    %147 = vector.multi_reduction <maximumf>, %146, %cst_61 [1] : vector<8x8xf32> to vector<8xf32>
    %148 = vector.shape_cast %147 : vector<8xf32> to vector<8x1xf32>
    %149 = vector.broadcast %148 : vector<8x1xf32> to vector<8x8xf32>
    %150 = arith.subf %146, %149 : vector<8x8xf32>
    %151 = math.exp %150 : vector<8x8xf32>
    %cst_62 = arith.constant dense<0.000000e+00> : vector<8xf32>
    %152 = vector.multi_reduction <add>, %151, %cst_62 [1] : vector<8x8xf32> to vector<8xf32>
    %153 = vector.shape_cast %152 : vector<8xf32> to vector<8x1xf32>
    %154 = tpu.reciprocal %153 {approx = true} : vector<8x1xf32> -> vector<8x1xf32>
    %155 = vector.broadcast %154 : vector<8x1xf32> to vector<8x8xf32>
    %156 = arith.mulf %151, %155 : vector<8x8xf32>
    %157 = arith.truncf %156 : vector<8x8xf32> to vector<8x8xbf16>
    %cst_63 = arith.constant dense<0.000000e+00> : vector<8x4xf32>
    %158 = tpu.matmul %157, %143, %cst_63 {dimension_numbers = #tpu.dot_dimension_numbers<[1], [0], [0], [1], [0, 0, 1, 1], [], []>} : vector<8x8xbf16>, vector<8x4xbf16>, vector<8x4xf32> -> vector<8x4xf32>
    %159 = arith.truncf %158 : vector<8x4xf32> to vector<8x4xbf16>
    %c4 = arith.constant 4 : index
    %c0_64 = arith.constant 0 : index
    %c0_65 = arith.constant 0 : index
    %160 = vector.load %arg11[%c4, %c0_64, %c0_65] : memref<8x4x32xbf16, #tpu.memory_space<vmem>>, vector<1x4x32xbf16>
    %161 = vector.shape_cast %160 : vector<1x4x32xbf16> to vector<4x32xbf16>
    %cst_66 = arith.constant dense<0.000000e+00> : vector<8x32xf32>
    %162 = tpu.matmul %159, %161, %cst_66 {dimension_numbers = #tpu.dot_dimension_numbers<[1], [0], [0], [1], [0, 0, 1, 1], [], []>} : vector<8x4xbf16>, vector<4x32xbf16>, vector<8x32xf32> -> vector<8x32xf32>
    %163 = arith.addf %137, %162 : vector<8x32xf32>
    %164 = vector.extract_strided_slice %31 {offsets = [0, 20], sizes = [8, 4], strides = [1, 1]} : vector<8x32xf32> to vector<8x4xf32>
    %165 = arith.truncf %164 : vector<8x4xf32> to vector<8x4xbf16>
    %166 = vector.extract_strided_slice %32 {offsets = [0, 20], sizes = [8, 4], strides = [1, 1]} : vector<8x32xf32> to vector<8x4xf32>
    %167 = arith.truncf %166 : vector<8x4xf32> to vector<8x4xbf16>
    %168 = vector.extract_strided_slice %30 {offsets = [0, 20], sizes = [8, 4], strides = [1, 1]} : vector<8x32xf32> to vector<8x4xf32>
    %169 = arith.truncf %168 : vector<8x4xf32> to vector<8x4xbf16>
    %cst_67 = arith.constant dense<0.000000e+00> : vector<8x8xf32>
    %170 = tpu.matmul %165, %167, %cst_67 {dimension_numbers = #tpu.dot_dimension_numbers<[1], [1], [0], [0], [0, 0, 1, 0], [], []>} : vector<8x4xbf16>, vector<8x4xbf16>, vector<8x8xf32> -> vector<8x8xf32>
    %cst_68 = arith.constant 5.000000e-01 : f32
    %171 = vector.broadcast %cst_68 : f32 to vector<8x8xf32>
    %172 = arith.mulf %170, %171 : vector<8x8xf32>
    %cst_69 = arith.constant dense<0xFF800000> : vector<8xf32>
    %173 = vector.multi_reduction <maximumf>, %172, %cst_69 [1] : vector<8x8xf32> to vector<8xf32>
    %174 = vector.shape_cast %173 : vector<8xf32> to vector<8x1xf32>
    %175 = vector.broadcast %174 : vector<8x1xf32> to vector<8x8xf32>
    %176 = arith.subf %172, %175 : vector<8x8xf32>
    %177 = math.exp %176 : vector<8x8xf32>
    %cst_70 = arith.constant dense<0.000000e+00> : vector<8xf32>
    %178 = vector.multi_reduction <add>, %177, %cst_70 [1] : vector<8x8xf32> to vector<8xf32>
    %179 = vector.shape_cast %178 : vector<8xf32> to vector<8x1xf32>
    %180 = tpu.reciprocal %179 {approx = true} : vector<8x1xf32> -> vector<8x1xf32>
    %181 = vector.broadcast %180 : vector<8x1xf32> to vector<8x8xf32>
    %182 = arith.mulf %177, %181 : vector<8x8xf32>
    %183 = arith.truncf %182 : vector<8x8xf32> to vector<8x8xbf16>
    %cst_71 = arith.constant dense<0.000000e+00> : vector<8x4xf32>
    %184 = tpu.matmul %183, %169, %cst_71 {dimension_numbers = #tpu.dot_dimension_numbers<[1], [0], [0], [1], [0, 0, 1, 1], [], []>} : vector<8x8xbf16>, vector<8x4xbf16>, vector<8x4xf32> -> vector<8x4xf32>
    %185 = arith.truncf %184 : vector<8x4xf32> to vector<8x4xbf16>
    %c5 = arith.constant 5 : index
    %c0_72 = arith.constant 0 : index
    %c0_73 = arith.constant 0 : index
    %186 = vector.load %arg11[%c5, %c0_72, %c0_73] : memref<8x4x32xbf16, #tpu.memory_space<vmem>>, vector<1x4x32xbf16>
    %187 = vector.shape_cast %186 : vector<1x4x32xbf16> to vector<4x32xbf16>
    %cst_74 = arith.constant dense<0.000000e+00> : vector<8x32xf32>
    %188 = tpu.matmul %185, %187, %cst_74 {dimension_numbers = #tpu.dot_dimension_numbers<[1], [0], [0], [1], [0, 0, 1, 1], [], []>} : vector<8x4xbf16>, vector<4x32xbf16>, vector<8x32xf32> -> vector<8x32xf32>
    %189 = arith.addf %163, %188 : vector<8x32xf32>
    %190 = vector.extract_strided_slice %31 {offsets = [0, 24], sizes = [8, 4], strides = [1, 1]} : vector<8x32xf32> to vector<8x4xf32>
    %191 = arith.truncf %190 : vector<8x4xf32> to vector<8x4xbf16>
    %192 = vector.extract_strided_slice %32 {offsets = [0, 24], sizes = [8, 4], strides = [1, 1]} : vector<8x32xf32> to vector<8x4xf32>
    %193 = arith.truncf %192 : vector<8x4xf32> to vector<8x4xbf16>
    %194 = vector.extract_strided_slice %30 {offsets = [0, 24], sizes = [8, 4], strides = [1, 1]} : vector<8x32xf32> to vector<8x4xf32>
    %195 = arith.truncf %194 : vector<8x4xf32> to vector<8x4xbf16>
    %cst_75 = arith.constant dense<0.000000e+00> : vector<8x8xf32>
    %196 = tpu.matmul %191, %193, %cst_75 {dimension_numbers = #tpu.dot_dimension_numbers<[1], [1], [0], [0], [0, 0, 1, 0], [], []>} : vector<8x4xbf16>, vector<8x4xbf16>, vector<8x8xf32> -> vector<8x8xf32>
    %cst_76 = arith.constant 5.000000e-01 : f32
    %197 = vector.broadcast %cst_76 : f32 to vector<8x8xf32>
    %198 = arith.mulf %196, %197 : vector<8x8xf32>
    %cst_77 = arith.constant dense<0xFF800000> : vector<8xf32>
    %199 = vector.multi_reduction <maximumf>, %198, %cst_77 [1] : vector<8x8xf32> to vector<8xf32>
    %200 = vector.shape_cast %199 : vector<8xf32> to vector<8x1xf32>
    %201 = vector.broadcast %200 : vector<8x1xf32> to vector<8x8xf32>
    %202 = arith.subf %198, %201 : vector<8x8xf32>
    %203 = math.exp %202 : vector<8x8xf32>
    %cst_78 = arith.constant dense<0.000000e+00> : vector<8xf32>
    %204 = vector.multi_reduction <add>, %203, %cst_78 [1] : vector<8x8xf32> to vector<8xf32>
    %205 = vector.shape_cast %204 : vector<8xf32> to vector<8x1xf32>
    %206 = tpu.reciprocal %205 {approx = true} : vector<8x1xf32> -> vector<8x1xf32>
    %207 = vector.broadcast %206 : vector<8x1xf32> to vector<8x8xf32>
    %208 = arith.mulf %203, %207 : vector<8x8xf32>
    %209 = arith.truncf %208 : vector<8x8xf32> to vector<8x8xbf16>
    %cst_79 = arith.constant dense<0.000000e+00> : vector<8x4xf32>
    %210 = tpu.matmul %209, %195, %cst_79 {dimension_numbers = #tpu.dot_dimension_numbers<[1], [0], [0], [1], [0, 0, 1, 1], [], []>} : vector<8x8xbf16>, vector<8x4xbf16>, vector<8x4xf32> -> vector<8x4xf32>
    %211 = arith.truncf %210 : vector<8x4xf32> to vector<8x4xbf16>
    %c6 = arith.constant 6 : index
    %c0_80 = arith.constant 0 : index
    %c0_81 = arith.constant 0 : index
    %212 = vector.load %arg11[%c6, %c0_80, %c0_81] : memref<8x4x32xbf16, #tpu.memory_space<vmem>>, vector<1x4x32xbf16>
    %213 = vector.shape_cast %212 : vector<1x4x32xbf16> to vector<4x32xbf16>
    %cst_82 = arith.constant dense<0.000000e+00> : vector<8x32xf32>
    %214 = tpu.matmul %211, %213, %cst_82 {dimension_numbers = #tpu.dot_dimension_numbers<[1], [0], [0], [1], [0, 0, 1, 1], [], []>} : vector<8x4xbf16>, vector<4x32xbf16>, vector<8x32xf32> -> vector<8x32xf32>
    %215 = arith.addf %189, %214 : vector<8x32xf32>
    %216 = vector.extract_strided_slice %31 {offsets = [0, 28], sizes = [8, 4], strides = [1, 1]} : vector<8x32xf32> to vector<8x4xf32>
    %217 = arith.truncf %216 : vector<8x4xf32> to vector<8x4xbf16>
    %218 = vector.extract_strided_slice %32 {offsets = [0, 28], sizes = [8, 4], strides = [1, 1]} : vector<8x32xf32> to vector<8x4xf32>
    %219 = arith.truncf %218 : vector<8x4xf32> to vector<8x4xbf16>
    %220 = vector.extract_strided_slice %30 {offsets = [0, 28], sizes = [8, 4], strides = [1, 1]} : vector<8x32xf32> to vector<8x4xf32>
    %221 = arith.truncf %220 : vector<8x4xf32> to vector<8x4xbf16>
    %cst_83 = arith.constant dense<0.000000e+00> : vector<8x8xf32>
    %222 = tpu.matmul %217, %219, %cst_83 {dimension_numbers = #tpu.dot_dimension_numbers<[1], [1], [0], [0], [0, 0, 1, 0], [], []>} : vector<8x4xbf16>, vector<8x4xbf16>, vector<8x8xf32> -> vector<8x8xf32>
    %cst_84 = arith.constant 5.000000e-01 : f32
    %223 = vector.broadcast %cst_84 : f32 to vector<8x8xf32>
    %224 = arith.mulf %222, %223 : vector<8x8xf32>
    %cst_85 = arith.constant dense<0xFF800000> : vector<8xf32>
    %225 = vector.multi_reduction <maximumf>, %224, %cst_85 [1] : vector<8x8xf32> to vector<8xf32>
    %226 = vector.shape_cast %225 : vector<8xf32> to vector<8x1xf32>
    %227 = vector.broadcast %226 : vector<8x1xf32> to vector<8x8xf32>
    %228 = arith.subf %224, %227 : vector<8x8xf32>
    %229 = math.exp %228 : vector<8x8xf32>
    %cst_86 = arith.constant dense<0.000000e+00> : vector<8xf32>
    %230 = vector.multi_reduction <add>, %229, %cst_86 [1] : vector<8x8xf32> to vector<8xf32>
    %231 = vector.shape_cast %230 : vector<8xf32> to vector<8x1xf32>
    %232 = tpu.reciprocal %231 {approx = true} : vector<8x1xf32> -> vector<8x1xf32>
    %233 = vector.broadcast %232 : vector<8x1xf32> to vector<8x8xf32>
    %234 = arith.mulf %229, %233 : vector<8x8xf32>
    %235 = arith.truncf %234 : vector<8x8xf32> to vector<8x8xbf16>
    %cst_87 = arith.constant dense<0.000000e+00> : vector<8x4xf32>
    %236 = tpu.matmul %235, %221, %cst_87 {dimension_numbers = #tpu.dot_dimension_numbers<[1], [0], [0], [1], [0, 0, 1, 1], [], []>} : vector<8x8xbf16>, vector<8x4xbf16>, vector<8x4xf32> -> vector<8x4xf32>
    %237 = arith.truncf %236 : vector<8x4xf32> to vector<8x4xbf16>
    %c7 = arith.constant 7 : index
    %c0_88 = arith.constant 0 : index
    %c0_89 = arith.constant 0 : index
    %238 = vector.load %arg11[%c7, %c0_88, %c0_89] : memref<8x4x32xbf16, #tpu.memory_space<vmem>>, vector<1x4x32xbf16>
    %239 = vector.shape_cast %238 : vector<1x4x32xbf16> to vector<4x32xbf16>
    %cst_90 = arith.constant dense<0.000000e+00> : vector<8x32xf32>
    %240 = tpu.matmul %237, %239, %cst_90 {dimension_numbers = #tpu.dot_dimension_numbers<[1], [0], [0], [1], [0, 0, 1, 1], [], []>} : vector<8x4xbf16>, vector<4x32xbf16>, vector<8x32xf32> -> vector<8x32xf32>
    %241 = arith.addf %215, %240 : vector<8x32xf32>
    %c0_91 = arith.constant 0 : index
    %c0_92 = arith.constant 0 : index
    %242 = vector.load %arg12[%c0_91, %c0_92] : memref<1x32xf32, #tpu.memory_space<vmem>>, vector<1x32xf32>
    %243 = vector.broadcast %242 : vector<1x32xf32> to vector<8x32xf32>
    %244 = arith.addf %241, %243 : vector<8x32xf32>
    %245 = arith.addf %1, %244 : vector<8x32xf32>
    %c0_93 = arith.constant 0 : index
    %c0_94 = arith.constant 0 : index
    %246 = vector.load %arg13[%c0_93, %c0_94] : memref<1x32xf32, #tpu.memory_space<vmem>>, vector<1x32xf32>
    %c0_95 = arith.constant 0 : index
    %c0_96 = arith.constant 0 : index
    %247 = vector.load %arg14[%c0_95, %c0_96] : memref<1x32xf32, #tpu.memory_space<vmem>>, vector<1x32xf32>
    %cst_97 = arith.constant dense<0.000000e+00> : vector<8xf32>
    %248 = vector.multi_reduction <add>, %245, %cst_97 [1] : vector<8x32xf32> to vector<8xf32>
    %249 = vector.shape_cast %248 : vector<8xf32> to vector<8x1xf32>
    %cst_98 = arith.constant 3.200000e+01 : f32
    %250 = vector.broadcast %cst_98 : f32 to vector<8x1xf32>
    %251 = arith.divf %249, %250 : vector<8x1xf32>
    %252 = vector.broadcast %251 : vector<8x1xf32> to vector<8x32xf32>
    %253 = arith.subf %245, %252 : vector<8x32xf32>
    %254 = arith.mulf %253, %253 : vector<8x32xf32>
    %cst_99 = arith.constant dense<0.000000e+00> : vector<8xf32>
    %255 = vector.multi_reduction <add>, %254, %cst_99 [1] : vector<8x32xf32> to vector<8xf32>
    %256 = vector.shape_cast %255 : vector<8xf32> to vector<8x1xf32>
    %cst_100 = arith.constant 3.200000e+01 : f32
    %257 = vector.broadcast %cst_100 : f32 to vector<8x1xf32>
    %258 = arith.divf %256, %257 : vector<8x1xf32>
    %259 = vector.broadcast %251 : vector<8x1xf32> to vector<8x32xf32>
    %260 = arith.subf %245, %259 : vector<8x32xf32>
    %cst_101 = arith.constant 9.99999974E-6 : f32
    %261 = vector.broadcast %cst_101 : f32 to vector<8x1xf32>
    %262 = arith.addf %258, %261 : vector<8x1xf32>
    %263 = math.rsqrt %262 : vector<8x1xf32>
    %264 = vector.broadcast %263 : vector<8x1xf32> to vector<8x32xf32>
    %265 = arith.mulf %260, %264 : vector<8x32xf32>
    %266 = vector.broadcast %246 : vector<1x32xf32> to vector<8x32xf32>
    %267 = arith.mulf %265, %266 : vector<8x32xf32>
    %268 = vector.broadcast %247 : vector<1x32xf32> to vector<8x32xf32>
    %269 = arith.addf %267, %268 : vector<8x32xf32>
    %c0_102 = arith.constant 0 : index
    %c0_103 = arith.constant 0 : index
    %c0_104 = arith.constant 0 : index
    %270 = vector.load %arg18[%c0_102, %c0_103, %c0_104] : memref<1x8x32xf32, #tpu.memory_space<vmem>>, vector<1x8x32xf32>
    %271 = vector.shape_cast %270 : vector<1x8x32xf32> to vector<8x32xf32>
    %272 = vector.shape_cast %269 : vector<8x32xf32> to vector<1x8x32xf32>
    tpu.vector_store %arg18[%c0_102, %c0_103, %c0_104], %272 {strides = array<i32>} : memref<1x8x32xf32, #tpu.memory_space<vmem>>, vector<1x8x32xf32>,
    %273 = arith.addf %269, %17 : vector<8x32xf32>
    %274 = arith.truncf %273 : vector<8x32xf32> to vector<8x32xbf16>
    %c0_105 = arith.constant 0 : index
    %c0_106 = arith.constant 0 : index
    %275 = vector.load %arg15[%c0_105, %c0_106] : memref<32x192xbf16, #tpu.memory_space<vmem>>, vector<32x192xbf16>
    %cst_107 = arith.constant dense<0.000000e+00> : vector<8x192xf32>
    %276 = tpu.matmul %274, %275, %cst_107 {dimension_numbers = #tpu.dot_dimension_numbers<[1], [0], [0], [1], [0, 0, 1, 1], [], []>} : vector<8x32xbf16>, vector<32x192xbf16>, vector<8x192xf32> -> vector<8x192xf32>
    %c0_108 = arith.constant 0 : index
    %c0_109 = arith.constant 0 : index
    %277 = vector.load %arg16[%c0_108, %c0_109] : memref<1x192xf32, #tpu.memory_space<vmem>>, vector<1x192xf32>
    %278 = vector.broadcast %277 : vector<1x192xf32> to vector<8x192xf32>
    %279 = arith.addf %276, %278 : vector<8x192xf32>
    %280 = vector.extract_strided_slice %279 {offsets = [0, 0], sizes = [8, 128], strides = [1, 1]} : vector<8x192xf32> to vector<8x128xf32>
    %281 = vector.extract_strided_slice %279 {offsets = [0, 128], sizes = [8, 64], strides = [1, 1]} : vector<8x192xf32> to vector<8x64xf32>
    %282 = tpu.iota {dimensions = array<i32: 1>} : vector<8x128xi32>
    %c1_i32 = arith.constant 1 : i32
    %283 = vector.broadcast %c1_i32 : i32 to vector<8x128xi32>
    %284 = arith.andi %282, %283 : vector<8x128xi32>
    %c0_i32 = arith.constant 0 : i32
    %285 = vector.broadcast %c0_i32 : i32 to vector<8x128xi32>
    %286 = arith.cmpi eq, %284, %285 : vector<8x128xi32>
    %287 = vector.extract_strided_slice %3 {offsets = [0, 0], sizes = [8, 1], strides = [1, 1]} : vector<8x4xf32> to vector<8x1xf32>
    %288 = vector.extract_strided_slice %3 {offsets = [0, 1], sizes = [8, 1], strides = [1, 1]} : vector<8x4xf32> to vector<8x1xf32>
    %289 = vector.shape_cast %287 : vector<8x1xf32> to vector<8x1xf32>
    %290 = vector.broadcast %289 : vector<8x1xf32> to vector<8x128xf32>
    %291 = vector.shape_cast %288 : vector<8x1xf32> to vector<8x1xf32>
    %292 = vector.broadcast %291 : vector<8x1xf32> to vector<8x128xf32>
    %293 = arith.select %286, %290, %292 : vector<8x128xi1>, vector<8x128xf32>
    %294 = vector.extract_strided_slice %3 {offsets = [0, 2], sizes = [8, 1], strides = [1, 1]} : vector<8x4xf32> to vector<8x1xf32>
    %295 = vector.extract_strided_slice %3 {offsets = [0, 3], sizes = [8, 1], strides = [1, 1]} : vector<8x4xf32> to vector<8x1xf32>
    %296 = vector.shape_cast %294 : vector<8x1xf32> to vector<8x1xf32>
    %297 = vector.broadcast %296 : vector<8x1xf32> to vector<8x128xf32>
    %298 = vector.shape_cast %295 : vector<8x1xf32> to vector<8x1xf32>
    %299 = vector.broadcast %298 : vector<8x1xf32> to vector<8x128xf32>
    %300 = arith.select %286, %297, %299 : vector<8x128xi1>, vector<8x128xf32>
    %cst_110 = arith.constant 1.250000e-01 : f32
    %301 = vector.broadcast %cst_110 : f32 to vector<8x128xf32>
    %302 = arith.mulf %280, %301 : vector<8x128xf32>
    %303 = arith.mulf %302, %300 : vector<8x128xf32>
    %304 = arith.addf %293, %303 : vector<8x128xf32>
    %c0_111 = arith.constant 0 : index
    %c0_112 = arith.constant 0 : index
    %c0_113 = arith.constant 0 : index
    %305 = vector.load %arg19[%c0_111, %c0_112, %c0_113] : memref<1x8x128xf32, #tpu.memory_space<vmem>>, vector<1x8x128xf32>
    %306 = vector.shape_cast %305 : vector<1x8x128xf32> to vector<8x128xf32>
    %307 = vector.shape_cast %304 : vector<8x128xf32> to vector<1x8x128xf32>
    tpu.vector_store %arg19[%c0_111, %c0_112, %c0_113], %307 {strides = array<i32>} : memref<1x8x128xf32, #tpu.memory_space<vmem>>, vector<1x8x128xf32>,
    %cst_114 = arith.constant dense<0xFF800000> : vector<8xf32>
    %308 = vector.multi_reduction <maximumf>, %281, %cst_114 [1] : vector<8x64xf32> to vector<8xf32>
    %309 = vector.shape_cast %308 : vector<8xf32> to vector<8x1xf32>
    %310 = vector.broadcast %309 : vector<8x1xf32> to vector<8x64xf32>
    %311 = arith.subf %281, %310 : vector<8x64xf32>
    %312 = math.exp %311 : vector<8x64xf32>
    %c0_115 = arith.constant 0 : index
    %c0_116 = arith.constant 0 : index
    %313 = vector.load %arg17[%c0_115, %c0_116] : memref<64x64xf32, #tpu.memory_space<vmem>>, vector<64x64xf32>
    %cst_117 = arith.constant dense<0.000000e+00> : vector<8x64xf32>
    %314 = tpu.matmul %312, %313, %cst_117 {dimension_numbers = #tpu.dot_dimension_numbers<[1], [0], [0], [1], [0, 0, 1, 1], [], []>} : vector<8x64xf32>, vector<64x64xf32>, vector<8x64xf32> -> vector<8x64xf32>
    %315 = tpu.reciprocal %314 {approx = true} : vector<8x64xf32> -> vector<8x64xf32>
    %316 = arith.mulf %312, %315 : vector<8x64xf32>
    %c0_118 = arith.constant 0 : index
    %c0_119 = arith.constant 0 : index
    %c0_120 = arith.constant 0 : index
    %317 = vector.load %arg20[%c0_118, %c0_119, %c0_120] : memref<1x8x64xf32, #tpu.memory_space<vmem>>, vector<1x8x64xf32>
    %318 = vector.shape_cast %317 : vector<1x8x64xf32> to vector<8x64xf32>
    %319 = vector.shape_cast %316 : vector<8x64xf32> to vector<1x8x64xf32>
    tpu.vector_store %arg20[%c0_118, %c0_119, %c0_120], %319 {strides = array<i32>} : memref<1x8x64xf32, #tpu.memory_space<vmem>>, vector<1x8x64xf32>,
    return
  }
  func.func @transform_0(%arg0: i32) -> (i32, i32, i32) {
    %c0_i32 = arith.constant 0 : i32
    %c0_i32_0 = arith.constant 0 : i32
    %c0_i32_1 = arith.constant 0 : i32
    return %arg0, %c0_i32, %c0_i32_0 : i32, i32, i32
  }
  func.func @transform_1(%arg0: i32) -> (i32, i32, i32) {
    %c0_i32 = arith.constant 0 : i32
    %c0_i32_0 = arith.constant 0 : i32
    %c0_i32_1 = arith.constant 0 : i32
    return %arg0, %c0_i32, %c0_i32_0 : i32, i32, i32
  }
  func.func @transform_2(%arg0: i32) -> (i32, i32) {
    %c0_i32 = arith.constant 0 : i32
    %c0_i32_0 = arith.constant 0 : i32
    %c0_i32_1 = arith.constant 0 : i32
    return %c0_i32, %c0_i32_0 : i32, i32
  }
  func.func @transform_3(%arg0: i32) -> (i32, i32) {
    %c0_i32 = arith.constant 0 : i32
    %c0_i32_0 = arith.constant 0 : i32
    %c0_i32_1 = arith.constant 0 : i32
    return %c0_i32, %c0_i32_0 : i32, i32
  }
  func.func @transform_4(%arg0: i32) -> (i32, i32) {
    %c0_i32 = arith.constant 0 : i32
    %c0_i32_0 = arith.constant 0 : i32
    %c0_i32_1 = arith.constant 0 : i32
    return %c0_i32, %c0_i32_0 : i32, i32
  }
  func.func @transform_5(%arg0: i32) -> (i32, i32) {
    %c0_i32 = arith.constant 0 : i32
    %c0_i32_0 = arith.constant 0 : i32
    %c0_i32_1 = arith.constant 0 : i32
    return %c0_i32, %c0_i32_0 : i32, i32
  }
  func.func @transform_6(%arg0: i32) -> (i32, i32) {
    %c0_i32 = arith.constant 0 : i32
    %c0_i32_0 = arith.constant 0 : i32
    %c0_i32_1 = arith.constant 0 : i32
    return %c0_i32, %c0_i32_0 : i32, i32
  }
  func.func @transform_7(%arg0: i32) -> (i32, i32) {
    %c0_i32 = arith.constant 0 : i32
    %c0_i32_0 = arith.constant 0 : i32
    %c0_i32_1 = arith.constant 0 : i32
    return %c0_i32, %c0_i32_0 : i32, i32
  }
  func.func @transform_8(%arg0: i32) -> (i32, i32) {
    %c0_i32 = arith.constant 0 : i32
    %c0_i32_0 = arith.constant 0 : i32
    %c0_i32_1 = arith.constant 0 : i32
    return %c0_i32, %c0_i32_0 : i32, i32
  }
  func.func @transform_9(%arg0: i32) -> (i32, i32) {
    %c0_i32 = arith.constant 0 : i32
    %c0_i32_0 = arith.constant 0 : i32
    %c0_i32_1 = arith.constant 0 : i32
    return %c0_i32, %c0_i32_0 : i32, i32
  }
  func.func @transform_10(%arg0: i32) -> (i32, i32, i32) {
    %c0_i32 = arith.constant 0 : i32
    %c0_i32_0 = arith.constant 0 : i32
    %c0_i32_1 = arith.constant 0 : i32
    %c0_i32_2 = arith.constant 0 : i32
    return %c0_i32, %c0_i32_0, %c0_i32_1 : i32, i32, i32
  }
  func.func @transform_11(%arg0: i32) -> (i32, i32) {
    %c0_i32 = arith.constant 0 : i32
    %c0_i32_0 = arith.constant 0 : i32
    %c0_i32_1 = arith.constant 0 : i32
    return %c0_i32, %c0_i32_0 : i32, i32
  }
  func.func @transform_12(%arg0: i32) -> (i32, i32) {
    %c0_i32 = arith.constant 0 : i32
    %c0_i32_0 = arith.constant 0 : i32
    %c0_i32_1 = arith.constant 0 : i32
    return %c0_i32, %c0_i32_0 : i32, i32
  }
  func.func @transform_13(%arg0: i32) -> (i32, i32) {
    %c0_i32 = arith.constant 0 : i32
    %c0_i32_0 = arith.constant 0 : i32
    %c0_i32_1 = arith.constant 0 : i32
    return %c0_i32, %c0_i32_0 : i32, i32
  }
  func.func @transform_14(%arg0: i32) -> (i32, i32) {
    %c0_i32 = arith.constant 0 : i32
    %c0_i32_0 = arith.constant 0 : i32
    %c0_i32_1 = arith.constant 0 : i32
    return %c0_i32, %c0_i32_0 : i32, i32
  }
  func.func @transform_15(%arg0: i32) -> (i32, i32) {
    %c0_i32 = arith.constant 0 : i32
    %c0_i32_0 = arith.constant 0 : i32
    %c0_i32_1 = arith.constant 0 : i32
    return %c0_i32, %c0_i32_0 : i32, i32
  }
  func.func @transform_16(%arg0: i32) -> (i32, i32) {
    %c0_i32 = arith.constant 0 : i32
    %c0_i32_0 = arith.constant 0 : i32
    %c0_i32_1 = arith.constant 0 : i32
    return %c0_i32, %c0_i32_0 : i32, i32
  }
  func.func @transform_17(%arg0: i32) -> (i32, i32, i32) {
    %c0_i32 = arith.constant 0 : i32
    %c0_i32_0 = arith.constant 0 : i32
    %c0_i32_1 = arith.constant 0 : i32
    return %arg0, %c0_i32, %c0_i32_0 : i32, i32, i32
  }
  func.func @transform_18(%arg0: i32) -> (i32, i32, i32) {
    %c0_i32 = arith.constant 0 : i32
    %c0_i32_0 = arith.constant 0 : i32
    %c0_i32_1 = arith.constant 0 : i32
    return %arg0, %c0_i32, %c0_i32_0 : i32, i32, i32
  }
  func.func @transform_19(%arg0: i32) -> (i32, i32, i32) {
    %c0_i32 = arith.constant 0 : i32
    %c0_i32_0 = arith.constant 0 : i32
    %c0_i32_1 = arith.constant 0 : i32
    return %arg0, %c0_i32, %c0_i32_0 : i32, i32, i32
  }
}

module attributes {stable_mosaic.version = 11 : i64} {
  func.func @_decoder_post_kernel(%arg0: i32, %arg1: memref<16x32xf32, #tpu.memory_space<vmem>>, %arg2: memref<16x32xf32, #tpu.memory_space<vmem>>, %arg3: memref<32x32xbf16, #tpu.memory_space<vmem>>, %arg4: memref<1x32xf32, #tpu.memory_space<vmem>>, %arg5: memref<1x32xf32, #tpu.memory_space<vmem>>, %arg6: memref<1x32xf32, #tpu.memory_space<vmem>>, %arg7: memref<32x64xbf16, #tpu.memory_space<vmem>>, %arg8: memref<1x64xf32, #tpu.memory_space<vmem>>, %arg9: memref<64x32xbf16, #tpu.memory_space<vmem>>, %arg10: memref<1x32xf32, #tpu.memory_space<vmem>>, %arg11: memref<1x32xf32, #tpu.memory_space<vmem>>, %arg12: memref<1x32xf32, #tpu.memory_space<vmem>>, %arg13: memref<32x32xbf16, #tpu.memory_space<vmem>>, %arg14: memref<1x32xf32, #tpu.memory_space<vmem>>, %arg15: memref<32x32xbf16, #tpu.memory_space<vmem>>, %arg16: memref<1x32xf32, #tpu.memory_space<vmem>>, %arg17: memref<32x20xbf16, #tpu.memory_space<vmem>>, %arg18: memref<32x20xbf16, #tpu.memory_space<vmem>>, %arg19: memref<1x20xf32, #tpu.memory_space<vmem>>, %arg20: memref<16x32xf32, #tpu.memory_space<vmem>>, %arg21: memref<16x20xf32, #tpu.memory_space<vmem>>) attributes {dimension_semantics = [#tpu.dimension_semantics<parallel>], iteration_bounds = array<i64: 1>, scalar_prefetch = 0 : i64, scratch_operands = 0 : i64, tpu.core_type = #tpu.core_type<tc>, window_params = [{transform_indices = @transform_0, window_bounds = array<i64: 16, 32>}, {transform_indices = @transform_1, window_bounds = array<i64: 16, 32>}, {pipeline_mode = #tpu.pipeline_mode<synchronous>, transform_indices = @transform_2, window_bounds = array<i64: 32, 32>}, {pipeline_mode = #tpu.pipeline_mode<synchronous>, transform_indices = @transform_3, window_bounds = array<i64: 1, 32>}, {pipeline_mode = #tpu.pipeline_mode<synchronous>, transform_indices = @transform_4, window_bounds = array<i64: 1, 32>}, {pipeline_mode = #tpu.pipeline_mode<synchronous>, transform_indices = @transform_5, window_bounds = array<i64: 1, 32>}, {pipeline_mode = #tpu.pipeline_mode<synchronous>, transform_indices = @transform_6, window_bounds = array<i64: 32, 64>}, {pipeline_mode = #tpu.pipeline_mode<synchronous>, transform_indices = @transform_7, window_bounds = array<i64: 1, 64>}, {pipeline_mode = #tpu.pipeline_mode<synchronous>, transform_indices = @transform_8, window_bounds = array<i64: 64, 32>}, {pipeline_mode = #tpu.pipeline_mode<synchronous>, transform_indices = @transform_9, window_bounds = array<i64: 1, 32>}, {pipeline_mode = #tpu.pipeline_mode<synchronous>, transform_indices = @transform_10, window_bounds = array<i64: 1, 32>}, {pipeline_mode = #tpu.pipeline_mode<synchronous>, transform_indices = @transform_11, window_bounds = array<i64: 1, 32>}, {pipeline_mode = #tpu.pipeline_mode<synchronous>, transform_indices = @transform_12, window_bounds = array<i64: 32, 32>}, {pipeline_mode = #tpu.pipeline_mode<synchronous>, transform_indices = @transform_13, window_bounds = array<i64: 1, 32>}, {pipeline_mode = #tpu.pipeline_mode<synchronous>, transform_indices = @transform_14, window_bounds = array<i64: 32, 32>}, {pipeline_mode = #tpu.pipeline_mode<synchronous>, transform_indices = @transform_15, window_bounds = array<i64: 1, 32>}, {pipeline_mode = #tpu.pipeline_mode<synchronous>, transform_indices = @transform_16, window_bounds = array<i64: 32, 20>}, {pipeline_mode = #tpu.pipeline_mode<synchronous>, transform_indices = @transform_17, window_bounds = array<i64: 32, 20>}, {pipeline_mode = #tpu.pipeline_mode<synchronous>, transform_indices = @transform_18, window_bounds = array<i64: 1, 20>}, {transform_indices = @transform_19, window_bounds = array<i64: 16, 32>}, {transform_indices = @transform_20, window_bounds = array<i64: 16, 20>}]} {
    %c0 = arith.constant 0 : index
    %c0_0 = arith.constant 0 : index
    %0 = vector.load %arg1[%c0, %c0_0] : memref<16x32xf32, #tpu.memory_space<vmem>>, vector<16x32xf32>
    %c0_1 = arith.constant 0 : index
    %c0_2 = arith.constant 0 : index
    %1 = vector.load %arg2[%c0_1, %c0_2] : memref<16x32xf32, #tpu.memory_space<vmem>>, vector<16x32xf32>
    %2 = arith.truncf %0 : vector<16x32xf32> to vector<16x32xbf16>
    %c0_3 = arith.constant 0 : index
    %c0_4 = arith.constant 0 : index
    %3 = vector.load %arg3[%c0_3, %c0_4] : memref<32x32xbf16, #tpu.memory_space<vmem>>, vector<32x32xbf16>
    %cst = arith.constant dense<0.000000e+00> : vector<16x32xf32>
    %4 = tpu.matmul %2, %3, %cst {dimension_numbers = #tpu.dot_dimension_numbers<[1], [0], [0], [1], [0, 0, 1, 1], [], []>} : vector<16x32xbf16>, vector<32x32xbf16>, vector<16x32xf32> -> vector<16x32xf32>
    %c0_5 = arith.constant 0 : index
    %c0_6 = arith.constant 0 : index
    %5 = vector.load %arg4[%c0_5, %c0_6] : memref<1x32xf32, #tpu.memory_space<vmem>>, vector<1x32xf32>
    %6 = vector.broadcast %5 : vector<1x32xf32> to vector<16x32xf32>
    %7 = arith.addf %4, %6 : vector<16x32xf32>
    %8 = arith.addf %1, %7 : vector<16x32xf32>
    %c0_7 = arith.constant 0 : index
    %c0_8 = arith.constant 0 : index
    %9 = vector.load %arg5[%c0_7, %c0_8] : memref<1x32xf32, #tpu.memory_space<vmem>>, vector<1x32xf32>
    %c0_9 = arith.constant 0 : index
    %c0_10 = arith.constant 0 : index
    %10 = vector.load %arg6[%c0_9, %c0_10] : memref<1x32xf32, #tpu.memory_space<vmem>>, vector<1x32xf32>
    %cst_11 = arith.constant dense<0.000000e+00> : vector<16xf32>
    %11 = vector.multi_reduction <add>, %8, %cst_11 [1] : vector<16x32xf32> to vector<16xf32>
    %12 = vector.shape_cast %11 : vector<16xf32> to vector<16x1xf32>
    %cst_12 = arith.constant 3.200000e+01 : f32
    %13 = vector.broadcast %cst_12 : f32 to vector<16x1xf32>
    %14 = arith.divf %12, %13 : vector<16x1xf32>
    %15 = vector.broadcast %14 : vector<16x1xf32> to vector<16x32xf32>
    %16 = arith.subf %8, %15 : vector<16x32xf32>
    %17 = arith.mulf %16, %16 : vector<16x32xf32>
    %cst_13 = arith.constant dense<0.000000e+00> : vector<16xf32>
    %18 = vector.multi_reduction <add>, %17, %cst_13 [1] : vector<16x32xf32> to vector<16xf32>
    %19 = vector.shape_cast %18 : vector<16xf32> to vector<16x1xf32>
    %cst_14 = arith.constant 3.200000e+01 : f32
    %20 = vector.broadcast %cst_14 : f32 to vector<16x1xf32>
    %21 = arith.divf %19, %20 : vector<16x1xf32>
    %22 = vector.broadcast %14 : vector<16x1xf32> to vector<16x32xf32>
    %23 = arith.subf %8, %22 : vector<16x32xf32>
    %cst_15 = arith.constant 9.99999974E-6 : f32
    %24 = vector.broadcast %cst_15 : f32 to vector<16x1xf32>
    %25 = arith.addf %21, %24 : vector<16x1xf32>
    %26 = math.rsqrt %25 : vector<16x1xf32>
    %27 = vector.broadcast %26 : vector<16x1xf32> to vector<16x32xf32>
    %28 = arith.mulf %23, %27 : vector<16x32xf32>
    %29 = vector.broadcast %9 : vector<1x32xf32> to vector<16x32xf32>
    %30 = arith.mulf %28, %29 : vector<16x32xf32>
    %31 = vector.broadcast %10 : vector<1x32xf32> to vector<16x32xf32>
    %32 = arith.addf %30, %31 : vector<16x32xf32>
    %33 = arith.truncf %32 : vector<16x32xf32> to vector<16x32xbf16>
    %c0_16 = arith.constant 0 : index
    %c0_17 = arith.constant 0 : index
    %34 = vector.load %arg7[%c0_16, %c0_17] : memref<32x64xbf16, #tpu.memory_space<vmem>>, vector<32x64xbf16>
    %cst_18 = arith.constant dense<0.000000e+00> : vector<16x64xf32>
    %35 = tpu.matmul %33, %34, %cst_18 {dimension_numbers = #tpu.dot_dimension_numbers<[1], [0], [0], [1], [0, 0, 1, 1], [], []>} : vector<16x32xbf16>, vector<32x64xbf16>, vector<16x64xf32> -> vector<16x64xf32>
    %c0_19 = arith.constant 0 : index
    %c0_20 = arith.constant 0 : index
    %36 = vector.load %arg8[%c0_19, %c0_20] : memref<1x64xf32, #tpu.memory_space<vmem>>, vector<1x64xf32>
    %37 = vector.broadcast %36 : vector<1x64xf32> to vector<16x64xf32>
    %38 = arith.addf %35, %37 : vector<16x64xf32>
    %cst_21 = arith.constant 0.000000e+00 : f32
    %39 = vector.broadcast %cst_21 : f32 to vector<16x64xf32>
    %40 = arith.maximumf %38, %39 : vector<16x64xf32>
    %41 = arith.truncf %40 : vector<16x64xf32> to vector<16x64xbf16>
    %c0_22 = arith.constant 0 : index
    %c0_23 = arith.constant 0 : index
    %42 = vector.load %arg9[%c0_22, %c0_23] : memref<64x32xbf16, #tpu.memory_space<vmem>>, vector<64x32xbf16>
    %cst_24 = arith.constant dense<0.000000e+00> : vector<16x32xf32>
    %43 = tpu.matmul %41, %42, %cst_24 {dimension_numbers = #tpu.dot_dimension_numbers<[1], [0], [0], [1], [0, 0, 1, 1], [], []>} : vector<16x64xbf16>, vector<64x32xbf16>, vector<16x32xf32> -> vector<16x32xf32>
    %c0_25 = arith.constant 0 : index
    %c0_26 = arith.constant 0 : index
    %44 = vector.load %arg10[%c0_25, %c0_26] : memref<1x32xf32, #tpu.memory_space<vmem>>, vector<1x32xf32>
    %45 = vector.broadcast %44 : vector<1x32xf32> to vector<16x32xf32>
    %46 = arith.addf %43, %45 : vector<16x32xf32>
    %47 = arith.addf %32, %46 : vector<16x32xf32>
    %c0_27 = arith.constant 0 : index
    %c0_28 = arith.constant 0 : index
    %48 = vector.load %arg11[%c0_27, %c0_28] : memref<1x32xf32, #tpu.memory_space<vmem>>, vector<1x32xf32>
    %c0_29 = arith.constant 0 : index
    %c0_30 = arith.constant 0 : index
    %49 = vector.load %arg12[%c0_29, %c0_30] : memref<1x32xf32, #tpu.memory_space<vmem>>, vector<1x32xf32>
    %cst_31 = arith.constant dense<0.000000e+00> : vector<16xf32>
    %50 = vector.multi_reduction <add>, %47, %cst_31 [1] : vector<16x32xf32> to vector<16xf32>
    %51 = vector.shape_cast %50 : vector<16xf32> to vector<16x1xf32>
    %cst_32 = arith.constant 3.200000e+01 : f32
    %52 = vector.broadcast %cst_32 : f32 to vector<16x1xf32>
    %53 = arith.divf %51, %52 : vector<16x1xf32>
    %54 = vector.broadcast %53 : vector<16x1xf32> to vector<16x32xf32>
    %55 = arith.subf %47, %54 : vector<16x32xf32>
    %56 = arith.mulf %55, %55 : vector<16x32xf32>
    %cst_33 = arith.constant dense<0.000000e+00> : vector<16xf32>
    %57 = vector.multi_reduction <add>, %56, %cst_33 [1] : vector<16x32xf32> to vector<16xf32>
    %58 = vector.shape_cast %57 : vector<16xf32> to vector<16x1xf32>
    %cst_34 = arith.constant 3.200000e+01 : f32
    %59 = vector.broadcast %cst_34 : f32 to vector<16x1xf32>
    %60 = arith.divf %58, %59 : vector<16x1xf32>
    %61 = vector.broadcast %53 : vector<16x1xf32> to vector<16x32xf32>
    %62 = arith.subf %47, %61 : vector<16x32xf32>
    %cst_35 = arith.constant 9.99999974E-6 : f32
    %63 = vector.broadcast %cst_35 : f32 to vector<16x1xf32>
    %64 = arith.addf %60, %63 : vector<16x1xf32>
    %65 = math.rsqrt %64 : vector<16x1xf32>
    %66 = vector.broadcast %65 : vector<16x1xf32> to vector<16x32xf32>
    %67 = arith.mulf %62, %66 : vector<16x32xf32>
    %68 = vector.broadcast %48 : vector<1x32xf32> to vector<16x32xf32>
    %69 = arith.mulf %67, %68 : vector<16x32xf32>
    %70 = vector.broadcast %49 : vector<1x32xf32> to vector<16x32xf32>
    %71 = arith.addf %69, %70 : vector<16x32xf32>
    %c0_36 = arith.constant 0 : index
    %c0_37 = arith.constant 0 : index
    %72 = vector.load %arg20[%c0_36, %c0_37] : memref<16x32xf32, #tpu.memory_space<vmem>>, vector<16x32xf32>
    tpu.vector_store %arg20[%c0_36, %c0_37], %71 {strides = array<i32>} : memref<16x32xf32, #tpu.memory_space<vmem>>, vector<16x32xf32>,
    %73 = arith.truncf %71 : vector<16x32xf32> to vector<16x32xbf16>
    %c0_38 = arith.constant 0 : index
    %c0_39 = arith.constant 0 : index
    %74 = vector.load %arg13[%c0_38, %c0_39] : memref<32x32xbf16, #tpu.memory_space<vmem>>, vector<32x32xbf16>
    %cst_40 = arith.constant dense<0.000000e+00> : vector<16x32xf32>
    %75 = tpu.matmul %73, %74, %cst_40 {dimension_numbers = #tpu.dot_dimension_numbers<[1], [0], [0], [1], [0, 0, 1, 1], [], []>} : vector<16x32xbf16>, vector<32x32xbf16>, vector<16x32xf32> -> vector<16x32xf32>
    %c0_41 = arith.constant 0 : index
    %c0_42 = arith.constant 0 : index
    %76 = vector.load %arg14[%c0_41, %c0_42] : memref<1x32xf32, #tpu.memory_space<vmem>>, vector<1x32xf32>
    %77 = vector.broadcast %76 : vector<1x32xf32> to vector<16x32xf32>
    %78 = arith.addf %75, %77 : vector<16x32xf32>
    %cst_43 = arith.constant 0.000000e+00 : f32
    %79 = vector.broadcast %cst_43 : f32 to vector<16x32xf32>
    %80 = arith.maximumf %78, %79 : vector<16x32xf32>
    %81 = arith.truncf %80 : vector<16x32xf32> to vector<16x32xbf16>
    %c0_44 = arith.constant 0 : index
    %c0_45 = arith.constant 0 : index
    %82 = vector.load %arg15[%c0_44, %c0_45] : memref<32x32xbf16, #tpu.memory_space<vmem>>, vector<32x32xbf16>
    %cst_46 = arith.constant dense<0.000000e+00> : vector<16x32xf32>
    %83 = tpu.matmul %81, %82, %cst_46 {dimension_numbers = #tpu.dot_dimension_numbers<[1], [0], [0], [1], [0, 0, 1, 1], [], []>} : vector<16x32xbf16>, vector<32x32xbf16>, vector<16x32xf32> -> vector<16x32xf32>
    %c0_47 = arith.constant 0 : index
    %c0_48 = arith.constant 0 : index
    %84 = vector.load %arg16[%c0_47, %c0_48] : memref<1x32xf32, #tpu.memory_space<vmem>>, vector<1x32xf32>
    %85 = vector.broadcast %84 : vector<1x32xf32> to vector<16x32xf32>
    %86 = arith.addf %83, %85 : vector<16x32xf32>
    %cst_49 = arith.constant 0.000000e+00 : f32
    %87 = vector.broadcast %cst_49 : f32 to vector<16x32xf32>
    %88 = arith.maximumf %86, %87 : vector<16x32xf32>
    %89 = arith.truncf %88 : vector<16x32xf32> to vector<16x32xbf16>
    %c0_50 = arith.constant 0 : index
    %c0_51 = arith.constant 0 : index
    %90 = vector.load %arg17[%c0_50, %c0_51] : memref<32x20xbf16, #tpu.memory_space<vmem>>, vector<32x20xbf16>
    %cst_52 = arith.constant dense<0.000000e+00> : vector<16x20xf32>
    %91 = tpu.matmul %89, %90, %cst_52 {dimension_numbers = #tpu.dot_dimension_numbers<[1], [0], [0], [1], [0, 0, 1, 1], [], []>} : vector<16x32xbf16>, vector<32x20xbf16>, vector<16x20xf32> -> vector<16x20xf32>
    %92 = arith.truncf %71 : vector<16x32xf32> to vector<16x32xbf16>
    %c0_53 = arith.constant 0 : index
    %c0_54 = arith.constant 0 : index
    %93 = vector.load %arg18[%c0_53, %c0_54] : memref<32x20xbf16, #tpu.memory_space<vmem>>, vector<32x20xbf16>
    %cst_55 = arith.constant dense<0.000000e+00> : vector<16x20xf32>
    %94 = tpu.matmul %92, %93, %cst_55 {dimension_numbers = #tpu.dot_dimension_numbers<[1], [0], [0], [1], [0, 0, 1, 1], [], []>} : vector<16x32xbf16>, vector<32x20xbf16>, vector<16x20xf32> -> vector<16x20xf32>
    %95 = arith.addf %91, %94 : vector<16x20xf32>
    %c0_56 = arith.constant 0 : index
    %c0_57 = arith.constant 0 : index
    %96 = vector.load %arg19[%c0_56, %c0_57] : memref<1x20xf32, #tpu.memory_space<vmem>>, vector<1x20xf32>
    %97 = vector.broadcast %96 : vector<1x20xf32> to vector<16x20xf32>
    %98 = arith.addf %95, %97 : vector<16x20xf32>
    %c0_58 = arith.constant 0 : index
    %c0_59 = arith.constant 0 : index
    %99 = vector.load %arg21[%c0_58, %c0_59] : memref<16x20xf32, #tpu.memory_space<vmem>>, vector<16x20xf32>
    tpu.vector_store %arg21[%c0_58, %c0_59], %98 {strides = array<i32>} : memref<16x20xf32, #tpu.memory_space<vmem>>, vector<16x20xf32>,
    return
  }
  func.func @transform_0(%arg0: i32) -> (i32, i32) {
    %c0_i32 = arith.constant 0 : i32
    %c0_i32_0 = arith.constant 0 : i32
    return %arg0, %c0_i32 : i32, i32
  }
  func.func @transform_1(%arg0: i32) -> (i32, i32) {
    %c0_i32 = arith.constant 0 : i32
    %c0_i32_0 = arith.constant 0 : i32
    return %arg0, %c0_i32 : i32, i32
  }
  func.func @transform_2(%arg0: i32) -> (i32, i32) {
    %c0_i32 = arith.constant 0 : i32
    %c0_i32_0 = arith.constant 0 : i32
    %c0_i32_1 = arith.constant 0 : i32
    return %c0_i32, %c0_i32_0 : i32, i32
  }
  func.func @transform_3(%arg0: i32) -> (i32, i32) {
    %c0_i32 = arith.constant 0 : i32
    %c0_i32_0 = arith.constant 0 : i32
    %c0_i32_1 = arith.constant 0 : i32
    return %c0_i32, %c0_i32_0 : i32, i32
  }
  func.func @transform_4(%arg0: i32) -> (i32, i32) {
    %c0_i32 = arith.constant 0 : i32
    %c0_i32_0 = arith.constant 0 : i32
    %c0_i32_1 = arith.constant 0 : i32
    return %c0_i32, %c0_i32_0 : i32, i32
  }
  func.func @transform_5(%arg0: i32) -> (i32, i32) {
    %c0_i32 = arith.constant 0 : i32
    %c0_i32_0 = arith.constant 0 : i32
    %c0_i32_1 = arith.constant 0 : i32
    return %c0_i32, %c0_i32_0 : i32, i32
  }
  func.func @transform_6(%arg0: i32) -> (i32, i32) {
    %c0_i32 = arith.constant 0 : i32
    %c0_i32_0 = arith.constant 0 : i32
    %c0_i32_1 = arith.constant 0 : i32
    return %c0_i32, %c0_i32_0 : i32, i32
  }
  func.func @transform_7(%arg0: i32) -> (i32, i32) {
    %c0_i32 = arith.constant 0 : i32
    %c0_i32_0 = arith.constant 0 : i32
    %c0_i32_1 = arith.constant 0 : i32
    return %c0_i32, %c0_i32_0 : i32, i32
  }
  func.func @transform_8(%arg0: i32) -> (i32, i32) {
    %c0_i32 = arith.constant 0 : i32
    %c0_i32_0 = arith.constant 0 : i32
    %c0_i32_1 = arith.constant 0 : i32
    return %c0_i32, %c0_i32_0 : i32, i32
  }
  func.func @transform_9(%arg0: i32) -> (i32, i32) {
    %c0_i32 = arith.constant 0 : i32
    %c0_i32_0 = arith.constant 0 : i32
    %c0_i32_1 = arith.constant 0 : i32
    return %c0_i32, %c0_i32_0 : i32, i32
  }
  func.func @transform_10(%arg0: i32) -> (i32, i32) {
    %c0_i32 = arith.constant 0 : i32
    %c0_i32_0 = arith.constant 0 : i32
    %c0_i32_1 = arith.constant 0 : i32
    return %c0_i32, %c0_i32_0 : i32, i32
  }
  func.func @transform_11(%arg0: i32) -> (i32, i32) {
    %c0_i32 = arith.constant 0 : i32
    %c0_i32_0 = arith.constant 0 : i32
    %c0_i32_1 = arith.constant 0 : i32
    return %c0_i32, %c0_i32_0 : i32, i32
  }
  func.func @transform_12(%arg0: i32) -> (i32, i32) {
    %c0_i32 = arith.constant 0 : i32
    %c0_i32_0 = arith.constant 0 : i32
    %c0_i32_1 = arith.constant 0 : i32
    return %c0_i32, %c0_i32_0 : i32, i32
  }
  func.func @transform_13(%arg0: i32) -> (i32, i32) {
    %c0_i32 = arith.constant 0 : i32
    %c0_i32_0 = arith.constant 0 : i32
    %c0_i32_1 = arith.constant 0 : i32
    return %c0_i32, %c0_i32_0 : i32, i32
  }
  func.func @transform_14(%arg0: i32) -> (i32, i32) {
    %c0_i32 = arith.constant 0 : i32
    %c0_i32_0 = arith.constant 0 : i32
    %c0_i32_1 = arith.constant 0 : i32
    return %c0_i32, %c0_i32_0 : i32, i32
  }
  func.func @transform_15(%arg0: i32) -> (i32, i32) {
    %c0_i32 = arith.constant 0 : i32
    %c0_i32_0 = arith.constant 0 : i32
    %c0_i32_1 = arith.constant 0 : i32
    return %c0_i32, %c0_i32_0 : i32, i32
  }
  func.func @transform_16(%arg0: i32) -> (i32, i32) {
    %c0_i32 = arith.constant 0 : i32
    %c0_i32_0 = arith.constant 0 : i32
    %c0_i32_1 = arith.constant 0 : i32
    return %c0_i32, %c0_i32_0 : i32, i32
  }
  func.func @transform_17(%arg0: i32) -> (i32, i32) {
    %c0_i32 = arith.constant 0 : i32
    %c0_i32_0 = arith.constant 0 : i32
    %c0_i32_1 = arith.constant 0 : i32
    return %c0_i32, %c0_i32_0 : i32, i32
  }
  func.func @transform_18(%arg0: i32) -> (i32, i32) {
    %c0_i32 = arith.constant 0 : i32
    %c0_i32_0 = arith.constant 0 : i32
    %c0_i32_1 = arith.constant 0 : i32
    return %c0_i32, %c0_i32_0 : i32, i32
  }
  func.func @transform_19(%arg0: i32) -> (i32, i32) {
    %c0_i32 = arith.constant 0 : i32
    %c0_i32_0 = arith.constant 0 : i32
    return %arg0, %c0_i32 : i32, i32
  }
  func.func @transform_20(%arg0: i32) -> (i32, i32) {
    %c0_i32 = arith.constant 0 : i32
    %c0_i32_0 = arith.constant 0 : i32
    return %arg0, %c0_i32 : i32, i32
  }
}

</mosaic_0001>

<llo_original>
// kernel: transformer_decoder_forward.9
$region0: #{transformer_decoder_forward.9}
  #allocation0 [shape = 'u32[]', space=smem, size = 0x4, offset = 0x4, fixed_abs, tag = 'smem constant byte address 0x4 - core index']
  #allocation1 [shape = 'u32[72,128]{1,0:T(1,128)}', space=vmem, size = 0x9000, scoped, tag = 'internal scratch']
  %s0 = inlined_call_operand.hbm [shape: f32[2,8,32], index: 0, kind: input, shape index: {}]
  %s1 = inlined_call_operand.vmem [shape: f32[2,8,4], index: 1, kind: input, shape index: {}]
  %s2 = inlined_call_operand.hbm [shape: bf16[4,64], index: 2, kind: input, shape index: {}]
  %s3 = inlined_call_operand.hbm [shape: f32[1,64], index: 3, kind: input, shape index: {}]
  %s4 = inlined_call_operand.vmem [shape: bf16[64,32], index: 4, kind: input, shape index: {}]
  %s5 = inlined_call_operand.hbm [shape: f32[1,32], index: 5, kind: input, shape index: {}]
  %s6 = inlined_call_operand.hbm [shape: bf16[32,64], index: 6, kind: input, shape index: {}]
  %s7 = inlined_call_operand.hbm [shape: f32[1,64], index: 7, kind: input, shape index: {}]
  %s8 = inlined_call_operand.hbm [shape: bf16[32,32], index: 8, kind: input, shape index: {}]
  %s9 = inlined_call_operand.hbm [shape: f32[1,32], index: 9, kind: input, shape index: {}]
  %s10 = inlined_call_operand.hbm [shape: bf16[8,4,32], index: 10, kind: input, shape index: {}]
  %s11 = inlined_call_operand.hbm [shape: f32[1,32], index: 11, kind: input, shape index: {}]
  %s12 = inlined_call_operand.hbm [shape: f32[1,32], index: 12, kind: input, shape index: {}]
  %s13 = inlined_call_operand.hbm [shape: f32[1,32], index: 13, kind: input, shape index: {}]
  %s14 = inlined_call_operand.hbm [shape: bf16[32,192], index: 14, kind: input, shape index: {}]
  %s15 = inlined_call_operand.hbm [shape: f32[1,192], index: 15, kind: input, shape index: {}]
  %s16 = inlined_call_operand.hbm [shape: f32[64,64], index: 16, kind: input, shape index: {}]
  %s17 = inlined_call_operand.hbm [shape: f32[2,8,32], index: 17, kind: output, shape index: {0}]
  %s18 = inlined_call_operand.vmem [shape: f32[2,8,128], index: 18, kind: output, shape index: {1}]
  %s19 = inlined_call_operand.hbm [shape: f32[2,8,64], index: 19, kind: output, shape index: {2}]
  %20 = xla_tuple %s17, %s18, %s19
  %s21 = sld [smem:[#allocation0]]
  $region177: #{transformer_decoder_forward.9} parent=0
    _
  %s23 = ssub.s32 1, %s21
  %s24 = scalar_select 0, %s23, %s21
  $region1: #{transformer_decoder_forward.9} parent=0
    #allocation2 [shape = 'u8[8192]{0}', space=vmem, size = 0x2000, scoped, tag = 'input window, operand 0']
    #allocation3 [shape = 's32[2]{0}', space=sflag, size = 0x8, scoped, tag = 'scoped memory for transformer_decoder_forward.9']
    #allocation4 [shape = 's32[2]{0}', space=sflag, size = 0x8, scoped, tag = 'scoped memory for transformer_decoder_forward.9']
    #allocation5 [shape = 'u8[1024]{0}', space=vmem, size = 0x400, scoped, tag = 'input window, operand 2, single buffered']
    #allocation6 [shape = 's32[1]{0}', space=sflag, size = 0x4, scoped, tag = 'scoped memory for transformer_decoder_forward.9']
    #allocation7 [shape = 'u8[512]{0}', space=vmem, size = 0x400, scoped, tag = 'input window, operand 3, single buffered']
    #allocation8 [shape = 'u8[512]{0}', space=vmem, size = 0x400, scoped, tag = 'input window, operand 5, single buffered']
    #allocation9 [shape = 's32[1]{0}', space=sflag, size = 0x4, scoped, tag = 'scoped memory for transformer_decoder_forward.9']
    #allocation10 [shape = 'u8[8192]{0}', space=vmem, size = 0x2000, scoped, tag = 'input window, operand 6, single buffered']
    #allocation11 [shape = 'u8[512]{0}', space=vmem, size = 0x400, scoped, tag = 'input window, operand 7, single buffered']
    #allocation12 [shape = 's32[1]{0}', space=sflag, size = 0x4, scoped, tag = 'scoped memory for transformer_decoder_forward.9']
    #allocation13 [shape = 'u8[8192]{0}', space=vmem, size = 0x2000, scoped, tag = 'input window, operand 8, single buffered']
    #allocation14 [shape = 'u8[512]{0}', space=vmem, size = 0x400, scoped, tag = 'input window, operand 9, single buffered']
    #allocation15 [shape = 's32[1]{0}', space=sflag, size = 0x4, scoped, tag = 'scoped memory for transformer_decoder_forward.9']
    #allocation16 [shape = 'u8[8192]{0}', space=vmem, size = 0x2000, scoped, tag = 'input window, operand 10, single buffered']
    #allocation17 [shape = 'u8[512]{0}', space=vmem, size = 0x400, scoped, tag = 'input window, operand 11, single buffered']
    #allocation18 [shape = 's32[1]{0}', space=sflag, size = 0x4, scoped, tag = 'scoped memory for transformer_decoder_forward.9']
    #allocation19 [shape = 'u8[512]{0}', space=vmem, size = 0x400, scoped, tag = 'input window, operand 12, single buffered']
    #allocation20 [shape = 'u8[512]{0}', space=vmem, size = 0x400, scoped, tag = 'input window, operand 13, single buffered']
    #allocation21 [shape = 's32[1]{0}', space=sflag, size = 0x4, scoped, tag = 'scoped memory for transformer_decoder_forward.9']
    #allocation22 [shape = 'u8[16384]{0}', space=vmem, size = 0x4000, scoped, tag = 'input window, operand 14, single buffered']
    #allocation23 [shape = 'u8[1024]{0}', space=vmem, size = 0x400, scoped, tag = 'input window, operand 15, single buffered']
    #allocation24 [shape = 's32[1]{0}', space=sflag, size = 0x4, scoped, tag = 'scoped memory for transformer_decoder_forward.9']
    #allocation25 [shape = 'u8[32768]{0}', space=vmem, size = 0x8000, scoped, tag = 'input window, operand 16, single buffered']
    #allocation26 [shape = 'u8[8192]{0}', space=vmem, size = 0x2000, scoped, tag = 'output window, operand 0']
    #allocation27 [shape = 'u8[8192]{0}', space=vmem, size = 0x2000, scoped, tag = 'output window, operand 2']
    #allocation28 [shape = 's32[2]{0}', space=sflag, size = 0x8, scoped, tag = 'scoped memory for transformer_decoder_forward.9']
    %25 = vsyncpa [#allocation3], 0
    %s26 = scalar_lea.sflag [#allocation3], 1
    %27 = vsyncpa %s26, 0
    %28 = vsyncpa [#allocation6], 0
    %29 = vsyncpa [#allocation9], 0
    %30 = vsyncpa [#allocation12], 0
    %31 = vsyncpa [#allocation15], 0
    %32 = vsyncpa [#allocation18], 0
    %33 = vsyncpa [#allocation21], 0
    %34 = vsyncpa [#allocation24], 0
    %35 = vsyncpa [#allocation4], 0
    %s36 = scalar_lea.sflag [#allocation4], 1
    %37 = vsyncpa %s36, 0
    %38 = vsyncpa [#allocation28], 0
    %s39 = scalar_lea.sflag [#allocation28], 1
    %40 = vsyncpa %s39, 0
    loop: start=0, step=1, limit=4
    $region2: #{transformer_decoder_forward.9} parent=1 // loop_pre_header
      _
    $region3: #{transformer_decoder_forward.9} parent=1 // loop_header
      %s42 = sphi 0, %s46
      %p43 = scmp.ge.s32.totalorder %s42, 4
      %s52 = sphi 0, %s54
      %s55 = sphi 0, %s52
      %s56 = sphi 0, %s55
      %s72 = sphi 0, %s56
      %s78 = sphi 0, %s80
      %s81 = sphi 0, %s78
      %s82 = sphi 0, %s81
      %s98 = sphi 0, %s82
      %s102 = sphi 0, %s102
      %s104 = sphi 0, %s102
      %s105 = sphi 0, %s104
      %s119 = sphi 0, %s105
      %s123 = sphi 0, %s123
      %s125 = sphi 0, %s123
      %s126 = sphi 0, %s125
      %s140 = sphi 0, %s126
      %s144 = sphi 0, %s144
      %s146 = sphi 0, %s144
      %s147 = sphi 0, %s146
      %s161 = sphi 0, %s147
      %s165 = sphi 0, %s165
      %s167 = sphi 0, %s165
      %s168 = sphi 0, %s167
      %s182 = sphi 0, %s168
      %s186 = sphi 0, %s186
      %s188 = sphi 0, %s186
      %s189 = sphi 0, %s188
      %s203 = sphi 0, %s189
      %s207 = sphi 0, %s207
      %s209 = sphi 0, %s207
      %s210 = sphi 0, %s209
      %s224 = sphi 0, %s210
      %s228 = sphi 0, %s228
      %s230 = sphi 0, %s228
      %s231 = sphi 0, %s230
      %s245 = sphi 0, %s231
      %s249 = sphi 0, %s249
      %s251 = sphi 0, %s249
      %s252 = sphi 0, %s251
      %s266 = sphi 0, %s252
      %s270 = sphi 0, %s270
      %s272 = sphi 0, %s270
      %s273 = sphi 0, %s272
      %s287 = sphi 0, %s273
      %s291 = sphi 0, %s291
      %s293 = sphi 0, %s291
      %s294 = sphi 0, %s293
      %s308 = sphi 0, %s294
      %s312 = sphi 0, %s312
      %s314 = sphi 0, %s312
      %s315 = sphi 0, %s314
      %s329 = sphi 0, %s315
      %s333 = sphi 0, %s333
      %s335 = sphi 0, %s333
      %s336 = sphi 0, %s335
      %s350 = sphi 0, %s336
      %s354 = sphi 0, %s354
      %s356 = sphi 0, %s354
      %s357 = sphi 0, %s356
      %s371 = sphi 0, %s357
      %s375 = sphi 0, %s375
      %s377 = sphi 0, %s375
      %s378 = sphi 0, %s377
      %s392 = sphi 0, %s378
      %s396 = sphi 0, %s396
      %s398 = sphi 0, %s396
      %s399 = sphi 0, %s398
      %s413 = sphi 0, %s399
      %s419 = sphi 0, %s421
      %s422 = sphi 0, %s419
      %s423 = sphi 0, %s422
      %s439 = sphi 0, %s423
      %s445 = sphi 0, %s447
      %s448 = sphi 0, %s445
      %s449 = sphi 0, %s448
      %s465 = sphi 0, %s449
      %s471 = sphi 0, %s473
      %s474 = sphi 0, %s471
      %s475 = sphi 0, %s474
      %s491 = sphi 0, %s475
    $region4: #{transformer_decoder_forward.9} parent=1 // loop_header_branch
      %45 = sbr.rel (%p43) target = $region8
    $region5: #{transformer_decoder_forward.9} parent=1 // loop_body
      %s47 = ssub.s32 %s42, 1
      %s48 = ssub.s32 %s42, 2
      %s49 = sadd.s32 %s42, 1
      %s50 = ssub.s32 %s42, %s49
      %p51 = scmp.eq.s32.totalorder %s50, 0
      %s53 = sadd.s32 %s52, 1
      %s54 = scalar_select %p51, %s52, %s53
      %p57 = pneg %p51
      %p58 = scmp.eq.s32.totalorder %s42, 1
      %p59 = por %p57, %p58
      %p60 = scmp.ne.s32.totalorder %s52, %s55
      %p61 = scmp.eq.s32.totalorder %s42, 0
      %p62 = por %p60, %p61
      %p63 = scmp.ne.s32.totalorder %s52, %s55
      %p64 = scmp.eq.s32.totalorder %s47, 1
      %p65 = por %p63, %p64
      %p66 = scmp.ne.s32.totalorder %s55, %s56
      %p67 = scmp.eq.s32.totalorder %s47, 0
      %p68 = por %p66, %p67
      %p69 = scmp.ne.s32.totalorder %s55, %s56
      %p70 = scmp.eq.s32.totalorder %s48, 1
      %p71 = por %p69, %p70
      %p73 = scmp.ne.s32.totalorder %s56, %s72
      %p74 = scmp.eq.s32.totalorder %s48, 0
      %p75 = por %p73, %p74
      %s76 = ssub.s32 %s42, %s49
      %p77 = scmp.eq.s32.totalorder %s76, 0
      %s79 = sadd.s32 %s78, 1
      %s80 = scalar_select %p77, %s78, %s79
      %p83 = pneg %p77
      %p84 = scmp.eq.s32.totalorder %s42, 1
      %p85 = por %p83, %p84
      %p86 = scmp.ne.s32.totalorder %s78, %s81
      %p87 = scmp.eq.s32.totalorder %s42, 0
      %p88 = por %p86, %p87
      %p89 = scmp.ne.s32.totalorder %s78, %s81
      %p90 = scmp.eq.s32.totalorder %s47, 1
      %p91 = por %p89, %p90
      %p92 = scmp.ne.s32.totalorder %s81, %s82
      %p93 = scmp.eq.s32.totalorder %s47, 0
      %p94 = por %p92, %p93
      %p95 = scmp.ne.s32.totalorder %s81, %s82
      %p96 = scmp.eq.s32.totalorder %s48, 1
      %p97 = por %p95, %p96
      %p99 = scmp.ne.s32.totalorder %s82, %s98
      %p100 = scmp.eq.s32.totalorder %s48, 0
      %p101 = por %p99, %p100
      %s103 = sadd.s32 %s102, 1
      %p106 = scmp.eq.s32.totalorder %s42, 1
      %p107 = scmp.ne.s32.totalorder %s102, %s104
      %p108 = scmp.eq.s32.totalorder %s42, 0
      %p109 = por %p107, %p108
      %p110 = scmp.ne.s32.totalorder %s102, %s104
      %p111 = scmp.eq.s32.totalorder %s47, 1
      %p112 = por %p110, %p111
      %p113 = scmp.ne.s32.totalorder %s104, %s105
      %p114 = scmp.eq.s32.totalorder %s47, 0
      %p115 = por %p113, %p114
      %p116 = scmp.ne.s32.totalorder %s104, %s105
      %p117 = scmp.eq.s32.totalorder %s48, 1
      %p118 = por %p116, %p117
      %p120 = scmp.ne.s32.totalorder %s105, %s119
      %p121 = scmp.eq.s32.totalorder %s48, 0
      %p122 = por %p120, %p121
      %s124 = sadd.s32 %s123, 1
      %p127 = scmp.eq.s32.totalorder %s42, 1
      %p128 = scmp.ne.s32.totalorder %s123, %s125
      %p129 = scmp.eq.s32.totalorder %s42, 0
      %p130 = por %p128, %p129
      %p131 = scmp.ne.s32.totalorder %s123, %s125
      %p132 = scmp.eq.s32.totalorder %s47, 1
      %p133 = por %p131, %p132
      %p134 = scmp.ne.s32.totalorder %s125, %s126
      %p135 = scmp.eq.s32.totalorder %s47, 0
      %p136 = por %p134, %p135
      %p137 = scmp.ne.s32.totalorder %s125, %s126
      %p138 = scmp.eq.s32.totalorder %s48, 1
      %p139 = por %p137, %p138
      %p141 = scmp.ne.s32.totalorder %s126, %s140
      %p142 = scmp.eq.s32.totalorder %s48, 0
      %p143 = por %p141, %p142
      %s145 = sadd.s32 %s144, 1
      %p148 = scmp.eq.s32.totalorder %s42, 1
      %p149 = scmp.ne.s32.totalorder %s144, %s146
      %p150 = scmp.eq.s32.totalorder %s42, 0
      %p151 = por %p149, %p150
      %p152 = scmp.ne.s32.totalorder %s144, %s146
      %p153 = scmp.eq.s32.totalorder %s47, 1
      %p154 = por %p152, %p153
      %p155 = scmp.ne.s32.totalorder %s146, %s147
      %p156 = scmp.eq.s32.totalorder %s47, 0
      %p157 = por %p155, %p156
      %p158 = scmp.ne.s32.totalorder %s146, %s147
      %p159 = scmp.eq.s32.totalorder %s48, 1
      %p160 = por %p158, %p159
      %p162 = scmp.ne.s32.totalorder %s147, %s161
      %p163 = scmp.eq.s32.totalorder %s48, 0
      %p164 = por %p162, %p163
      %s166 = sadd.s32 %s165, 1
      %p169 = scmp.eq.s32.totalorder %s42, 1
      %p170 = scmp.ne.s32.totalorder %s165, %s167
      %p171 = scmp.eq.s32.totalorder %s42, 0
      %p172 = por %p170, %p171
      %p173 = scmp.ne.s32.totalorder %s165, %s167
      %p174 = scmp.eq.s32.totalorder %s47, 1
      %p175 = por %p173, %p174
      %p176 = scmp.ne.s32.totalorder %s167, %s168
      %p177 = scmp.eq.s32.totalorder %s47, 0
      %p178 = por %p176, %p177
      %p179 = scmp.ne.s32.totalorder %s167, %s168
      %p180 = scmp.eq.s32.totalorder %s48, 1
      %p181 = por %p179, %p180
      %p183 = scmp.ne.s32.totalorder %s168, %s182
      %p184 = scmp.eq.s32.totalorder %s48, 0
      %p185 = por %p183, %p184
      %s187 = sadd.s32 %s186, 1
      %p190 = scmp.eq.s32.totalorder %s42, 1
      %p191 = scmp.ne.s32.totalorder %s186, %s188
      %p192 = scmp.eq.s32.totalorder %s42, 0
      %p193 = por %p191, %p192
      %p194 = scmp.ne.s32.totalorder %s186, %s188
      %p195 = scmp.eq.s32.totalorder %s47, 1
      %p196 = por %p194, %p195
      %p197 = scmp.ne.s32.totalorder %s188, %s189
      %p198 = scmp.eq.s32.totalorder %s47, 0
      %p199 = por %p197, %p198
      %p200 = scmp.ne.s32.totalorder %s188, %s189
      %p201 = scmp.eq.s32.totalorder %s48, 1
      %p202 = por %p200, %p201
      %p204 = scmp.ne.s32.totalorder %s189, %s203
      %p205 = scmp.eq.s32.totalorder %s48, 0
      %p206 = por %p204, %p205
      %s208 = sadd.s32 %s207, 1
      %p211 = scmp.eq.s32.totalorder %s42, 1
      %p212 = scmp.ne.s32.totalorder %s207, %s209
      %p213 = scmp.eq.s32.totalorder %s42, 0
      %p214 = por %p212, %p213
      %p215 = scmp.ne.s32.totalorder %s207, %s209
      %p216 = scmp.eq.s32.totalorder %s47, 1
      %p217 = por %p215, %p216
      %p218 = scmp.ne.s32.totalorder %s209, %s210
      %p219 = scmp.eq.s32.totalorder %s47, 0
      %p220 = por %p218, %p219
      %p221 = scmp.ne.s32.totalorder %s209, %s210
      %p222 = scmp.eq.s32.totalorder %s48, 1
      %p223 = por %p221, %p222
      %p225 = scmp.ne.s32.totalorder %s210, %s224
      %p226 = scmp.eq.s32.totalorder %s48, 0
      %p227 = por %p225, %p226
      %s229 = sadd.s32 %s228, 1
      %p232 = scmp.eq.s32.totalorder %s42, 1
      %p233 = scmp.ne.s32.totalorder %s228, %s230
      %p234 = scmp.eq.s32.totalorder %s42, 0
      %p235 = por %p233, %p234
      %p236 = scmp.ne.s32.totalorder %s228, %s230
      %p237 = scmp.eq.s32.totalorder %s47, 1
      %p238 = por %p236, %p237
      %p239 = scmp.ne.s32.totalorder %s230, %s231
      %p240 = scmp.eq.s32.totalorder %s47, 0
      %p241 = por %p239, %p240
      %p242 = scmp.ne.s32.totalorder %s230, %s231
      %p243 = scmp.eq.s32.totalorder %s48, 1
      %p244 = por %p242, %p243
      %p246 = scmp.ne.s32.totalorder %s231, %s245
      %p247 = scmp.eq.s32.totalorder %s48, 0
      %p248 = por %p246, %p247
      %s250 = sadd.s32 %s249, 1
      %p253 = scmp.eq.s32.totalorder %s42, 1
      %p254 = scmp.ne.s32.totalorder %s249, %s251
      %p255 = scmp.eq.s32.totalorder %s42, 0
      %p256 = por %p254, %p255
      %p257 = scmp.ne.s32.totalorder %s249, %s251
      %p258 = scmp.eq.s32.totalorder %s47, 1
      %p259 = por %p257, %p258
      %p260 = scmp.ne.s32.totalorder %s251, %s252
      %p261 = scmp.eq.s32.totalorder %s47, 0
      %p262 = por %p260, %p261
      %p263 = scmp.ne.s32.totalorder %s251, %s252
      %p264 = scmp.eq.s32.totalorder %s48, 1
      %p265 = por %p263, %p264
      %p267 = scmp.ne.s32.totalorder %s252, %s266
      %p268 = scmp.eq.s32.totalorder %s48, 0
      %p269 = por %p267, %p268
      %s271 = sadd.s32 %s270, 1
      %p274 = scmp.eq.s32.totalorder %s42, 1
      %p275 = scmp.ne.s32.totalorder %s270, %s272
      %p276 = scmp.eq.s32.totalorder %s42, 0
      %p277 = por %p275, %p276
      %p278 = scmp.ne.s32.totalorder %s270, %s272
      %p279 = scmp.eq.s32.totalorder %s47, 1
      %p280 = por %p278, %p279
      %p281 = scmp.ne.s32.totalorder %s272, %s273
      %p282 = scmp.eq.s32.totalorder %s47, 0
      %p283 = por %p281, %p282
      %p284 = scmp.ne.s32.totalorder %s272, %s273
      %p285 = scmp.eq.s32.totalorder %s48, 1
      %p286 = por %p284, %p285
      %p288 = scmp.ne.s32.totalorder %s273, %s287
      %p289 = scmp.eq.s32.totalorder %s48, 0
      %p290 = por %p288, %p289
      %s292 = sadd.s32 %s291, 1
      %p295 = scmp.eq.s32.totalorder %s42, 1
      %p296 = scmp.ne.s32.totalorder %s291, %s293
      %p297 = scmp.eq.s32.totalorder %s42, 0
      %p298 = por %p296, %p297
      %p299 = scmp.ne.s32.totalorder %s291, %s293
      %p300 = scmp.eq.s32.totalorder %s47, 1
      %p301 = por %p299, %p300
      %p302 = scmp.ne.s32.totalorder %s293, %s294
      %p303 = scmp.eq.s32.totalorder %s47, 0
      %p304 = por %p302, %p303
      %p305 = scmp.ne.s32.totalorder %s293, %s294
      %p306 = scmp.eq.s32.totalorder %s48, 1
      %p307 = por %p305, %p306
      %p309 = scmp.ne.s32.totalorder %s294, %s308
      %p310 = scmp.eq.s32.totalorder %s48, 0
      %p311 = por %p309, %p310
      %s313 = sadd.s32 %s312, 1
      %p316 = scmp.eq.s32.totalorder %s42, 1
      %p317 = scmp.ne.s32.totalorder %s312, %s314
      %p318 = scmp.eq.s32.totalorder %s42, 0
      %p319 = por %p317, %p318
      %p320 = scmp.ne.s32.totalorder %s312, %s314
      %p321 = scmp.eq.s32.totalorder %s47, 1
      %p322 = por %p320, %p321
      %p323 = scmp.ne.s32.totalorder %s314, %s315
      %p324 = scmp.eq.s32.totalorder %s47, 0
      %p325 = por %p323, %p324
      %p326 = scmp.ne.s32.totalorder %s314, %s315
      %p327 = scmp.eq.s32.totalorder %s48, 1
      %p328 = por %p326, %p327
      %p330 = scmp.ne.s32.totalorder %s315, %s329
      %p331 = scmp.eq.s32.totalorder %s48, 0
      %p332 = por %p330, %p331
      %s334 = sadd.s32 %s333, 1
      %p337 = scmp.eq.s32.totalorder %s42, 1
      %p338 = scmp.ne.s32.totalorder %s333, %s335
      %p339 = scmp.eq.s32.totalorder %s42, 0
      %p340 = por %p338, %p339
      %p341 = scmp.ne.s32.totalorder %s333, %s335
      %p342 = scmp.eq.s32.totalorder %s47, 1
      %p343 = por %p341, %p342
      %p344 = scmp.ne.s32.totalorder %s335, %s336
      %p345 = scmp.eq.s32.totalorder %s47, 0
      %p346 = por %p344, %p345
      %p347 = scmp.ne.s32.totalorder %s335, %s336
      %p348 = scmp.eq.s32.totalorder %s48, 1
      %p349 = por %p347, %p348
      %p351 = scmp.ne.s32.totalorder %s336, %s350
      %p352 = scmp.eq.s32.totalorder %s48, 0
      %p353 = por %p351, %p352
      %s355 = sadd.s32 %s354, 1
      %p358 = scmp.eq.s32.totalorder %s42, 1
      %p359 = scmp.ne.s32.totalorder %s354, %s356
      %p360 = scmp.eq.s32.totalorder %s42, 0
      %p361 = por %p359, %p360
      %p362 = scmp.ne.s32.totalorder %s354, %s356
      %p363 = scmp.eq.s32.totalorder %s47, 1
      %p364 = por %p362, %p363
      %p365 = scmp.ne.s32.totalorder %s356, %s357
      %p366 = scmp.eq.s32.totalorder %s47, 0
      %p367 = por %p365, %p366
      %p368 = scmp.ne.s32.totalorder %s356, %s357
      %p369 = scmp.eq.s32.totalorder %s48, 1
      %p370 = por %p368, %p369
      %p372 = scmp.ne.s32.totalorder %s357, %s371
      %p373 = scmp.eq.s32.totalorder %s48, 0
      %p374 = por %p372, %p373
      %s376 = sadd.s32 %s375, 1
      %p379 = scmp.eq.s32.totalorder %s42, 1
      %p380 = scmp.ne.s32.totalorder %s375, %s377
      %p381 = scmp.eq.s32.totalorder %s42, 0
      %p382 = por %p380, %p381
      %p383 = scmp.ne.s32.totalorder %s375, %s377
      %p384 = scmp.eq.s32.totalorder %s47, 1
      %p385 = por %p383, %p384
      %p386 = scmp.ne.s32.totalorder %s377, %s378
      %p387 = scmp.eq.s32.totalorder %s47, 0
      %p388 = por %p386, %p387
      %p389 = scmp.ne.s32.totalorder %s377, %s378
      %p390 = scmp.eq.s32.totalorder %s48, 1
      %p391 = por %p389, %p390
      %p393 = scmp.ne.s32.totalorder %s378, %s392
      %p394 = scmp.eq.s32.totalorder %s48, 0
      %p395 = por %p393, %p394
      %s397 = sadd.s32 %s396, 1
      %p400 = scmp.eq.s32.totalorder %s42, 1
      %p401 = scmp.ne.s32.totalorder %s396, %s398
      %p402 = scmp.eq.s32.totalorder %s42, 0
      %p403 = por %p401, %p402
      %p404 = scmp.ne.s32.totalorder %s396, %s398
      %p405 = scmp.eq.s32.totalorder %s47, 1
      %p406 = por %p404, %p405
      %p407 = scmp.ne.s32.totalorder %s398, %s399
      %p408 = scmp.eq.s32.totalorder %s47, 0
      %p409 = por %p407, %p408
      %p410 = scmp.ne.s32.totalorder %s398, %s399
      %p411 = scmp.eq.s32.totalorder %s48, 1
      %p412 = por %p410, %p411
      %p414 = scmp.ne.s32.totalorder %s399, %s413
      %p415 = scmp.eq.s32.totalorder %s48, 0
      %p416 = por %p414, %p415
      %s417 = ssub.s32 %s42, %s49
      %p418 = scmp.eq.s32.totalorder %s417, 0
      %s420 = sadd.s32 %s419, 1
      %s421 = scalar_select %p418, %s419, %s420
      %p424 = pneg %p418
      %p425 = scmp.eq.s32.totalorder %s42, 1
      %p426 = por %p424, %p425
      %p427 = scmp.ne.s32.totalorder %s419, %s422
      %p428 = scmp.eq.s32.totalorder %s42, 0
      %p429 = por %p427, %p428
      %p430 = scmp.ne.s32.totalorder %s419, %s422
      %p431 = scmp.eq.s32.totalorder %s47, 1
      %p432 = por %p430, %p431
      %p433 = scmp.ne.s32.totalorder %s422, %s423
      %p434 = scmp.eq.s32.totalorder %s47, 0
      %p435 = por %p433, %p434
      %p436 = scmp.ne.s32.totalorder %s422, %s423
      %p437 = scmp.eq.s32.totalorder %s48, 1
      %p438 = por %p436, %p437
      %p440 = scmp.ne.s32.totalorder %s423, %s439
      %p441 = scmp.eq.s32.totalorder %s48, 0
      %p442 = por %p440, %p441
      %s443 = ssub.s32 %s42, %s49
      %p444 = scmp.eq.s32.totalorder %s443, 0
      %s446 = sadd.s32 %s445, 1
      %s447 = scalar_select %p444, %s445, %s446
      %p450 = pneg %p444
      %p451 = scmp.eq.s32.totalorder %s42, 1
      %p452 = por %p450, %p451
      %p453 = scmp.ne.s32.totalorder %s445, %s448
      %p454 = scmp.eq.s32.totalorder %s42, 0
      %p455 = por %p453, %p454
      %p456 = scmp.ne.s32.totalorder %s445, %s448
      %p457 = scmp.eq.s32.totalorder %s47, 1
      %p458 = por %p456, %p457
      %p459 = scmp.ne.s32.totalorder %s448, %s449
      %p460 = scmp.eq.s32.totalorder %s47, 0
      %p461 = por %p459, %p460
      %p462 = scmp.ne.s32.totalorder %s448, %s449
      %p463 = scmp.eq.s32.totalorder %s48, 1
      %p464 = por %p462, %p463
      %p466 = scmp.ne.s32.totalorder %s449, %s465
      %p467 = scmp.eq.s32.totalorder %s48, 0
      %p468 = por %p466, %p467
      %s469 = ssub.s32 %s42, %s49
      %p470 = scmp.eq.s32.totalorder %s469, 0
      %s472 = sadd.s32 %s471, 1
      %s473 = scalar_select %p470, %s471, %s472
      %p476 = pneg %p470
      %p477 = scmp.eq.s32.totalorder %s42, 1
      %p478 = por %p476, %p477
      %p479 = scmp.ne.s32.totalorder %s471, %s474
      %p480 = scmp.eq.s32.totalorder %s42, 0
      %p481 = por %p479, %p480
      %p482 = scmp.ne.s32.totalorder %s471, %s474
      %p483 = scmp.eq.s32.totalorder %s47, 1
      %p484 = por %p482, %p483
      %p485 = scmp.ne.s32.totalorder %s474, %s475
      %p486 = scmp.eq.s32.totalorder %s47, 0
      %p487 = por %p485, %p486
      %p488 = scmp.ne.s32.totalorder %s474, %s475
      %p489 = scmp.eq.s32.totalorder %s48, 1
      %p490 = por %p488, %p489
      %p492 = scmp.ne.s32.totalorder %s475, %s491
      %p493 = scmp.eq.s32.totalorder %s48, 0
      %p494 = por %p492, %p493
      %p495 = scmp.le.s32.totalorder 1, %s42
      %p496 = scmp.lt.s32.totalorder %s42, 3
      %p497 = pnand %p495, %p496
      %p498 = pneg %p497
      // Predicated region
      $region9: #{transformer_decoder_forward.9} parent=5 // pred_check
        _
      $region10: #{transformer_decoder_forward.9} parent=5 // pred_check_branch
        %500 = sbr.rel (%p497) target = $region12
      $region11: #{transformer_decoder_forward.9} parent=5 // pred_region
        %s501 = ssub.s32 %s42, 1
        // Predicated region
        $region13: #{transformer_decoder_forward.9} parent=11 // pred_check
          %p502 = pneg %p115
        $region14: #{transformer_decoder_forward.9} parent=11 // pred_check_branch
          %504 = sbr.rel (%p502) target = $region16
        $region15: #{transformer_decoder_forward.9} parent=11 // pred_region
          %506 = vsyncadd [#allocation6], 0
          %s508 = sshll.u32 %s2, 4
          %s509 = int_to_ptr.hbm [resolvable:$true] %s508
          %s510 = sshll.u32 [#allocation5], 4
          %s511 = int_to_ptr.vmem [resolvable:$true] %s510
          %513 = dma.hbm_to_vmem [thread:$0]  %s509, 32, %s511, [#allocation6]
        $region16: #{transformer_decoder_forward.9} parent=11 // pred_fallthru
          _
        // Predicated region
        $region17: #{transformer_decoder_forward.9} parent=11 // pred_check
          %p514 = pneg %p136
        $region18: #{transformer_decoder_forward.9} parent=11 // pred_check_branch
          %516 = sbr.rel (%p514) target = $region20
        $region19: #{transformer_decoder_forward.9} parent=11 // pred_region
          %518 = vsyncadd [#allocation6], 0
          %s520 = sshll.u32 %s3, 4
          %s521 = int_to_ptr.hbm [resolvable:$true] %s520
          %s522 = sshll.u32 [#allocation7], 4
          %s523 = int_to_ptr.vmem [resolvable:$true] %s522
          %525 = dma.hbm_to_vmem [thread:$0]  %s521, 16, %s523, [#allocation6]
        $region20: #{transformer_decoder_forward.9} parent=11 // pred_fallthru
          _
        // Predicated region
        $region21: #{transformer_decoder_forward.9} parent=11 // pred_check
          %p526 = pneg %p157
        $region22: #{transformer_decoder_forward.9} parent=11 // pred_check_branch
          %528 = sbr.rel (%p526) target = $region24
        $region23: #{transformer_decoder_forward.9} parent=11 // pred_region
          _
        $region24: #{transformer_decoder_forward.9} parent=11 // pred_fallthru
          _
        // Predicated region
        $region25: #{transformer_decoder_forward.9} parent=11 // pred_check
          %p529 = pneg %p178
        $region26: #{transformer_decoder_forward.9} parent=11 // pred_check_branch
          %531 = sbr.rel (%p529) target = $region28
        $region27: #{transformer_decoder_forward.9} parent=11 // pred_region
          %533 = vsyncadd [#allocation9], 0
          %s535 = sshll.u32 %s5, 4
          %s536 = int_to_ptr.hbm [resolvable:$true] %s535
          %s537 = sshll.u32 [#allocation8], 4
          %s538 = int_to_ptr.vmem [resolvable:$true] %s537
          %540 = dma.hbm_to_vmem [thread:$0]  %s536, 16, %s538, [#allocation9]
        $region28: #{transformer_decoder_forward.9} parent=11 // pred_fallthru
          _
        // Predicated region
        $region29: #{transformer_decoder_forward.9} parent=11 // pred_check
          %p541 = pneg %p199
        $region30: #{transformer_decoder_forward.9} parent=11 // pred_check_branch
          %543 = sbr.rel (%p541) target = $region32
        $region31: #{transformer_decoder_forward.9} parent=11 // pred_region
          %545 = vsyncadd [#allocation9], 0
          %s546 = sshll.u32 %s6, 4
          %s547 = int_to_ptr.hbm [resolvable:$true] %s546
          %s548 = sshll.u32 [#allocation10], 4
          %s549 = int_to_ptr.vmem [resolvable:$true] %s548
          %554 = dma.hbm_to_vmem [thread:$0]  %s547, 256, %s549, [#allocation9], 64, 64, 4
        $region32: #{transformer_decoder_forward.9} parent=11 // pred_fallthru
          _
        // Predicated region
        $region33: #{transformer_decoder_forward.9} parent=11 // pred_check
          %p555 = pneg %p220
        $region34: #{transformer_decoder_forward.9} parent=11 // pred_check_branch
          %557 = sbr.rel (%p555) target = $region36
        $region35: #{transformer_decoder_forward.9} parent=11 // pred_region
          %559 = vsyncadd [#allocation12], 0
          %s561 = sshll.u32 %s7, 4
          %s562 = int_to_ptr.hbm [resolvable:$true] %s561
          %s563 = sshll.u32 [#allocation11], 4
          %s564 = int_to_ptr.vmem [resolvable:$true] %s563
          %566 = dma.hbm_to_vmem [thread:$0]  %s562, 16, %s564, [#allocation12]
        $region36: #{transformer_decoder_forward.9} parent=11 // pred_fallthru
          _
        // Predicated region
        $region37: #{transformer_decoder_forward.9} parent=11 // pred_check
          %p567 = pneg %p241
        $region38: #{transformer_decoder_forward.9} parent=11 // pred_check_branch
          %569 = sbr.rel (%p567) target = $region40
        $region39: #{transformer_decoder_forward.9} parent=11 // pred_region
          %571 = vsyncadd [#allocation12], 0
          %s572 = sshll.u32 %s8, 4
          %s573 = int_to_ptr.hbm [resolvable:$true] %s572
          %s574 = sshll.u32 [#allocation13], 4
          %s575 = int_to_ptr.vmem [resolvable:$true] %s574
          %580 = dma.hbm_to_vmem [thread:$0]  %s573, 256, %s575, [#allocation12], 64, 64, 4
        $region40: #{transformer_decoder_forward.9} parent=11 // pred_fallthru
          _
        // Predicated region
        $region41: #{transformer_decoder_forward.9} parent=11 // pred_check
          %p581 = pneg %p262
        $region42: #{transformer_decoder_forward.9} parent=11 // pred_check_branch
          %583 = sbr.rel (%p581) target = $region44
        $region43: #{transformer_decoder_forward.9} parent=11 // pred_region
          %585 = vsyncadd [#allocation15], 0
          %s587 = sshll.u32 %s9, 4
          %s588 = int_to_ptr.hbm [resolvable:$true] %s587
          %s589 = sshll.u32 [#allocation14], 4
          %s590 = int_to_ptr.vmem [resolvable:$true] %s589
          %592 = dma.hbm_to_vmem [thread:$0]  %s588, 16, %s590, [#allocation15]
        $region44: #{transformer_decoder_forward.9} parent=11 // pred_fallthru
          _
        // Predicated region
        $region45: #{transformer_decoder_forward.9} parent=11 // pred_check
          %p593 = pneg %p283
        $region46: #{transformer_decoder_forward.9} parent=11 // pred_check_branch
          %595 = sbr.rel (%p593) target = $region48
        $region47: #{transformer_decoder_forward.9} parent=11 // pred_region
          %597 = vsyncadd [#allocation15], 0
          %s598 = sshll.u32 %s10, 4
          %s599 = int_to_ptr.hbm [resolvable:$true] %s598
          %s600 = sshll.u32 [#allocation16], 4
          %s601 = int_to_ptr.vmem [resolvable:$true] %s600
          %606 = dma.hbm_to_vmem [thread:$0]  %s599, 256, %s601, [#allocation15], 32, 32, 2
        $region48: #{transformer_decoder_forward.9} parent=11 // pred_fallthru
          _
        // Predicated region
        $region49: #{transformer_decoder_forward.9} parent=11 // pred_check
          %p607 = pneg %p304
        $region50: #{transformer_decoder_forward.9} parent=11 // pred_check_branch
          %609 = sbr.rel (%p607) target = $region52
        $region51: #{transformer_decoder_forward.9} parent=11 // pred_region
          %611 = vsyncadd [#allocation18], 0
          %s613 = sshll.u32 %s11, 4
          %s614 = int_to_ptr.hbm [resolvable:$true] %s613
          %s615 = sshll.u32 [#allocation17], 4
          %s616 = int_to_ptr.vmem [resolvable:$true] %s615
          %618 = dma.hbm_to_vmem [thread:$0]  %s614, 16, %s616, [#allocation18]
        $region52: #{transformer_decoder_forward.9} parent=11 // pred_fallthru
          _
        // Predicated region
        $region53: #{transformer_decoder_forward.9} parent=11 // pred_check
          %p619 = pneg %p325
        $region54: #{transformer_decoder_forward.9} parent=11 // pred_check_branch
          %621 = sbr.rel (%p619) target = $region56
        $region55: #{transformer_decoder_forward.9} parent=11 // pred_region
          %623 = vsyncadd [#allocation18], 0
          %s625 = sshll.u32 %s12, 4
          %s626 = int_to_ptr.hbm [resolvable:$true] %s625
          %s627 = sshll.u32 [#allocation19], 4
          %s628 = int_to_ptr.vmem [resolvable:$true] %s627
          %630 = dma.hbm_to_vmem [thread:$0]  %s626, 16, %s628, [#allocation18]
        $region56: #{transformer_decoder_forward.9} parent=11 // pred_fallthru
          _
        // Predicated region
        $region57: #{transformer_decoder_forward.9} parent=11 // pred_check
          %p631 = pneg %p346
        $region58: #{transformer_decoder_forward.9} parent=11 // pred_check_branch
          %633 = sbr.rel (%p631) target = $region60
        $region59: #{transformer_decoder_forward.9} parent=11 // pred_region
          %635 = vsyncadd [#allocation21], 0
          %s637 = sshll.u32 %s13, 4
          %s638 = int_to_ptr.hbm [resolvable:$true] %s637
          %s639 = sshll.u32 [#allocation20], 4
          %s640 = int_to_ptr.vmem [resolvable:$true] %s639
          %642 = dma.hbm_to_vmem [thread:$0]  %s638, 16, %s640, [#allocation21]
        $region60: #{transformer_decoder_forward.9} parent=11 // pred_fallthru
          _
        // Predicated region
        $region61: #{transformer_decoder_forward.9} parent=11 // pred_check
          %p643 = pneg %p367
        $region62: #{transformer_decoder_forward.9} parent=11 // pred_check_branch
          %645 = sbr.rel (%p643) target = $region64
        $region63: #{transformer_decoder_forward.9} parent=11 // pred_region
          %647 = vsyncadd [#allocation21], 0
          %s648 = sshll.u32 %s14, 4
          %s649 = int_to_ptr.hbm [resolvable:$true] %s648
          %s650 = sshll.u32 [#allocation22], 4
          %s651 = int_to_ptr.vmem [resolvable:$true] %s650
          %656 = dma.hbm_to_vmem [thread:$0]  %s649, 512, %s651, [#allocation21], 128, 128, 8
        $region64: #{transformer_decoder_forward.9} parent=11 // pred_fallthru
          _
        // Predicated region
        $region65: #{transformer_decoder_forward.9} parent=11 // pred_check
          %p657 = pneg %p388
        $region66: #{transformer_decoder_forward.9} parent=11 // pred_check_branch
          %659 = sbr.rel (%p657) target = $region68
        $region67: #{transformer_decoder_forward.9} parent=11 // pred_region
          %661 = vsyncadd [#allocation24], 0
          %s663 = sshll.u32 %s15, 4
          %s664 = int_to_ptr.hbm [resolvable:$true] %s663
          %s665 = sshll.u32 [#allocation23], 4
          %s666 = int_to_ptr.vmem [resolvable:$true] %s665
          %668 = dma.hbm_to_vmem [thread:$0]  %s664, 32, %s666, [#allocation24]
        $region68: #{transformer_decoder_forward.9} parent=11 // pred_fallthru
          _
        // Predicated region
        $region69: #{transformer_decoder_forward.9} parent=11 // pred_check
          %p669 = pneg %p409
        $region70: #{transformer_decoder_forward.9} parent=11 // pred_check_branch
          %671 = sbr.rel (%p669) target = $region72
        $region71: #{transformer_decoder_forward.9} parent=11 // pred_region
          %673 = vsyncadd [#allocation24], 0
          %s674 = sshll.u32 %s16, 4
          %s675 = int_to_ptr.hbm [resolvable:$true] %s674
          %s676 = sshll.u32 [#allocation25], 4
          %s677 = int_to_ptr.vmem [resolvable:$true] %s676
          %682 = dma.hbm_to_vmem [thread:$0]  %s675, 1024, %s677, [#allocation24], 128, 128, 8
        $region72: #{transformer_decoder_forward.9} parent=11 // pred_fallthru
          _
      $region12: #{transformer_decoder_forward.9} parent=5 // pred_fallthru
        _
      %p683 = scmp.lt.s32.totalorder %s42, 2
      // Predicated region
      $region73: #{transformer_decoder_forward.9} parent=5 // pred_check
        %p684 = pneg %p683
      $region74: #{transformer_decoder_forward.9} parent=5 // pred_check_branch
        %686 = sbr.rel (%p684) target = $region76
      $region75: #{transformer_decoder_forward.9} parent=5 // pred_region
        // Predicated region
        $region77: #{transformer_decoder_forward.9} parent=75 // pred_check
          %p687 = pneg %p62
        $region78: #{transformer_decoder_forward.9} parent=75 // pred_check_branch
          %689 = sbr.rel (%p687) target = $region80
        $region79: #{transformer_decoder_forward.9} parent=75 // pred_region
          %s690 = sand.u32 %s52, 1
          %s691 = scalar_lea.sflag [#allocation3], %s690
          %s692 = sand.u32 %s52, 1
          %s693 = smul.addr %s692, 8
          %s694 = scalar_lea.vmem [#allocation2], %s693
          %696 = vsyncadd %s691, 0
          %s697 = smul.addr %s42, 8
          %s698 = scalar_lea.hbm %s0, %s697
          %s700 = sshll.u32 %s698, 4
          %s701 = int_to_ptr.hbm [resolvable:$true] %s700
          %s702 = sshll.u32 %s694, 4
          %s703 = int_to_ptr.vmem [resolvable:$true] %s702
          %705 = dma.hbm_to_vmem [thread:$0]  %s701, 128, %s703, %s691
        $region80: #{transformer_decoder_forward.9} parent=75 // pred_fallthru
          _
        // Predicated region
        $region81: #{transformer_decoder_forward.9} parent=75 // pred_check
          %p706 = pneg %p88
        $region82: #{transformer_decoder_forward.9} parent=75 // pred_check_branch
          %708 = sbr.rel (%p706) target = $region84
        $region83: #{transformer_decoder_forward.9} parent=75 // pred_region
          %p709 = scmp.lt.s32.totalorder %s42, 1
          %s710 = scalar_select %p709, %s42, 1
          %s711 = smul.addr %s710, 8
          %s712 = scalar_lea.vmem %s1, %s711
        $region84: #{transformer_decoder_forward.9} parent=75 // pred_fallthru
          _
      $region76: #{transformer_decoder_forward.9} parent=5 // pred_fallthru
        _
      %p713 = scmp.le.s32.totalorder 1, %s42
      %p714 = scmp.lt.s32.totalorder %s42, 3
      %p715 = pnand %p713, %p714
      %p716 = pneg %p715
      // Predicated region
      $region85: #{transformer_decoder_forward.9} parent=5 // pred_check
        _
      $region86: #{transformer_decoder_forward.9} parent=5 // pred_check_branch
        %718 = sbr.rel (%p715) target = $region88
      $region87: #{transformer_decoder_forward.9} parent=5 // pred_region
        %s719 = ssub.s32 %s42, 1
        %s720 = sand.u32 %s55, 1
        %s721 = scalar_lea.sflag [#allocation3], %s720
        %s722 = sand.u32 %s55, 1
        %s723 = smul.addr %s722, 8
        %s724 = scalar_lea.vmem [#allocation2], %s723
        // Predicated region
        $region89: #{transformer_decoder_forward.9} parent=87 // pred_check
          %p725 = pneg %p68
        $region90: #{transformer_decoder_forward.9} parent=87 // pred_check_branch
          %727 = sbr.rel (%p725) target = $region92
        $region91: #{transformer_decoder_forward.9} parent=87 // pred_region
          %729 = dma.done %s721, 128
        $region92: #{transformer_decoder_forward.9} parent=87 // pred_fallthru
          _
        // Predicated region
        $region93: #{transformer_decoder_forward.9} parent=87 // pred_check
          %p730 = pneg %p115
        $region94: #{transformer_decoder_forward.9} parent=87 // pred_check_branch
          %732 = sbr.rel (%p730) target = $region96
        $region95: #{transformer_decoder_forward.9} parent=87 // pred_region
          %734 = dma.done [#allocation6], 32
        $region96: #{transformer_decoder_forward.9} parent=87 // pred_fallthru
          _
        // Predicated region
        $region97: #{transformer_decoder_forward.9} parent=87 // pred_check
          %p735 = pneg %p136
        $region98: #{transformer_decoder_forward.9} parent=87 // pred_check_branch
          %737 = sbr.rel (%p735) target = $region100
        $region99: #{transformer_decoder_forward.9} parent=87 // pred_region
          %739 = dma.done [#allocation6], 16
        $region100: #{transformer_decoder_forward.9} parent=87 // pred_fallthru
          _
        // Predicated region
        $region101: #{transformer_decoder_forward.9} parent=87 // pred_check
          %p740 = pneg %p178
        $region102: #{transformer_decoder_forward.9} parent=87 // pred_check_branch
          %742 = sbr.rel (%p740) target = $region104
        $region103: #{transformer_decoder_forward.9} parent=87 // pred_region
          %744 = dma.done [#allocation9], 16
        $region104: #{transformer_decoder_forward.9} parent=87 // pred_fallthru
          _
        // Predicated region
        $region105: #{transformer_decoder_forward.9} parent=87 // pred_check
          %p745 = pneg %p199
        $region106: #{transformer_decoder_forward.9} parent=87 // pred_check_branch
          %747 = sbr.rel (%p745) target = $region108
        $region107: #{transformer_decoder_forward.9} parent=87 // pred_region
          %749 = dma.done [#allocation9], 256
        $region108: #{transformer_decoder_forward.9} parent=87 // pred_fallthru
          _
        // Predicated region
        $region109: #{transformer_decoder_forward.9} parent=87 // pred_check
          %p750 = pneg %p220
        $region110: #{transformer_decoder_forward.9} parent=87 // pred_check_branch
          %752 = sbr.rel (%p750) target = $region112
        $region111: #{transformer_decoder_forward.9} parent=87 // pred_region
          %754 = dma.done [#allocation12], 16
        $region112: #{transformer_decoder_forward.9} parent=87 // pred_fallthru
          _
        // Predicated region
        $region113: #{transformer_decoder_forward.9} parent=87 // pred_check
          %p755 = pneg %p241
        $region114: #{transformer_decoder_forward.9} parent=87 // pred_check_branch
          %757 = sbr.rel (%p755) target = $region116
        $region115: #{transformer_decoder_forward.9} parent=87 // pred_region
          %759 = dma.done [#allocation12], 256
        $region116: #{transformer_decoder_forward.9} parent=87 // pred_fallthru
          _
        // Predicated region
        $region117: #{transformer_decoder_forward.9} parent=87 // pred_check
          %p760 = pneg %p262
        $region118: #{transformer_decoder_forward.9} parent=87 // pred_check_branch
          %762 = sbr.rel (%p760) target = $region120
        $region119: #{transformer_decoder_forward.9} parent=87 // pred_region
          %764 = dma.done [#allocation15], 16
        $region120: #{transformer_decoder_forward.9} parent=87 // pred_fallthru
          _
        // Predicated region
        $region121: #{transformer_decoder_forward.9} parent=87 // pred_check
          %p765 = pneg %p283
        $region122: #{transformer_decoder_forward.9} parent=87 // pred_check_branch
          %767 = sbr.rel (%p765) target = $region124
        $region123: #{transformer_decoder_forward.9} parent=87 // pred_region
          %769 = dma.done [#allocation15], 256
        $region124: #{transformer_decoder_forward.9} parent=87 // pred_fallthru
          _
        // Predicated region
        $region125: #{transformer_decoder_forward.9} parent=87 // pred_check
          %p770 = pneg %p304
        $region126: #{transformer_decoder_forward.9} parent=87 // pred_check_branch
          %772 = sbr.rel (%p770) target = $region128
        $region127: #{transformer_decoder_forward.9} parent=87 // pred_region
          %774 = dma.done [#allocation18], 16
        $region128: #{transformer_decoder_forward.9} parent=87 // pred_fallthru
          _
        // Predicated region
        $region129: #{transformer_decoder_forward.9} parent=87 // pred_check
          %p775 = pneg %p325
        $region130: #{transformer_decoder_forward.9} parent=87 // pred_check_branch
          %777 = sbr.rel (%p775) target = $region132
        $region131: #{transformer_decoder_forward.9} parent=87 // pred_region
          %779 = dma.done [#allocation18], 16
        $region132: #{transformer_decoder_forward.9} parent=87 // pred_fallthru
          _
        // Predicated region
        $region133: #{transformer_decoder_forward.9} parent=87 // pred_check
          %p780 = pneg %p346
        $region134: #{transformer_decoder_forward.9} parent=87 // pred_check_branch
          %782 = sbr.rel (%p780) target = $region136
        $region135: #{transformer_decoder_forward.9} parent=87 // pred_region
          %784 = dma.done [#allocation21], 16
        $region136: #{transformer_decoder_forward.9} parent=87 // pred_fallthru
          _
        // Predicated region
        $region137: #{transformer_decoder_forward.9} parent=87 // pred_check
          %p785 = pneg %p367
        $region138: #{transformer_decoder_forward.9} parent=87 // pred_check_branch
          %787 = sbr.rel (%p785) target = $region140
        $region139: #{transformer_decoder_forward.9} parent=87 // pred_region
          %789 = dma.done [#allocation21], 512
        $region140: #{transformer_decoder_forward.9} parent=87 // pred_fallthru
          _
        // Predicated region
        $region141: #{transformer_decoder_forward.9} parent=87 // pred_check
          %p790 = pneg %p388
        $region142: #{transformer_decoder_forward.9} parent=87 // pred_check_branch
          %792 = sbr.rel (%p790) target = $region144
        $region143: #{transformer_decoder_forward.9} parent=87 // pred_region
          %794 = dma.done [#allocation24], 32
        $region144: #{transformer_decoder_forward.9} parent=87 // pred_fallthru
          _
        // Predicated region
        $region145: #{transformer_decoder_forward.9} parent=87 // pred_check
          %p795 = pneg %p409
        $region146: #{transformer_decoder_forward.9} parent=87 // pred_check_branch
          %797 = sbr.rel (%p795) target = $region148
        $region147: #{transformer_decoder_forward.9} parent=87 // pred_region
          %799 = dma.done [#allocation24], 1024
        $region148: #{transformer_decoder_forward.9} parent=87 // pred_fallthru
          _
        %s800 = sand.u32 %s55, 1
        %s801 = scalar_lea.sflag [#allocation3], %s800
        %s802 = sand.u32 %s55, 1
        %s803 = smul.addr %s802, 8
        %s804 = scalar_lea.vmem [#allocation2], %s803
        %p805 = pneg %p68
        %p806 = pneg %p65
        %p807 = scmp.lt.s32.totalorder %s47, 1
        %s808 = scalar_select %p807, %s47, 1
        %s809 = smul.addr %s808, 8
        %s810 = scalar_lea.vmem %s1, %s809
        %p811 = pneg %p94
        %p812 = pneg %p91
        %p813 = pneg %p115
        %p814 = pneg %p112
        %p815 = pneg %p136
        %p816 = pneg %p133
        %p817 = pneg %p157
        %p818 = pneg %p154
        %p819 = pneg %p178
        %p820 = pneg %p175
        %p821 = pneg %p199
        %p822 = pneg %p196
        %p823 = pneg %p220
        %p824 = pneg %p217
        %p825 = pneg %p241
        %p826 = pneg %p238
        %p827 = pneg %p262
        %p828 = pneg %p259
        %p829 = pneg %p283
        %p830 = pneg %p280
        %p831 = pneg %p304
        %p832 = pneg %p301
        %p833 = pneg %p325
        %p834 = pneg %p322
        %p835 = pneg %p346
        %p836 = pneg %p343
        %p837 = pneg %p367
        %p838 = pneg %p364
        %p839 = pneg %p388
        %p840 = pneg %p385
        %p841 = pneg %p409
        %p842 = pneg %p406
        %p843 = pneg %p435
        %p844 = pneg %p432
        %s845 = sand.u32 %s422, 1
        %s846 = scalar_lea.sflag [#allocation4], %s845
        %s847 = sand.u32 %s422, 1
        %s848 = smul.addr %s847, 8
        %s849 = scalar_lea.vmem [#allocation26], %s848
        %p850 = pneg %p461
        %p851 = pneg %p458
        %p852 = scmp.lt.s32.totalorder %s47, 1
        %s853 = scalar_select %p852, %s47, 1
        %s854 = smul.addr %s853, 8
        %s855 = scalar_lea.vmem %s18, %s854
        %p856 = pneg %p487
        %p857 = pneg %p484
        %s858 = sand.u32 %s474, 1
        %s859 = scalar_lea.sflag [#allocation28], %s858
        %s860 = sand.u32 %s474, 1
        %s861 = smul.addr %s860, 8
        %s862 = scalar_lea.vmem [#allocation27], %s861
        %p863 = scmp.lt.s32.totalorder %s47, 1
        %s864 = scalar_select %p863, %s47, 1
        %s865 = smul.addr %s864, 8
        %s866 = scalar_lea.vmem %s1, %s865
        %p867 = scmp.lt.s32.totalorder %s47, 1
        %s868 = scalar_select %p867, %s47, 1
        %s869 = smul.addr %s868, 8
        %s870 = scalar_lea.vmem %s18, %s869
        %v872 = vld [vmem:[%s724] sm:$0xff]
        %v873 = vld [vmem:[%s866] sm:$0xff]
        %v874 = vpack.c.bf16 %v873, %v873
        %v875 = vld [vmem:[#allocation5] sm:$0x3]
        %v876 = vld [vmem:[#allocation7] sm:$0x1]
        %v878 = vperm.slane %v876, 0
        %vm880 = vcmask 31744
        %v882 = vsel %vm880, %v874, 0
        %vm884 = vcmask 1041408
        %v886 = vsel %vm884, %v875, 0
        %888 = vmatpush.bf16.msra.mxu0 0
        %889 = vmatpush.bf16.msra.mxu0 0
        %890 = vmatpush.bf16.msra.mxu0 0
        %891 = vmatpush.bf16.msra.mxu0 0
        %892 = vmatpush.bf16.msra.mxu0 0
        %893 = vmatpush.bf16.msra.mxu0 0
        %894 = vmatpush.bf16.msra.mxu0 0
        %895 = vmatpush.bf16.msra.mxu0 %v886
        %896 = vmatmul.bf16.gmra.mxu0 %v882
        %v897 = vpop.f32.mrf.mxu0
        %v898 = vadd.f32 %v878, %v897
        %v899 = vpop.f32.mrf.mxu0
        %900 = vdwg.mxu0
        %v901 = vmax.f32 %v898, 0.0
        %v902 = vpack.c.bf16 %v901, %v901
        %v903 = vld [vmem:[%s4] sm:$0xf]
        %v904 = vld [vmem:[%s4 + $0x4] sm:$0xf]
        %v905 = vld [vmem:[%s4 + $0x8] sm:$0xf]
        %v906 = vld [vmem:[%s4 + $0xc] sm:$0xf]
        %v907 = vld [vmem:[%s4 + $0x10] sm:$0xf]
        %v908 = vld [vmem:[%s4 + $0x14] sm:$0xf]
        %v909 = vld [vmem:[%s4 + $0x18] sm:$0xf]
        %v910 = vld [vmem:[%s4 + $0x1c] sm:$0xf]
        %v911 = vld [vmem:[#allocation8] sm:$0x1]
        %v913 = vperm.slane %v911, 0
        %v923 = vunpack.c.l.b16 %v903
        %v924 = vunpack.c.l.b16 %v904
        %v925 = vunpack.c.l.b16 %v905
        %v926 = vunpack.c.l.b16 %v906
        %v927 = vunpack.c.l.b16 %v907
        %v928 = vunpack.c.l.b16 %v908
        %v929 = vunpack.c.l.b16 %v909
        %v930 = vunpack.c.l.b16 %v910
        %v931 = vpack.c.b16 %v924, %v923
        %v932 = vpack.c.b16 %v926, %v925
        %v933 = vpack.c.b16 %v928, %v927
        %v934 = vpack.c.b16 %v930, %v929
        %vm939 = vcmask 523264
        %v941 = vsel %vm939, %v902, 0
        %943 = vmatpush.bf16.msra.mxu0 0
        %944 = vmatpush.bf16.msra.mxu0 0
        %945 = vmatpush.bf16.msra.mxu0 0
        %946 = vmatpush.bf16.msra.mxu0 0
        %947 = vmatpush.bf16.msra.mxu0 %v934
        %948 = vmatpush.bf16.msra.mxu0 %v933
        %949 = vmatpush.bf16.msra.mxu0 %v932
        %950 = vmatpush.bf16.msra.mxu0 %v931
        %951 = vmatmul.bf16.gmra.mxu0 %v941
        %v952 = vpop.f32.mrf.mxu0
        %v953 = vadd.f32 %v913, %v952
        %v954 = vpop.f32.mrf.mxu0
        %955 = vdwg.mxu0
        %v956 = vadd.f32 %v872, %v953
        %v957 = vpack.c.bf16 %v956, %v956
        %v958 = vld [vmem:[#allocation10] sm:$0xf]
        %v959 = vld [vmem:[#allocation10 + $0x4] sm:$0xf]
        %v960 = vld [vmem:[#allocation10 + $0x8] sm:$0xf]
        %v961 = vld [vmem:[#allocation10 + $0xc] sm:$0xf]
        %v962 = vld [vmem:[#allocation11] sm:$0x1]
        %v964 = vperm.slane %v962, 0
        %v970 = vunpack.c.l.b16 %v958
        %v971 = vunpack.c.l.b16 %v959
        %v972 = vunpack.c.l.b16 %v960
        %v973 = vunpack.c.l.b16 %v961
        %v974 = vpack.c.b16 %v971, %v970
        %v975 = vpack.c.b16 %v973, %v972
        %vm978 = vcmask 261120
        %v980 = vsel %vm978, %v957, 0
        %982 = vmatpush.bf16.msra.mxu0 0
        %983 = vmatpush.bf16.msra.mxu0 0
        %984 = vmatpush.bf16.msra.mxu0 0
        %985 = vmatpush.bf16.msra.mxu0 0
        %986 = vmatpush.bf16.msra.mxu0 0
        %987 = vmatpush.bf16.msra.mxu0 0
        %988 = vmatpush.bf16.msra.mxu0 %v975
        %989 = vmatpush.bf16.msra.mxu0 %v974
        %990 = vmatmul.bf16.gmra.mxu0 %v980
        %v991 = vpop.f32.mrf.mxu0
        %v992 = vadd.f32 %v964, %v991
        %v993 = vpop.f32.mrf.mxu0
        %994 = vdwg.mxu0
        %v995 = vpack.c.bf16 %v872, %v872
        %v996 = vld [vmem:[#allocation13] sm:$0xf]
        %v997 = vld [vmem:[#allocation13 + $0x4] sm:$0xf]
        %v998 = vld [vmem:[#allocation13 + $0x8] sm:$0xf]
        %v999 = vld [vmem:[#allocation13 + $0xc] sm:$0xf]
        %v1000 = vld [vmem:[#allocation14] sm:$0x1]
        %v1002 = vperm.slane %v1000, 0
        %v1008 = vunpack.c.l.b16 %v996
        %v1009 = vunpack.c.l.b16 %v997
        %v1010 = vunpack.c.l.b16 %v998
        %v1011 = vunpack.c.l.b16 %v999
        %v1012 = vpack.c.b16 %v1009, %v1008
        %v1013 = vpack.c.b16 %v1011, %v1010
        %v1017 = vsel %vm978, %v995, 0
        %1019 = vmatpush.bf16.msra.mxu0 0
        %1020 = vmatpush.bf16.msra.mxu0 0
        %1021 = vmatpush.bf16.msra.mxu0 0
        %1022 = vmatpush.bf16.msra.mxu0 0
        %1023 = vmatpush.bf16.msra.mxu0 0
        %1024 = vmatpush.bf16.msra.mxu0 0
        %1025 = vmatpush.bf16.msra.mxu0 %v1013
        %1026 = vmatpush.bf16.msra.mxu0 %v1012
        %1027 = vmatmul.bf16.gmra.mxu0 %v1017
        %v1028 = vpop.f32.mrf.mxu0
        %v1029 = vadd.f32 %v1002, %v1028
        %v1030 = vpop.f32.mrf.mxu0
        %1031 = vdwg.mxu0
        %v1032 = vpack.c.bf16 %v992, %v992
        %v1033 = vpack.c.bf16 %v1029, %v1029
        %1035 = vrot.lane.b32.xlu0 %v1032, 96
        %v1036 = vpop.permute.xlu0 %1035
        %v1038 = vsel %vm880, %v1032, 0
        %v1041 = vsel %vm880, %v1036, 0
        %1043 = vmatpush.bf16.xpose.msra.mxu0 0
        %1044 = vmatpush.bf16.xpose.msra.mxu0 0
        %1045 = vmatpush.bf16.xpose.msra.mxu0 0
        %1046 = vmatpush.bf16.xpose.msra.mxu0 0
        %1047 = vmatpush.bf16.xpose.msra.mxu0 0
        %1048 = vmatpush.bf16.xpose.msra.mxu0 0
        %1049 = vmatpush.bf16.xpose.msra.mxu0 0
        %1050 = vmatpush.bf16.xpose.msra.mxu0 %v1041
        %1051 = vmatmul.bf16.gmra.mxu0 %v1038
        %v1052 = vpop.f32.mrf.mxu0
        %v1053 = vadd.f32 0.0, %v1052
        %v1054 = vpop.f32.mrf.mxu0
        %1055 = vdwg.mxu0
        %v1056 = vmul.f32 %v1053, 0.5
        %vm1057 = vcmask 64512
        %v1058 = vsel %vm1057, %v1056, -inf
        %1059 = vmax.xlane.f32.xlu0 %v1058
        %v1060 = vpop.xlane.xlu0 %1059
        %v1061 = vsub.f32 %v1056, %v1060
        %v1062 = vmul.f32 %v1061, 1.442695
        %v1063 = vpow.pop %v1062
        %v1064 = vsel %vm1057, %v1063, 0.0
        %1065 = vadd.xlane.f32.xlu0 %v1064
        %v1066 = vpop.xlane.xlu0 %1065
        %v1067 = vrcp.pop %v1066
        %v1068 = vmul.f32 %v1063, %v1067
        %v1069 = vpack.c.bf16 %v1068, %v1068
        %v1071 = vsel %vm1057, %v1069, 0
        %vm1073 = vcmask 1043456
        %v1075 = vsel %vm1073, %v1033, 0
        %1077 = vmatpush.bf16.msra.mxu0 0
        %1078 = vmatpush.bf16.msra.mxu0 0
        %1079 = vmatpush.bf16.msra.mxu0 0
        %1080 = vmatpush.bf16.msra.mxu0 0
        %1081 = vmatpush.bf16.msra.mxu0 0
        %1082 = vmatpush.bf16.msra.mxu0 0
        %1083 = vmatpush.bf16.msra.mxu0 0
        %1084 = vmatpush.bf16.msra.mxu0 %v1075
        %1085 = vmatmul.bf16.gmra.mxu0 %v1071
        %v1086 = vpop.f32.mrf.mxu0
        %v1087 = vadd.f32 0.0, %v1086
        %v1088 = vpop.f32.mrf.mxu0
        %1089 = vdwg.mxu0
        %v1090 = vpack.c.bf16 %v1087, %v1087
        %v1091 = vld [vmem:[#allocation16] sm:$0x3]
        %1092 = vrot.lane.b32.xlu0 %v1032, 124
        %v1093 = vpop.permute.xlu0 %1092
        %1094 = vrot.lane.b32.xlu0 %v1032, 92
        %v1095 = vpop.permute.xlu0 %1094
        %v1097 = vsel %vm880, %v1093, 0
        %v1100 = vsel %vm880, %v1095, 0
        %1102 = vmatpush.bf16.xpose.msra.mxu0 0
        %1103 = vmatpush.bf16.xpose.msra.mxu0 0
        %1104 = vmatpush.bf16.xpose.msra.mxu0 0
        %1105 = vmatpush.bf16.xpose.msra.mxu0 0
        %1106 = vmatpush.bf16.xpose.msra.mxu0 0
        %1107 = vmatpush.bf16.xpose.msra.mxu0 0
        %1108 = vmatpush.bf16.xpose.msra.mxu0 0
        %1109 = vmatpush.bf16.xpose.msra.mxu0 %v1100
        %1110 = vmatmul.bf16.gmra.mxu0 %v1097
        %v1111 = vpop.f32.mrf.mxu0
        %v1112 = vadd.f32 0.0, %v1111
        %v1113 = vpop.f32.mrf.mxu0
        %1114 = vdwg.mxu0
        %v1115 = vmul.f32 %v1112, 0.5
        %v1116 = vsel %vm1057, %v1115, -inf
        %1117 = vmax.xlane.f32.xlu0 %v1116
        %v1118 = vpop.xlane.xlu0 %1117
        %v1119 = vsub.f32 %v1115, %v1118
        %v1120 = vmul.f32 %v1119, 1.442695
        %v1121 = vpow.pop %v1120
        %v1122 = vsel %vm1057, %v1121, 0.0
        %1123 = vadd.xlane.f32.xlu0 %v1122
        %v1124 = vpop.xlane.xlu0 %1123
        %v1125 = vrcp.pop %v1124
        %v1126 = vmul.f32 %v1121, %v1125
        %v1127 = vpack.c.bf16 %v1126, %v1126
        %1129 = vrot.lane.b32.xlu0 %v1033, 124
        %v1130 = vpop.permute.xlu0 %1129
        %v1132 = vsel %vm1057, %v1127, 0
        %v1135 = vsel %vm1073, %v1130, 0
        %1137 = vmatpush.bf16.msra.mxu0 0
        %1138 = vmatpush.bf16.msra.mxu0 0
        %1139 = vmatpush.bf16.msra.mxu0 0
        %1140 = vmatpush.bf16.msra.mxu0 0
        %1141 = vmatpush.bf16.msra.mxu0 0
        %1142 = vmatpush.bf16.msra.mxu0 0
        %1143 = vmatpush.bf16.msra.mxu0 0
        %1144 = vmatpush.bf16.msra.mxu0 %v1135
        %1145 = vmatmul.bf16.gmra.mxu0 %v1132
        %v1146 = vpop.f32.mrf.mxu0
        %v1147 = vadd.f32 0.0, %v1146
        %v1148 = vpop.f32.mrf.mxu0
        %1149 = vdwg.mxu0
        %v1150 = vpack.c.bf16 %v1147, %v1147
        %s1151 = scalar_lea.vmem [#allocation16], 2
        %v1152 = vld [vmem:[%s1151] sm:$0x3]
        %v1154 = vsel %vm880, %v1150, 0
        %v1157 = vsel %vm884, %v1152, 0
        %1159 = vmatpush.bf16.msra.mxu0 0
        %1160 = vmatpush.bf16.msra.mxu0 0
        %1161 = vmatpush.bf16.msra.mxu0 0
        %1162 = vmatpush.bf16.msra.mxu0 0
        %1163 = vmatpush.bf16.msra.mxu0 0
        %1164 = vmatpush.bf16.msra.mxu0 0
        %1165 = vmatpush.bf16.msra.mxu0 0
        %1166 = vmatpush.bf16.msra.mxu0 %v1157
        %1167 = vmatmul.bf16.gmra.mxu0 %v1154
        %v1168 = vpop.f32.mrf.mxu0
        %v1169 = vadd.f32 0.0, %v1168
        %v1170 = vpop.f32.mrf.mxu0
        %1171 = vdwg.mxu0
        %v1173 = vsel %vm880, %v1090, 0
        %v1176 = vsel %vm884, %v1091, 0
        %1178 = vmatpush.bf16.msra.mxu0 0
        %1179 = vmatpush.bf16.msra.mxu0 0
        %1180 = vmatpush.bf16.msra.mxu0 0
        %1181 = vmatpush.bf16.msra.mxu0 0
        %1182 = vmatpush.bf16.msra.mxu0 0
        %1183 = vmatpush.bf16.msra.mxu0 0
        %1184 = vmatpush.bf16.msra.mxu0 0
        %1185 = vmatpush.bf16.msra.mxu0 %v1176
        %1186 = vmatmul.bf16.gmra.mxu0 %v1173
        %v1187 = vpop.f32.mrf.mxu0
        %v1188 = vadd.f32 %v1169, %v1187
        %v1189 = vpop.f32.mrf.mxu0
        %1190 = vdwg.mxu0
        %1191 = vrot.lane.b32.xlu0 %v1032, 120
        %v1192 = vpop.permute.xlu0 %1191
        %1193 = vrot.lane.b32.xlu0 %v1032, 88
        %v1194 = vpop.permute.xlu0 %1193
        %v1196 = vsel %vm880, %v1192, 0
        %v1199 = vsel %vm880, %v1194, 0
        %1201 = vmatpush.bf16.xpose.msra.mxu0 0
        %1202 = vmatpush.bf16.xpose.msra.mxu0 0
        %1203 = vmatpush.bf16.xpose.msra.mxu0 0
        %1204 = vmatpush.bf16.xpose.msra.mxu0 0
        %1205 = vmatpush.bf16.xpose.msra.mxu0 0
        %1206 = vmatpush.bf16.xpose.msra.mxu0 0
        %1207 = vmatpush.bf16.xpose.msra.mxu0 0
        %1208 = vmatpush.bf16.xpose.msra.mxu0 %v1199
        %1209 = vmatmul.bf16.gmra.mxu0 %v1196
        %v1210 = vpop.f32.mrf.mxu0
        %v1211 = vadd.f32 0.0, %v1210
        %v1212 = vpop.f32.mrf.mxu0
        %1213 = vdwg.mxu0
        %v1214 = vmul.f32 %v1211, 0.5
        %v1215 = vsel %vm1057, %v1214, -inf
        %1216 = vmax.xlane.f32.xlu0 %v1215
        %v1217 = vpop.xlane.xlu0 %1216
        %v1218 = vsub.f32 %v1214, %v1217
        %v1219 = vmul.f32 %v1218, 1.442695
        %v1220 = vpow.pop %v1219
        %v1221 = vsel %vm1057, %v1220, 0.0
        %1222 = vadd.xlane.f32.xlu0 %v1221
        %v1223 = vpop.xlane.xlu0 %1222
        %v1224 = vrcp.pop %v1223
        %v1225 = vmul.f32 %v1220, %v1224
        %v1226 = vpack.c.bf16 %v1225, %v1225
        %1227 = vrot.lane.b32.xlu0 %v1033, 120
        %v1228 = vpop.permute.xlu0 %1227
        %v1230 = vsel %vm1057, %v1226, 0
        %v1233 = vsel %vm1073, %v1228, 0
        %1235 = vmatpush.bf16.msra.mxu0 0
        %1236 = vmatpush.bf16.msra.mxu0 0
        %1237 = vmatpush.bf16.msra.mxu0 0
        %1238 = vmatpush.bf16.msra.mxu0 0
        %1239 = vmatpush.bf16.msra.mxu0 0
        %1240 = vmatpush.bf16.msra.mxu0 0
        %1241 = vmatpush.bf16.msra.mxu0 0
        %1242 = vmatpush.bf16.msra.mxu0 %v1233
        %1243 = vmatmul.bf16.gmra.mxu0 %v1230
        %v1244 = vpop.f32.mrf.mxu0
        %v1245 = vadd.f32 0.0, %v1244
        %v1246 = vpop.f32.mrf.mxu0
        %1247 = vdwg.mxu0
        %v1248 = vpack.c.bf16 %v1245, %v1245
        %s1249 = scalar_lea.vmem [#allocation16], 4
        %v1250 = vld [vmem:[%s1249] sm:$0x3]
        %v1252 = vsel %vm880, %v1248, 0
        %v1255 = vsel %vm884, %v1250, 0
        %1257 = vmatpush.bf16.msra.mxu0 0
        %1258 = vmatpush.bf16.msra.mxu0 0
        %1259 = vmatpush.bf16.msra.mxu0 0
        %1260 = vmatpush.bf16.msra.mxu0 0
        %1261 = vmatpush.bf16.msra.mxu0 0
        %1262 = vmatpush.bf16.msra.mxu0 0
        %1263 = vmatpush.bf16.msra.mxu0 0
        %1264 = vmatpush.bf16.msra.mxu0 %v1255
        %1265 = vmatmul.bf16.gmra.mxu0 %v1252
        %v1266 = vpop.f32.mrf.mxu0
        %v1267 = vadd.f32 0.0, %v1266
        %v1268 = vpop.f32.mrf.mxu0
        %1269 = vdwg.mxu0
        %v1270 = vadd.f32 %v1188, %v1267
        %1271 = vrot.lane.b32.xlu0 %v1032, 116
        %v1272 = vpop.permute.xlu0 %1271
        %1273 = vrot.lane.b32.xlu0 %v1032, 84
        %v1274 = vpop.permute.xlu0 %1273
        %v1276 = vsel %vm880, %v1272, 0
        %v1279 = vsel %vm880, %v1274, 0
        %1281 = vmatpush.bf16.xpose.msra.mxu0 0
        %1282 = vmatpush.bf16.xpose.msra.mxu0 0
        %1283 = vmatpush.bf16.xpose.msra.mxu0 0
        %1284 = vmatpush.bf16.xpose.msra.mxu0 0
        %1285 = vmatpush.bf16.xpose.msra.mxu0 0
        %1286 = vmatpush.bf16.xpose.msra.mxu0 0
        %1287 = vmatpush.bf16.xpose.msra.mxu0 0
        %1288 = vmatpush.bf16.xpose.msra.mxu0 %v1279
        %1289 = vmatmul.bf16.gmra.mxu0 %v1276
        %v1290 = vpop.f32.mrf.mxu0
        %v1291 = vadd.f32 0.0, %v1290
        %v1292 = vpop.f32.mrf.mxu0
        %1293 = vdwg.mxu0
        %v1294 = vmul.f32 %v1291, 0.5
        %v1295 = vsel %vm1057, %v1294, -inf
        %1296 = vmax.xlane.f32.xlu0 %v1295
        %v1297 = vpop.xlane.xlu0 %1296
        %v1298 = vsub.f32 %v1294, %v1297
        %v1299 = vmul.f32 %v1298, 1.442695
        %v1300 = vpow.pop %v1299
        %v1301 = vsel %vm1057, %v1300, 0.0
        %1302 = vadd.xlane.f32.xlu0 %v1301
        %v1303 = vpop.xlane.xlu0 %1302
        %v1304 = vrcp.pop %v1303
        %v1305 = vmul.f32 %v1300, %v1304
        %v1306 = vpack.c.bf16 %v1305, %v1305
        %1307 = vrot.lane.b32.xlu0 %v1033, 116
        %v1308 = vpop.permute.xlu0 %1307
        %v1310 = vsel %vm1057, %v1306, 0
        %v1313 = vsel %vm1073, %v1308, 0
        %1315 = vmatpush.bf16.msra.mxu0 0
        %1316 = vmatpush.bf16.msra.mxu0 0
        %1317 = vmatpush.bf16.msra.mxu0 0
        %1318 = vmatpush.bf16.msra.mxu0 0
        %1319 = vmatpush.bf16.msra.mxu0 0
        %1320 = vmatpush.bf16.msra.mxu0 0
        %1321 = vmatpush.bf16.msra.mxu0 0
        %1322 = vmatpush.bf16.msra.mxu0 %v1313
        %1323 = vmatmul.bf16.gmra.mxu0 %v1310
        %v1324 = vpop.f32.mrf.mxu0
        %v1325 = vadd.f32 0.0, %v1324
        %v1326 = vpop.f32.mrf.mxu0
        %1327 = vdwg.mxu0
        %v1328 = vpack.c.bf16 %v1325, %v1325
        %s1329 = scalar_lea.vmem [#allocation16], 6
        %v1330 = vld [vmem:[%s1329] sm:$0x3]
        %v1332 = vsel %vm880, %v1328, 0
        %v1335 = vsel %vm884, %v1330, 0
        %1337 = vmatpush.bf16.msra.mxu0 0
        %1338 = vmatpush.bf16.msra.mxu0 0
        %1339 = vmatpush.bf16.msra.mxu0 0
        %1340 = vmatpush.bf16.msra.mxu0 0
        %1341 = vmatpush.bf16.msra.mxu0 0
        %1342 = vmatpush.bf16.msra.mxu0 0
        %1343 = vmatpush.bf16.msra.mxu0 0
        %1344 = vmatpush.bf16.msra.mxu0 %v1335
        %1345 = vmatmul.bf16.gmra.mxu0 %v1332
        %v1346 = vpop.f32.mrf.mxu0
        %v1347 = vadd.f32 0.0, %v1346
        %v1348 = vpop.f32.mrf.mxu0
        %1349 = vdwg.mxu0
        %v1350 = vadd.f32 %v1270, %v1347
        %1351 = vrot.lane.b32.xlu0 %v1032, 112
        %v1352 = vpop.permute.xlu0 %1351
        %1353 = vrot.lane.b32.xlu0 %v1032, 80
        %v1354 = vpop.permute.xlu0 %1353
        %v1356 = vsel %vm880, %v1352, 0
        %v1359 = vsel %vm880, %v1354, 0
        %1361 = vmatpush.bf16.xpose.msra.mxu0 0
        %1362 = vmatpush.bf16.xpose.msra.mxu0 0
        %1363 = vmatpush.bf16.xpose.msra.mxu0 0
        %1364 = vmatpush.bf16.xpose.msra.mxu0 0
        %1365 = vmatpush.bf16.xpose.msra.mxu0 0
        %1366 = vmatpush.bf16.xpose.msra.mxu0 0
        %1367 = vmatpush.bf16.xpose.msra.mxu0 0
        %1368 = vmatpush.bf16.xpose.msra.mxu0 %v1359
        %1369 = vmatmul.bf16.gmra.mxu0 %v1356
        %v1370 = vpop.f32.mrf.mxu0
        %v1371 = vadd.f32 0.0, %v1370
        %v1372 = vpop.f32.mrf.mxu0
        %1373 = vdwg.mxu0
        %v1374 = vmul.f32 %v1371, 0.5
        %v1375 = vsel %vm1057, %v1374, -inf
        %1376 = vmax.xlane.f32.xlu0 %v1375
        %v1377 = vpop.xlane.xlu0 %1376
        %v1378 = vsub.f32 %v1374, %v1377
        %v1379 = vmul.f32 %v1378, 1.442695
        %v1380 = vpow.pop %v1379
        %v1381 = vsel %vm1057, %v1380, 0.0
        %1382 = vadd.xlane.f32.xlu0 %v1381
        %v1383 = vpop.xlane.xlu0 %1382
        %v1384 = vrcp.pop %v1383
        %v1385 = vmul.f32 %v1380, %v1384
        %v1386 = vpack.c.bf16 %v1385, %v1385
        %1387 = vrot.lane.b32.xlu0 %v1033, 112
        %v1388 = vpop.permute.xlu0 %1387
        %v1390 = vsel %vm1057, %v1386, 0
        %v1393 = vsel %vm1073, %v1388, 0
        %1395 = vmatpush.bf16.msra.mxu0 0
        %1396 = vmatpush.bf16.msra.mxu0 0
        %1397 = vmatpush.bf16.msra.mxu0 0
        %1398 = vmatpush.bf16.msra.mxu0 0
        %1399 = vmatpush.bf16.msra.mxu0 0
        %1400 = vmatpush.bf16.msra.mxu0 0
        %1401 = vmatpush.bf16.msra.mxu0 0
        %1402 = vmatpush.bf16.msra.mxu0 %v1393
        %1403 = vmatmul.bf16.gmra.mxu0 %v1390
        %v1404 = vpop.f32.mrf.mxu0
        %v1405 = vadd.f32 0.0, %v1404
        %v1406 = vpop.f32.mrf.mxu0
        %1407 = vdwg.mxu0
        %v1408 = vpack.c.bf16 %v1405, %v1405
        %s1409 = scalar_lea.vmem [#allocation16], 8
        %v1410 = vld [vmem:[%s1409] sm:$0x3]
        %v1412 = vsel %vm880, %v1408, 0
        %v1415 = vsel %vm884, %v1410, 0
        %1417 = vmatpush.bf16.msra.mxu0 0
        %1418 = vmatpush.bf16.msra.mxu0 0
        %1419 = vmatpush.bf16.msra.mxu0 0
        %1420 = vmatpush.bf16.msra.mxu0 0
        %1421 = vmatpush.bf16.msra.mxu0 0
        %1422 = vmatpush.bf16.msra.mxu0 0
        %1423 = vmatpush.bf16.msra.mxu0 0
        %1424 = vmatpush.bf16.msra.mxu0 %v1415
        %1425 = vmatmul.bf16.gmra.mxu0 %v1412
        %v1426 = vpop.f32.mrf.mxu0
        %v1427 = vadd.f32 0.0, %v1426
        %v1428 = vpop.f32.mrf.mxu0
        %1429 = vdwg.mxu0
        %v1430 = vadd.f32 %v1350, %v1427
        %1431 = vrot.lane.b32.xlu0 %v1032, 108
        %v1432 = vpop.permute.xlu0 %1431
        %1433 = vrot.lane.b32.xlu0 %v1032, 76
        %v1434 = vpop.permute.xlu0 %1433
        %v1436 = vsel %vm880, %v1432, 0
        %v1439 = vsel %vm880, %v1434, 0
        %1441 = vmatpush.bf16.xpose.msra.mxu0 0
        %1442 = vmatpush.bf16.xpose.msra.mxu0 0
        %1443 = vmatpush.bf16.xpose.msra.mxu0 0
        %1444 = vmatpush.bf16.xpose.msra.mxu0 0
        %1445 = vmatpush.bf16.xpose.msra.mxu0 0
        %1446 = vmatpush.bf16.xpose.msra.mxu0 0
        %1447 = vmatpush.bf16.xpose.msra.mxu0 0
        %1448 = vmatpush.bf16.xpose.msra.mxu0 %v1439
        %1449 = vmatmul.bf16.gmra.mxu0 %v1436
        %v1450 = vpop.f32.mrf.mxu0
        %v1451 = vadd.f32 0.0, %v1450
        %v1452 = vpop.f32.mrf.mxu0
        %1453 = vdwg.mxu0
        %v1454 = vmul.f32 %v1451, 0.5
        %v1455 = vsel %vm1057, %v1454, -inf
        %1456 = vmax.xlane.f32.xlu0 %v1455
        %v1457 = vpop.xlane.xlu0 %1456
        %v1458 = vsub.f32 %v1454, %v1457
        %v1459 = vmul.f32 %v1458, 1.442695
        %v1460 = vpow.pop %v1459
        %v1461 = vsel %vm1057, %v1460, 0.0
        %1462 = vadd.xlane.f32.xlu0 %v1461
        %v1463 = vpop.xlane.xlu0 %1462
        %v1464 = vrcp.pop %v1463
        %v1465 = vmul.f32 %v1460, %v1464
        %v1466 = vpack.c.bf16 %v1465, %v1465
        %1467 = vrot.lane.b32.xlu0 %v1033, 108
        %v1468 = vpop.permute.xlu0 %1467
        %v1470 = vsel %vm1057, %v1466, 0
        %v1473 = vsel %vm1073, %v1468, 0
        %1475 = vmatpush.bf16.msra.mxu0 0
        %1476 = vmatpush.bf16.msra.mxu0 0
        %1477 = vmatpush.bf16.msra.mxu0 0
        %1478 = vmatpush.bf16.msra.mxu0 0
        %1479 = vmatpush.bf16.msra.mxu0 0
        %1480 = vmatpush.bf16.msra.mxu0 0
        %1481 = vmatpush.bf16.msra.mxu0 0
        %1482 = vmatpush.bf16.msra.mxu0 %v1473
        %1483 = vmatmul.bf16.gmra.mxu0 %v1470
        %v1484 = vpop.f32.mrf.mxu0
        %v1485 = vadd.f32 0.0, %v1484
        %v1486 = vpop.f32.mrf.mxu0
        %1487 = vdwg.mxu0
        %v1488 = vpack.c.bf16 %v1485, %v1485
        %s1489 = scalar_lea.vmem [#allocation16], 10
        %v1490 = vld [vmem:[%s1489] sm:$0x3]
        %v1492 = vsel %vm880, %v1488, 0
        %v1495 = vsel %vm884, %v1490, 0
        %1497 = vmatpush.bf16.msra.mxu0 0
        %1498 = vmatpush.bf16.msra.mxu0 0
        %1499 = vmatpush.bf16.msra.mxu0 0
        %1500 = vmatpush.bf16.msra.mxu0 0
        %1501 = vmatpush.bf16.msra.mxu0 0
        %1502 = vmatpush.bf16.msra.mxu0 0
        %1503 = vmatpush.bf16.msra.mxu0 0
        %1504 = vmatpush.bf16.msra.mxu0 %v1495
        %1505 = vmatmul.bf16.gmra.mxu0 %v1492
        %v1506 = vpop.f32.mrf.mxu0
        %v1507 = vadd.f32 0.0, %v1506
        %v1508 = vpop.f32.mrf.mxu0
        %1509 = vdwg.mxu0
        %v1510 = vadd.f32 %v1430, %v1507
        %1511 = vrot.lane.b32.xlu0 %v1032, 104
        %v1512 = vpop.permute.xlu0 %1511
        %1513 = vrot.lane.b32.xlu0 %v1032, 72
        %v1514 = vpop.permute.xlu0 %1513
        %v1516 = vsel %vm880, %v1512, 0
        %v1519 = vsel %vm880, %v1514, 0
        %1521 = vmatpush.bf16.xpose.msra.mxu0 0
        %1522 = vmatpush.bf16.xpose.msra.mxu0 0
        %1523 = vmatpush.bf16.xpose.msra.mxu0 0
        %1524 = vmatpush.bf16.xpose.msra.mxu0 0
        %1525 = vmatpush.bf16.xpose.msra.mxu0 0
        %1526 = vmatpush.bf16.xpose.msra.mxu0 0
        %1527 = vmatpush.bf16.xpose.msra.mxu0 0
        %1528 = vmatpush.bf16.xpose.msra.mxu0 %v1519
        %1529 = vmatmul.bf16.gmra.mxu0 %v1516
        %v1530 = vpop.f32.mrf.mxu0
        %v1531 = vadd.f32 0.0, %v1530
        %v1532 = vpop.f32.mrf.mxu0
        %1533 = vdwg.mxu0
        %v1534 = vmul.f32 %v1531, 0.5
        %v1535 = vsel %vm1057, %v1534, -inf
        %1536 = vmax.xlane.f32.xlu0 %v1535
        %v1537 = vpop.xlane.xlu0 %1536
        %v1538 = vsub.f32 %v1534, %v1537
        %v1539 = vmul.f32 %v1538, 1.442695
        %v1540 = vpow.pop %v1539
        %v1541 = vsel %vm1057, %v1540, 0.0
        %1542 = vadd.xlane.f32.xlu0 %v1541
        %v1543 = vpop.xlane.xlu0 %1542
        %v1544 = vrcp.pop %v1543
        %v1545 = vmul.f32 %v1540, %v1544
        %v1546 = vpack.c.bf16 %v1545, %v1545
        %1547 = vrot.lane.b32.xlu0 %v1033, 104
        %v1548 = vpop.permute.xlu0 %1547
        %v1550 = vsel %vm1057, %v1546, 0
        %v1553 = vsel %vm1073, %v1548, 0
        %1555 = vmatpush.bf16.msra.mxu0 0
        %1556 = vmatpush.bf16.msra.mxu0 0
        %1557 = vmatpush.bf16.msra.mxu0 0
        %1558 = vmatpush.bf16.msra.mxu0 0
        %1559 = vmatpush.bf16.msra.mxu0 0
        %1560 = vmatpush.bf16.msra.mxu0 0
        %1561 = vmatpush.bf16.msra.mxu0 0
        %1562 = vmatpush.bf16.msra.mxu0 %v1553
        %1563 = vmatmul.bf16.gmra.mxu0 %v1550
        %v1564 = vpop.f32.mrf.mxu0
        %v1565 = vadd.f32 0.0, %v1564
        %v1566 = vpop.f32.mrf.mxu0
        %1567 = vdwg.mxu0
        %v1568 = vpack.c.bf16 %v1565, %v1565
        %s1569 = scalar_lea.vmem [#allocation16], 12
        %v1570 = vld [vmem:[%s1569] sm:$0x3]
        %v1572 = vsel %vm880, %v1568, 0
        %v1575 = vsel %vm884, %v1570, 0
        %1577 = vmatpush.bf16.msra.mxu0 0
        %1578 = vmatpush.bf16.msra.mxu0 0
        %1579 = vmatpush.bf16.msra.mxu0 0
        %1580 = vmatpush.bf16.msra.mxu0 0
        %1581 = vmatpush.bf16.msra.mxu0 0
        %1582 = vmatpush.bf16.msra.mxu0 0
        %1583 = vmatpush.bf16.msra.mxu0 0
        %1584 = vmatpush.bf16.msra.mxu0 %v1575
        %1585 = vmatmul.bf16.gmra.mxu0 %v1572
        %v1586 = vpop.f32.mrf.mxu0
        %v1587 = vadd.f32 0.0, %v1586
        %v1588 = vpop.f32.mrf.mxu0
        %1589 = vdwg.mxu0
        %v1590 = vadd.f32 %v1510, %v1587
        %1591 = vrot.lane.b32.xlu0 %v1032, 100
        %v1592 = vpop.permute.xlu0 %1591
        %1593 = vrot.lane.b32.xlu0 %v1032, 68
        %v1594 = vpop.permute.xlu0 %1593
        %v1596 = vsel %vm880, %v1592, 0
        %v1599 = vsel %vm880, %v1594, 0
        %1601 = vmatpush.bf16.xpose.msra.mxu0 0
        %1602 = vmatpush.bf16.xpose.msra.mxu0 0
        %1603 = vmatpush.bf16.xpose.msra.mxu0 0
        %1604 = vmatpush.bf16.xpose.msra.mxu0 0
        %1605 = vmatpush.bf16.xpose.msra.mxu0 0
        %1606 = vmatpush.bf16.xpose.msra.mxu0 0
        %1607 = vmatpush.bf16.xpose.msra.mxu0 0
        %1608 = vmatpush.bf16.xpose.msra.mxu0 %v1599
        %1609 = vmatmul.bf16.gmra.mxu0 %v1596
        %v1610 = vpop.f32.mrf.mxu0
        %v1611 = vadd.f32 0.0, %v1610
        %v1612 = vpop.f32.mrf.mxu0
        %1613 = vdwg.mxu0
        %v1614 = vmul.f32 %v1611, 0.5
        %v1615 = vsel %vm1057, %v1614, -inf
        %1616 = vmax.xlane.f32.xlu0 %v1615
        %v1617 = vpop.xlane.xlu0 %1616
        %v1618 = vsub.f32 %v1614, %v1617
        %v1619 = vmul.f32 %v1618, 1.442695
        %v1620 = vpow.pop %v1619
        %v1621 = vsel %vm1057, %v1620, 0.0
        %1622 = vadd.xlane.f32.xlu0 %v1621
        %v1623 = vpop.xlane.xlu0 %1622
        %v1624 = vrcp.pop %v1623
        %v1625 = vmul.f32 %v1620, %v1624
        %v1626 = vpack.c.bf16 %v1625, %v1625
        %1627 = vrot.lane.b32.xlu0 %v1033, 100
        %v1628 = vpop.permute.xlu0 %1627
        %v1630 = vsel %vm1057, %v1626, 0
        %v1633 = vsel %vm1073, %v1628, 0
        %1635 = vmatpush.bf16.msra.mxu0 0
        %1636 = vmatpush.bf16.msra.mxu0 0
        %1637 = vmatpush.bf16.msra.mxu0 0
        %1638 = vmatpush.bf16.msra.mxu0 0
        %1639 = vmatpush.bf16.msra.mxu0 0
        %1640 = vmatpush.bf16.msra.mxu0 0
        %1641 = vmatpush.bf16.msra.mxu0 0
        %1642 = vmatpush.bf16.msra.mxu0 %v1633
        %1643 = vmatmul.bf16.gmra.mxu0 %v1630
        %v1644 = vpop.f32.mrf.mxu0
        %v1645 = vadd.f32 0.0, %v1644
        %v1646 = vpop.f32.mrf.mxu0
        %1647 = vdwg.mxu0
        %v1648 = vpack.c.bf16 %v1645, %v1645
        %s1649 = scalar_lea.vmem [#allocation16], 14
        %v1650 = vld [vmem:[%s1649] sm:$0x3]
        %v1652 = vsel %vm880, %v1648, 0
        %v1655 = vsel %vm884, %v1650, 0
        %1657 = vmatpush.bf16.msra.mxu0 0
        %1658 = vmatpush.bf16.msra.mxu0 0
        %1659 = vmatpush.bf16.msra.mxu0 0
        %1660 = vmatpush.bf16.msra.mxu0 0
        %1661 = vmatpush.bf16.msra.mxu0 0
        %1662 = vmatpush.bf16.msra.mxu0 0
        %1663 = vmatpush.bf16.msra.mxu0 0
        %1664 = vmatpush.bf16.msra.mxu0 %v1655
        %1665 = vmatmul.bf16.gmra.mxu0 %v1652
        %v1666 = vpop.f32.mrf.mxu0
        %v1667 = vadd.f32 0.0, %v1666
        %v1668 = vpop.f32.mrf.mxu0
        %1669 = vdwg.mxu0
        %v1670 = vadd.f32 %v1590, %v1667
        %v1671 = vld [vmem:[#allocation17] sm:$0x1]
        %v1673 = vperm.slane %v1671, 0
        %v1675 = vadd.f32 %v1670, %v1673
        %v1676 = vadd.f32 %v872, %v1675
        %v1677 = vld [vmem:[#allocation19] sm:$0x1]
        %v1678 = vld [vmem:[#allocation20] sm:$0x1]
        %v1679 = vsel %vm978, %v1676, 0.0
        %1680 = vadd.xlane.f32.xlu0 %v1679
        %v1681 = vpop.xlane.xlu0 %1680
        %v1682 = vrcp.pop 32.0
        %v1683 = vmul.f32 32.0, %v1682
        %v1684 = vsub.f32 1.0, %v1683
        %v1685 = vmul.f32 %v1682, %v1684
        %v1686 = vadd.f32 %v1682, %v1685
        %vm1687 = vweird.f32 %v1682
        %v1688 = vsel %vm1687, %v1682, %v1686
        %v1689 = vmul.f32 %v1681, %v1688
        %v1690 = vsub.f32 %v1676, %v1689
        %v1691 = vmul.f32 %v1690, %v1690
        %v1692 = vsel %vm978, %v1691, 0.0
        %1693 = vadd.xlane.f32.xlu0 %v1692
        %v1694 = vpop.xlane.xlu0 %1693
        %v1695 = vmul.f32 %v1694, %v1688
        %v1696 = vadd.f32 %v1695, 1e-05
        %v1697 = vrsqrt.pop %v1696
        %v1698 = vmul.f32 %v1697, %v1696
        %v1699 = vmul.f32 %v1698, %v1697
        %v1700 = vmul.f32 0.5, %v1699
        %v1701 = vsub.f32 1.5, %v1700
        %v1702 = vmul.f32 %v1697, %v1701
        %vm1703 = vweird.f32 %v1696
        %vm1704 = vweird.f32 %v1697
        %vm1705 = vmor %vm1703, %vm1704
        %v1706 = vsel %vm1705, %v1697, %v1702
        %v1707 = vmul.f32 %v1690, %v1706
        %v1709 = vperm.slane %v1677, 0
        %v1711 = vmul.f32 %v1707, %v1709
        %v1713 = vperm.slane %v1678, 0
        %v1715 = vadd.f32 %v1711, %v1713
        %1716 = vst.msk [vmem:[%s849] sm:$0xff] %vm978, %v1715
        %v1717 = vadd.f32 %v1715, %v953
        %v1718 = vpack.c.bf16 %v1717, %v1717
        %v1719 = vld [vmem:[#allocation22] sm:$0xff]
        %v1720 = vld [vmem:[#allocation22 + $0x8] sm:$0xff]
        %v1721 = vld [vmem:[#allocation22 + $0x10] sm:$0xff]
        %v1722 = vld [vmem:[#allocation22 + $0x18] sm:$0xff]
        %v1723 = vld [vmem:[#allocation23] sm:$0x3]
        %v1725 = vperm.slane %v1723, 0
        %v1726 = vperm.slane %v1723, 1
        %v1733 = vunpack.c.l.b16 %v1719
        %v1734 = vunpack.c.h.b16 %v1719
        %v1735 = vunpack.c.l.b16 %v1720
        %v1736 = vunpack.c.h.b16 %v1720
        %v1737 = vunpack.c.l.b16 %v1721
        %v1738 = vunpack.c.h.b16 %v1721
        %v1739 = vunpack.c.l.b16 %v1722
        %v1740 = vunpack.c.h.b16 %v1722
        %v1741 = vpack.c.b16 %v1735, %v1733
        %v1742 = vpack.c.b16 %v1736, %v1734
        %v1743 = vpack.c.b16 %v1739, %v1737
        %v1744 = vpack.c.b16 %v1740, %v1738
        %v1750 = vsel %vm978, %v1718, 0
        %1752 = vmatpush.bf16.msra.mxu0 0
        %1753 = vmatpush.bf16.msra.mxu0 0
        %1754 = vmatpush.bf16.msra.mxu0 0
        %1755 = vmatpush.bf16.msra.mxu0 0
        %1756 = vmatpush.bf16.msra.mxu0 0
        %1757 = vmatpush.bf16.msra.mxu0 0
        %1758 = vmatpush.bf16.msra.mxu0 %v1743
        %1759 = vmatpush.bf16.msra.mxu0 %v1741
        %1760 = vmatmul.bf16.gmra.mxu0 %v1750
        %v1761 = vpop.f32.mrf.mxu0
        %v1762 = vadd.f32 %v1725, %v1761
        %v1763 = vpop.f32.mrf.mxu0
        %1764 = vdwg.mxu0
        %1765 = vmatpush.bf16.msra.mxu0 0
        %1766 = vmatpush.bf16.msra.mxu0 0
        %1767 = vmatpush.bf16.msra.mxu0 0
        %1768 = vmatpush.bf16.msra.mxu0 0
        %1769 = vmatpush.bf16.msra.mxu0 0
        %1770 = vmatpush.bf16.msra.mxu0 0
        %1771 = vmatpush.bf16.msra.mxu0 %v1744
        %1772 = vmatpush.bf16.msra.mxu0 %v1742
        %1773 = vmatmul.bf16.gmra.mxu0 %v1750
        %v1774 = vpop.f32.mrf.mxu0
        %v1775 = vadd.f32 %v1726, %v1774
        %v1776 = vpop.f32.mrf.mxu0
        %1777 = vdwg.mxu0
        %v1778 = vlaneseq
        %v1779 = vand.u32 %v1778, 127
        %v1780 = vand.u32 %v1779, 1
        %vm1781 = vcmp.eq.s32.totalorder %v1780, 0
        %1783 = vset.pattern.permute.xlu0 0
        %1784 = vperm.xlu0 %1783, %v873
        %v1785 = vpop.permute.xlu0 %1784
        %1787 = vset.pattern.permute.xlu0 1
        %1788 = vperm.xlu0 %1787, %v873
        %v1789 = vpop.permute.xlu0 %1788
        %v1791 = vsel %vm1781, %v1785, %v1789
        %1792 = vset.pattern.permute.xlu0 2
        %1793 = vperm.xlu0 %1792, %v873
        %v1794 = vpop.permute.xlu0 %1793
        %1796 = vset.pattern.permute.xlu0 3
        %1797 = vperm.xlu0 %1796, %v873
        %v1798 = vpop.permute.xlu0 %1797
        %v1800 = vsel %vm1781, %v1794, %v1798
        %v1801 = vmul.f32 %v1762, 0.125
        %v1802 = vmul.f32 %v1801, %v1800
        %v1803 = vadd.f32 %v1791, %v1802
        %1804 = vst [vmem:[%s870] sm:$0xff] %v1803
        %v1805 = vsel %vm939, %v1775, -inf
        %1806 = vmax.xlane.f32.xlu0 %v1805
        %v1807 = vpop.xlane.xlu0 %1806
        %v1808 = vsub.f32 %v1775, %v1807
        %v1809 = vmul.f32 %v1808, 1.442695
        %v1810 = vpow.pop %v1809
        %v1811 = vld [vmem:[#allocation25] sm:$0xff]
        %v1812 = vld [vmem:[#allocation25 + $0x8] sm:$0xff]
        %v1813 = vld [vmem:[#allocation25 + $0x10] sm:$0xff]
        %v1814 = vld [vmem:[#allocation25 + $0x18] sm:$0xff]
        %v1815 = vld [vmem:[#allocation25 + $0x20] sm:$0xff]
        %v1816 = vld [vmem:[#allocation25 + $0x28] sm:$0xff]
        %v1817 = vld [vmem:[#allocation25 + $0x30] sm:$0xff]
        %v1818 = vld [vmem:[#allocation25 + $0x38] sm:$0xff]
        %v1820 = vsel %vm939, %v1810, 0
        %1822 = vmatpush.msra.mxu0 0.0
        %1823 = vmatpush.msra.mxu0 0.0
        %1824 = vmatpush.msra.mxu0 0.0
        %1825 = vmatpush.msra.mxu0 0.0
        %1826 = vmatpush.msra.mxu0 0.0
        %1827 = vmatpush.msra.mxu0 0.0
        %1828 = vmatpush.msra.mxu0 0.0
        %1829 = vmatpush.msra.mxu0 0.0
        %1830 = vmatpush.msra.mxu0 %v1818
        %1831 = vmatpush.msra.mxu0 %v1817
        %1832 = vmatpush.msra.mxu0 %v1816
        %1833 = vmatpush.msra.mxu0 %v1815
        %1834 = vmatpush.msra.mxu0 %v1814
        %1835 = vmatpush.msra.mxu0 %v1813
        %1836 = vmatpush.msra.mxu0 %v1812
        %1837 = vmatpush.msra.mxu0 %v1811
        %1838 = vmatmul.f32.gmra.mxu0 %v1820
        %v1839 = vpop.f32.mrf.mxu0
        %v1840 = vadd.f32 0.0, %v1839
        %1841 = vdwg.mxu0
        %v1842 = vrcp.pop %v1840
        %v1843 = vmul.f32 %v1810, %v1842
        %1844 = vst.msk [vmem:[%s862] sm:$0xff] %vm939, %v1843
        %s1845 = sand.u32 %s422, 1
        %s1846 = scalar_lea.sflag [#allocation4], %s1845
        %s1847 = sand.u32 %s422, 1
        %s1848 = smul.addr %s1847, 8
        %s1849 = scalar_lea.vmem [#allocation26], %s1848
        %p1850 = scmp.lt.s32.totalorder %s47, 1
        %s1851 = scalar_select %p1850, %s47, 1
        %s1852 = smul.addr %s1851, 8
        %s1853 = scalar_lea.vmem %s18, %s1852
        %s1854 = sand.u32 %s474, 1
        %s1855 = scalar_lea.sflag [#allocation28], %s1854
        %s1856 = sand.u32 %s474, 1
        %s1857 = smul.addr %s1856, 8
        %s1858 = scalar_lea.vmem [#allocation27], %s1857
        // Predicated region
        $region149: #{transformer_decoder_forward.9} parent=87 // pred_check
          %p1859 = pneg %p432
        $region150: #{transformer_decoder_forward.9} parent=87 // pred_check_branch
          %1861 = sbr.rel (%p1859) target = $region152
        $region151: #{transformer_decoder_forward.9} parent=87 // pred_region
          %1863 = vsyncadd %s1846, 0
          %s1864 = smul.addr %s47, 8
          %s1865 = scalar_lea.hbm %s17, %s1864
          %s1867 = sshll.u32 %s1849, 4
          %s1868 = int_to_ptr.vmem [resolvable:$true] %s1867
          %s1869 = sshll.u32 %s1865, 4
          %s1870 = int_to_ptr.hbm [resolvable:$true] %s1869
          %1872 = dma.vmem_to_hbm [thread:$0]  %s1868, 128, %s1870, %s1846
        $region152: #{transformer_decoder_forward.9} parent=87 // pred_fallthru
          _
        // Predicated region
        $region153: #{transformer_decoder_forward.9} parent=87 // pred_check
          %p1873 = pneg %p458
        $region154: #{transformer_decoder_forward.9} parent=87 // pred_check_branch
          %1875 = sbr.rel (%p1873) target = $region156
        $region155: #{transformer_decoder_forward.9} parent=87 // pred_region
          _
        $region156: #{transformer_decoder_forward.9} parent=87 // pred_fallthru
          _
        // Predicated region
        $region157: #{transformer_decoder_forward.9} parent=87 // pred_check
          %p1876 = pneg %p484
        $region158: #{transformer_decoder_forward.9} parent=87 // pred_check_branch
          %1878 = sbr.rel (%p1876) target = $region160
        $region159: #{transformer_decoder_forward.9} parent=87 // pred_region
          %1880 = vsyncadd %s1855, 0
          %s1881 = smul.addr %s47, 8
          %s1882 = scalar_lea.hbm %s19, %s1881
          %s1884 = sshll.u32 %s1858, 4
          %s1885 = int_to_ptr.vmem [resolvable:$true] %s1884
          %s1886 = sshll.u32 %s1882, 4
          %s1887 = int_to_ptr.hbm [resolvable:$true] %s1886
          %1889 = dma.vmem_to_hbm [thread:$0]  %s1885, 128, %s1887, %s1855
        $region160: #{transformer_decoder_forward.9} parent=87 // pred_fallthru
          _
      $region88: #{transformer_decoder_forward.9} parent=5 // pred_fallthru
        _
      %p1890 = scmp.le.s32.totalorder 2, %s42
      // Predicated region
      $region161: #{transformer_decoder_forward.9} parent=5 // pred_check
        %p1891 = pneg %p1890
      $region162: #{transformer_decoder_forward.9} parent=5 // pred_check_branch
        %1893 = sbr.rel (%p1891) target = $region164
      $region163: #{transformer_decoder_forward.9} parent=5 // pred_region
        %s1894 = ssub.s32 %s42, 2
        // Predicated region
        $region165: #{transformer_decoder_forward.9} parent=163 // pred_check
          %p1895 = pneg %p438
        $region166: #{transformer_decoder_forward.9} parent=163 // pred_check_branch
          %1897 = sbr.rel (%p1895) target = $region168
        $region167: #{transformer_decoder_forward.9} parent=163 // pred_region
          %s1898 = sand.u32 %s423, 1
          %s1899 = scalar_lea.sflag [#allocation4], %s1898
          %s1900 = sand.u32 %s423, 1
          %s1901 = smul.addr %s1900, 8
          %s1902 = scalar_lea.vmem [#allocation26], %s1901
          %1904 = dma.done %s1899, 128
        $region168: #{transformer_decoder_forward.9} parent=163 // pred_fallthru
          _
        // Predicated region
        $region169: #{transformer_decoder_forward.9} parent=163 // pred_check
          %p1905 = pneg %p464
        $region170: #{transformer_decoder_forward.9} parent=163 // pred_check_branch
          %1907 = sbr.rel (%p1905) target = $region172
        $region171: #{transformer_decoder_forward.9} parent=163 // pred_region
          %p1908 = scmp.lt.s32.totalorder %s48, 1
          %s1909 = scalar_select %p1908, %s48, 1
          %s1910 = smul.addr %s1909, 8
          %s1911 = scalar_lea.vmem %s18, %s1910
        $region172: #{transformer_decoder_forward.9} parent=163 // pred_fallthru
          _
        // Predicated region
        $region173: #{transformer_decoder_forward.9} parent=163 // pred_check
          %p1912 = pneg %p490
        $region174: #{transformer_decoder_forward.9} parent=163 // pred_check_branch
          %1914 = sbr.rel (%p1912) target = $region176
        $region175: #{transformer_decoder_forward.9} parent=163 // pred_region
          %s1915 = sand.u32 %s475, 1
          %s1916 = scalar_lea.sflag [#allocation28], %s1915
          %s1917 = sand.u32 %s475, 1
          %s1918 = smul.addr %s1917, 8
          %s1919 = scalar_lea.vmem [#allocation27], %s1918
          %1921 = dma.done %s1916, 128
        $region176: #{transformer_decoder_forward.9} parent=163 // pred_fallthru
          _
      $region164: #{transformer_decoder_forward.9} parent=5 // pred_fallthru
        _
    $region6: #{transformer_decoder_forward.9} parent=1 // loop_footer
      %s46 = sadd.s32 1, %s42
    $region7: #{transformer_decoder_forward.9} parent=1 // loop_footer_branch
      %41 = sbr.rel target = $region3
    $region8: #{transformer_decoder_forward.9} parent=1 // loop_exit
      _
    %1922 = vsyncpa [#allocation3], 1
    %s1923 = scalar_lea.sflag [#allocation3], 1
    %1924 = vsyncpa %s1923, 1
    %1925 = vsyncpa [#allocation6], 1
    %1926 = vsyncpa [#allocation9], 1
    %1927 = vsyncpa [#allocation12], 1
    %1928 = vsyncpa [#allocation15], 1
    %1929 = vsyncpa [#allocation18], 1
    %1930 = vsyncpa [#allocation21], 1
    %1931 = vsyncpa [#allocation24], 1
    %1932 = vsyncpa [#allocation4], 1
    %s1933 = scalar_lea.sflag [#allocation4], 1
    %1934 = vsyncpa %s1933, 1
    %1935 = vsyncpa [#allocation28], 1
    %s1936 = scalar_lea.sflag [#allocation28], 1
    %1937 = vsyncpa %s1936, 1

// kernel: transformer_decoder_forward.10
$region0: #{transformer_decoder_forward.10}
  #allocation0 [shape = 'u32[]', space=smem, size = 0x4, offset = 0x4, fixed_abs, tag = 'smem constant byte address 0x4 - core index']
  #allocation1 [shape = 'u32[72,128]{1,0:T(1,128)}', space=vmem, size = 0x9000, scoped, tag = 'internal scratch']
  %s0 = inlined_call_operand.vmem [shape: f32[40,32], index: 0, kind: input, shape index: {}]
  %s1 = inlined_call_operand.vmem [shape: bf16[32,32], index: 1, kind: input, shape index: {}]
  %s2 = inlined_call_operand.vmem [shape: f32[1,32], index: 2, kind: input, shape index: {}]
  %s3 = inlined_call_operand.vmem [shape: f32[40,32], index: 3, kind: output, shape index: {}]
  %s4 = sld [smem:[#allocation0]]
  $region22: #{transformer_decoder_forward.10} parent=0
    _
  %s6 = ssub.s32 1, %s4
  %s7 = scalar_select 0, %s6, %s4
  // Predicated region
  $region2: #{transformer_decoder_forward.10} parent=0 // pred_check
    _
  $region3: #{transformer_decoder_forward.10} parent=0 // pred_check_branch
    %9 = sbr.rel (0) target = $region5
  $region4: #{transformer_decoder_forward.10} parent=0 // pred_region
    _
  $region5: #{transformer_decoder_forward.10} parent=0 // pred_fallthru
    _
  // Predicated region
  $region6: #{transformer_decoder_forward.10} parent=0 // pred_check
    _
  $region7: #{transformer_decoder_forward.10} parent=0 // pred_check_branch
    %11 = sbr.rel (0) target = $region9
  $region8: #{transformer_decoder_forward.10} parent=0 // pred_region
    _
  $region9: #{transformer_decoder_forward.10} parent=0 // pred_fallthru
    _
  // Predicated region
  $region10: #{transformer_decoder_forward.10} parent=0 // pred_check
    _
  $region11: #{transformer_decoder_forward.10} parent=0 // pred_check_branch
    %13 = sbr.rel (0) target = $region13
  $region12: #{transformer_decoder_forward.10} parent=0 // pred_region
    _
  $region13: #{transformer_decoder_forward.10} parent=0 // pred_fallthru
    _
  %v15 = vld [vmem:[%s0] sm:$0xff]
  %v16 = vld [vmem:[%s0 + $0x8] sm:$0xff]
  %v17 = vld [vmem:[%s0 + $0x10] sm:$0xff]
  %v18 = vld [vmem:[%s0 + $0x18] sm:$0xff]
  %v19 = vld [vmem:[%s0 + $0x20] sm:$0xff]
  %v20 = vpack.c.bf16 %v16, %v15
  %v21 = vpack.c.bf16 %v18, %v17
  %v22 = vpack.c.bf16 %v19, %v19
  %v23 = vld [vmem:[%s1] sm:$0xf]
  %v24 = vld [vmem:[%s1 + $0x4] sm:$0xf]
  %v25 = vld [vmem:[%s1 + $0x8] sm:$0xf]
  %v26 = vld [vmem:[%s1 + $0xc] sm:$0xf]
  %v27 = vld [vmem:[%s2] sm:$0x1]
  %v29 = vperm.slane %v27, 0
  %v35 = vunpack.c.l.b16 %v23
  %v36 = vunpack.c.l.b16 %v24
  %v37 = vunpack.c.l.b16 %v25
  %v38 = vunpack.c.l.b16 %v26
  %v39 = vpack.c.b16 %v36, %v35
  %v40 = vpack.c.b16 %v38, %v37
  %vm43 = vcmask 261120
  %v45 = vsel %vm43, %v20, 0
  %v48 = vsel %vm43, %v21, 0
  %v51 = vsel %vm43, %v22, 0
  %53 = vmatpush.bf16.msra.mxu0 0
  %54 = vmatpush.bf16.msra.mxu0 0
  %55 = vmatpush.bf16.msra.mxu0 0
  %56 = vmatpush.bf16.msra.mxu0 0
  %57 = vmatpush.bf16.msra.mxu0 0
  %58 = vmatpush.bf16.msra.mxu0 0
  %59 = vmatpush.bf16.msra.mxu0 %v40
  %60 = vmatpush.bf16.msra.mxu0 %v39
  %61 = vmatmul.bf16.gmra.mxu0 %v45
  %v62 = vpop.f32.mrf.mxu0
  %v63 = vadd.f32 %v29, %v62
  %v64 = vpop.f32.mrf.mxu0
  %v65 = vadd.f32 %v29, %v64
  %66 = vmatmul.bf16.gmra.mxu0 %v48
  %v67 = vpop.f32.mrf.mxu0
  %v68 = vadd.f32 %v29, %v67
  %v69 = vpop.f32.mrf.mxu0
  %v70 = vadd.f32 %v29, %v69
  %71 = vmatmul.bf16.gmra.mxu0 %v51
  %v72 = vpop.f32.mrf.mxu0
  %v73 = vadd.f32 %v29, %v72
  %v74 = vpop.f32.mrf.mxu0
  %75 = vdwg.mxu0
  %76 = vst.msk [vmem:[%s3] sm:$0xff] %vm43, %v63
  %77 = vst.msk [vmem:[%s3 + $0x8] sm:$0xff] %vm43, %v65
  %78 = vst.msk [vmem:[%s3 + $0x10] sm:$0xff] %vm43, %v68
  %79 = vst.msk [vmem:[%s3 + $0x18] sm:$0xff] %vm43, %v70
  %80 = vst.msk [vmem:[%s3 + $0x20] sm:$0xff] %vm43, %v73
  // Predicated region
  $region14: #{transformer_decoder_forward.10} parent=0 // pred_check
    _
  $region15: #{transformer_decoder_forward.10} parent=0 // pred_check_branch
    %82 = sbr.rel (0) target = $region17
  $region16: #{transformer_decoder_forward.10} parent=0 // pred_region
    _
  $region17: #{transformer_decoder_forward.10} parent=0 // pred_fallthru
    _
  // Predicated region
  $region18: #{transformer_decoder_forward.10} parent=0 // pred_check
    _
  $region19: #{transformer_decoder_forward.10} parent=0 // pred_check_branch
    %84 = sbr.rel (0) target = $region21
  $region20: #{transformer_decoder_forward.10} parent=0 // pred_region
    _
  $region21: #{transformer_decoder_forward.10} parent=0 // pred_fallthru
    _

// kernel: transformer_decoder_forward.11
$region0: #{transformer_decoder_forward.11}
  #allocation0 [shape = 'u32[]', space=smem, size = 0x4, offset = 0x4, fixed_abs, tag = 'smem constant byte address 0x4 - core index']
  #allocation1 [shape = 'u32[72,128]{1,0:T(1,128)}', space=vmem, size = 0x9000, scoped, tag = 'internal scratch']
  %s0 = inlined_call_operand.vmem [shape: f32[16,32], index: 0, kind: input, shape index: {}]
  %s1 = inlined_call_operand.vmem [shape: f32[16,32], index: 1, kind: input, shape index: {}]
  %s2 = inlined_call_operand.vmem [shape: bf16[32,32], index: 2, kind: input, shape index: {}]
  %s3 = inlined_call_operand.vmem [shape: f32[1,32], index: 3, kind: input, shape index: {}]
  %s4 = inlined_call_operand.vmem [shape: f32[1,32], index: 4, kind: input, shape index: {}]
  %s5 = inlined_call_operand.vmem [shape: f32[1,32], index: 5, kind: input, shape index: {}]
  %s6 = inlined_call_operand.vmem [shape: bf16[32,64], index: 6, kind: input, shape index: {}]
  %s7 = inlined_call_operand.vmem [shape: f32[1,64], index: 7, kind: input, shape index: {}]
  %s8 = inlined_call_operand.vmem [shape: bf16[64,32], index: 8, kind: input, shape index: {}]
  %s9 = inlined_call_operand.vmem [shape: f32[1,32], index: 9, kind: input, shape index: {}]
  %s10 = inlined_call_operand.vmem [shape: f32[1,32], index: 10, kind: input, shape index: {}]
  %s11 = inlined_call_operand.vmem [shape: f32[1,32], index: 11, kind: input, shape index: {}]
  %s12 = inlined_call_operand.vmem [shape: bf16[32,32], index: 12, kind: input, shape index: {}]
  %s13 = inlined_call_operand.vmem [shape: f32[1,32], index: 13, kind: input, shape index: {}]
  %s14 = inlined_call_operand.vmem [shape: bf16[32,32], index: 14, kind: input, shape index: {}]
  %s15 = inlined_call_operand.vmem [shape: f32[1,32], index: 15, kind: input, shape index: {}]
  %s16 = inlined_call_operand.vmem [shape: bf16[32,20], index: 16, kind: input, shape index: {}]
  %s17 = inlined_call_operand.vmem [shape: bf16[32,20], index: 17, kind: input, shape index: {}]
  %s18 = inlined_call_operand.vmem [shape: f32[1,20], index: 18, kind: input, shape index: {}]
  %s19 = inlined_call_operand.vmem [shape: f32[16,32], index: 19, kind: output, shape index: {0}]
  %s20 = inlined_call_operand.vmem [shape: f32[16,20], index: 20, kind: output, shape index: {1}]
  %21 = xla_tuple %s19, %s20
  %s22 = sld [smem:[#allocation0]]
  $region94: #{transformer_decoder_forward.11} parent=0
    _
  %s24 = ssub.s32 1, %s22
  %s25 = scalar_select 0, %s24, %s22
  // Predicated region
  $region2: #{transformer_decoder_forward.11} parent=0 // pred_check
    _
  $region3: #{transformer_decoder_forward.11} parent=0 // pred_check_branch
    %27 = sbr.rel (0) target = $region5
  $region4: #{transformer_decoder_forward.11} parent=0 // pred_region
    _
  $region5: #{transformer_decoder_forward.11} parent=0 // pred_fallthru
    _
  // Predicated region
  $region6: #{transformer_decoder_forward.11} parent=0 // pred_check
    _
  $region7: #{transformer_decoder_forward.11} parent=0 // pred_check_branch
    %29 = sbr.rel (0) target = $region9
  $region8: #{transformer_decoder_forward.11} parent=0 // pred_region
    _
  $region9: #{transformer_decoder_forward.11} parent=0 // pred_fallthru
    _
  // Predicated region
  $region10: #{transformer_decoder_forward.11} parent=0 // pred_check
    _
  $region11: #{transformer_decoder_forward.11} parent=0 // pred_check_branch
    %31 = sbr.rel (0) target = $region13
  $region12: #{transformer_decoder_forward.11} parent=0 // pred_region
    _
  $region13: #{transformer_decoder_forward.11} parent=0 // pred_fallthru
    _
  // Predicated region
  $region14: #{transformer_decoder_forward.11} parent=0 // pred_check
    _
  $region15: #{transformer_decoder_forward.11} parent=0 // pred_check_branch
    %33 = sbr.rel (0) target = $region17
  $region16: #{transformer_decoder_forward.11} parent=0 // pred_region
    _
  $region17: #{transformer_decoder_forward.11} parent=0 // pred_fallthru
    _
  // Predicated region
  $region18: #{transformer_decoder_forward.11} parent=0 // pred_check
    _
  $region19: #{transformer_decoder_forward.11} parent=0 // pred_check_branch
    %35 = sbr.rel (0) target = $region21
  $region20: #{transformer_decoder_forward.11} parent=0 // pred_region
    _
  $region21: #{transformer_decoder_forward.11} parent=0 // pred_fallthru
    _
  // Predicated region
  $region22: #{transformer_decoder_forward.11} parent=0 // pred_check
    _
  $region23: #{transformer_decoder_forward.11} parent=0 // pred_check_branch
    %37 = sbr.rel (0) target = $region25
  $region24: #{transformer_decoder_forward.11} parent=0 // pred_region
    _
  $region25: #{transformer_decoder_forward.11} parent=0 // pred_fallthru
    _
  // Predicated region
  $region26: #{transformer_decoder_forward.11} parent=0 // pred_check
    _
  $region27: #{transformer_decoder_forward.11} parent=0 // pred_check_branch
    %39 = sbr.rel (0) target = $region29
  $region28: #{transformer_decoder_forward.11} parent=0 // pred_region
    _
  $region29: #{transformer_decoder_forward.11} parent=0 // pred_fallthru
    _
  // Predicated region
  $region30: #{transformer_decoder_forward.11} parent=0 // pred_check
    _
  $region31: #{transformer_decoder_forward.11} parent=0 // pred_check_branch
    %41 = sbr.rel (0) target = $region33
  $region32: #{transformer_decoder_forward.11} parent=0 // pred_region
    _
  $region33: #{transformer_decoder_forward.11} parent=0 // pred_fallthru
    _
  // Predicated region
  $region34: #{transformer_decoder_forward.11} parent=0 // pred_check
    _
  $region35: #{transformer_decoder_forward.11} parent=0 // pred_check_branch
    %43 = sbr.rel (0) target = $region37
  $region36: #{transformer_decoder_forward.11} parent=0 // pred_region
    _
  $region37: #{transformer_decoder_forward.11} parent=0 // pred_fallthru
    _
  // Predicated region
  $region38: #{transformer_decoder_forward.11} parent=0 // pred_check
    _
  $region39: #{transformer_decoder_forward.11} parent=0 // pred_check_branch
    %45 = sbr.rel (0) target = $region41
  $region40: #{transformer_decoder_forward.11} parent=0 // pred_region
    _
  $region41: #{transformer_decoder_forward.11} parent=0 // pred_fallthru
    _
  // Predicated region
  $region42: #{transformer_decoder_forward.11} parent=0 // pred_check
    _
  $region43: #{transformer_decoder_forward.11} parent=0 // pred_check_branch
    %47 = sbr.rel (0) target = $region45
  $region44: #{transformer_decoder_forward.11} parent=0 // pred_region
    _
  $region45: #{transformer_decoder_forward.11} parent=0 // pred_fallthru
    _
  // Predicated region
  $region46: #{transformer_decoder_forward.11} parent=0 // pred_check
    _
  $region47: #{transformer_decoder_forward.11} parent=0 // pred_check_branch
    %49 = sbr.rel (0) target = $region49
  $region48: #{transformer_decoder_forward.11} parent=0 // pred_region
    _
  $region49: #{transformer_decoder_forward.11} parent=0 // pred_fallthru
    _
  // Predicated region
  $region50: #{transformer_decoder_forward.11} parent=0 // pred_check
    _
  $region51: #{transformer_decoder_forward.11} parent=0 // pred_check_branch
    %51 = sbr.rel (0) target = $region53
  $region52: #{transformer_decoder_forward.11} parent=0 // pred_region
    _
  $region53: #{transformer_decoder_forward.11} parent=0 // pred_fallthru
    _
  // Predicated region
  $region54: #{transformer_decoder_forward.11} parent=0 // pred_check
    _
  $region55: #{transformer_decoder_forward.11} parent=0 // pred_check_branch
    %53 = sbr.rel (0) target = $region57
  $region56: #{transformer_decoder_forward.11} parent=0 // pred_region
    _
  $region57: #{transformer_decoder_forward.11} parent=0 // pred_fallthru
    _
  // Predicated region
  $region58: #{transformer_decoder_forward.11} parent=0 // pred_check
    _
  $region59: #{transformer_decoder_forward.11} parent=0 // pred_check_branch
    %55 = sbr.rel (0) target = $region61
  $region60: #{transformer_decoder_forward.11} parent=0 // pred_region
    _
  $region61: #{transformer_decoder_forward.11} parent=0 // pred_fallthru
    _
  // Predicated region
  $region62: #{transformer_decoder_forward.11} parent=0 // pred_check
    _
  $region63: #{transformer_decoder_forward.11} parent=0 // pred_check_branch
    %57 = sbr.rel (0) target = $region65
  $region64: #{transformer_decoder_forward.11} parent=0 // pred_region
    _
  $region65: #{transformer_decoder_forward.11} parent=0 // pred_fallthru
    _
  // Predicated region
  $region66: #{transformer_decoder_forward.11} parent=0 // pred_check
    _
  $region67: #{transformer_decoder_forward.11} parent=0 // pred_check_branch
    %59 = sbr.rel (0) target = $region69
  $region68: #{transformer_decoder_forward.11} parent=0 // pred_region
    _
  $region69: #{transformer_decoder_forward.11} parent=0 // pred_fallthru
    _
  // Predicated region
  $region70: #{transformer_decoder_forward.11} parent=0 // pred_check
    _
  $region71: #{transformer_decoder_forward.11} parent=0 // pred_check_branch
    %61 = sbr.rel (0) target = $region73
  $region72: #{transformer_decoder_forward.11} parent=0 // pred_region
    _
  $region73: #{transformer_decoder_forward.11} parent=0 // pred_fallthru
    _
  // Predicated region
  $region74: #{transformer_decoder_forward.11} parent=0 // pred_check
    _
  $region75: #{transformer_decoder_forward.11} parent=0 // pred_check_branch
    %63 = sbr.rel (0) target = $region77
  $region76: #{transformer_decoder_forward.11} parent=0 // pred_region
    _
  $region77: #{transformer_decoder_forward.11} parent=0 // pred_fallthru
    _
  %v65 = vld [vmem:[%s0] sm:$0xff]
  %v66 = vld [vmem:[%s0 + $0x8] sm:$0xff]
  %v67 = vld [vmem:[%s1] sm:$0xff]
  %v68 = vld [vmem:[%s1 + $0x8] sm:$0xff]
  %v69 = vpack.c.bf16 %v66, %v65
  %v70 = vld [vmem:[%s2] sm:$0xf]
  %v71 = vld [vmem:[%s2 + $0x4] sm:$0xf]
  %v72 = vld [vmem:[%s2 + $0x8] sm:$0xf]
  %v73 = vld [vmem:[%s2 + $0xc] sm:$0xf]
  %v74 = vld [vmem:[%s3] sm:$0x1]
  %v76 = vperm.slane %v74, 0
  %v82 = vunpack.c.l.b16 %v70
  %v83 = vunpack.c.l.b16 %v71
  %v84 = vunpack.c.l.b16 %v72
  %v85 = vunpack.c.l.b16 %v73
  %v86 = vpack.c.b16 %v83, %v82
  %v87 = vpack.c.b16 %v85, %v84
  %vm90 = vcmask 261120
  %v92 = vsel %vm90, %v69, 0
  %94 = vmatpush.bf16.msra.mxu0 0
  %95 = vmatpush.bf16.msra.mxu0 0
  %96 = vmatpush.bf16.msra.mxu0 0
  %97 = vmatpush.bf16.msra.mxu0 0
  %98 = vmatpush.bf16.msra.mxu0 0
  %99 = vmatpush.bf16.msra.mxu0 0
  %100 = vmatpush.bf16.msra.mxu0 %v87
  %101 = vmatpush.bf16.msra.mxu0 %v86
  %102 = vmatmul.bf16.gmra.mxu0 %v92
  %v103 = vpop.f32.mrf.mxu0
  %v104 = vadd.f32 %v76, %v103
  %v105 = vpop.f32.mrf.mxu0
  %v106 = vadd.f32 %v76, %v105
  %107 = vdwg.mxu0
  %v108 = vadd.f32 %v67, %v104
  %v109 = vadd.f32 %v68, %v106
  %v110 = vld [vmem:[%s4] sm:$0x1]
  %v111 = vld [vmem:[%s5] sm:$0x1]
  %v112 = vsel %vm90, %v108, 0.0
  %113 = vadd.xlane.f32.xlu0 %v112
  %v114 = vpop.xlane.xlu0 %113
  %v115 = vsel %vm90, %v109, 0.0
  %116 = vadd.xlane.f32.xlu0 %v115
  %v117 = vpop.xlane.xlu0 %116
  %v118 = vrcp.pop 32.0
  %v119 = vmul.f32 32.0, %v118
  %v120 = vsub.f32 1.0, %v119
  %v121 = vmul.f32 %v118, %v120
  %v122 = vadd.f32 %v118, %v121
  %vm123 = vweird.f32 %v118
  %v124 = vsel %vm123, %v118, %v122
  %v125 = vmul.f32 %v114, %v124
  %v126 = vmul.f32 %v117, %v124
  %v127 = vsub.f32 %v108, %v125
  %v128 = vsub.f32 %v109, %v126
  %v129 = vmul.f32 %v127, %v127
  %v130 = vmul.f32 %v128, %v128
  %v131 = vsel %vm90, %v129, 0.0
  %132 = vadd.xlane.f32.xlu0 %v131
  %v133 = vpop.xlane.xlu0 %132
  %v134 = vsel %vm90, %v130, 0.0
  %135 = vadd.xlane.f32.xlu0 %v134
  %v136 = vpop.xlane.xlu0 %135
  %v137 = vmul.f32 %v133, %v124
  %v138 = vmul.f32 %v136, %v124
  %v139 = vadd.f32 %v137, 1e-05
  %v140 = vadd.f32 %v138, 1e-05
  %v141 = vrsqrt.pop %v139
  %v142 = vmul.f32 %v141, %v139
  %v143 = vmul.f32 %v142, %v141
  %v144 = vmul.f32 0.5, %v143
  %v145 = vsub.f32 1.5, %v144
  %v146 = vmul.f32 %v141, %v145
  %vm147 = vweird.f32 %v139
  %vm148 = vweird.f32 %v141
  %vm149 = vmor %vm147, %vm148
  %v150 = vsel %vm149, %v141, %v146
  %v151 = vrsqrt.pop %v140
  %v152 = vmul.f32 %v151, %v140
  %v153 = vmul.f32 %v152, %v151
  %v154 = vmul.f32 0.5, %v153
  %v155 = vsub.f32 1.5, %v154
  %v156 = vmul.f32 %v151, %v155
  %vm157 = vweird.f32 %v140
  %vm158 = vweird.f32 %v151
  %vm159 = vmor %vm157, %vm158
  %v160 = vsel %vm159, %v151, %v156
  %v161 = vmul.f32 %v127, %v150
  %v162 = vmul.f32 %v128, %v160
  %v164 = vperm.slane %v110, 0
  %v166 = vmul.f32 %v161, %v164
  %v167 = vmul.f32 %v162, %v164
  %v169 = vperm.slane %v111, 0
  %v171 = vadd.f32 %v166, %v169
  %v172 = vadd.f32 %v167, %v169
  %v173 = vpack.c.bf16 %v172, %v171
  %v174 = vld [vmem:[%s6] sm:$0xf]
  %v175 = vld [vmem:[%s6 + $0x4] sm:$0xf]
  %v176 = vld [vmem:[%s6 + $0x8] sm:$0xf]
  %v177 = vld [vmem:[%s6 + $0xc] sm:$0xf]
  %v178 = vld [vmem:[%s7] sm:$0x1]
  %v180 = vperm.slane %v178, 0
  %v186 = vunpack.c.l.b16 %v174
  %v187 = vunpack.c.l.b16 %v175
  %v188 = vunpack.c.l.b16 %v176
  %v189 = vunpack.c.l.b16 %v177
  %v190 = vpack.c.b16 %v187, %v186
  %v191 = vpack.c.b16 %v189, %v188
  %v195 = vsel %vm90, %v173, 0
  %197 = vmatpush.bf16.msra.mxu0 0
  %198 = vmatpush.bf16.msra.mxu0 0
  %199 = vmatpush.bf16.msra.mxu0 0
  %200 = vmatpush.bf16.msra.mxu0 0
  %201 = vmatpush.bf16.msra.mxu0 0
  %202 = vmatpush.bf16.msra.mxu0 0
  %203 = vmatpush.bf16.msra.mxu0 %v191
  %204 = vmatpush.bf16.msra.mxu0 %v190
  %205 = vmatmul.bf16.gmra.mxu0 %v195
  %v206 = vpop.f32.mrf.mxu0
  %v207 = vadd.f32 %v180, %v206
  %v208 = vpop.f32.mrf.mxu0
  %v209 = vadd.f32 %v180, %v208
  %210 = vdwg.mxu0
  %v211 = vmax.f32 %v207, 0.0
  %v212 = vmax.f32 %v209, 0.0
  %v213 = vpack.c.bf16 %v212, %v211
  %v214 = vld [vmem:[%s8] sm:$0xf]
  %v215 = vld [vmem:[%s8 + $0x4] sm:$0xf]
  %v216 = vld [vmem:[%s8 + $0x8] sm:$0xf]
  %v217 = vld [vmem:[%s8 + $0xc] sm:$0xf]
  %v218 = vld [vmem:[%s8 + $0x10] sm:$0xf]
  %v219 = vld [vmem:[%s8 + $0x14] sm:$0xf]
  %v220 = vld [vmem:[%s8 + $0x18] sm:$0xf]
  %v221 = vld [vmem:[%s8 + $0x1c] sm:$0xf]
  %v222 = vld [vmem:[%s9] sm:$0x1]
  %v224 = vperm.slane %v222, 0
  %v234 = vunpack.c.l.b16 %v214
  %v235 = vunpack.c.l.b16 %v215
  %v236 = vunpack.c.l.b16 %v216
  %v237 = vunpack.c.l.b16 %v217
  %v238 = vunpack.c.l.b16 %v218
  %v239 = vunpack.c.l.b16 %v219
  %v240 = vunpack.c.l.b16 %v220
  %v241 = vunpack.c.l.b16 %v221
  %v242 = vpack.c.b16 %v235, %v234
  %v243 = vpack.c.b16 %v237, %v236
  %v244 = vpack.c.b16 %v239, %v238
  %v245 = vpack.c.b16 %v241, %v240
  %vm250 = vcmask 523264
  %v252 = vsel %vm250, %v213, 0
  %254 = vmatpush.bf16.msra.mxu0 0
  %255 = vmatpush.bf16.msra.mxu0 0
  %256 = vmatpush.bf16.msra.mxu0 0
  %257 = vmatpush.bf16.msra.mxu0 0
  %258 = vmatpush.bf16.msra.mxu0 %v245
  %259 = vmatpush.bf16.msra.mxu0 %v244
  %260 = vmatpush.bf16.msra.mxu0 %v243
  %261 = vmatpush.bf16.msra.mxu0 %v242
  %262 = vmatmul.bf16.gmra.mxu0 %v252
  %v263 = vpop.f32.mrf.mxu0
  %v264 = vadd.f32 %v224, %v263
  %v265 = vpop.f32.mrf.mxu0
  %v266 = vadd.f32 %v224, %v265
  %267 = vdwg.mxu0
  %v268 = vadd.f32 %v171, %v264
  %v269 = vadd.f32 %v172, %v266
  %v270 = vld [vmem:[%s10] sm:$0x1]
  %v271 = vld [vmem:[%s11] sm:$0x1]
  %v272 = vsel %vm90, %v268, 0.0
  %273 = vadd.xlane.f32.xlu0 %v272
  %v274 = vpop.xlane.xlu0 %273
  %v275 = vsel %vm90, %v269, 0.0
  %276 = vadd.xlane.f32.xlu0 %v275
  %v277 = vpop.xlane.xlu0 %276
  %v278 = vmul.f32 %v274, %v124
  %v279 = vmul.f32 %v277, %v124
  %v280 = vsub.f32 %v268, %v278
  %v281 = vsub.f32 %v269, %v279
  %v282 = vmul.f32 %v280, %v280
  %v283 = vmul.f32 %v281, %v281
  %v284 = vsel %vm90, %v282, 0.0
  %285 = vadd.xlane.f32.xlu0 %v284
  %v286 = vpop.xlane.xlu0 %285
  %v287 = vsel %vm90, %v283, 0.0
  %288 = vadd.xlane.f32.xlu0 %v287
  %v289 = vpop.xlane.xlu0 %288
  %v290 = vmul.f32 %v286, %v124
  %v291 = vmul.f32 %v289, %v124
  %v292 = vadd.f32 %v290, 1e-05
  %v293 = vadd.f32 %v291, 1e-05
  %v294 = vrsqrt.pop %v292
  %v295 = vmul.f32 %v294, %v292
  %v296 = vmul.f32 %v295, %v294
  %v297 = vmul.f32 0.5, %v296
  %v298 = vsub.f32 1.5, %v297
  %v299 = vmul.f32 %v294, %v298
  %vm300 = vweird.f32 %v292
  %vm301 = vweird.f32 %v294
  %vm302 = vmor %vm300, %vm301
  %v303 = vsel %vm302, %v294, %v299
  %v304 = vrsqrt.pop %v293
  %v305 = vmul.f32 %v304, %v293
  %v306 = vmul.f32 %v305, %v304
  %v307 = vmul.f32 0.5, %v306
  %v308 = vsub.f32 1.5, %v307
  %v309 = vmul.f32 %v304, %v308
  %vm310 = vweird.f32 %v293
  %vm311 = vweird.f32 %v304
  %vm312 = vmor %vm310, %vm311
  %v313 = vsel %vm312, %v304, %v309
  %v314 = vmul.f32 %v280, %v303
  %v315 = vmul.f32 %v281, %v313
  %v317 = vperm.slane %v270, 0
  %v319 = vmul.f32 %v314, %v317
  %v320 = vmul.f32 %v315, %v317
  %v322 = vperm.slane %v271, 0
  %v324 = vadd.f32 %v319, %v322
  %v325 = vadd.f32 %v320, %v322
  %326 = vst.msk [vmem:[%s19] sm:$0xff] %vm90, %v324
  %327 = vst.msk [vmem:[%s19 + $0x8] sm:$0xff] %vm90, %v325
  %v328 = vpack.c.bf16 %v325, %v324
  %v329 = vld [vmem:[%s12] sm:$0xf]
  %v330 = vld [vmem:[%s12 + $0x4] sm:$0xf]
  %v331 = vld [vmem:[%s12 + $0x8] sm:$0xf]
  %v332 = vld [vmem:[%s12 + $0xc] sm:$0xf]
  %v333 = vld [vmem:[%s13] sm:$0x1]
  %v335 = vperm.slane %v333, 0
  %v341 = vunpack.c.l.b16 %v329
  %v342 = vunpack.c.l.b16 %v330
  %v343 = vunpack.c.l.b16 %v331
  %v344 = vunpack.c.l.b16 %v332
  %v345 = vpack.c.b16 %v342, %v341
  %v346 = vpack.c.b16 %v344, %v343
  %v350 = vsel %vm90, %v328, 0
  %352 = vmatpush.bf16.msra.mxu0 0
  %353 = vmatpush.bf16.msra.mxu0 0
  %354 = vmatpush.bf16.msra.mxu0 0
  %355 = vmatpush.bf16.msra.mxu0 0
  %356 = vmatpush.bf16.msra.mxu0 0
  %357 = vmatpush.bf16.msra.mxu0 0
  %358 = vmatpush.bf16.msra.mxu0 %v346
  %359 = vmatpush.bf16.msra.mxu0 %v345
  %360 = vmatmul.bf16.gmra.mxu0 %v350
  %v361 = vpop.f32.mrf.mxu0
  %v362 = vadd.f32 %v335, %v361
  %v363 = vpop.f32.mrf.mxu0
  %v364 = vadd.f32 %v335, %v363
  %365 = vdwg.mxu0
  %v366 = vmax.f32 %v362, 0.0
  %v367 = vmax.f32 %v364, 0.0
  %v368 = vpack.c.bf16 %v367, %v366
  %v369 = vld [vmem:[%s14] sm:$0xf]
  %v370 = vld [vmem:[%s14 + $0x4] sm:$0xf]
  %v371 = vld [vmem:[%s14 + $0x8] sm:$0xf]
  %v372 = vld [vmem:[%s14 + $0xc] sm:$0xf]
  %v373 = vld [vmem:[%s15] sm:$0x1]
  %v375 = vperm.slane %v373, 0
  %v381 = vunpack.c.l.b16 %v369
  %v382 = vunpack.c.l.b16 %v370
  %v383 = vunpack.c.l.b16 %v371
  %v384 = vunpack.c.l.b16 %v372
  %v385 = vpack.c.b16 %v382, %v381
  %v386 = vpack.c.b16 %v384, %v383
  %v390 = vsel %vm90, %v368, 0
  %392 = vmatpush.bf16.msra.mxu0 0
  %393 = vmatpush.bf16.msra.mxu0 0
  %394 = vmatpush.bf16.msra.mxu0 0
  %395 = vmatpush.bf16.msra.mxu0 0
  %396 = vmatpush.bf16.msra.mxu0 0
  %397 = vmatpush.bf16.msra.mxu0 0
  %398 = vmatpush.bf16.msra.mxu0 %v386
  %399 = vmatpush.bf16.msra.mxu0 %v385
  %400 = vmatmul.bf16.gmra.mxu0 %v390
  %v401 = vpop.f32.mrf.mxu0
  %v402 = vadd.f32 %v375, %v401
  %v403 = vpop.f32.mrf.mxu0
  %v404 = vadd.f32 %v375, %v403
  %405 = vdwg.mxu0
  %v406 = vmax.f32 %v402, 0.0
  %v407 = vmax.f32 %v404, 0.0
  %v408 = vpack.c.bf16 %v407, %v406
  %v409 = vld [vmem:[%s16] sm:$0xf]
  %v410 = vld [vmem:[%s16 + $0x4] sm:$0xf]
  %v411 = vld [vmem:[%s16 + $0x8] sm:$0xf]
  %v412 = vld [vmem:[%s16 + $0xc] sm:$0xf]
  %v413 = vld [vmem:[%s17] sm:$0xf]
  %v414 = vld [vmem:[%s17 + $0x4] sm:$0xf]
  %v415 = vld [vmem:[%s17 + $0x8] sm:$0xf]
  %v416 = vld [vmem:[%s17 + $0xc] sm:$0xf]
  %v421 = vunpack.c.l.b16 %v413
  %v422 = vunpack.c.l.b16 %v414
  %v423 = vunpack.c.l.b16 %v415
  %v424 = vunpack.c.l.b16 %v416
  %v425 = vpack.c.b16 %v422, %v421
  %v426 = vpack.c.b16 %v424, %v423
  %429 = vmatpush.bf16.msra.mxu0 0
  %430 = vmatpush.bf16.msra.mxu0 0
  %431 = vmatpush.bf16.msra.mxu0 0
  %432 = vmatpush.bf16.msra.mxu0 0
  %433 = vmatpush.bf16.msra.mxu0 0
  %434 = vmatpush.bf16.msra.mxu0 0
  %435 = vmatpush.bf16.msra.mxu0 %v426
  %436 = vmatpush.bf16.msra.mxu0 %v425
  %437 = vmatmul.bf16.gmra.mxu0 %v350
  %v438 = vpop.f32.mrf.mxu0
  %v439 = vadd.f32 0.0, %v438
  %v440 = vpop.f32.mrf.mxu0
  %v441 = vadd.f32 0.0, %v440
  %442 = vdwg.mxu0
  %v447 = vunpack.c.l.b16 %v409
  %v448 = vunpack.c.l.b16 %v410
  %v449 = vunpack.c.l.b16 %v411
  %v450 = vunpack.c.l.b16 %v412
  %v451 = vpack.c.b16 %v448, %v447
  %v452 = vpack.c.b16 %v450, %v449
  %v456 = vsel %vm90, %v408, 0
  %458 = vmatpush.bf16.msra.mxu0 0
  %459 = vmatpush.bf16.msra.mxu0 0
  %460 = vmatpush.bf16.msra.mxu0 0
  %461 = vmatpush.bf16.msra.mxu0 0
  %462 = vmatpush.bf16.msra.mxu0 0
  %463 = vmatpush.bf16.msra.mxu0 0
  %464 = vmatpush.bf16.msra.mxu0 %v452
  %465 = vmatpush.bf16.msra.mxu0 %v451
  %466 = vmatmul.bf16.gmra.mxu0 %v456
  %v467 = vpop.f32.mrf.mxu0
  %v468 = vadd.f32 %v439, %v467
  %v469 = vpop.f32.mrf.mxu0
  %v470 = vadd.f32 %v441, %v469
  %471 = vdwg.mxu0
  %v472 = vld [vmem:[%s18] sm:$0x1]
  %v474 = vperm.slane %v472, 0
  %v476 = vadd.f32 %v468, %v474
  %v477 = vadd.f32 %v470, %v474
  %vm478 = vcmask 162816
  %479 = vst.msk [vmem:[%s20] sm:$0xff] %vm478, %v476
  %480 = vst.msk [vmem:[%s20 + $0x8] sm:$0xff] %vm478, %v477
  // Predicated region
  $region78: #{transformer_decoder_forward.11} parent=0 // pred_check
    _
  $region79: #{transformer_decoder_forward.11} parent=0 // pred_check_branch
    %482 = sbr.rel (0) target = $region81
  $region80: #{transformer_decoder_forward.11} parent=0 // pred_region
    _
  $region81: #{transformer_decoder_forward.11} parent=0 // pred_fallthru
    _
  // Predicated region
  $region82: #{transformer_decoder_forward.11} parent=0 // pred_check
    _
  $region83: #{transformer_decoder_forward.11} parent=0 // pred_check_branch
    %484 = sbr.rel (0) target = $region85
  $region84: #{transformer_decoder_forward.11} parent=0 // pred_region
    _
  $region85: #{transformer_decoder_forward.11} parent=0 // pred_fallthru
    _
  // Predicated region
  $region86: #{transformer_decoder_forward.11} parent=0 // pred_check
    _
  $region87: #{transformer_decoder_forward.11} parent=0 // pred_check_branch
    %486 = sbr.rel (0) target = $region89
  $region88: #{transformer_decoder_forward.11} parent=0 // pred_region
    _
  $region89: #{transformer_decoder_forward.11} parent=0 // pred_fallthru
    _
  // Predicated region
  $region90: #{transformer_decoder_forward.11} parent=0 // pred_check
    _
  $region91: #{transformer_decoder_forward.11} parent=0 // pred_check_branch
    %488 = sbr.rel (0) target = $region93
  $region92: #{transformer_decoder_forward.11} parent=0 // pred_region
    _
  $region93: #{transformer_decoder_forward.11} parent=0 // pred_fallthru
    _

// kernel: transformer_decoder_forward.12
$region0: #{transformer_decoder_forward.12}
  #allocation0 [shape = 'u32[]', space=smem, size = 0x4, offset = 0x4, fixed_abs, tag = 'smem constant byte address 0x4 - core index']
  #allocation1 [shape = 'u32[72,128]{1,0:T(1,128)}', space=vmem, size = 0x9000, scoped, tag = 'internal scratch']
  %s0 = inlined_call_operand.vmem [shape: f32[2,8,32], index: 0, kind: input, shape index: {}]
  %s1 = inlined_call_operand.vmem [shape: f32[2,8,4], index: 1, kind: input, shape index: {}]
  %s2 = inlined_call_operand.vmem [shape: bf16[4,64], index: 2, kind: input, shape index: {}]
  %s3 = inlined_call_operand.vmem [shape: f32[1,64], index: 3, kind: input, shape index: {}]
  %s4 = inlined_call_operand.vmem [shape: bf16[64,32], index: 4, kind: input, shape index: {}]
  %s5 = inlined_call_operand.vmem [shape: f32[1,32], index: 5, kind: input, shape index: {}]
  %s6 = inlined_call_operand.vmem [shape: bf16[32,64], index: 6, kind: input, shape index: {}]
  %s7 = inlined_call_operand.vmem [shape: f32[1,64], index: 7, kind: input, shape index: {}]
  %s8 = inlined_call_operand.vmem [shape: bf16[32,32], index: 8, kind: input, shape index: {}]
  %s9 = inlined_call_operand.vmem [shape: f32[1,32], index: 9, kind: input, shape index: {}]
  %s10 = inlined_call_operand.vmem [shape: bf16[8,4,32], index: 10, kind: input, shape index: {}]
  %s11 = inlined_call_operand.vmem [shape: f32[1,32], index: 11, kind: input, shape index: {}]
  %s12 = inlined_call_operand.vmem [shape: f32[1,32], index: 12, kind: input, shape index: {}]
  %s13 = inlined_call_operand.vmem [shape: f32[1,32], index: 13, kind: input, shape index: {}]
  %s14 = inlined_call_operand.vmem [shape: bf16[32,192], index: 14, kind: input, shape index: {}]
  %s15 = inlined_call_operand.vmem [shape: f32[1,192], index: 15, kind: input, shape index: {}]
  %s16 = inlined_call_operand.vmem [shape: f32[64,64], index: 16, kind: input, shape index: {}]
  %s17 = inlined_call_operand.hbm [shape: f32[2,8,32], index: 17, kind: output, shape index: {0}]
  %s18 = inlined_call_operand.vmem [shape: f32[2,8,128], index: 18, kind: output, shape index: {1}]
  %s19 = inlined_call_operand.hbm [shape: f32[2,8,64], index: 19, kind: output, shape index: {2}]
  %20 = xla_tuple %s17, %s18, %s19
  %s21 = sld [smem:[#allocation0]]
  $region117: #{transformer_decoder_forward.12} parent=0
    _
  %s23 = ssub.s32 1, %s21
  %s24 = scalar_select 0, %s23, %s21
  $region1: #{transformer_decoder_forward.12} parent=0
    #allocation2 [shape = 'u8[8192]{0}', space=vmem, size = 0x2000, scoped, tag = 'output window, operand 0']
    #allocation3 [shape = 's32[2]{0}', space=sflag, size = 0x8, scoped, tag = 'scoped memory for transformer_decoder_forward.12']
    #allocation4 [shape = 'u8[8192]{0}', space=vmem, size = 0x2000, scoped, tag = 'output window, operand 2']
    #allocation5 [shape = 's32[2]{0}', space=sflag, size = 0x8, scoped, tag = 'scoped memory for transformer_decoder_forward.12']
    %25 = vsyncpa [#allocation3], 0
    %s26 = scalar_lea.sflag [#allocation3], 1
    %27 = vsyncpa %s26, 0
    %28 = vsyncpa [#allocation5], 0
    %s29 = scalar_lea.sflag [#allocation5], 1
    %30 = vsyncpa %s29, 0
    loop: start=0, step=1, limit=4
    $region2: #{transformer_decoder_forward.12} parent=1 // loop_pre_header
      _
    $region3: #{transformer_decoder_forward.12} parent=1 // loop_header
      %s32 = sphi 0, %s36
      %p33 = scmp.ge.s32.totalorder %s32, 4
      %s42 = sphi 0, %s44
      %s45 = sphi 0, %s42
      %s46 = sphi 0, %s45
      %s62 = sphi 0, %s46
      %s68 = sphi 0, %s70
      %s71 = sphi 0, %s68
      %s72 = sphi 0, %s71
      %s88 = sphi 0, %s72
      %s92 = sphi 0, %s92
      %s94 = sphi 0, %s92
      %s95 = sphi 0, %s94
      %s109 = sphi 0, %s95
      %s113 = sphi 0, %s113
      %s115 = sphi 0, %s113
      %s116 = sphi 0, %s115
      %s130 = sphi 0, %s116
      %s134 = sphi 0, %s134
      %s136 = sphi 0, %s134
      %s137 = sphi 0, %s136
      %s151 = sphi 0, %s137
      %s155 = sphi 0, %s155
      %s157 = sphi 0, %s155
      %s158 = sphi 0, %s157
      %s172 = sphi 0, %s158
      %s176 = sphi 0, %s176
      %s178 = sphi 0, %s176
      %s179 = sphi 0, %s178
      %s193 = sphi 0, %s179
      %s197 = sphi 0, %s197
      %s199 = sphi 0, %s197
      %s200 = sphi 0, %s199
      %s214 = sphi 0, %s200
      %s218 = sphi 0, %s218
      %s220 = sphi 0, %s218
      %s221 = sphi 0, %s220
      %s235 = sphi 0, %s221
      %s239 = sphi 0, %s239
      %s241 = sphi 0, %s239
      %s242 = sphi 0, %s241
      %s256 = sphi 0, %s242
      %s260 = sphi 0, %s260
      %s262 = sphi 0, %s260
      %s263 = sphi 0, %s262
      %s277 = sphi 0, %s263
      %s281 = sphi 0, %s281
      %s283 = sphi 0, %s281
      %s284 = sphi 0, %s283
      %s298 = sphi 0, %s284
      %s302 = sphi 0, %s302
      %s304 = sphi 0, %s302
      %s305 = sphi 0, %s304
      %s319 = sphi 0, %s305
      %s323 = sphi 0, %s323
      %s325 = sphi 0, %s323
      %s326 = sphi 0, %s325
      %s340 = sphi 0, %s326
      %s344 = sphi 0, %s344
      %s346 = sphi 0, %s344
      %s347 = sphi 0, %s346
      %s361 = sphi 0, %s347
      %s365 = sphi 0, %s365
      %s367 = sphi 0, %s365
      %s368 = sphi 0, %s367
      %s382 = sphi 0, %s368
      %s386 = sphi 0, %s386
      %s388 = sphi 0, %s386
      %s389 = sphi 0, %s388
      %s403 = sphi 0, %s389
      %s409 = sphi 0, %s411
      %s412 = sphi 0, %s409
      %s413 = sphi 0, %s412
      %s429 = sphi 0, %s413
      %s435 = sphi 0, %s437
      %s438 = sphi 0, %s435
      %s439 = sphi 0, %s438
      %s455 = sphi 0, %s439
      %s461 = sphi 0, %s463
      %s464 = sphi 0, %s461
      %s465 = sphi 0, %s464
      %s481 = sphi 0, %s465
    $region4: #{transformer_decoder_forward.12} parent=1 // loop_header_branch
      %35 = sbr.rel (%p33) target = $region8
    $region5: #{transformer_decoder_forward.12} parent=1 // loop_body
      %s37 = ssub.s32 %s32, 1
      %s38 = ssub.s32 %s32, 2
      %s39 = sadd.s32 %s32, 1
      %s40 = ssub.s32 %s32, %s39
      %p41 = scmp.eq.s32.totalorder %s40, 0
      %s43 = sadd.s32 %s42, 1
      %s44 = scalar_select %p41, %s42, %s43
      %p47 = pneg %p41
      %p48 = scmp.eq.s32.totalorder %s32, 1
      %p49 = por %p47, %p48
      %p50 = scmp.ne.s32.totalorder %s42, %s45
      %p51 = scmp.eq.s32.totalorder %s32, 0
      %p52 = por %p50, %p51
      %p53 = scmp.ne.s32.totalorder %s42, %s45
      %p54 = scmp.eq.s32.totalorder %s37, 1
      %p55 = por %p53, %p54
      %p56 = scmp.ne.s32.totalorder %s45, %s46
      %p57 = scmp.eq.s32.totalorder %s37, 0
      %p58 = por %p56, %p57
      %p59 = scmp.ne.s32.totalorder %s45, %s46
      %p60 = scmp.eq.s32.totalorder %s38, 1
      %p61 = por %p59, %p60
      %p63 = scmp.ne.s32.totalorder %s46, %s62
      %p64 = scmp.eq.s32.totalorder %s38, 0
      %p65 = por %p63, %p64
      %s66 = ssub.s32 %s32, %s39
      %p67 = scmp.eq.s32.totalorder %s66, 0
      %s69 = sadd.s32 %s68, 1
      %s70 = scalar_select %p67, %s68, %s69
      %p73 = pneg %p67
      %p74 = scmp.eq.s32.totalorder %s32, 1
      %p75 = por %p73, %p74
      %p76 = scmp.ne.s32.totalorder %s68, %s71
      %p77 = scmp.eq.s32.totalorder %s32, 0
      %p78 = por %p76, %p77
      %p79 = scmp.ne.s32.totalorder %s68, %s71
      %p80 = scmp.eq.s32.totalorder %s37, 1
      %p81 = por %p79, %p80
      %p82 = scmp.ne.s32.totalorder %s71, %s72
      %p83 = scmp.eq.s32.totalorder %s37, 0
      %p84 = por %p82, %p83
      %p85 = scmp.ne.s32.totalorder %s71, %s72
      %p86 = scmp.eq.s32.totalorder %s38, 1
      %p87 = por %p85, %p86
      %p89 = scmp.ne.s32.totalorder %s72, %s88
      %p90 = scmp.eq.s32.totalorder %s38, 0
      %p91 = por %p89, %p90
      %s93 = sadd.s32 %s92, 1
      %p96 = scmp.eq.s32.totalorder %s32, 1
      %p97 = scmp.ne.s32.totalorder %s92, %s94
      %p98 = scmp.eq.s32.totalorder %s32, 0
      %p99 = por %p97, %p98
      %p100 = scmp.ne.s32.totalorder %s92, %s94
      %p101 = scmp.eq.s32.totalorder %s37, 1
      %p102 = por %p100, %p101
      %p103 = scmp.ne.s32.totalorder %s94, %s95
      %p104 = scmp.eq.s32.totalorder %s37, 0
      %p105 = por %p103, %p104
      %p106 = scmp.ne.s32.totalorder %s94, %s95
      %p107 = scmp.eq.s32.totalorder %s38, 1
      %p108 = por %p106, %p107
      %p110 = scmp.ne.s32.totalorder %s95, %s109
      %p111 = scmp.eq.s32.totalorder %s38, 0
      %p112 = por %p110, %p111
      %s114 = sadd.s32 %s113, 1
      %p117 = scmp.eq.s32.totalorder %s32, 1
      %p118 = scmp.ne.s32.totalorder %s113, %s115
      %p119 = scmp.eq.s32.totalorder %s32, 0
      %p120 = por %p118, %p119
      %p121 = scmp.ne.s32.totalorder %s113, %s115
      %p122 = scmp.eq.s32.totalorder %s37, 1
      %p123 = por %p121, %p122
      %p124 = scmp.ne.s32.totalorder %s115, %s116
      %p125 = scmp.eq.s32.totalorder %s37, 0
      %p126 = por %p124, %p125
      %p127 = scmp.ne.s32.totalorder %s115, %s116
      %p128 = scmp.eq.s32.totalorder %s38, 1
      %p129 = por %p127, %p128
      %p131 = scmp.ne.s32.totalorder %s116, %s130
      %p132 = scmp.eq.s32.totalorder %s38, 0
      %p133 = por %p131, %p132
      %s135 = sadd.s32 %s134, 1
      %p138 = scmp.eq.s32.totalorder %s32, 1
      %p139 = scmp.ne.s32.totalorder %s134, %s136
      %p140 = scmp.eq.s32.totalorder %s32, 0
      %p141 = por %p139, %p140
      %p142 = scmp.ne.s32.totalorder %s134, %s136
      %p143 = scmp.eq.s32.totalorder %s37, 1
      %p144 = por %p142, %p143
      %p145 = scmp.ne.s32.totalorder %s136, %s137
      %p146 = scmp.eq.s32.totalorder %s37, 0
      %p147 = por %p145, %p146
      %p148 = scmp.ne.s32.totalorder %s136, %s137
      %p149 = scmp.eq.s32.totalorder %s38, 1
      %p150 = por %p148, %p149
      %p152 = scmp.ne.s32.totalorder %s137, %s151
      %p153 = scmp.eq.s32.totalorder %s38, 0
      %p154 = por %p152, %p153
      %s156 = sadd.s32 %s155, 1
      %p159 = scmp.eq.s32.totalorder %s32, 1
      %p160 = scmp.ne.s32.totalorder %s155, %s157
      %p161 = scmp.eq.s32.totalorder %s32, 0
      %p162 = por %p160, %p161
      %p163 = scmp.ne.s32.totalorder %s155, %s157
      %p164 = scmp.eq.s32.totalorder %s37, 1
      %p165 = por %p163, %p164
      %p166 = scmp.ne.s32.totalorder %s157, %s158
      %p167 = scmp.eq.s32.totalorder %s37, 0
      %p168 = por %p166, %p167
      %p169 = scmp.ne.s32.totalorder %s157, %s158
      %p170 = scmp.eq.s32.totalorder %s38, 1
      %p171 = por %p169, %p170
      %p173 = scmp.ne.s32.totalorder %s158, %s172
      %p174 = scmp.eq.s32.totalorder %s38, 0
      %p175 = por %p173, %p174
      %s177 = sadd.s32 %s176, 1
      %p180 = scmp.eq.s32.totalorder %s32, 1
      %p181 = scmp.ne.s32.totalorder %s176, %s178
      %p182 = scmp.eq.s32.totalorder %s32, 0
      %p183 = por %p181, %p182
      %p184 = scmp.ne.s32.totalorder %s176, %s178
      %p185 = scmp.eq.s32.totalorder %s37, 1
      %p186 = por %p184, %p185
      %p187 = scmp.ne.s32.totalorder %s178, %s179
      %p188 = scmp.eq.s32.totalorder %s37, 0
      %p189 = por %p187, %p188
      %p190 = scmp.ne.s32.totalorder %s178, %s179
      %p191 = scmp.eq.s32.totalorder %s38, 1
      %p192 = por %p190, %p191
      %p194 = scmp.ne.s32.totalorder %s179, %s193
      %p195 = scmp.eq.s32.totalorder %s38, 0
      %p196 = por %p194, %p195
      %s198 = sadd.s32 %s197, 1
      %p201 = scmp.eq.s32.totalorder %s32, 1
      %p202 = scmp.ne.s32.totalorder %s197, %s199
      %p203 = scmp.eq.s32.totalorder %s32, 0
      %p204 = por %p202, %p203
      %p205 = scmp.ne.s32.totalorder %s197, %s199
      %p206 = scmp.eq.s32.totalorder %s37, 1
      %p207 = por %p205, %p206
      %p208 = scmp.ne.s32.totalorder %s199, %s200
      %p209 = scmp.eq.s32.totalorder %s37, 0
      %p210 = por %p208, %p209
      %p211 = scmp.ne.s32.totalorder %s199, %s200
      %p212 = scmp.eq.s32.totalorder %s38, 1
      %p213 = por %p211, %p212
      %p215 = scmp.ne.s32.totalorder %s200, %s214
      %p216 = scmp.eq.s32.totalorder %s38, 0
      %p217 = por %p215, %p216
      %s219 = sadd.s32 %s218, 1
      %p222 = scmp.eq.s32.totalorder %s32, 1
      %p223 = scmp.ne.s32.totalorder %s218, %s220
      %p224 = scmp.eq.s32.totalorder %s32, 0
      %p225 = por %p223, %p224
      %p226 = scmp.ne.s32.totalorder %s218, %s220
      %p227 = scmp.eq.s32.totalorder %s37, 1
      %p228 = por %p226, %p227
      %p229 = scmp.ne.s32.totalorder %s220, %s221
      %p230 = scmp.eq.s32.totalorder %s37, 0
      %p231 = por %p229, %p230
      %p232 = scmp.ne.s32.totalorder %s220, %s221
      %p233 = scmp.eq.s32.totalorder %s38, 1
      %p234 = por %p232, %p233
      %p236 = scmp.ne.s32.totalorder %s221, %s235
      %p237 = scmp.eq.s32.totalorder %s38, 0
      %p238 = por %p236, %p237
      %s240 = sadd.s32 %s239, 1
      %p243 = scmp.eq.s32.totalorder %s32, 1
      %p244 = scmp.ne.s32.totalorder %s239, %s241
      %p245 = scmp.eq.s32.totalorder %s32, 0
      %p246 = por %p244, %p245
      %p247 = scmp.ne.s32.totalorder %s239, %s241
      %p248 = scmp.eq.s32.totalorder %s37, 1
      %p249 = por %p247, %p248
      %p250 = scmp.ne.s32.totalorder %s241, %s242
      %p251 = scmp.eq.s32.totalorder %s37, 0
      %p252 = por %p250, %p251
      %p253 = scmp.ne.s32.totalorder %s241, %s242
      %p254 = scmp.eq.s32.totalorder %s38, 1
      %p255 = por %p253, %p254
      %p257 = scmp.ne.s32.totalorder %s242, %s256
      %p258 = scmp.eq.s32.totalorder %s38, 0
      %p259 = por %p257, %p258
      %s261 = sadd.s32 %s260, 1
      %p264 = scmp.eq.s32.totalorder %s32, 1
      %p265 = scmp.ne.s32.totalorder %s260, %s262
      %p266 = scmp.eq.s32.totalorder %s32, 0
      %p267 = por %p265, %p266
      %p268 = scmp.ne.s32.totalorder %s260, %s262
      %p269 = scmp.eq.s32.totalorder %s37, 1
      %p270 = por %p268, %p269
      %p271 = scmp.ne.s32.totalorder %s262, %s263
      %p272 = scmp.eq.s32.totalorder %s37, 0
      %p273 = por %p271, %p272
      %p274 = scmp.ne.s32.totalorder %s262, %s263
      %p275 = scmp.eq.s32.totalorder %s38, 1
      %p276 = por %p274, %p275
      %p278 = scmp.ne.s32.totalorder %s263, %s277
      %p279 = scmp.eq.s32.totalorder %s38, 0
      %p280 = por %p278, %p279
      %s282 = sadd.s32 %s281, 1
      %p285 = scmp.eq.s32.totalorder %s32, 1
      %p286 = scmp.ne.s32.totalorder %s281, %s283
      %p287 = scmp.eq.s32.totalorder %s32, 0
      %p288 = por %p286, %p287
      %p289 = scmp.ne.s32.totalorder %s281, %s283
      %p290 = scmp.eq.s32.totalorder %s37, 1
      %p291 = por %p289, %p290
      %p292 = scmp.ne.s32.totalorder %s283, %s284
      %p293 = scmp.eq.s32.totalorder %s37, 0
      %p294 = por %p292, %p293
      %p295 = scmp.ne.s32.totalorder %s283, %s284
      %p296 = scmp.eq.s32.totalorder %s38, 1
      %p297 = por %p295, %p296
      %p299 = scmp.ne.s32.totalorder %s284, %s298
      %p300 = scmp.eq.s32.totalorder %s38, 0
      %p301 = por %p299, %p300
      %s303 = sadd.s32 %s302, 1
      %p306 = scmp.eq.s32.totalorder %s32, 1
      %p307 = scmp.ne.s32.totalorder %s302, %s304
      %p308 = scmp.eq.s32.totalorder %s32, 0
      %p309 = por %p307, %p308
      %p310 = scmp.ne.s32.totalorder %s302, %s304
      %p311 = scmp.eq.s32.totalorder %s37, 1
      %p312 = por %p310, %p311
      %p313 = scmp.ne.s32.totalorder %s304, %s305
      %p314 = scmp.eq.s32.totalorder %s37, 0
      %p315 = por %p313, %p314
      %p316 = scmp.ne.s32.totalorder %s304, %s305
      %p317 = scmp.eq.s32.totalorder %s38, 1
      %p318 = por %p316, %p317
      %p320 = scmp.ne.s32.totalorder %s305, %s319
      %p321 = scmp.eq.s32.totalorder %s38, 0
      %p322 = por %p320, %p321
      %s324 = sadd.s32 %s323, 1
      %p327 = scmp.eq.s32.totalorder %s32, 1
      %p328 = scmp.ne.s32.totalorder %s323, %s325
      %p329 = scmp.eq.s32.totalorder %s32, 0
      %p330 = por %p328, %p329
      %p331 = scmp.ne.s32.totalorder %s323, %s325
      %p332 = scmp.eq.s32.totalorder %s37, 1
      %p333 = por %p331, %p332
      %p334 = scmp.ne.s32.totalorder %s325, %s326
      %p335 = scmp.eq.s32.totalorder %s37, 0
      %p336 = por %p334, %p335
      %p337 = scmp.ne.s32.totalorder %s325, %s326
      %p338 = scmp.eq.s32.totalorder %s38, 1
      %p339 = por %p337, %p338
      %p341 = scmp.ne.s32.totalorder %s326, %s340
      %p342 = scmp.eq.s32.totalorder %s38, 0
      %p343 = por %p341, %p342
      %s345 = sadd.s32 %s344, 1
      %p348 = scmp.eq.s32.totalorder %s32, 1
      %p349 = scmp.ne.s32.totalorder %s344, %s346
      %p350 = scmp.eq.s32.totalorder %s32, 0
      %p351 = por %p349, %p350
      %p352 = scmp.ne.s32.totalorder %s344, %s346
      %p353 = scmp.eq.s32.totalorder %s37, 1
      %p354 = por %p352, %p353
      %p355 = scmp.ne.s32.totalorder %s346, %s347
      %p356 = scmp.eq.s32.totalorder %s37, 0
      %p357 = por %p355, %p356
      %p358 = scmp.ne.s32.totalorder %s346, %s347
      %p359 = scmp.eq.s32.totalorder %s38, 1
      %p360 = por %p358, %p359
      %p362 = scmp.ne.s32.totalorder %s347, %s361
      %p363 = scmp.eq.s32.totalorder %s38, 0
      %p364 = por %p362, %p363
      %s366 = sadd.s32 %s365, 1
      %p369 = scmp.eq.s32.totalorder %s32, 1
      %p370 = scmp.ne.s32.totalorder %s365, %s367
      %p371 = scmp.eq.s32.totalorder %s32, 0
      %p372 = por %p370, %p371
      %p373 = scmp.ne.s32.totalorder %s365, %s367
      %p374 = scmp.eq.s32.totalorder %s37, 1
      %p375 = por %p373, %p374
      %p376 = scmp.ne.s32.totalorder %s367, %s368
      %p377 = scmp.eq.s32.totalorder %s37, 0
      %p378 = por %p376, %p377
      %p379 = scmp.ne.s32.totalorder %s367, %s368
      %p380 = scmp.eq.s32.totalorder %s38, 1
      %p381 = por %p379, %p380
      %p383 = scmp.ne.s32.totalorder %s368, %s382
      %p384 = scmp.eq.s32.totalorder %s38, 0
      %p385 = por %p383, %p384
      %s387 = sadd.s32 %s386, 1
      %p390 = scmp.eq.s32.totalorder %s32, 1
      %p391 = scmp.ne.s32.totalorder %s386, %s388
      %p392 = scmp.eq.s32.totalorder %s32, 0
      %p393 = por %p391, %p392
      %p394 = scmp.ne.s32.totalorder %s386, %s388
      %p395 = scmp.eq.s32.totalorder %s37, 1
      %p396 = por %p394, %p395
      %p397 = scmp.ne.s32.totalorder %s388, %s389
      %p398 = scmp.eq.s32.totalorder %s37, 0
      %p399 = por %p397, %p398
      %p400 = scmp.ne.s32.totalorder %s388, %s389
      %p401 = scmp.eq.s32.totalorder %s38, 1
      %p402 = por %p400, %p401
      %p404 = scmp.ne.s32.totalorder %s389, %s403
      %p405 = scmp.eq.s32.totalorder %s38, 0
      %p406 = por %p404, %p405
      %s407 = ssub.s32 %s32, %s39
      %p408 = scmp.eq.s32.totalorder %s407, 0
      %s410 = sadd.s32 %s409, 1
      %s411 = scalar_select %p408, %s409, %s410
      %p414 = pneg %p408
      %p415 = scmp.eq.s32.totalorder %s32, 1
      %p416 = por %p414, %p415
      %p417 = scmp.ne.s32.totalorder %s409, %s412
      %p418 = scmp.eq.s32.totalorder %s32, 0
      %p419 = por %p417, %p418
      %p420 = scmp.ne.s32.totalorder %s409, %s412
      %p421 = scmp.eq.s32.totalorder %s37, 1
      %p422 = por %p420, %p421
      %p423 = scmp.ne.s32.totalorder %s412, %s413
      %p424 = scmp.eq.s32.totalorder %s37, 0
      %p425 = por %p423, %p424
      %p426 = scmp.ne.s32.totalorder %s412, %s413
      %p427 = scmp.eq.s32.totalorder %s38, 1
      %p428 = por %p426, %p427
      %p430 = scmp.ne.s32.totalorder %s413, %s429
      %p431 = scmp.eq.s32.totalorder %s38, 0
      %p432 = por %p430, %p431
      %s433 = ssub.s32 %s32, %s39
      %p434 = scmp.eq.s32.totalorder %s433, 0
      %s436 = sadd.s32 %s435, 1
      %s437 = scalar_select %p434, %s435, %s436
      %p440 = pneg %p434
      %p441 = scmp.eq.s32.totalorder %s32, 1
      %p442 = por %p440, %p441
      %p443 = scmp.ne.s32.totalorder %s435, %s438
      %p444 = scmp.eq.s32.totalorder %s32, 0
      %p445 = por %p443, %p444
      %p446 = scmp.ne.s32.totalorder %s435, %s438
      %p447 = scmp.eq.s32.totalorder %s37, 1
      %p448 = por %p446, %p447
      %p449 = scmp.ne.s32.totalorder %s438, %s439
      %p450 = scmp.eq.s32.totalorder %s37, 0
      %p451 = por %p449, %p450
      %p452 = scmp.ne.s32.totalorder %s438, %s439
      %p453 = scmp.eq.s32.totalorder %s38, 1
      %p454 = por %p452, %p453
      %p456 = scmp.ne.s32.totalorder %s439, %s455
      %p457 = scmp.eq.s32.totalorder %s38, 0
      %p458 = por %p456, %p457
      %s459 = ssub.s32 %s32, %s39
      %p460 = scmp.eq.s32.totalorder %s459, 0
      %s462 = sadd.s32 %s461, 1
      %s463 = scalar_select %p460, %s461, %s462
      %p466 = pneg %p460
      %p467 = scmp.eq.s32.totalorder %s32, 1
      %p468 = por %p466, %p467
      %p469 = scmp.ne.s32.totalorder %s461, %s464
      %p470 = scmp.eq.s32.totalorder %s32, 0
      %p471 = por %p469, %p470
      %p472 = scmp.ne.s32.totalorder %s461, %s464
      %p473 = scmp.eq.s32.totalorder %s37, 1
      %p474 = por %p472, %p473
      %p475 = scmp.ne.s32.totalorder %s464, %s465
      %p476 = scmp.eq.s32.totalorder %s37, 0
      %p477 = por %p475, %p476
      %p478 = scmp.ne.s32.totalorder %s464, %s465
      %p479 = scmp.eq.s32.totalorder %s38, 1
      %p480 = por %p478, %p479
      %p482 = scmp.ne.s32.totalorder %s465, %s481
      %p483 = scmp.eq.s32.totalorder %s38, 0
      %p484 = por %p482, %p483
      %p485 = scmp.le.s32.totalorder 1, %s32
      %p486 = scmp.lt.s32.totalorder %s32, 3
      %p487 = pnand %p485, %p486
      %p488 = pneg %p487
      // Predicated region
      $region9: #{transformer_decoder_forward.12} parent=5 // pred_check
        _
      $region10: #{transformer_decoder_forward.12} parent=5 // pred_check_branch
        %490 = sbr.rel (%p487) target = $region12
      $region11: #{transformer_decoder_forward.12} parent=5 // pred_region
        %s491 = ssub.s32 %s32, 1
        // Predicated region
        $region13: #{transformer_decoder_forward.12} parent=11 // pred_check
          %p492 = pneg %p105
        $region14: #{transformer_decoder_forward.12} parent=11 // pred_check_branch
          %494 = sbr.rel (%p492) target = $region16
        $region15: #{transformer_decoder_forward.12} parent=11 // pred_region
          _
        $region16: #{transformer_decoder_forward.12} parent=11 // pred_fallthru
          _
        // Predicated region
        $region17: #{transformer_decoder_forward.12} parent=11 // pred_check
          %p495 = pneg %p126
        $region18: #{transformer_decoder_forward.12} parent=11 // pred_check_branch
          %497 = sbr.rel (%p495) target = $region20
        $region19: #{transformer_decoder_forward.12} parent=11 // pred_region
          _
        $region20: #{transformer_decoder_forward.12} parent=11 // pred_fallthru
          _
        // Predicated region
        $region21: #{transformer_decoder_forward.12} parent=11 // pred_check
          %p498 = pneg %p147
        $region22: #{transformer_decoder_forward.12} parent=11 // pred_check_branch
          %500 = sbr.rel (%p498) target = $region24
        $region23: #{transformer_decoder_forward.12} parent=11 // pred_region
          _
        $region24: #{transformer_decoder_forward.12} parent=11 // pred_fallthru
          _
        // Predicated region
        $region25: #{transformer_decoder_forward.12} parent=11 // pred_check
          %p501 = pneg %p168
        $region26: #{transformer_decoder_forward.12} parent=11 // pred_check_branch
          %503 = sbr.rel (%p501) target = $region28
        $region27: #{transformer_decoder_forward.12} parent=11 // pred_region
          _
        $region28: #{transformer_decoder_forward.12} parent=11 // pred_fallthru
          _
        // Predicated region
        $region29: #{transformer_decoder_forward.12} parent=11 // pred_check
          %p504 = pneg %p189
        $region30: #{transformer_decoder_forward.12} parent=11 // pred_check_branch
          %506 = sbr.rel (%p504) target = $region32
        $region31: #{transformer_decoder_forward.12} parent=11 // pred_region
          _
        $region32: #{transformer_decoder_forward.12} parent=11 // pred_fallthru
          _
        // Predicated region
        $region33: #{transformer_decoder_forward.12} parent=11 // pred_check
          %p507 = pneg %p210
        $region34: #{transformer_decoder_forward.12} parent=11 // pred_check_branch
          %509 = sbr.rel (%p507) target = $region36
        $region35: #{transformer_decoder_forward.12} parent=11 // pred_region
          _
        $region36: #{transformer_decoder_forward.12} parent=11 // pred_fallthru
          _
        // Predicated region
        $region37: #{transformer_decoder_forward.12} parent=11 // pred_check
          %p510 = pneg %p231
        $region38: #{transformer_decoder_forward.12} parent=11 // pred_check_branch
          %512 = sbr.rel (%p510) target = $region40
        $region39: #{transformer_decoder_forward.12} parent=11 // pred_region
          _
        $region40: #{transformer_decoder_forward.12} parent=11 // pred_fallthru
          _
        // Predicated region
        $region41: #{transformer_decoder_forward.12} parent=11 // pred_check
          %p513 = pneg %p252
        $region42: #{transformer_decoder_forward.12} parent=11 // pred_check_branch
          %515 = sbr.rel (%p513) target = $region44
        $region43: #{transformer_decoder_forward.12} parent=11 // pred_region
          _
        $region44: #{transformer_decoder_forward.12} parent=11 // pred_fallthru
          _
        // Predicated region
        $region45: #{transformer_decoder_forward.12} parent=11 // pred_check
          %p516 = pneg %p273
        $region46: #{transformer_decoder_forward.12} parent=11 // pred_check_branch
          %518 = sbr.rel (%p516) target = $region48
        $region47: #{transformer_decoder_forward.12} parent=11 // pred_region
          _
        $region48: #{transformer_decoder_forward.12} parent=11 // pred_fallthru
          _
        // Predicated region
        $region49: #{transformer_decoder_forward.12} parent=11 // pred_check
          %p519 = pneg %p294
        $region50: #{transformer_decoder_forward.12} parent=11 // pred_check_branch
          %521 = sbr.rel (%p519) target = $region52
        $region51: #{transformer_decoder_forward.12} parent=11 // pred_region
          _
        $region52: #{transformer_decoder_forward.12} parent=11 // pred_fallthru
          _
        // Predicated region
        $region53: #{transformer_decoder_forward.12} parent=11 // pred_check
          %p522 = pneg %p315
        $region54: #{transformer_decoder_forward.12} parent=11 // pred_check_branch
          %524 = sbr.rel (%p522) target = $region56
        $region55: #{transformer_decoder_forward.12} parent=11 // pred_region
          _
        $region56: #{transformer_decoder_forward.12} parent=11 // pred_fallthru
          _
        // Predicated region
        $region57: #{transformer_decoder_forward.12} parent=11 // pred_check
          %p525 = pneg %p336
        $region58: #{transformer_decoder_forward.12} parent=11 // pred_check_branch
          %527 = sbr.rel (%p525) target = $region60
        $region59: #{transformer_decoder_forward.12} parent=11 // pred_region
          _
        $region60: #{transformer_decoder_forward.12} parent=11 // pred_fallthru
          _
        // Predicated region
        $region61: #{transformer_decoder_forward.12} parent=11 // pred_check
          %p528 = pneg %p357
        $region62: #{transformer_decoder_forward.12} parent=11 // pred_check_branch
          %530 = sbr.rel (%p528) target = $region64
        $region63: #{transformer_decoder_forward.12} parent=11 // pred_region
          _
        $region64: #{transformer_decoder_forward.12} parent=11 // pred_fallthru
          _
        // Predicated region
        $region65: #{transformer_decoder_forward.12} parent=11 // pred_check
          %p531 = pneg %p378
        $region66: #{transformer_decoder_forward.12} parent=11 // pred_check_branch
          %533 = sbr.rel (%p531) target = $region68
        $region67: #{transformer_decoder_forward.12} parent=11 // pred_region
          _
        $region68: #{transformer_decoder_forward.12} parent=11 // pred_fallthru
          _
        // Predicated region
        $region69: #{transformer_decoder_forward.12} parent=11 // pred_check
          %p534 = pneg %p399
        $region70: #{transformer_decoder_forward.12} parent=11 // pred_check_branch
          %536 = sbr.rel (%p534) target = $region72
        $region71: #{transformer_decoder_forward.12} parent=11 // pred_region
          _
        $region72: #{transformer_decoder_forward.12} parent=11 // pred_fallthru
          _
      $region12: #{transformer_decoder_forward.12} parent=5 // pred_fallthru
        _
      %p537 = scmp.lt.s32.totalorder %s32, 2
      // Predicated region
      $region73: #{transformer_decoder_forward.12} parent=5 // pred_check
        %p538 = pneg %p537
      $region74: #{transformer_decoder_forward.12} parent=5 // pred_check_branch
        %540 = sbr.rel (%p538) target = $region76
      $region75: #{transformer_decoder_forward.12} parent=5 // pred_region
        // Predicated region
        $region77: #{transformer_decoder_forward.12} parent=75 // pred_check
          %p541 = pneg %p52
        $region78: #{transformer_decoder_forward.12} parent=75 // pred_check_branch
          %543 = sbr.rel (%p541) target = $region80
        $region79: #{transformer_decoder_forward.12} parent=75 // pred_region
          %p544 = scmp.lt.s32.totalorder %s32, 1
          %s545 = scalar_select %p544, %s32, 1
          %s546 = smul.addr %s545, 8
          %s547 = scalar_lea.vmem %s0, %s546
        $region80: #{transformer_decoder_forward.12} parent=75 // pred_fallthru
          _
        // Predicated region
        $region81: #{transformer_decoder_forward.12} parent=75 // pred_check
          %p548 = pneg %p78
        $region82: #{transformer_decoder_forward.12} parent=75 // pred_check_branch
          %550 = sbr.rel (%p548) target = $region84
        $region83: #{transformer_decoder_forward.12} parent=75 // pred_region
          %p551 = scmp.lt.s32.totalorder %s32, 1
          %s552 = scalar_select %p551, %s32, 1
          %s553 = smul.addr %s552, 8
          %s554 = scalar_lea.vmem %s1, %s553
        $region84: #{transformer_decoder_forward.12} parent=75 // pred_fallthru
          _
      $region76: #{transformer_decoder_forward.12} parent=5 // pred_fallthru
        _
      %p555 = scmp.le.s32.totalorder 1, %s32
      %p556 = scmp.lt.s32.totalorder %s32, 3
      %p557 = pnand %p555, %p556
      %p558 = pneg %p557
      // Predicated region
      $region85: #{transformer_decoder_forward.12} parent=5 // pred_check
        _
      $region86: #{transformer_decoder_forward.12} parent=5 // pred_check_branch
        %560 = sbr.rel (%p557) target = $region88
      $region87: #{transformer_decoder_forward.12} parent=5 // pred_region
        %s561 = ssub.s32 %s32, 1
        %p562 = scmp.lt.s32.totalorder %s37, 1
        %s563 = scalar_select %p562, %s37, 1
        %s564 = smul.addr %s563, 8
        %s565 = scalar_lea.vmem %s0, %s564
        %p566 = pneg %p58
        %p567 = pneg %p55
        %p568 = scmp.lt.s32.totalorder %s37, 1
        %s569 = scalar_select %p568, %s37, 1
        %s570 = smul.addr %s569, 8
        %s571 = scalar_lea.vmem %s1, %s570
        %p572 = pneg %p84
        %p573 = pneg %p81
        %p574 = pneg %p105
        %p575 = pneg %p102
        %p576 = pneg %p126
        %p577 = pneg %p123
        %p578 = pneg %p147
        %p579 = pneg %p144
        %p580 = pneg %p168
        %p581 = pneg %p165
        %p582 = pneg %p189
        %p583 = pneg %p186
        %p584 = pneg %p210
        %p585 = pneg %p207
        %p586 = pneg %p231
        %p587 = pneg %p228
        %p588 = pneg %p252
        %p589 = pneg %p249
        %p590 = pneg %p273
        %p591 = pneg %p270
        %p592 = pneg %p294
        %p593 = pneg %p291
        %p594 = pneg %p315
        %p595 = pneg %p312
        %p596 = pneg %p336
        %p597 = pneg %p333
        %p598 = pneg %p357
        %p599 = pneg %p354
        %p600 = pneg %p378
        %p601 = pneg %p375
        %p602 = pneg %p399
        %p603 = pneg %p396
        %p604 = pneg %p425
        %p605 = pneg %p422
        %s606 = sand.u32 %s412, 1
        %s607 = scalar_lea.sflag [#allocation3], %s606
        %s608 = sand.u32 %s412, 1
        %s609 = smul.addr %s608, 8
        %s610 = scalar_lea.vmem [#allocation2], %s609
        %p611 = pneg %p451
        %p612 = pneg %p448
        %p613 = scmp.lt.s32.totalorder %s37, 1
        %s614 = scalar_select %p613, %s37, 1
        %s615 = smul.addr %s614, 8
        %s616 = scalar_lea.vmem %s18, %s615
        %p617 = pneg %p477
        %p618 = pneg %p474
        %s619 = sand.u32 %s464, 1
        %s620 = scalar_lea.sflag [#allocation5], %s619
        %s621 = sand.u32 %s464, 1
        %s622 = smul.addr %s621, 8
        %s623 = scalar_lea.vmem [#allocation4], %s622
        %p624 = scmp.lt.s32.totalorder %s37, 1
        %s625 = scalar_select %p624, %s37, 1
        %s626 = smul.addr %s625, 8
        %s627 = scalar_lea.vmem %s0, %s626
        %p628 = scmp.lt.s32.totalorder %s37, 1
        %s629 = scalar_select %p628, %s37, 1
        %s630 = smul.addr %s629, 8
        %s631 = scalar_lea.vmem %s1, %s630
        %p632 = scmp.lt.s32.totalorder %s37, 1
        %s633 = scalar_select %p632, %s37, 1
        %s634 = smul.addr %s633, 8
        %s635 = scalar_lea.vmem %s18, %s634
        %v637 = vld [vmem:[%s627] sm:$0xff]
        %v638 = vld [vmem:[%s631] sm:$0xff]
        %v639 = vpack.c.bf16 %v638, %v638
        %v640 = vld [vmem:[%s2] sm:$0x3]
        %v641 = vld [vmem:[%s3] sm:$0x1]
        %v643 = vperm.slane %v641, 0
        %vm645 = vcmask 31744
        %v647 = vsel %vm645, %v639, 0
        %vm649 = vcmask 1041408
        %v651 = vsel %vm649, %v640, 0
        %653 = vmatpush.bf16.msra.mxu0 0
        %654 = vmatpush.bf16.msra.mxu0 0
        %655 = vmatpush.bf16.msra.mxu0 0
        %656 = vmatpush.bf16.msra.mxu0 0
        %657 = vmatpush.bf16.msra.mxu0 0
        %658 = vmatpush.bf16.msra.mxu0 0
        %659 = vmatpush.bf16.msra.mxu0 0
        %660 = vmatpush.bf16.msra.mxu0 %v651
        %661 = vmatmul.bf16.gmra.mxu0 %v647
        %v662 = vpop.f32.mrf.mxu0
        %v663 = vadd.f32 %v643, %v662
        %v664 = vpop.f32.mrf.mxu0
        %665 = vdwg.mxu0
        %v666 = vmax.f32 %v663, 0.0
        %v667 = vpack.c.bf16 %v666, %v666
        %v668 = vld [vmem:[%s4] sm:$0xf]
        %v669 = vld [vmem:[%s4 + $0x4] sm:$0xf]
        %v670 = vld [vmem:[%s4 + $0x8] sm:$0xf]
        %v671 = vld [vmem:[%s4 + $0xc] sm:$0xf]
        %v672 = vld [vmem:[%s4 + $0x10] sm:$0xf]
        %v673 = vld [vmem:[%s4 + $0x14] sm:$0xf]
        %v674 = vld [vmem:[%s4 + $0x18] sm:$0xf]
        %v675 = vld [vmem:[%s4 + $0x1c] sm:$0xf]
        %v676 = vld [vmem:[%s5] sm:$0x1]
        %v678 = vperm.slane %v676, 0
        %v688 = vunpack.c.l.b16 %v668
        %v689 = vunpack.c.l.b16 %v669
        %v690 = vunpack.c.l.b16 %v670
        %v691 = vunpack.c.l.b16 %v671
        %v692 = vunpack.c.l.b16 %v672
        %v693 = vunpack.c.l.b16 %v673
        %v694 = vunpack.c.l.b16 %v674
        %v695 = vunpack.c.l.b16 %v675
        %v696 = vpack.c.b16 %v689, %v688
        %v697 = vpack.c.b16 %v691, %v690
        %v698 = vpack.c.b16 %v693, %v692
        %v699 = vpack.c.b16 %v695, %v694
        %vm704 = vcmask 523264
        %v706 = vsel %vm704, %v667, 0
        %708 = vmatpush.bf16.msra.mxu0 0
        %709 = vmatpush.bf16.msra.mxu0 0
        %710 = vmatpush.bf16.msra.mxu0 0
        %711 = vmatpush.bf16.msra.mxu0 0
        %712 = vmatpush.bf16.msra.mxu0 %v699
        %713 = vmatpush.bf16.msra.mxu0 %v698
        %714 = vmatpush.bf16.msra.mxu0 %v697
        %715 = vmatpush.bf16.msra.mxu0 %v696
        %716 = vmatmul.bf16.gmra.mxu0 %v706
        %v717 = vpop.f32.mrf.mxu0
        %v718 = vadd.f32 %v678, %v717
        %v719 = vpop.f32.mrf.mxu0
        %720 = vdwg.mxu0
        %v721 = vadd.f32 %v637, %v718
        %v722 = vpack.c.bf16 %v721, %v721
        %v723 = vld [vmem:[%s6] sm:$0xf]
        %v724 = vld [vmem:[%s6 + $0x4] sm:$0xf]
        %v725 = vld [vmem:[%s6 + $0x8] sm:$0xf]
        %v726 = vld [vmem:[%s6 + $0xc] sm:$0xf]
        %v727 = vld [vmem:[%s7] sm:$0x1]
        %v729 = vperm.slane %v727, 0
        %v735 = vunpack.c.l.b16 %v723
        %v736 = vunpack.c.l.b16 %v724
        %v737 = vunpack.c.l.b16 %v725
        %v738 = vunpack.c.l.b16 %v726
        %v739 = vpack.c.b16 %v736, %v735
        %v740 = vpack.c.b16 %v738, %v737
        %vm743 = vcmask 261120
        %v745 = vsel %vm743, %v722, 0
        %747 = vmatpush.bf16.msra.mxu0 0
        %748 = vmatpush.bf16.msra.mxu0 0
        %749 = vmatpush.bf16.msra.mxu0 0
        %750 = vmatpush.bf16.msra.mxu0 0
        %751 = vmatpush.bf16.msra.mxu0 0
        %752 = vmatpush.bf16.msra.mxu0 0
        %753 = vmatpush.bf16.msra.mxu0 %v740
        %754 = vmatpush.bf16.msra.mxu0 %v739
        %755 = vmatmul.bf16.gmra.mxu0 %v745
        %v756 = vpop.f32.mrf.mxu0
        %v757 = vadd.f32 %v729, %v756
        %v758 = vpop.f32.mrf.mxu0
        %759 = vdwg.mxu0
        %v760 = vpack.c.bf16 %v637, %v637
        %v761 = vld [vmem:[%s8] sm:$0xf]
        %v762 = vld [vmem:[%s8 + $0x4] sm:$0xf]
        %v763 = vld [vmem:[%s8 + $0x8] sm:$0xf]
        %v764 = vld [vmem:[%s8 + $0xc] sm:$0xf]
        %v765 = vld [vmem:[%s9] sm:$0x1]
        %v767 = vperm.slane %v765, 0
        %v773 = vunpack.c.l.b16 %v761
        %v774 = vunpack.c.l.b16 %v762
        %v775 = vunpack.c.l.b16 %v763
        %v776 = vunpack.c.l.b16 %v764
        %v777 = vpack.c.b16 %v774, %v773
        %v778 = vpack.c.b16 %v776, %v775
        %v782 = vsel %vm743, %v760, 0
        %784 = vmatpush.bf16.msra.mxu0 0
        %785 = vmatpush.bf16.msra.mxu0 0
        %786 = vmatpush.bf16.msra.mxu0 0
        %787 = vmatpush.bf16.msra.mxu0 0
        %788 = vmatpush.bf16.msra.mxu0 0
        %789 = vmatpush.bf16.msra.mxu0 0
        %790 = vmatpush.bf16.msra.mxu0 %v778
        %791 = vmatpush.bf16.msra.mxu0 %v777
        %792 = vmatmul.bf16.gmra.mxu0 %v782
        %v793 = vpop.f32.mrf.mxu0
        %v794 = vadd.f32 %v767, %v793
        %v795 = vpop.f32.mrf.mxu0
        %796 = vdwg.mxu0
        %v797 = vpack.c.bf16 %v757, %v757
        %v798 = vpack.c.bf16 %v794, %v794
        %800 = vrot.lane.b32.xlu0 %v797, 96
        %v801 = vpop.permute.xlu0 %800
        %v803 = vsel %vm645, %v797, 0
        %v806 = vsel %vm645, %v801, 0
        %808 = vmatpush.bf16.xpose.msra.mxu0 0
        %809 = vmatpush.bf16.xpose.msra.mxu0 0
        %810 = vmatpush.bf16.xpose.msra.mxu0 0
        %811 = vmatpush.bf16.xpose.msra.mxu0 0
        %812 = vmatpush.bf16.xpose.msra.mxu0 0
        %813 = vmatpush.bf16.xpose.msra.mxu0 0
        %814 = vmatpush.bf16.xpose.msra.mxu0 0
        %815 = vmatpush.bf16.xpose.msra.mxu0 %v806
        %816 = vmatmul.bf16.gmra.mxu0 %v803
        %v817 = vpop.f32.mrf.mxu0
        %v818 = vadd.f32 0.0, %v817
        %v819 = vpop.f32.mrf.mxu0
        %820 = vdwg.mxu0
        %v821 = vmul.f32 %v818, 0.5
        %vm822 = vcmask 64512
        %v823 = vsel %vm822, %v821, -inf
        %824 = vmax.xlane.f32.xlu0 %v823
        %v825 = vpop.xlane.xlu0 %824
        %v826 = vsub.f32 %v821, %v825
        %v827 = vmul.f32 %v826, 1.442695
        %v828 = vpow.pop %v827
        %v829 = vsel %vm822, %v828, 0.0
        %830 = vadd.xlane.f32.xlu0 %v829
        %v831 = vpop.xlane.xlu0 %830
        %v832 = vrcp.pop %v831
        %v833 = vmul.f32 %v828, %v832
        %v834 = vpack.c.bf16 %v833, %v833
        %v836 = vsel %vm822, %v834, 0
        %vm838 = vcmask 1043456
        %v840 = vsel %vm838, %v798, 0
        %842 = vmatpush.bf16.msra.mxu0 0
        %843 = vmatpush.bf16.msra.mxu0 0
        %844 = vmatpush.bf16.msra.mxu0 0
        %845 = vmatpush.bf16.msra.mxu0 0
        %846 = vmatpush.bf16.msra.mxu0 0
        %847 = vmatpush.bf16.msra.mxu0 0
        %848 = vmatpush.bf16.msra.mxu0 0
        %849 = vmatpush.bf16.msra.mxu0 %v840
        %850 = vmatmul.bf16.gmra.mxu0 %v836
        %v851 = vpop.f32.mrf.mxu0
        %v852 = vadd.f32 0.0, %v851
        %v853 = vpop.f32.mrf.mxu0
        %854 = vdwg.mxu0
        %v855 = vpack.c.bf16 %v852, %v852
        %v856 = vld [vmem:[%s10] sm:$0x3]
        %857 = vrot.lane.b32.xlu0 %v797, 124
        %v858 = vpop.permute.xlu0 %857
        %859 = vrot.lane.b32.xlu0 %v797, 92
        %v860 = vpop.permute.xlu0 %859
        %v862 = vsel %vm645, %v858, 0
        %v865 = vsel %vm645, %v860, 0
        %867 = vmatpush.bf16.xpose.msra.mxu0 0
        %868 = vmatpush.bf16.xpose.msra.mxu0 0
        %869 = vmatpush.bf16.xpose.msra.mxu0 0
        %870 = vmatpush.bf16.xpose.msra.mxu0 0
        %871 = vmatpush.bf16.xpose.msra.mxu0 0
        %872 = vmatpush.bf16.xpose.msra.mxu0 0
        %873 = vmatpush.bf16.xpose.msra.mxu0 0
        %874 = vmatpush.bf16.xpose.msra.mxu0 %v865
        %875 = vmatmul.bf16.gmra.mxu0 %v862
        %v876 = vpop.f32.mrf.mxu0
        %v877 = vadd.f32 0.0, %v876
        %v878 = vpop.f32.mrf.mxu0
        %879 = vdwg.mxu0
        %v880 = vmul.f32 %v877, 0.5
        %v881 = vsel %vm822, %v880, -inf
        %882 = vmax.xlane.f32.xlu0 %v881
        %v883 = vpop.xlane.xlu0 %882
        %v884 = vsub.f32 %v880, %v883
        %v885 = vmul.f32 %v884, 1.442695
        %v886 = vpow.pop %v885
        %v887 = vsel %vm822, %v886, 0.0
        %888 = vadd.xlane.f32.xlu0 %v887
        %v889 = vpop.xlane.xlu0 %888
        %v890 = vrcp.pop %v889
        %v891 = vmul.f32 %v886, %v890
        %v892 = vpack.c.bf16 %v891, %v891
        %894 = vrot.lane.b32.xlu0 %v798, 124
        %v895 = vpop.permute.xlu0 %894
        %v897 = vsel %vm822, %v892, 0
        %v900 = vsel %vm838, %v895, 0
        %902 = vmatpush.bf16.msra.mxu0 0
        %903 = vmatpush.bf16.msra.mxu0 0
        %904 = vmatpush.bf16.msra.mxu0 0
        %905 = vmatpush.bf16.msra.mxu0 0
        %906 = vmatpush.bf16.msra.mxu0 0
        %907 = vmatpush.bf16.msra.mxu0 0
        %908 = vmatpush.bf16.msra.mxu0 0
        %909 = vmatpush.bf16.msra.mxu0 %v900
        %910 = vmatmul.bf16.gmra.mxu0 %v897
        %v911 = vpop.f32.mrf.mxu0
        %v912 = vadd.f32 0.0, %v911
        %v913 = vpop.f32.mrf.mxu0
        %914 = vdwg.mxu0
        %v915 = vpack.c.bf16 %v912, %v912
        %s916 = scalar_lea.vmem %s10, 2
        %v917 = vld [vmem:[%s916] sm:$0x3]
        %v919 = vsel %vm645, %v915, 0
        %v922 = vsel %vm649, %v917, 0
        %924 = vmatpush.bf16.msra.mxu0 0
        %925 = vmatpush.bf16.msra.mxu0 0
        %926 = vmatpush.bf16.msra.mxu0 0
        %927 = vmatpush.bf16.msra.mxu0 0
        %928 = vmatpush.bf16.msra.mxu0 0
        %929 = vmatpush.bf16.msra.mxu0 0
        %930 = vmatpush.bf16.msra.mxu0 0
        %931 = vmatpush.bf16.msra.mxu0 %v922
        %932 = vmatmul.bf16.gmra.mxu0 %v919
        %v933 = vpop.f32.mrf.mxu0
        %v934 = vadd.f32 0.0, %v933
        %v935 = vpop.f32.mrf.mxu0
        %936 = vdwg.mxu0
        %v938 = vsel %vm645, %v855, 0
        %v941 = vsel %vm649, %v856, 0
        %943 = vmatpush.bf16.msra.mxu0 0
        %944 = vmatpush.bf16.msra.mxu0 0
        %945 = vmatpush.bf16.msra.mxu0 0
        %946 = vmatpush.bf16.msra.mxu0 0
        %947 = vmatpush.bf16.msra.mxu0 0
        %948 = vmatpush.bf16.msra.mxu0 0
        %949 = vmatpush.bf16.msra.mxu0 0
        %950 = vmatpush.bf16.msra.mxu0 %v941
        %951 = vmatmul.bf16.gmra.mxu0 %v938
        %v952 = vpop.f32.mrf.mxu0
        %v953 = vadd.f32 %v934, %v952
        %v954 = vpop.f32.mrf.mxu0
        %955 = vdwg.mxu0
        %956 = vrot.lane.b32.xlu0 %v797, 120
        %v957 = vpop.permute.xlu0 %956
        %958 = vrot.lane.b32.xlu0 %v797, 88
        %v959 = vpop.permute.xlu0 %958
        %v961 = vsel %vm645, %v957, 0
        %v964 = vsel %vm645, %v959, 0
        %966 = vmatpush.bf16.xpose.msra.mxu0 0
        %967 = vmatpush.bf16.xpose.msra.mxu0 0
        %968 = vmatpush.bf16.xpose.msra.mxu0 0
        %969 = vmatpush.bf16.xpose.msra.mxu0 0
        %970 = vmatpush.bf16.xpose.msra.mxu0 0
        %971 = vmatpush.bf16.xpose.msra.mxu0 0
        %972 = vmatpush.bf16.xpose.msra.mxu0 0
        %973 = vmatpush.bf16.xpose.msra.mxu0 %v964
        %974 = vmatmul.bf16.gmra.mxu0 %v961
        %v975 = vpop.f32.mrf.mxu0
        %v976 = vadd.f32 0.0, %v975
        %v977 = vpop.f32.mrf.mxu0
        %978 = vdwg.mxu0
        %v979 = vmul.f32 %v976, 0.5
        %v980 = vsel %vm822, %v979, -inf
        %981 = vmax.xlane.f32.xlu0 %v980
        %v982 = vpop.xlane.xlu0 %981
        %v983 = vsub.f32 %v979, %v982
        %v984 = vmul.f32 %v983, 1.442695
        %v985 = vpow.pop %v984
        %v986 = vsel %vm822, %v985, 0.0
        %987 = vadd.xlane.f32.xlu0 %v986
        %v988 = vpop.xlane.xlu0 %987
        %v989 = vrcp.pop %v988
        %v990 = vmul.f32 %v985, %v989
        %v991 = vpack.c.bf16 %v990, %v990
        %992 = vrot.lane.b32.xlu0 %v798, 120
        %v993 = vpop.permute.xlu0 %992
        %v995 = vsel %vm822, %v991, 0
        %v998 = vsel %vm838, %v993, 0
        %1000 = vmatpush.bf16.msra.mxu0 0
        %1001 = vmatpush.bf16.msra.mxu0 0
        %1002 = vmatpush.bf16.msra.mxu0 0
        %1003 = vmatpush.bf16.msra.mxu0 0
        %1004 = vmatpush.bf16.msra.mxu0 0
        %1005 = vmatpush.bf16.msra.mxu0 0
        %1006 = vmatpush.bf16.msra.mxu0 0
        %1007 = vmatpush.bf16.msra.mxu0 %v998
        %1008 = vmatmul.bf16.gmra.mxu0 %v995
        %v1009 = vpop.f32.mrf.mxu0
        %v1010 = vadd.f32 0.0, %v1009
        %v1011 = vpop.f32.mrf.mxu0
        %1012 = vdwg.mxu0
        %v1013 = vpack.c.bf16 %v1010, %v1010
        %s1014 = scalar_lea.vmem %s10, 4
        %v1015 = vld [vmem:[%s1014] sm:$0x3]
        %v1017 = vsel %vm645, %v1013, 0
        %v1020 = vsel %vm649, %v1015, 0
        %1022 = vmatpush.bf16.msra.mxu0 0
        %1023 = vmatpush.bf16.msra.mxu0 0
        %1024 = vmatpush.bf16.msra.mxu0 0
        %1025 = vmatpush.bf16.msra.mxu0 0
        %1026 = vmatpush.bf16.msra.mxu0 0
        %1027 = vmatpush.bf16.msra.mxu0 0
        %1028 = vmatpush.bf16.msra.mxu0 0
        %1029 = vmatpush.bf16.msra.mxu0 %v1020
        %1030 = vmatmul.bf16.gmra.mxu0 %v1017
        %v1031 = vpop.f32.mrf.mxu0
        %v1032 = vadd.f32 0.0, %v1031
        %v1033 = vpop.f32.mrf.mxu0
        %1034 = vdwg.mxu0
        %v1035 = vadd.f32 %v953, %v1032
        %1036 = vrot.lane.b32.xlu0 %v797, 116
        %v1037 = vpop.permute.xlu0 %1036
        %1038 = vrot.lane.b32.xlu0 %v797, 84
        %v1039 = vpop.permute.xlu0 %1038
        %v1041 = vsel %vm645, %v1037, 0
        %v1044 = vsel %vm645, %v1039, 0
        %1046 = vmatpush.bf16.xpose.msra.mxu0 0
        %1047 = vmatpush.bf16.xpose.msra.mxu0 0
        %1048 = vmatpush.bf16.xpose.msra.mxu0 0
        %1049 = vmatpush.bf16.xpose.msra.mxu0 0
        %1050 = vmatpush.bf16.xpose.msra.mxu0 0
        %1051 = vmatpush.bf16.xpose.msra.mxu0 0
        %1052 = vmatpush.bf16.xpose.msra.mxu0 0
        %1053 = vmatpush.bf16.xpose.msra.mxu0 %v1044
        %1054 = vmatmul.bf16.gmra.mxu0 %v1041
        %v1055 = vpop.f32.mrf.mxu0
        %v1056 = vadd.f32 0.0, %v1055
        %v1057 = vpop.f32.mrf.mxu0
        %1058 = vdwg.mxu0
        %v1059 = vmul.f32 %v1056, 0.5
        %v1060 = vsel %vm822, %v1059, -inf
        %1061 = vmax.xlane.f32.xlu0 %v1060
        %v1062 = vpop.xlane.xlu0 %1061
        %v1063 = vsub.f32 %v1059, %v1062
        %v1064 = vmul.f32 %v1063, 1.442695
        %v1065 = vpow.pop %v1064
        %v1066 = vsel %vm822, %v1065, 0.0
        %1067 = vadd.xlane.f32.xlu0 %v1066
        %v1068 = vpop.xlane.xlu0 %1067
        %v1069 = vrcp.pop %v1068
        %v1070 = vmul.f32 %v1065, %v1069
        %v1071 = vpack.c.bf16 %v1070, %v1070
        %1072 = vrot.lane.b32.xlu0 %v798, 116
        %v1073 = vpop.permute.xlu0 %1072
        %v1075 = vsel %vm822, %v1071, 0
        %v1078 = vsel %vm838, %v1073, 0
        %1080 = vmatpush.bf16.msra.mxu0 0
        %1081 = vmatpush.bf16.msra.mxu0 0
        %1082 = vmatpush.bf16.msra.mxu0 0
        %1083 = vmatpush.bf16.msra.mxu0 0
        %1084 = vmatpush.bf16.msra.mxu0 0
        %1085 = vmatpush.bf16.msra.mxu0 0
        %1086 = vmatpush.bf16.msra.mxu0 0
        %1087 = vmatpush.bf16.msra.mxu0 %v1078
        %1088 = vmatmul.bf16.gmra.mxu0 %v1075
        %v1089 = vpop.f32.mrf.mxu0
        %v1090 = vadd.f32 0.0, %v1089
        %v1091 = vpop.f32.mrf.mxu0
        %1092 = vdwg.mxu0
        %v1093 = vpack.c.bf16 %v1090, %v1090
        %s1094 = scalar_lea.vmem %s10, 6
        %v1095 = vld [vmem:[%s1094] sm:$0x3]
        %v1097 = vsel %vm645, %v1093, 0
        %v1100 = vsel %vm649, %v1095, 0
        %1102 = vmatpush.bf16.msra.mxu0 0
        %1103 = vmatpush.bf16.msra.mxu0 0
        %1104 = vmatpush.bf16.msra.mxu0 0
        %1105 = vmatpush.bf16.msra.mxu0 0
        %1106 = vmatpush.bf16.msra.mxu0 0
        %1107 = vmatpush.bf16.msra.mxu0 0
        %1108 = vmatpush.bf16.msra.mxu0 0
        %1109 = vmatpush.bf16.msra.mxu0 %v1100
        %1110 = vmatmul.bf16.gmra.mxu0 %v1097
        %v1111 = vpop.f32.mrf.mxu0
        %v1112 = vadd.f32 0.0, %v1111
        %v1113 = vpop.f32.mrf.mxu0
        %1114 = vdwg.mxu0
        %v1115 = vadd.f32 %v1035, %v1112
        %1116 = vrot.lane.b32.xlu0 %v797, 112
        %v1117 = vpop.permute.xlu0 %1116
        %1118 = vrot.lane.b32.xlu0 %v797, 80
        %v1119 = vpop.permute.xlu0 %1118
        %v1121 = vsel %vm645, %v1117, 0
        %v1124 = vsel %vm645, %v1119, 0
        %1126 = vmatpush.bf16.xpose.msra.mxu0 0
        %1127 = vmatpush.bf16.xpose.msra.mxu0 0
        %1128 = vmatpush.bf16.xpose.msra.mxu0 0
        %1129 = vmatpush.bf16.xpose.msra.mxu0 0
        %1130 = vmatpush.bf16.xpose.msra.mxu0 0
        %1131 = vmatpush.bf16.xpose.msra.mxu0 0
        %1132 = vmatpush.bf16.xpose.msra.mxu0 0
        %1133 = vmatpush.bf16.xpose.msra.mxu0 %v1124
        %1134 = vmatmul.bf16.gmra.mxu0 %v1121
        %v1135 = vpop.f32.mrf.mxu0
        %v1136 = vadd.f32 0.0, %v1135
        %v1137 = vpop.f32.mrf.mxu0
        %1138 = vdwg.mxu0
        %v1139 = vmul.f32 %v1136, 0.5
        %v1140 = vsel %vm822, %v1139, -inf
        %1141 = vmax.xlane.f32.xlu0 %v1140
        %v1142 = vpop.xlane.xlu0 %1141
        %v1143 = vsub.f32 %v1139, %v1142
        %v1144 = vmul.f32 %v1143, 1.442695
        %v1145 = vpow.pop %v1144
        %v1146 = vsel %vm822, %v1145, 0.0
        %1147 = vadd.xlane.f32.xlu0 %v1146
        %v1148 = vpop.xlane.xlu0 %1147
        %v1149 = vrcp.pop %v1148
        %v1150 = vmul.f32 %v1145, %v1149
        %v1151 = vpack.c.bf16 %v1150, %v1150
        %1152 = vrot.lane.b32.xlu0 %v798, 112
        %v1153 = vpop.permute.xlu0 %1152
        %v1155 = vsel %vm822, %v1151, 0
        %v1158 = vsel %vm838, %v1153, 0
        %1160 = vmatpush.bf16.msra.mxu0 0
        %1161 = vmatpush.bf16.msra.mxu0 0
        %1162 = vmatpush.bf16.msra.mxu0 0
        %1163 = vmatpush.bf16.msra.mxu0 0
        %1164 = vmatpush.bf16.msra.mxu0 0
        %1165 = vmatpush.bf16.msra.mxu0 0
        %1166 = vmatpush.bf16.msra.mxu0 0
        %1167 = vmatpush.bf16.msra.mxu0 %v1158
        %1168 = vmatmul.bf16.gmra.mxu0 %v1155
        %v1169 = vpop.f32.mrf.mxu0
        %v1170 = vadd.f32 0.0, %v1169
        %v1171 = vpop.f32.mrf.mxu0
        %1172 = vdwg.mxu0
        %v1173 = vpack.c.bf16 %v1170, %v1170
        %s1174 = scalar_lea.vmem %s10, 8
        %v1175 = vld [vmem:[%s1174] sm:$0x3]
        %v1177 = vsel %vm645, %v1173, 0
        %v1180 = vsel %vm649, %v1175, 0
        %1182 = vmatpush.bf16.msra.mxu0 0
        %1183 = vmatpush.bf16.msra.mxu0 0
        %1184 = vmatpush.bf16.msra.mxu0 0
        %1185 = vmatpush.bf16.msra.mxu0 0
        %1186 = vmatpush.bf16.msra.mxu0 0
        %1187 = vmatpush.bf16.msra.mxu0 0
        %1188 = vmatpush.bf16.msra.mxu0 0
        %1189 = vmatpush.bf16.msra.mxu0 %v1180
        %1190 = vmatmul.bf16.gmra.mxu0 %v1177
        %v1191 = vpop.f32.mrf.mxu0
        %v1192 = vadd.f32 0.0, %v1191
        %v1193 = vpop.f32.mrf.mxu0
        %1194 = vdwg.mxu0
        %v1195 = vadd.f32 %v1115, %v1192
        %1196 = vrot.lane.b32.xlu0 %v797, 108
        %v1197 = vpop.permute.xlu0 %1196
        %1198 = vrot.lane.b32.xlu0 %v797, 76
        %v1199 = vpop.permute.xlu0 %1198
        %v1201 = vsel %vm645, %v1197, 0
        %v1204 = vsel %vm645, %v1199, 0
        %1206 = vmatpush.bf16.xpose.msra.mxu0 0
        %1207 = vmatpush.bf16.xpose.msra.mxu0 0
        %1208 = vmatpush.bf16.xpose.msra.mxu0 0
        %1209 = vmatpush.bf16.xpose.msra.mxu0 0
        %1210 = vmatpush.bf16.xpose.msra.mxu0 0
        %1211 = vmatpush.bf16.xpose.msra.mxu0 0
        %1212 = vmatpush.bf16.xpose.msra.mxu0 0
        %1213 = vmatpush.bf16.xpose.msra.mxu0 %v1204
        %1214 = vmatmul.bf16.gmra.mxu0 %v1201
        %v1215 = vpop.f32.mrf.mxu0
        %v1216 = vadd.f32 0.0, %v1215
        %v1217 = vpop.f32.mrf.mxu0
        %1218 = vdwg.mxu0
        %v1219 = vmul.f32 %v1216, 0.5
        %v1220 = vsel %vm822, %v1219, -inf
        %1221 = vmax.xlane.f32.xlu0 %v1220
        %v1222 = vpop.xlane.xlu0 %1221
        %v1223 = vsub.f32 %v1219, %v1222
        %v1224 = vmul.f32 %v1223, 1.442695
        %v1225 = vpow.pop %v1224
        %v1226 = vsel %vm822, %v1225, 0.0
        %1227 = vadd.xlane.f32.xlu0 %v1226
        %v1228 = vpop.xlane.xlu0 %1227
        %v1229 = vrcp.pop %v1228
        %v1230 = vmul.f32 %v1225, %v1229
        %v1231 = vpack.c.bf16 %v1230, %v1230
        %1232 = vrot.lane.b32.xlu0 %v798, 108
        %v1233 = vpop.permute.xlu0 %1232
        %v1235 = vsel %vm822, %v1231, 0
        %v1238 = vsel %vm838, %v1233, 0
        %1240 = vmatpush.bf16.msra.mxu0 0
        %1241 = vmatpush.bf16.msra.mxu0 0
        %1242 = vmatpush.bf16.msra.mxu0 0
        %1243 = vmatpush.bf16.msra.mxu0 0
        %1244 = vmatpush.bf16.msra.mxu0 0
        %1245 = vmatpush.bf16.msra.mxu0 0
        %1246 = vmatpush.bf16.msra.mxu0 0
        %1247 = vmatpush.bf16.msra.mxu0 %v1238
        %1248 = vmatmul.bf16.gmra.mxu0 %v1235
        %v1249 = vpop.f32.mrf.mxu0
        %v1250 = vadd.f32 0.0, %v1249
        %v1251 = vpop.f32.mrf.mxu0
        %1252 = vdwg.mxu0
        %v1253 = vpack.c.bf16 %v1250, %v1250
        %s1254 = scalar_lea.vmem %s10, 10
        %v1255 = vld [vmem:[%s1254] sm:$0x3]
        %v1257 = vsel %vm645, %v1253, 0
        %v1260 = vsel %vm649, %v1255, 0
        %1262 = vmatpush.bf16.msra.mxu0 0
        %1263 = vmatpush.bf16.msra.mxu0 0
        %1264 = vmatpush.bf16.msra.mxu0 0
        %1265 = vmatpush.bf16.msra.mxu0 0
        %1266 = vmatpush.bf16.msra.mxu0 0
        %1267 = vmatpush.bf16.msra.mxu0 0
        %1268 = vmatpush.bf16.msra.mxu0 0
        %1269 = vmatpush.bf16.msra.mxu0 %v1260
        %1270 = vmatmul.bf16.gmra.mxu0 %v1257
        %v1271 = vpop.f32.mrf.mxu0
        %v1272 = vadd.f32 0.0, %v1271
        %v1273 = vpop.f32.mrf.mxu0
        %1274 = vdwg.mxu0
        %v1275 = vadd.f32 %v1195, %v1272
        %1276 = vrot.lane.b32.xlu0 %v797, 104
        %v1277 = vpop.permute.xlu0 %1276
        %1278 = vrot.lane.b32.xlu0 %v797, 72
        %v1279 = vpop.permute.xlu0 %1278
        %v1281 = vsel %vm645, %v1277, 0
        %v1284 = vsel %vm645, %v1279, 0
        %1286 = vmatpush.bf16.xpose.msra.mxu0 0
        %1287 = vmatpush.bf16.xpose.msra.mxu0 0
        %1288 = vmatpush.bf16.xpose.msra.mxu0 0
        %1289 = vmatpush.bf16.xpose.msra.mxu0 0
        %1290 = vmatpush.bf16.xpose.msra.mxu0 0
        %1291 = vmatpush.bf16.xpose.msra.mxu0 0
        %1292 = vmatpush.bf16.xpose.msra.mxu0 0
        %1293 = vmatpush.bf16.xpose.msra.mxu0 %v1284
        %1294 = vmatmul.bf16.gmra.mxu0 %v1281
        %v1295 = vpop.f32.mrf.mxu0
        %v1296 = vadd.f32 0.0, %v1295
        %v1297 = vpop.f32.mrf.mxu0
        %1298 = vdwg.mxu0
        %v1299 = vmul.f32 %v1296, 0.5
        %v1300 = vsel %vm822, %v1299, -inf
        %1301 = vmax.xlane.f32.xlu0 %v1300
        %v1302 = vpop.xlane.xlu0 %1301
        %v1303 = vsub.f32 %v1299, %v1302
        %v1304 = vmul.f32 %v1303, 1.442695
        %v1305 = vpow.pop %v1304
        %v1306 = vsel %vm822, %v1305, 0.0
        %1307 = vadd.xlane.f32.xlu0 %v1306
        %v1308 = vpop.xlane.xlu0 %1307
        %v1309 = vrcp.pop %v1308
        %v1310 = vmul.f32 %v1305, %v1309
        %v1311 = vpack.c.bf16 %v1310, %v1310
        %1312 = vrot.lane.b32.xlu0 %v798, 104
        %v1313 = vpop.permute.xlu0 %1312
        %v1315 = vsel %vm822, %v1311, 0
        %v1318 = vsel %vm838, %v1313, 0
        %1320 = vmatpush.bf16.msra.mxu0 0
        %1321 = vmatpush.bf16.msra.mxu0 0
        %1322 = vmatpush.bf16.msra.mxu0 0
        %1323 = vmatpush.bf16.msra.mxu0 0
        %1324 = vmatpush.bf16.msra.mxu0 0
        %1325 = vmatpush.bf16.msra.mxu0 0
        %1326 = vmatpush.bf16.msra.mxu0 0
        %1327 = vmatpush.bf16.msra.mxu0 %v1318
        %1328 = vmatmul.bf16.gmra.mxu0 %v1315
        %v1329 = vpop.f32.mrf.mxu0
        %v1330 = vadd.f32 0.0, %v1329
        %v1331 = vpop.f32.mrf.mxu0
        %1332 = vdwg.mxu0
        %v1333 = vpack.c.bf16 %v1330, %v1330
        %s1334 = scalar_lea.vmem %s10, 12
        %v1335 = vld [vmem:[%s1334] sm:$0x3]
        %v1337 = vsel %vm645, %v1333, 0
        %v1340 = vsel %vm649, %v1335, 0
        %1342 = vmatpush.bf16.msra.mxu0 0
        %1343 = vmatpush.bf16.msra.mxu0 0
        %1344 = vmatpush.bf16.msra.mxu0 0
        %1345 = vmatpush.bf16.msra.mxu0 0
        %1346 = vmatpush.bf16.msra.mxu0 0
        %1347 = vmatpush.bf16.msra.mxu0 0
        %1348 = vmatpush.bf16.msra.mxu0 0
        %1349 = vmatpush.bf16.msra.mxu0 %v1340
        %1350 = vmatmul.bf16.gmra.mxu0 %v1337
        %v1351 = vpop.f32.mrf.mxu0
        %v1352 = vadd.f32 0.0, %v1351
        %v1353 = vpop.f32.mrf.mxu0
        %1354 = vdwg.mxu0
        %v1355 = vadd.f32 %v1275, %v1352
        %1356 = vrot.lane.b32.xlu0 %v797, 100
        %v1357 = vpop.permute.xlu0 %1356
        %1358 = vrot.lane.b32.xlu0 %v797, 68
        %v1359 = vpop.permute.xlu0 %1358
        %v1361 = vsel %vm645, %v1357, 0
        %v1364 = vsel %vm645, %v1359, 0
        %1366 = vmatpush.bf16.xpose.msra.mxu0 0
        %1367 = vmatpush.bf16.xpose.msra.mxu0 0
        %1368 = vmatpush.bf16.xpose.msra.mxu0 0
        %1369 = vmatpush.bf16.xpose.msra.mxu0 0
        %1370 = vmatpush.bf16.xpose.msra.mxu0 0
        %1371 = vmatpush.bf16.xpose.msra.mxu0 0
        %1372 = vmatpush.bf16.xpose.msra.mxu0 0
        %1373 = vmatpush.bf16.xpose.msra.mxu0 %v1364
        %1374 = vmatmul.bf16.gmra.mxu0 %v1361
        %v1375 = vpop.f32.mrf.mxu0
        %v1376 = vadd.f32 0.0, %v1375
        %v1377 = vpop.f32.mrf.mxu0
        %1378 = vdwg.mxu0
        %v1379 = vmul.f32 %v1376, 0.5
        %v1380 = vsel %vm822, %v1379, -inf
        %1381 = vmax.xlane.f32.xlu0 %v1380
        %v1382 = vpop.xlane.xlu0 %1381
        %v1383 = vsub.f32 %v1379, %v1382
        %v1384 = vmul.f32 %v1383, 1.442695
        %v1385 = vpow.pop %v1384
        %v1386 = vsel %vm822, %v1385, 0.0
        %1387 = vadd.xlane.f32.xlu0 %v1386
        %v1388 = vpop.xlane.xlu0 %1387
        %v1389 = vrcp.pop %v1388
        %v1390 = vmul.f32 %v1385, %v1389
        %v1391 = vpack.c.bf16 %v1390, %v1390
        %1392 = vrot.lane.b32.xlu0 %v798, 100
        %v1393 = vpop.permute.xlu0 %1392
        %v1395 = vsel %vm822, %v1391, 0
        %v1398 = vsel %vm838, %v1393, 0
        %1400 = vmatpush.bf16.msra.mxu0 0
        %1401 = vmatpush.bf16.msra.mxu0 0
        %1402 = vmatpush.bf16.msra.mxu0 0
        %1403 = vmatpush.bf16.msra.mxu0 0
        %1404 = vmatpush.bf16.msra.mxu0 0
        %1405 = vmatpush.bf16.msra.mxu0 0
        %1406 = vmatpush.bf16.msra.mxu0 0
        %1407 = vmatpush.bf16.msra.mxu0 %v1398
        %1408 = vmatmul.bf16.gmra.mxu0 %v1395
        %v1409 = vpop.f32.mrf.mxu0
        %v1410 = vadd.f32 0.0, %v1409
        %v1411 = vpop.f32.mrf.mxu0
        %1412 = vdwg.mxu0
        %v1413 = vpack.c.bf16 %v1410, %v1410
        %s1414 = scalar_lea.vmem %s10, 14
        %v1415 = vld [vmem:[%s1414] sm:$0x3]
        %v1417 = vsel %vm645, %v1413, 0
        %v1420 = vsel %vm649, %v1415, 0
        %1422 = vmatpush.bf16.msra.mxu0 0
        %1423 = vmatpush.bf16.msra.mxu0 0
        %1424 = vmatpush.bf16.msra.mxu0 0
        %1425 = vmatpush.bf16.msra.mxu0 0
        %1426 = vmatpush.bf16.msra.mxu0 0
        %1427 = vmatpush.bf16.msra.mxu0 0
        %1428 = vmatpush.bf16.msra.mxu0 0
        %1429 = vmatpush.bf16.msra.mxu0 %v1420
        %1430 = vmatmul.bf16.gmra.mxu0 %v1417
        %v1431 = vpop.f32.mrf.mxu0
        %v1432 = vadd.f32 0.0, %v1431
        %v1433 = vpop.f32.mrf.mxu0
        %1434 = vdwg.mxu0
        %v1435 = vadd.f32 %v1355, %v1432
        %v1436 = vld [vmem:[%s11] sm:$0x1]
        %v1438 = vperm.slane %v1436, 0
        %v1440 = vadd.f32 %v1435, %v1438
        %v1441 = vadd.f32 %v637, %v1440
        %v1442 = vld [vmem:[%s12] sm:$0x1]
        %v1443 = vld [vmem:[%s13] sm:$0x1]
        %v1444 = vsel %vm743, %v1441, 0.0
        %1445 = vadd.xlane.f32.xlu0 %v1444
        %v1446 = vpop.xlane.xlu0 %1445
        %v1447 = vrcp.pop 32.0
        %v1448 = vmul.f32 32.0, %v1447
        %v1449 = vsub.f32 1.0, %v1448
        %v1450 = vmul.f32 %v1447, %v1449
        %v1451 = vadd.f32 %v1447, %v1450
        %vm1452 = vweird.f32 %v1447
        %v1453 = vsel %vm1452, %v1447, %v1451
        %v1454 = vmul.f32 %v1446, %v1453
        %v1455 = vsub.f32 %v1441, %v1454
        %v1456 = vmul.f32 %v1455, %v1455
        %v1457 = vsel %vm743, %v1456, 0.0
        %1458 = vadd.xlane.f32.xlu0 %v1457
        %v1459 = vpop.xlane.xlu0 %1458
        %v1460 = vmul.f32 %v1459, %v1453
        %v1461 = vadd.f32 %v1460, 1e-05
        %v1462 = vrsqrt.pop %v1461
        %v1463 = vmul.f32 %v1462, %v1461
        %v1464 = vmul.f32 %v1463, %v1462
        %v1465 = vmul.f32 0.5, %v1464
        %v1466 = vsub.f32 1.5, %v1465
        %v1467 = vmul.f32 %v1462, %v1466
        %vm1468 = vweird.f32 %v1461
        %vm1469 = vweird.f32 %v1462
        %vm1470 = vmor %vm1468, %vm1469
        %v1471 = vsel %vm1470, %v1462, %v1467
        %v1472 = vmul.f32 %v1455, %v1471
        %v1474 = vperm.slane %v1442, 0
        %v1476 = vmul.f32 %v1472, %v1474
        %v1478 = vperm.slane %v1443, 0
        %v1480 = vadd.f32 %v1476, %v1478
        %1481 = vst.msk [vmem:[%s610] sm:$0xff] %vm743, %v1480
        %v1482 = vadd.f32 %v1480, %v718
        %v1483 = vpack.c.bf16 %v1482, %v1482
        %v1484 = vld [vmem:[%s14] sm:$0xff]
        %v1485 = vld [vmem:[%s14 + $0x8] sm:$0xff]
        %v1486 = vld [vmem:[%s14 + $0x10] sm:$0xff]
        %v1487 = vld [vmem:[%s14 + $0x18] sm:$0xff]
        %v1488 = vld [vmem:[%s15] sm:$0x3]
        %v1490 = vperm.slane %v1488, 0
        %v1491 = vperm.slane %v1488, 1
        %v1498 = vunpack.c.l.b16 %v1484
        %v1499 = vunpack.c.h.b16 %v1484
        %v1500 = vunpack.c.l.b16 %v1485
        %v1501 = vunpack.c.h.b16 %v1485
        %v1502 = vunpack.c.l.b16 %v1486
        %v1503 = vunpack.c.h.b16 %v1486
        %v1504 = vunpack.c.l.b16 %v1487
        %v1505 = vunpack.c.h.b16 %v1487
        %v1506 = vpack.c.b16 %v1500, %v1498
        %v1507 = vpack.c.b16 %v1501, %v1499
        %v1508 = vpack.c.b16 %v1504, %v1502
        %v1509 = vpack.c.b16 %v1505, %v1503
        %v1515 = vsel %vm743, %v1483, 0
        %1517 = vmatpush.bf16.msra.mxu0 0
        %1518 = vmatpush.bf16.msra.mxu0 0
        %1519 = vmatpush.bf16.msra.mxu0 0
        %1520 = vmatpush.bf16.msra.mxu0 0
        %1521 = vmatpush.bf16.msra.mxu0 0
        %1522 = vmatpush.bf16.msra.mxu0 0
        %1523 = vmatpush.bf16.msra.mxu0 %v1508
        %1524 = vmatpush.bf16.msra.mxu0 %v1506
        %1525 = vmatmul.bf16.gmra.mxu0 %v1515
        %v1526 = vpop.f32.mrf.mxu0
        %v1527 = vadd.f32 %v1490, %v1526
        %v1528 = vpop.f32.mrf.mxu0
        %1529 = vdwg.mxu0
        %1530 = vmatpush.bf16.msra.mxu0 0
        %1531 = vmatpush.bf16.msra.mxu0 0
        %1532 = vmatpush.bf16.msra.mxu0 0
        %1533 = vmatpush.bf16.msra.mxu0 0
        %1534 = vmatpush.bf16.msra.mxu0 0
        %1535 = vmatpush.bf16.msra.mxu0 0
        %1536 = vmatpush.bf16.msra.mxu0 %v1509
        %1537 = vmatpush.bf16.msra.mxu0 %v1507
        %1538 = vmatmul.bf16.gmra.mxu0 %v1515
        %v1539 = vpop.f32.mrf.mxu0
        %v1540 = vadd.f32 %v1491, %v1539
        %v1541 = vpop.f32.mrf.mxu0
        %1542 = vdwg.mxu0
        %v1543 = vlaneseq
        %v1544 = vand.u32 %v1543, 127
        %v1545 = vand.u32 %v1544, 1
        %vm1546 = vcmp.eq.s32.totalorder %v1545, 0
        %1548 = vset.pattern.permute.xlu0 0
        %1549 = vperm.xlu0 %1548, %v638
        %v1550 = vpop.permute.xlu0 %1549
        %1552 = vset.pattern.permute.xlu0 1
        %1553 = vperm.xlu0 %1552, %v638
        %v1554 = vpop.permute.xlu0 %1553
        %v1556 = vsel %vm1546, %v1550, %v1554
        %1557 = vset.pattern.permute.xlu0 2
        %1558 = vperm.xlu0 %1557, %v638
        %v1559 = vpop.permute.xlu0 %1558
        %1561 = vset.pattern.permute.xlu0 3
        %1562 = vperm.xlu0 %1561, %v638
        %v1563 = vpop.permute.xlu0 %1562
        %v1565 = vsel %vm1546, %v1559, %v1563
        %v1566 = vmul.f32 %v1527, 0.125
        %v1567 = vmul.f32 %v1566, %v1565
        %v1568 = vadd.f32 %v1556, %v1567
        %1569 = vst [vmem:[%s635] sm:$0xff] %v1568
        %v1570 = vsel %vm704, %v1540, -inf
        %1571 = vmax.xlane.f32.xlu0 %v1570
        %v1572 = vpop.xlane.xlu0 %1571
        %v1573 = vsub.f32 %v1540, %v1572
        %v1574 = vmul.f32 %v1573, 1.442695
        %v1575 = vpow.pop %v1574
        %v1576 = vld [vmem:[%s16] sm:$0xff]
        %v1577 = vld [vmem:[%s16 + $0x8] sm:$0xff]
        %v1578 = vld [vmem:[%s16 + $0x10] sm:$0xff]
        %v1579 = vld [vmem:[%s16 + $0x18] sm:$0xff]
        %v1580 = vld [vmem:[%s16 + $0x20] sm:$0xff]
        %v1581 = vld [vmem:[%s16 + $0x28] sm:$0xff]
        %v1582 = vld [vmem:[%s16 + $0x30] sm:$0xff]
        %v1583 = vld [vmem:[%s16 + $0x38] sm:$0xff]
        %v1585 = vsel %vm704, %v1575, 0
        %1587 = vmatpush.msra.mxu0 0.0
        %1588 = vmatpush.msra.mxu0 0.0
        %1589 = vmatpush.msra.mxu0 0.0
        %1590 = vmatpush.msra.mxu0 0.0
        %1591 = vmatpush.msra.mxu0 0.0
        %1592 = vmatpush.msra.mxu0 0.0
        %1593 = vmatpush.msra.mxu0 0.0
        %1594 = vmatpush.msra.mxu0 0.0
        %1595 = vmatpush.msra.mxu0 %v1583
        %1596 = vmatpush.msra.mxu0 %v1582
        %1597 = vmatpush.msra.mxu0 %v1581
        %1598 = vmatpush.msra.mxu0 %v1580
        %1599 = vmatpush.msra.mxu0 %v1579
        %1600 = vmatpush.msra.mxu0 %v1578
        %1601 = vmatpush.msra.mxu0 %v1577
        %1602 = vmatpush.msra.mxu0 %v1576
        %1603 = vmatmul.f32.gmra.mxu0 %v1585
        %v1604 = vpop.f32.mrf.mxu0
        %v1605 = vadd.f32 0.0, %v1604
        %1606 = vdwg.mxu0
        %v1607 = vrcp.pop %v1605
        %v1608 = vmul.f32 %v1575, %v1607
        %1609 = vst.msk [vmem:[%s623] sm:$0xff] %vm704, %v1608
        %s1610 = sand.u32 %s412, 1
        %s1611 = scalar_lea.sflag [#allocation3], %s1610
        %s1612 = sand.u32 %s412, 1
        %s1613 = smul.addr %s1612, 8
        %s1614 = scalar_lea.vmem [#allocation2], %s1613
        %p1615 = scmp.lt.s32.totalorder %s37, 1
        %s1616 = scalar_select %p1615, %s37, 1
        %s1617 = smul.addr %s1616, 8
        %s1618 = scalar_lea.vmem %s18, %s1617
        %s1619 = sand.u32 %s464, 1
        %s1620 = scalar_lea.sflag [#allocation5], %s1619
        %s1621 = sand.u32 %s464, 1
        %s1622 = smul.addr %s1621, 8
        %s1623 = scalar_lea.vmem [#allocation4], %s1622
        // Predicated region
        $region89: #{transformer_decoder_forward.12} parent=87 // pred_check
          %p1624 = pneg %p422
        $region90: #{transformer_decoder_forward.12} parent=87 // pred_check_branch
          %1626 = sbr.rel (%p1624) target = $region92
        $region91: #{transformer_decoder_forward.12} parent=87 // pred_region
          %1628 = vsyncadd %s1611, 0
          %s1629 = smul.addr %s37, 8
          %s1630 = scalar_lea.hbm %s17, %s1629
          %s1632 = sshll.u32 %s1614, 4
          %s1633 = int_to_ptr.vmem [resolvable:$true] %s1632
          %s1634 = sshll.u32 %s1630, 4
          %s1635 = int_to_ptr.hbm [resolvable:$true] %s1634
          %1637 = dma.vmem_to_hbm [thread:$0]  %s1633, 128, %s1635, %s1611
        $region92: #{transformer_decoder_forward.12} parent=87 // pred_fallthru
          _
        // Predicated region
        $region93: #{transformer_decoder_forward.12} parent=87 // pred_check
          %p1638 = pneg %p448
        $region94: #{transformer_decoder_forward.12} parent=87 // pred_check_branch
          %1640 = sbr.rel (%p1638) target = $region96
        $region95: #{transformer_decoder_forward.12} parent=87 // pred_region
          _
        $region96: #{transformer_decoder_forward.12} parent=87 // pred_fallthru
          _
        // Predicated region
        $region97: #{transformer_decoder_forward.12} parent=87 // pred_check
          %p1641 = pneg %p474
        $region98: #{transformer_decoder_forward.12} parent=87 // pred_check_branch
          %1643 = sbr.rel (%p1641) target = $region100
        $region99: #{transformer_decoder_forward.12} parent=87 // pred_region
          %1645 = vsyncadd %s1620, 0
          %s1646 = smul.addr %s37, 8
          %s1647 = scalar_lea.hbm %s19, %s1646
          %s1649 = sshll.u32 %s1623, 4
          %s1650 = int_to_ptr.vmem [resolvable:$true] %s1649
          %s1651 = sshll.u32 %s1647, 4
          %s1652 = int_to_ptr.hbm [resolvable:$true] %s1651
          %1654 = dma.vmem_to_hbm [thread:$0]  %s1650, 128, %s1652, %s1620
        $region100: #{transformer_decoder_forward.12} parent=87 // pred_fallthru
          _
      $region88: #{transformer_decoder_forward.12} parent=5 // pred_fallthru
        _
      %p1655 = scmp.le.s32.totalorder 2, %s32
      // Predicated region
      $region101: #{transformer_decoder_forward.12} parent=5 // pred_check
        %p1656 = pneg %p1655
      $region102: #{transformer_decoder_forward.12} parent=5 // pred_check_branch
        %1658 = sbr.rel (%p1656) target = $region104
      $region103: #{transformer_decoder_forward.12} parent=5 // pred_region
        %s1659 = ssub.s32 %s32, 2
        // Predicated region
        $region105: #{transformer_decoder_forward.12} parent=103 // pred_check
          %p1660 = pneg %p428
        $region106: #{transformer_decoder_forward.12} parent=103 // pred_check_branch
          %1662 = sbr.rel (%p1660) target = $region108
        $region107: #{transformer_decoder_forward.12} parent=103 // pred_region
          %s1663 = sand.u32 %s413, 1
          %s1664 = scalar_lea.sflag [#allocation3], %s1663
          %s1665 = sand.u32 %s413, 1
          %s1666 = smul.addr %s1665, 8
          %s1667 = scalar_lea.vmem [#allocation2], %s1666
          %1669 = dma.done %s1664, 128
        $region108: #{transformer_decoder_forward.12} parent=103 // pred_fallthru
          _
        // Predicated region
        $region109: #{transformer_decoder_forward.12} parent=103 // pred_check
          %p1670 = pneg %p454
        $region110: #{transformer_decoder_forward.12} parent=103 // pred_check_branch
          %1672 = sbr.rel (%p1670) target = $region112
        $region111: #{transformer_decoder_forward.12} parent=103 // pred_region
          %p1673 = scmp.lt.s32.totalorder %s38, 1
          %s1674 = scalar_select %p1673, %s38, 1
          %s1675 = smul.addr %s1674, 8
          %s1676 = scalar_lea.vmem %s18, %s1675
        $region112: #{transformer_decoder_forward.12} parent=103 // pred_fallthru
          _
        // Predicated region
        $region113: #{transformer_decoder_forward.12} parent=103 // pred_check
          %p1677 = pneg %p480
        $region114: #{transformer_decoder_forward.12} parent=103 // pred_check_branch
          %1679 = sbr.rel (%p1677) target = $region116
        $region115: #{transformer_decoder_forward.12} parent=103 // pred_region
          %s1680 = sand.u32 %s465, 1
          %s1681 = scalar_lea.sflag [#allocation5], %s1680
          %s1682 = sand.u32 %s465, 1
          %s1683 = smul.addr %s1682, 8
          %s1684 = scalar_lea.vmem [#allocation4], %s1683
          %1686 = dma.done %s1681, 128
        $region116: #{transformer_decoder_forward.12} parent=103 // pred_fallthru
          _
      $region104: #{transformer_decoder_forward.12} parent=5 // pred_fallthru
        _
    $region6: #{transformer_decoder_forward.12} parent=1 // loop_footer
      %s36 = sadd.s32 1, %s32
    $region7: #{transformer_decoder_forward.12} parent=1 // loop_footer_branch
      %31 = sbr.rel target = $region3
    $region8: #{transformer_decoder_forward.12} parent=1 // loop_exit
      _
    %1687 = vsyncpa [#allocation3], 1
    %s1688 = scalar_lea.sflag [#allocation3], 1
    %1689 = vsyncpa %s1688, 1
    %1690 = vsyncpa [#allocation5], 1
    %s1691 = scalar_lea.sflag [#allocation5], 1
    %1692 = vsyncpa %s1691, 1

// kernel: transformer_decoder_forward.17
$region0: #{transformer_decoder_forward.17}
  #allocation0 [shape = 'u32[]', space=smem, size = 0x4, offset = 0x4, fixed_abs, tag = 'smem constant byte address 0x4 - core index']
  #allocation1 [shape = 'u32[72,128]{1,0:T(1,128)}', space=vmem, size = 0x9000, scoped, tag = 'internal scratch']
  %s0 = inlined_call_operand.vmem [shape: f32[16,32], index: 0, kind: input, shape index: {}]
  %s1 = inlined_call_operand.vmem [shape: f32[16,32], index: 1, kind: input, shape index: {}]
  %s2 = inlined_call_operand.vmem [shape: bf16[32,32], index: 2, kind: input, shape index: {}]
  %s3 = inlined_call_operand.vmem [shape: f32[1,32], index: 3, kind: input, shape index: {}]
  %s4 = inlined_call_operand.vmem [shape: f32[1,32], index: 4, kind: input, shape index: {}]
  %s5 = inlined_call_operand.vmem [shape: f32[1,32], index: 5, kind: input, shape index: {}]
  %s6 = inlined_call_operand.vmem [shape: bf16[32,64], index: 6, kind: input, shape index: {}]
  %s7 = inlined_call_operand.vmem [shape: f32[1,64], index: 7, kind: input, shape index: {}]
  %s8 = inlined_call_operand.vmem [shape: bf16[64,32], index: 8, kind: input, shape index: {}]
  %s9 = inlined_call_operand.vmem [shape: f32[1,32], index: 9, kind: input, shape index: {}]
  %s10 = inlined_call_operand.vmem [shape: f32[1,32], index: 10, kind: input, shape index: {}]
  %s11 = inlined_call_operand.vmem [shape: f32[1,32], index: 11, kind: input, shape index: {}]
  %s12 = inlined_call_operand.vmem [shape: bf16[32,32], index: 12, kind: input, shape index: {}]
  %s13 = inlined_call_operand.vmem [shape: f32[1,32], index: 13, kind: input, shape index: {}]
  %s14 = inlined_call_operand.vmem [shape: bf16[32,32], index: 14, kind: input, shape index: {}]
  %s15 = inlined_call_operand.vmem [shape: f32[1,32], index: 15, kind: input, shape index: {}]
  %s16 = inlined_call_operand.vmem [shape: bf16[32,20], index: 16, kind: input, shape index: {}]
  %s17 = inlined_call_operand.vmem [shape: bf16[32,20], index: 17, kind: input, shape index: {}]
  %s18 = inlined_call_operand.vmem [shape: f32[1,20], index: 18, kind: input, shape index: {}]
  %s19 = inlined_call_operand.hbm [shape: f32[16,32], index: 19, kind: output, shape index: {0}]
  %s20 = inlined_call_operand.vmem [shape: f32[16,20], index: 20, kind: output, shape index: {1}]
  %21 = xla_tuple %s19, %s20
  %s22 = sld [smem:[#allocation0]]
  $region94: #{transformer_decoder_forward.17} parent=0
    _
  %s24 = ssub.s32 1, %s22
  %s25 = scalar_select 0, %s24, %s22
  $region1: #{transformer_decoder_forward.17} parent=0
    #allocation2 [shape = 'u8[8192]{0}', space=vmem, size = 0x2000, scoped, tag = 'output window, operand 0, single buffered']
    #allocation3 [shape = 's32[1]{0}', space=sflag, size = 0x4, scoped, tag = 'scoped memory for transformer_decoder_forward.17']
    %26 = vsyncpa [#allocation3], 0
    // Predicated region
    $region2: #{transformer_decoder_forward.17} parent=1 // pred_check
      _
    $region3: #{transformer_decoder_forward.17} parent=1 // pred_check_branch
      %28 = sbr.rel (0) target = $region5
    $region4: #{transformer_decoder_forward.17} parent=1 // pred_region
      _
    $region5: #{transformer_decoder_forward.17} parent=1 // pred_fallthru
      _
    // Predicated region
    $region6: #{transformer_decoder_forward.17} parent=1 // pred_check
      _
    $region7: #{transformer_decoder_forward.17} parent=1 // pred_check_branch
      %30 = sbr.rel (0) target = $region9
    $region8: #{transformer_decoder_forward.17} parent=1 // pred_region
      _
    $region9: #{transformer_decoder_forward.17} parent=1 // pred_fallthru
      _
    // Predicated region
    $region10: #{transformer_decoder_forward.17} parent=1 // pred_check
      _
    $region11: #{transformer_decoder_forward.17} parent=1 // pred_check_branch
      %32 = sbr.rel (0) target = $region13
    $region12: #{transformer_decoder_forward.17} parent=1 // pred_region
      _
    $region13: #{transformer_decoder_forward.17} parent=1 // pred_fallthru
      _
    // Predicated region
    $region14: #{transformer_decoder_forward.17} parent=1 // pred_check
      _
    $region15: #{transformer_decoder_forward.17} parent=1 // pred_check_branch
      %34 = sbr.rel (0) target = $region17
    $region16: #{transformer_decoder_forward.17} parent=1 // pred_region
      _
    $region17: #{transformer_decoder_forward.17} parent=1 // pred_fallthru
      _
    // Predicated region
    $region18: #{transformer_decoder_forward.17} parent=1 // pred_check
      _
    $region19: #{transformer_decoder_forward.17} parent=1 // pred_check_branch
      %36 = sbr.rel (0) target = $region21
    $region20: #{transformer_decoder_forward.17} parent=1 // pred_region
      _
    $region21: #{transformer_decoder_forward.17} parent=1 // pred_fallthru
      _
    // Predicated region
    $region22: #{transformer_decoder_forward.17} parent=1 // pred_check
      _
    $region23: #{transformer_decoder_forward.17} parent=1 // pred_check_branch
      %38 = sbr.rel (0) target = $region25
    $region24: #{transformer_decoder_forward.17} parent=1 // pred_region
      _
    $region25: #{transformer_decoder_forward.17} parent=1 // pred_fallthru
      _
    // Predicated region
    $region26: #{transformer_decoder_forward.17} parent=1 // pred_check
      _
    $region27: #{transformer_decoder_forward.17} parent=1 // pred_check_branch
      %40 = sbr.rel (0) target = $region29
    $region28: #{transformer_decoder_forward.17} parent=1 // pred_region
      _
    $region29: #{transformer_decoder_forward.17} parent=1 // pred_fallthru
      _
    // Predicated region
    $region30: #{transformer_decoder_forward.17} parent=1 // pred_check
      _
    $region31: #{transformer_decoder_forward.17} parent=1 // pred_check_branch
      %42 = sbr.rel (0) target = $region33
    $region32: #{transformer_decoder_forward.17} parent=1 // pred_region
      _
    $region33: #{transformer_decoder_forward.17} parent=1 // pred_fallthru
      _
    // Predicated region
    $region34: #{transformer_decoder_forward.17} parent=1 // pred_check
      _
    $region35: #{transformer_decoder_forward.17} parent=1 // pred_check_branch
      %44 = sbr.rel (0) target = $region37
    $region36: #{transformer_decoder_forward.17} parent=1 // pred_region
      _
    $region37: #{transformer_decoder_forward.17} parent=1 // pred_fallthru
      _
    // Predicated region
    $region38: #{transformer_decoder_forward.17} parent=1 // pred_check
      _
    $region39: #{transformer_decoder_forward.17} parent=1 // pred_check_branch
      %46 = sbr.rel (0) target = $region41
    $region40: #{transformer_decoder_forward.17} parent=1 // pred_region
      _
    $region41: #{transformer_decoder_forward.17} parent=1 // pred_fallthru
      _
    // Predicated region
    $region42: #{transformer_decoder_forward.17} parent=1 // pred_check
      _
    $region43: #{transformer_decoder_forward.17} parent=1 // pred_check_branch
      %48 = sbr.rel (0) target = $region45
    $region44: #{transformer_decoder_forward.17} parent=1 // pred_region
      _
    $region45: #{transformer_decoder_forward.17} parent=1 // pred_fallthru
      _
    // Predicated region
    $region46: #{transformer_decoder_forward.17} parent=1 // pred_check
      _
    $region47: #{transformer_decoder_forward.17} parent=1 // pred_check_branch
      %50 = sbr.rel (0) target = $region49
    $region48: #{transformer_decoder_forward.17} parent=1 // pred_region
      _
    $region49: #{transformer_decoder_forward.17} parent=1 // pred_fallthru
      _
    // Predicated region
    $region50: #{transformer_decoder_forward.17} parent=1 // pred_check
      _
    $region51: #{transformer_decoder_forward.17} parent=1 // pred_check_branch
      %52 = sbr.rel (0) target = $region53
    $region52: #{transformer_decoder_forward.17} parent=1 // pred_region
      _
    $region53: #{transformer_decoder_forward.17} parent=1 // pred_fallthru
      _
    // Predicated region
    $region54: #{transformer_decoder_forward.17} parent=1 // pred_check
      _
    $region55: #{transformer_decoder_forward.17} parent=1 // pred_check_branch
      %54 = sbr.rel (0) target = $region57
    $region56: #{transformer_decoder_forward.17} parent=1 // pred_region
      _
    $region57: #{transformer_decoder_forward.17} parent=1 // pred_fallthru
      _
    // Predicated region
    $region58: #{transformer_decoder_forward.17} parent=1 // pred_check
      _
    $region59: #{transformer_decoder_forward.17} parent=1 // pred_check_branch
      %56 = sbr.rel (0) target = $region61
    $region60: #{transformer_decoder_forward.17} parent=1 // pred_region
      _
    $region61: #{transformer_decoder_forward.17} parent=1 // pred_fallthru
      _
    // Predicated region
    $region62: #{transformer_decoder_forward.17} parent=1 // pred_check
      _
    $region63: #{transformer_decoder_forward.17} parent=1 // pred_check_branch
      %58 = sbr.rel (0) target = $region65
    $region64: #{transformer_decoder_forward.17} parent=1 // pred_region
      _
    $region65: #{transformer_decoder_forward.17} parent=1 // pred_fallthru
      _
    // Predicated region
    $region66: #{transformer_decoder_forward.17} parent=1 // pred_check
      _
    $region67: #{transformer_decoder_forward.17} parent=1 // pred_check_branch
      %60 = sbr.rel (0) target = $region69
    $region68: #{transformer_decoder_forward.17} parent=1 // pred_region
      _
    $region69: #{transformer_decoder_forward.17} parent=1 // pred_fallthru
      _
    // Predicated region
    $region70: #{transformer_decoder_forward.17} parent=1 // pred_check
      _
    $region71: #{transformer_decoder_forward.17} parent=1 // pred_check_branch
      %62 = sbr.rel (0) target = $region73
    $region72: #{transformer_decoder_forward.17} parent=1 // pred_region
      _
    $region73: #{transformer_decoder_forward.17} parent=1 // pred_fallthru
      _
    // Predicated region
    $region74: #{transformer_decoder_forward.17} parent=1 // pred_check
      _
    $region75: #{transformer_decoder_forward.17} parent=1 // pred_check_branch
      %64 = sbr.rel (0) target = $region77
    $region76: #{transformer_decoder_forward.17} parent=1 // pred_region
      _
    $region77: #{transformer_decoder_forward.17} parent=1 // pred_fallthru
      _
    %v66 = vld [vmem:[%s0] sm:$0xff]
    %v67 = vld [vmem:[%s0 + $0x8] sm:$0xff]
    %v68 = vld [vmem:[%s1] sm:$0xff]
    %v69 = vld [vmem:[%s1 + $0x8] sm:$0xff]
    %v70 = vpack.c.bf16 %v67, %v66
    %v71 = vld [vmem:[%s2] sm:$0xf]
    %v72 = vld [vmem:[%s2 + $0x4] sm:$0xf]
    %v73 = vld [vmem:[%s2 + $0x8] sm:$0xf]
    %v74 = vld [vmem:[%s2 + $0xc] sm:$0xf]
    %v75 = vld [vmem:[%s3] sm:$0x1]
    %v77 = vperm.slane %v75, 0
    %v83 = vunpack.c.l.b16 %v71
    %v84 = vunpack.c.l.b16 %v72
    %v85 = vunpack.c.l.b16 %v73
    %v86 = vunpack.c.l.b16 %v74
    %v87 = vpack.c.b16 %v84, %v83
    %v88 = vpack.c.b16 %v86, %v85
    %vm91 = vcmask 261120
    %v93 = vsel %vm91, %v70, 0
    %95 = vmatpush.bf16.msra.mxu0 0
    %96 = vmatpush.bf16.msra.mxu0 0
    %97 = vmatpush.bf16.msra.mxu0 0
    %98 = vmatpush.bf16.msra.mxu0 0
    %99 = vmatpush.bf16.msra.mxu0 0
    %100 = vmatpush.bf16.msra.mxu0 0
    %101 = vmatpush.bf16.msra.mxu0 %v88
    %102 = vmatpush.bf16.msra.mxu0 %v87
    %103 = vmatmul.bf16.gmra.mxu0 %v93
    %v104 = vpop.f32.mrf.mxu0
    %v105 = vadd.f32 %v77, %v104
    %v106 = vpop.f32.mrf.mxu0
    %v107 = vadd.f32 %v77, %v106
    %108 = vdwg.mxu0
    %v109 = vadd.f32 %v68, %v105
    %v110 = vadd.f32 %v69, %v107
    %v111 = vld [vmem:[%s4] sm:$0x1]
    %v112 = vld [vmem:[%s5] sm:$0x1]
    %v113 = vsel %vm91, %v109, 0.0
    %114 = vadd.xlane.f32.xlu0 %v113
    %v115 = vpop.xlane.xlu0 %114
    %v116 = vsel %vm91, %v110, 0.0
    %117 = vadd.xlane.f32.xlu0 %v116
    %v118 = vpop.xlane.xlu0 %117
    %v119 = vrcp.pop 32.0
    %v120 = vmul.f32 32.0, %v119
    %v121 = vsub.f32 1.0, %v120
    %v122 = vmul.f32 %v119, %v121
    %v123 = vadd.f32 %v119, %v122
    %vm124 = vweird.f32 %v119
    %v125 = vsel %vm124, %v119, %v123
    %v126 = vmul.f32 %v115, %v125
    %v127 = vmul.f32 %v118, %v125
    %v128 = vsub.f32 %v109, %v126
    %v129 = vsub.f32 %v110, %v127
    %v130 = vmul.f32 %v128, %v128
    %v131 = vmul.f32 %v129, %v129
    %v132 = vsel %vm91, %v130, 0.0
    %133 = vadd.xlane.f32.xlu0 %v132
    %v134 = vpop.xlane.xlu0 %133
    %v135 = vsel %vm91, %v131, 0.0
    %136 = vadd.xlane.f32.xlu0 %v135
    %v137 = vpop.xlane.xlu0 %136
    %v138 = vmul.f32 %v134, %v125
    %v139 = vmul.f32 %v137, %v125
    %v140 = vadd.f32 %v138, 1e-05
    %v141 = vadd.f32 %v139, 1e-05
    %v142 = vrsqrt.pop %v140
    %v143 = vmul.f32 %v142, %v140
    %v144 = vmul.f32 %v143, %v142
    %v145 = vmul.f32 0.5, %v144
    %v146 = vsub.f32 1.5, %v145
    %v147 = vmul.f32 %v142, %v146
    %vm148 = vweird.f32 %v140
    %vm149 = vweird.f32 %v142
    %vm150 = vmor %vm148, %vm149
    %v151 = vsel %vm150, %v142, %v147
    %v152 = vrsqrt.pop %v141
    %v153 = vmul.f32 %v152, %v141
    %v154 = vmul.f32 %v153, %v152
    %v155 = vmul.f32 0.5, %v154
    %v156 = vsub.f32 1.5, %v155
    %v157 = vmul.f32 %v152, %v156
    %vm158 = vweird.f32 %v141
    %vm159 = vweird.f32 %v152
    %vm160 = vmor %vm158, %vm159
    %v161 = vsel %vm160, %v152, %v157
    %v162 = vmul.f32 %v128, %v151
    %v163 = vmul.f32 %v129, %v161
    %v165 = vperm.slane %v111, 0
    %v167 = vmul.f32 %v162, %v165
    %v168 = vmul.f32 %v163, %v165
    %v170 = vperm.slane %v112, 0
    %v172 = vadd.f32 %v167, %v170
    %v173 = vadd.f32 %v168, %v170
    %v174 = vpack.c.bf16 %v173, %v172
    %v175 = vld [vmem:[%s6] sm:$0xf]
    %v176 = vld [vmem:[%s6 + $0x4] sm:$0xf]
    %v177 = vld [vmem:[%s6 + $0x8] sm:$0xf]
    %v178 = vld [vmem:[%s6 + $0xc] sm:$0xf]
    %v179 = vld [vmem:[%s7] sm:$0x1]
    %v181 = vperm.slane %v179, 0
    %v187 = vunpack.c.l.b16 %v175
    %v188 = vunpack.c.l.b16 %v176
    %v189 = vunpack.c.l.b16 %v177
    %v190 = vunpack.c.l.b16 %v178
    %v191 = vpack.c.b16 %v188, %v187
    %v192 = vpack.c.b16 %v190, %v189
    %v196 = vsel %vm91, %v174, 0
    %198 = vmatpush.bf16.msra.mxu0 0
    %199 = vmatpush.bf16.msra.mxu0 0
    %200 = vmatpush.bf16.msra.mxu0 0
    %201 = vmatpush.bf16.msra.mxu0 0
    %202 = vmatpush.bf16.msra.mxu0 0
    %203 = vmatpush.bf16.msra.mxu0 0
    %204 = vmatpush.bf16.msra.mxu0 %v192
    %205 = vmatpush.bf16.msra.mxu0 %v191
    %206 = vmatmul.bf16.gmra.mxu0 %v196
    %v207 = vpop.f32.mrf.mxu0
    %v208 = vadd.f32 %v181, %v207
    %v209 = vpop.f32.mrf.mxu0
    %v210 = vadd.f32 %v181, %v209
    %211 = vdwg.mxu0
    %v212 = vmax.f32 %v208, 0.0
    %v213 = vmax.f32 %v210, 0.0
    %v214 = vpack.c.bf16 %v213, %v212
    %v215 = vld [vmem:[%s8] sm:$0xf]
    %v216 = vld [vmem:[%s8 + $0x4] sm:$0xf]
    %v217 = vld [vmem:[%s8 + $0x8] sm:$0xf]
    %v218 = vld [vmem:[%s8 + $0xc] sm:$0xf]
    %v219 = vld [vmem:[%s8 + $0x10] sm:$0xf]
    %v220 = vld [vmem:[%s8 + $0x14] sm:$0xf]
    %v221 = vld [vmem:[%s8 + $0x18] sm:$0xf]
    %v222 = vld [vmem:[%s8 + $0x1c] sm:$0xf]
    %v223 = vld [vmem:[%s9] sm:$0x1]
    %v225 = vperm.slane %v223, 0
    %v235 = vunpack.c.l.b16 %v215
    %v236 = vunpack.c.l.b16 %v216
    %v237 = vunpack.c.l.b16 %v217
    %v238 = vunpack.c.l.b16 %v218
    %v239 = vunpack.c.l.b16 %v219
    %v240 = vunpack.c.l.b16 %v220
    %v241 = vunpack.c.l.b16 %v221
    %v242 = vunpack.c.l.b16 %v222
    %v243 = vpack.c.b16 %v236, %v235
    %v244 = vpack.c.b16 %v238, %v237
    %v245 = vpack.c.b16 %v240, %v239
    %v246 = vpack.c.b16 %v242, %v241
    %vm251 = vcmask 523264
    %v253 = vsel %vm251, %v214, 0
    %255 = vmatpush.bf16.msra.mxu0 0
    %256 = vmatpush.bf16.msra.mxu0 0
    %257 = vmatpush.bf16.msra.mxu0 0
    %258 = vmatpush.bf16.msra.mxu0 0
    %259 = vmatpush.bf16.msra.mxu0 %v246
    %260 = vmatpush.bf16.msra.mxu0 %v245
    %261 = vmatpush.bf16.msra.mxu0 %v244
    %262 = vmatpush.bf16.msra.mxu0 %v243
    %263 = vmatmul.bf16.gmra.mxu0 %v253
    %v264 = vpop.f32.mrf.mxu0
    %v265 = vadd.f32 %v225, %v264
    %v266 = vpop.f32.mrf.mxu0
    %v267 = vadd.f32 %v225, %v266
    %268 = vdwg.mxu0
    %v269 = vadd.f32 %v172, %v265
    %v270 = vadd.f32 %v173, %v267
    %v271 = vld [vmem:[%s10] sm:$0x1]
    %v272 = vld [vmem:[%s11] sm:$0x1]
    %v273 = vsel %vm91, %v269, 0.0
    %274 = vadd.xlane.f32.xlu0 %v273
    %v275 = vpop.xlane.xlu0 %274
    %v276 = vsel %vm91, %v270, 0.0
    %277 = vadd.xlane.f32.xlu0 %v276
    %v278 = vpop.xlane.xlu0 %277
    %v279 = vmul.f32 %v275, %v125
    %v280 = vmul.f32 %v278, %v125
    %v281 = vsub.f32 %v269, %v279
    %v282 = vsub.f32 %v270, %v280
    %v283 = vmul.f32 %v281, %v281
    %v284 = vmul.f32 %v282, %v282
    %v285 = vsel %vm91, %v283, 0.0
    %286 = vadd.xlane.f32.xlu0 %v285
    %v287 = vpop.xlane.xlu0 %286
    %v288 = vsel %vm91, %v284, 0.0
    %289 = vadd.xlane.f32.xlu0 %v288
    %v290 = vpop.xlane.xlu0 %289
    %v291 = vmul.f32 %v287, %v125
    %v292 = vmul.f32 %v290, %v125
    %v293 = vadd.f32 %v291, 1e-05
    %v294 = vadd.f32 %v292, 1e-05
    %v295 = vrsqrt.pop %v293
    %v296 = vmul.f32 %v295, %v293
    %v297 = vmul.f32 %v296, %v295
    %v298 = vmul.f32 0.5, %v297
    %v299 = vsub.f32 1.5, %v298
    %v300 = vmul.f32 %v295, %v299
    %vm301 = vweird.f32 %v293
    %vm302 = vweird.f32 %v295
    %vm303 = vmor %vm301, %vm302
    %v304 = vsel %vm303, %v295, %v300
    %v305 = vrsqrt.pop %v294
    %v306 = vmul.f32 %v305, %v294
    %v307 = vmul.f32 %v306, %v305
    %v308 = vmul.f32 0.5, %v307
    %v309 = vsub.f32 1.5, %v308
    %v310 = vmul.f32 %v305, %v309
    %vm311 = vweird.f32 %v294
    %vm312 = vweird.f32 %v305
    %vm313 = vmor %vm311, %vm312
    %v314 = vsel %vm313, %v305, %v310
    %v315 = vmul.f32 %v281, %v304
    %v316 = vmul.f32 %v282, %v314
    %v318 = vperm.slane %v271, 0
    %v320 = vmul.f32 %v315, %v318
    %v321 = vmul.f32 %v316, %v318
    %v323 = vperm.slane %v272, 0
    %v325 = vadd.f32 %v320, %v323
    %v326 = vadd.f32 %v321, %v323
    %327 = vst.msk [vmem:[#allocation2] sm:$0xff] %vm91, %v325
    %328 = vst.msk [vmem:[#allocation2 + $0x8] sm:$0xff] %vm91, %v326
    %v329 = vpack.c.bf16 %v326, %v325
    %v330 = vld [vmem:[%s12] sm:$0xf]
    %v331 = vld [vmem:[%s12 + $0x4] sm:$0xf]
    %v332 = vld [vmem:[%s12 + $0x8] sm:$0xf]
    %v333 = vld [vmem:[%s12 + $0xc] sm:$0xf]
    %v334 = vld [vmem:[%s13] sm:$0x1]
    %v336 = vperm.slane %v334, 0
    %v342 = vunpack.c.l.b16 %v330
    %v343 = vunpack.c.l.b16 %v331
    %v344 = vunpack.c.l.b16 %v332
    %v345 = vunpack.c.l.b16 %v333
    %v346 = vpack.c.b16 %v343, %v342
    %v347 = vpack.c.b16 %v345, %v344
    %v351 = vsel %vm91, %v329, 0
    %353 = vmatpush.bf16.msra.mxu0 0
    %354 = vmatpush.bf16.msra.mxu0 0
    %355 = vmatpush.bf16.msra.mxu0 0
    %356 = vmatpush.bf16.msra.mxu0 0
    %357 = vmatpush.bf16.msra.mxu0 0
    %358 = vmatpush.bf16.msra.mxu0 0
    %359 = vmatpush.bf16.msra.mxu0 %v347
    %360 = vmatpush.bf16.msra.mxu0 %v346
    %361 = vmatmul.bf16.gmra.mxu0 %v351
    %v362 = vpop.f32.mrf.mxu0
    %v363 = vadd.f32 %v336, %v362
    %v364 = vpop.f32.mrf.mxu0
    %v365 = vadd.f32 %v336, %v364
    %366 = vdwg.mxu0
    %v367 = vmax.f32 %v363, 0.0
    %v368 = vmax.f32 %v365, 0.0
    %v369 = vpack.c.bf16 %v368, %v367
    %v370 = vld [vmem:[%s14] sm:$0xf]
    %v371 = vld [vmem:[%s14 + $0x4] sm:$0xf]
    %v372 = vld [vmem:[%s14 + $0x8] sm:$0xf]
    %v373 = vld [vmem:[%s14 + $0xc] sm:$0xf]
    %v374 = vld [vmem:[%s15] sm:$0x1]
    %v376 = vperm.slane %v374, 0
    %v382 = vunpack.c.l.b16 %v370
    %v383 = vunpack.c.l.b16 %v371
    %v384 = vunpack.c.l.b16 %v372
    %v385 = vunpack.c.l.b16 %v373
    %v386 = vpack.c.b16 %v383, %v382
    %v387 = vpack.c.b16 %v385, %v384
    %v391 = vsel %vm91, %v369, 0
    %393 = vmatpush.bf16.msra.mxu0 0
    %394 = vmatpush.bf16.msra.mxu0 0
    %395 = vmatpush.bf16.msra.mxu0 0
    %396 = vmatpush.bf16.msra.mxu0 0
    %397 = vmatpush.bf16.msra.mxu0 0
    %398 = vmatpush.bf16.msra.mxu0 0
    %399 = vmatpush.bf16.msra.mxu0 %v387
    %400 = vmatpush.bf16.msra.mxu0 %v386
    %401 = vmatmul.bf16.gmra.mxu0 %v391
    %v402 = vpop.f32.mrf.mxu0
    %v403 = vadd.f32 %v376, %v402
    %v404 = vpop.f32.mrf.mxu0
    %v405 = vadd.f32 %v376, %v404
    %406 = vdwg.mxu0
    %v407 = vmax.f32 %v403, 0.0
    %v408 = vmax.f32 %v405, 0.0
    %v409 = vpack.c.bf16 %v408, %v407
    %v410 = vld [vmem:[%s16] sm:$0xf]
    %v411 = vld [vmem:[%s16 + $0x4] sm:$0xf]
    %v412 = vld [vmem:[%s16 + $0x8] sm:$0xf]
    %v413 = vld [vmem:[%s16 + $0xc] sm:$0xf]
    %v414 = vld [vmem:[%s17] sm:$0xf]
    %v415 = vld [vmem:[%s17 + $0x4] sm:$0xf]
    %v416 = vld [vmem:[%s17 + $0x8] sm:$0xf]
    %v417 = vld [vmem:[%s17 + $0xc] sm:$0xf]
    %v422 = vunpack.c.l.b16 %v414
    %v423 = vunpack.c.l.b16 %v415
    %v424 = vunpack.c.l.b16 %v416
    %v425 = vunpack.c.l.b16 %v417
    %v426 = vpack.c.b16 %v423, %v422
    %v427 = vpack.c.b16 %v425, %v424
    %430 = vmatpush.bf16.msra.mxu0 0
    %431 = vmatpush.bf16.msra.mxu0 0
    %432 = vmatpush.bf16.msra.mxu0 0
    %433 = vmatpush.bf16.msra.mxu0 0
    %434 = vmatpush.bf16.msra.mxu0 0
    %435 = vmatpush.bf16.msra.mxu0 0
    %436 = vmatpush.bf16.msra.mxu0 %v427
    %437 = vmatpush.bf16.msra.mxu0 %v426
    %438 = vmatmul.bf16.gmra.mxu0 %v351
    %v439 = vpop.f32.mrf.mxu0
    %v440 = vadd.f32 0.0, %v439
    %v441 = vpop.f32.mrf.mxu0
    %v442 = vadd.f32 0.0, %v441
    %443 = vdwg.mxu0
    %v448 = vunpack.c.l.b16 %v410
    %v449 = vunpack.c.l.b16 %v411
    %v450 = vunpack.c.l.b16 %v412
    %v451 = vunpack.c.l.b16 %v413
    %v452 = vpack.c.b16 %v449, %v448
    %v453 = vpack.c.b16 %v451, %v450
    %v457 = vsel %vm91, %v409, 0
    %459 = vmatpush.bf16.msra.mxu0 0
    %460 = vmatpush.bf16.msra.mxu0 0
    %461 = vmatpush.bf16.msra.mxu0 0
    %462 = vmatpush.bf16.msra.mxu0 0
    %463 = vmatpush.bf16.msra.mxu0 0
    %464 = vmatpush.bf16.msra.mxu0 0
    %465 = vmatpush.bf16.msra.mxu0 %v453
    %466 = vmatpush.bf16.msra.mxu0 %v452
    %467 = vmatmul.bf16.gmra.mxu0 %v457
    %v468 = vpop.f32.mrf.mxu0
    %v469 = vadd.f32 %v440, %v468
    %v470 = vpop.f32.mrf.mxu0
    %v471 = vadd.f32 %v442, %v470
    %472 = vdwg.mxu0
    %v473 = vld [vmem:[%s18] sm:$0x1]
    %v475 = vperm.slane %v473, 0
    %v477 = vadd.f32 %v469, %v475
    %v478 = vadd.f32 %v471, %v475
    %vm479 = vcmask 162816
    %480 = vst.msk [vmem:[%s20] sm:$0xff] %vm479, %v477
    %481 = vst.msk [vmem:[%s20 + $0x8] sm:$0xff] %vm479, %v478
    // Predicated region
    $region78: #{transformer_decoder_forward.17} parent=1 // pred_check
      _
    $region79: #{transformer_decoder_forward.17} parent=1 // pred_check_branch
      %483 = sbr.rel (0) target = $region81
    $region80: #{transformer_decoder_forward.17} parent=1 // pred_region
      %485 = vsyncadd [#allocation3], 0
      %s486 = sshll.u32 [#allocation2], 4
      %s487 = int_to_ptr.vmem [resolvable:$true] %s486
      %s488 = sshll.u32 %s19, 4
      %s489 = int_to_ptr.hbm [resolvable:$true] %s488
      %494 = dma.vmem_to_hbm [thread:$0]  %s487, 256, %s489, [#allocation3], 128, 128, 8
    $region81: #{transformer_decoder_forward.17} parent=1 // pred_fallthru
      _
    // Predicated region
    $region82: #{transformer_decoder_forward.17} parent=1 // pred_check
      _
    $region83: #{transformer_decoder_forward.17} parent=1 // pred_check_branch
      %496 = sbr.rel (0) target = $region85
    $region84: #{transformer_decoder_forward.17} parent=1 // pred_region
      _
    $region85: #{transformer_decoder_forward.17} parent=1 // pred_fallthru
      _
    // Predicated region
    $region86: #{transformer_decoder_forward.17} parent=1 // pred_check
      _
    $region87: #{transformer_decoder_forward.17} parent=1 // pred_check_branch
      %498 = sbr.rel (0) target = $region89
    $region88: #{transformer_decoder_forward.17} parent=1 // pred_region
      %500 = dma.done [#allocation3], 256
    $region89: #{transformer_decoder_forward.17} parent=1 // pred_fallthru
      _
    // Predicated region
    $region90: #{transformer_decoder_forward.17} parent=1 // pred_check
      _
    $region91: #{transformer_decoder_forward.17} parent=1 // pred_check_branch
      %502 = sbr.rel (0) target = $region93
    $region92: #{transformer_decoder_forward.17} parent=1 // pred_region
      _
    $region93: #{transformer_decoder_forward.17} parent=1 // pred_fallthru
      _
    %503 = vsyncpa [#allocation3], 1

</llo_original>
